<compile_context>
chip_gen: v7x
topology: tpu7x:2x2x1
jax: 0.10.0
libtpu: 0.0.40
codegen_flags: <defaults>
</compile_context>

<pallas_src>
import functools

import jax
import jax.numpy as jnp
from jax.experimental import pallas as pl
from jax.experimental.pallas import tpu as pltpu

LANE = 128
SUBLANE = 8


def _round_up(n, m):
    return ((n + m - 1) // m) * m


# ------------------------------ fused kernel ---------------------------------

def _music_lstm_kernel(x_ref,
                       wih1_ref, whh1_ref, b1_ref,
                       wih2_ref, whh2_ref, b2_ref,
                       wih3_ref, whh3_ref, b3_ref,
                       wd_ref, bd_ref,
                       y_ref,
                       h1_sc, h2_sc, h3_sc,
                       *, seq_len, batch):
    """x_ref: (T*Bp, D) time-major rows.  y_ref: (T*Bp, Op).  Gate order: [i, f, g, o]."""
    TB = seq_len * batch

    def run_layer(x2d, wih_ref, whh_ref, b_ref, h_sc):
        Hp = whh_ref.shape[0]            # padded hidden size
        G4 = whh_ref.shape[1]            # 4 * Hp (gates along lanes)

        # Lane mask for the "g" gate block [2Hp, 3Hp): tanh there, sigmoid elsewhere.
        lane = jax.lax.broadcasted_iota(jnp.int32, (batch, G4), 1)
        is_g = (lane >= 2 * Hp) & (lane < 3 * Hp)

        def scoped(gx_sc):
            # Hoisted input projection (+ fused biases): one lane-dense matmul + store.
            gx_sc[...] = (
                jnp.dot(x2d, wih_ref[...], preferred_element_type=jnp.float32)
                + b_ref[...])

            def step(t, carry):
                h, c = carry
                off = pl.multiple_of(t * batch, SUBLANE)
                # Single fused recurrent matmul; weight read from VMEM each iteration.
                gates = gx_sc[pl.ds(off, batch), :] + jnp.dot(
                    h, whh_ref[...], preferred_element_type=jnp.float32)
                acts = jnp.where(is_g, jnp.tanh(gates), jax.nn.sigmoid(gates))
                i_g = acts[:, 0 * Hp:1 * Hp]
                f_g = acts[:, 1 * Hp:2 * Hp]
                g_g = acts[:, 2 * Hp:3 * Hp]
                o_g = acts[:, 3 * Hp:4 * Hp]
                c_new = f_g * c + i_g * g_g
                h_new = o_g * jnp.tanh(c_new)
                h_sc[pl.ds(off, batch), :] = h_new
                return (h_new, c_new)

            zeros = jnp.zeros((batch, Hp), jnp.float32)
            unroll = True if seq_len <= 16 else 8
            jax.lax.fori_loop(0, seq_len, step, (zeros, zeros), unroll=unroll)

        # Sequential run_scoped scopes reuse the same VMEM region -> peak = max(layer gx).
        pl.run_scoped(scoped, pltpu.VMEM((TB, G4), jnp.float32))
        return h_sc[...]                                   # (T*Bp, Hp)

    x2d = x_ref[...]                                       # (T*Bp, D)
    h1 = run_layer(x2d, wih1_ref, whh1_ref, b1_ref, h1_sc)
    # dropout1: identity (eval mode)
    h2 = run_layer(h1, wih2_ref, whh2_ref, b2_ref, h2_sc)
    # dropout2: identity (eval mode)
    h3 = run_layer(h2, wih3_ref, whh3_ref, b3_ref, h3_sc)
    # dropout3: identity (eval mode)

    # Dense + sigmoid head over the whole sequence; single lane-dense (T*Bp, Op) store.
    logits = jnp.dot(h3, wd_ref[...], preferred_element_type=jnp.float32) + bd_ref[...]
    y_ref[...] = jax.nn.sigmoid(logits).astype(y_ref.dtype)


def _full_spec(shape):
    n = len(shape)
    return pl.BlockSpec(shape, lambda i, _n=n: (0,) * _n)


def _music_lstm_pallas(x2d, seq_len, batch_pad, kp):
    TB, _ = x2d.shape
    wih1, whh1, b1 = kp["lstm1"]
    wih2, whh2, b2 = kp["lstm2"]
    wih3, whh3, b3 = kp["lstm3"]
    wd, bd = kp["dense"]
    H1p, H2p, H3p = whh1.shape[0], whh2.shape[0], whh3.shape[0]
    Op = wd.shape[-1]

    # Alignment invariants (padding done in prepare_params / wrapper).
    assert batch_pad % SUBLANE == 0 and TB == seq_len * batch_pad
    for whh in (whh1, whh2, whh3):
        assert whh.shape[1] == 4 * whh.shape[0] and whh.shape[1] % LANE == 0
    assert Op % LANE == 0

    inputs = (x2d, wih1, whh1, b1, wih2, whh2, b2, wih3, whh3, b3, wd, bd)

    # Explicit scoped-VMEM budget: resident inputs/outputs + h slabs + one gx slab.
    def _nbytes(a):
        return int(a.size) * jnp.dtype(a.dtype).itemsize
    in_bytes = sum(_nbytes(a) for a in inputs)
    out_bytes = TB * Op * 4
    h_bytes = TB * 4 * (H1p + H2p + H3p)
    gx_bytes = TB * 4 * 4 * max(H1p, H2p, H3p)
    vmem_limit = int(min(max(2 * (in_bytes + out_bytes + h_bytes + gx_bytes), 32 << 20),
                         96 << 20))

    return pl.pallas_call(
        functools.partial(_music_lstm_kernel, seq_len=seq_len, batch=batch_pad),
        out_shape=jax.ShapeDtypeStruct((TB, Op), jnp.float32),
        grid_spec=pltpu.PrefetchScalarGridSpec(
            num_scalar_prefetch=0,
            grid=(1,),
            in_specs=[_full_spec(a.shape) for a in inputs],
            out_specs=_full_spec((TB, Op)),
            scratch_shapes=[
                pltpu.VMEM((TB, H1p), jnp.float32),   # h1 sequence
                pltpu.VMEM((TB, H2p), jnp.float32),   # h2 sequence
                pltpu.VMEM((TB, H3p), jnp.float32),   # h3 sequence
            ],
        ),
        compiler_params=pltpu.CompilerParams(
            dimension_semantics=("arbitrary",),
            vmem_limit_bytes=vmem_limit),
    )(*inputs)


@functools.partial(jax.jit, static_argnums=(2,))
def music_lstm_forward(x, kparams, out_dim):
    """x: (B, T, input_size) float32 (batch_first, like the PyTorch module)."""
    B, T, D = x.shape
    B_pad = _round_up(B, SUBLANE)
    xt = jnp.transpose(x, (1, 0, 2))                          # time-major (T, B, D)
    xt = jnp.pad(xt, ((0, 0), (0, B_pad - B), (0, 0)))        # sublane-aligned batch
    x2d = xt.reshape(T * B_pad, D)
    y2d = _music_lstm_pallas(x2d, T, B_pad, kparams)          # (T*B_pad, Op)
    y = y2d.reshape(T, B_pad, -1)[:, :B, :out_dim]            # drop pads
    return jnp.transpose(y, (1, 0, 2))                        # back to (B, T, O)


# ----------------------------- parameters ------------------------------------

def init_params(key, input_size, hidden_size):
    """PyTorch-layout params: uniform(-1/sqrt(H), 1/sqrt(H)), gate rows [i,f,g,o]."""
    h2 = hidden_size // 2

    def lstm_params(k, in_dim, hid):
        bound = 1.0 / jnp.sqrt(hid)
        k1, k2, k3, k4 = jax.random.split(k, 4)
        w_ih = jax.random.uniform(k1, (4 * hid, in_dim), jnp.float32, -bound, bound)
        w_hh = jax.random.uniform(k2, (4 * hid, hid), jnp.float32, -bound, bound)
        b_ih = jax.random.uniform(k3, (4 * hid,), jnp.float32, -bound, bound)
        b_hh = jax.random.uniform(k4, (4 * hid,), jnp.float32, -bound, bound)
        return (w_ih, w_hh, b_ih, b_hh)

    k1, k2, k3, k4, k5 = jax.random.split(key, 5)
    bound = 1.0 / jnp.sqrt(h2)
    return {
        "lstm1": lstm_params(k1, input_size, hidden_size),
        "lstm2": lstm_params(k2, hidden_size, h2),
        "lstm3": lstm_params(k3, h2, h2),
        "dense_w": jax.random.uniform(k4, (input_size, h2), jnp.float32, -bound, bound),
        "dense_b": jax.random.uniform(k5, (input_size,), jnp.float32, -bound, bound),
    }


def prepare_params(params):
    """One-time conversion to kernel layout.

    Per layer: gates fused along lanes -> w_ih: (Din_pad, 4*Hp), w_hh: (Hp, 4*Hp),
    bias (b_ih + b_hh): (1, 4*Hp).  Hidden sizes padded to multiples of 128 with zeros
    (exact: padded hidden units stay 0).  Dense head padded to (H3p, 128*k).
    """
    def prep(w_ih, w_hh, b_ih, b_hh, din_pad):
        H4, Din = w_ih.shape
        H = H4 // 4
        Hp = _round_up(H, LANE)
        wih = jnp.transpose(w_ih.reshape(4, H, Din), (0, 2, 1))      # (4, Din, H)
        wih = jnp.pad(wih, ((0, 0), (0, din_pad - Din), (0, Hp - H)))
        wih = jnp.concatenate([wih[g] for g in range(4)], axis=-1)   # (Din_pad, 4Hp)
        whh = jnp.transpose(w_hh.reshape(4, H, H), (0, 2, 1))        # (4, H, H)
        whh = jnp.pad(whh, ((0, 0), (0, Hp - H), (0, Hp - H)))
        whh = jnp.concatenate([whh[g] for g in range(4)], axis=-1)   # (Hp, 4Hp)
        b = jnp.pad((b_ih + b_hh).reshape(4, H), ((0, 0), (0, Hp - H)))
        b = b.reshape(1, 4 * Hp)                                     # (1, 4Hp)
        return (wih, whh, b), Hp

    D = params["lstm1"][0].shape[1]
    l1, H1p = prep(*params["lstm1"], din_pad=D)
    l2, H2p = prep(*params["lstm2"], din_pad=H1p)
    l3, H3p = prep(*params["lstm3"], din_pad=H2p)

    O, H3 = params["dense_w"].shape
    Op = _round_up(O, LANE)
    wd = jnp.pad(jnp.transpose(params["dense_w"]), ((0, H3p - H3), (0, Op - O)))  # (H3p, Op)
    bd = jnp.pad(params["dense_b"], (0, Op - O)).reshape(1, Op)

    return {"lstm1": l1, "lstm2": l2, "lstm3": l3, "dense": (wd, bd)}


# ----------------------------- pure-JAX reference -----------------------------

def _lstm_ref(x_tm, w_ih, w_hh, b_ih, b_hh):
    T, B, _ = x_tm.shape
    H = w_hh.shape[1]

    def step(carry, x_t):
        h, c = carry
        gates = x_t @ w_ih.T + h @ w_hh.T + b_ih + b_hh
        i, f, g, o = jnp.split(gates, 4, axis=-1)
        c = jax.nn.sigmoid(f) * c + jax.nn.sigmoid(i) * jnp.tanh(g)
        h = jax.nn.sigmoid(o) * jnp.tanh(c)
        return (h, c), h

    init = (jnp.zeros((B, H), jnp.float32), jnp.zeros((B, H), jnp.float32))
    _, hs = jax.lax.scan(step, init, x_tm)
    return hs


def music_lstm_ref(x, params):
    xt = jnp.transpose(x, (1, 0, 2))
    h1 = _lstm_ref(xt, *params["lstm1"])
    h2 = _lstm_ref(h1, *params["lstm2"])
    h3 = _lstm_ref(h2, *params["lstm3"])
    y = jax.nn.sigmoid(h3 @ params["dense_w"].T + params["dense_b"])
    return jnp.transpose(y, (1, 0, 2))


# ----------------------------------- main -------------------------------------

if __name__ == "__main__":
    INPUT_SIZE = 16
    HIDDEN = 32
    B, T = 2, 8

    key = jax.random.PRNGKey(0)
    kx, kp = jax.random.split(key)
    x = jax.random.normal(kx, (B, T, INPUT_SIZE), jnp.float32)
    params = init_params(kp, INPUT_SIZE, HIDDEN)
    kparams = prepare_params(params)

    out = jax.block_until_ready(music_lstm_forward(x, kparams, INPUT_SIZE))
    assert out.shape == (B, T, INPUT_SIZE), out.shape
    assert bool(jnp.all(jnp.isfinite(out)))
    assert bool(jnp.all((out >= 0.0) & (out <= 1.0)))       # sigmoid range

    ref = jax.block_until_ready(music_lstm_ref(x, params))
    max_err = float(jnp.max(jnp.abs(out - ref)))
    assert max_err < 5e-3, max_err                          # f32 path, MXU accumulation slack

    print("KERNEL_OK")
</pallas_src>

<mosaic_0001>
module attributes {stable_mosaic.version = 11 : i64} {
  func.func @_music_lstm_kernel(%arg0: i32, %arg1: memref<64x16xf32, #tpu.memory_space<vmem>>, %arg2: memref<16x512xf32, #tpu.memory_space<vmem>>, %arg3: memref<128x512xf32, #tpu.memory_space<vmem>>, %arg4: memref<1x512xf32, #tpu.memory_space<vmem>>, %arg5: memref<128x512xf32, #tpu.memory_space<vmem>>, %arg6: memref<128x512xf32, #tpu.memory_space<vmem>>, %arg7: memref<1x512xf32, #tpu.memory_space<vmem>>, %arg8: memref<128x512xf32, #tpu.memory_space<vmem>>, %arg9: memref<128x512xf32, #tpu.memory_space<vmem>>, %arg10: memref<1x512xf32, #tpu.memory_space<vmem>>, %arg11: memref<128x128xf32, #tpu.memory_space<vmem>>, %arg12: memref<1x128xf32, #tpu.memory_space<vmem>>, %arg13: memref<64x128xf32, #tpu.memory_space<vmem>>, %arg14: memref<64x128xf32, #tpu.memory_space<vmem>>, %arg15: memref<64x128xf32, #tpu.memory_space<vmem>>, %arg16: memref<64x128xf32, #tpu.memory_space<vmem>>) attributes {dimension_semantics = [#tpu.dimension_semantics<arbitrary>], iteration_bounds = array<i64: 1>, scalar_prefetch = 0 : i64, scratch_operands = 3 : i64, tpu.core_type = #tpu.core_type<tc>, window_params = [{pipeline_mode = #tpu.pipeline_mode<synchronous>, transform_indices = @transform_0, window_bounds = array<i64: 64, 16>}, {pipeline_mode = #tpu.pipeline_mode<synchronous>, transform_indices = @transform_1, window_bounds = array<i64: 16, 512>}, {pipeline_mode = #tpu.pipeline_mode<synchronous>, transform_indices = @transform_2, window_bounds = array<i64: 128, 512>}, {pipeline_mode = #tpu.pipeline_mode<synchronous>, transform_indices = @transform_3, window_bounds = array<i64: 1, 512>}, {pipeline_mode = #tpu.pipeline_mode<synchronous>, transform_indices = @transform_4, window_bounds = array<i64: 128, 512>}, {pipeline_mode = #tpu.pipeline_mode<synchronous>, transform_indices = @transform_5, window_bounds = array<i64: 128, 512>}, {pipeline_mode = #tpu.pipeline_mode<synchronous>, transform_indices = @transform_6, window_bounds = array<i64: 1, 512>}, {pipeline_mode = #tpu.pipeline_mode<synchronous>, transform_indices = @transform_7, window_bounds = array<i64: 128, 512>}, {pipeline_mode = #tpu.pipeline_mode<synchronous>, transform_indices = @transform_8, window_bounds = array<i64: 128, 512>}, {pipeline_mode = #tpu.pipeline_mode<synchronous>, transform_indices = @transform_9, window_bounds = array<i64: 1, 512>}, {pipeline_mode = #tpu.pipeline_mode<synchronous>, transform_indices = @transform_10, window_bounds = array<i64: 128, 128>}, {pipeline_mode = #tpu.pipeline_mode<synchronous>, transform_indices = @transform_11, window_bounds = array<i64: 1, 128>}, {pipeline_mode = #tpu.pipeline_mode<synchronous>, transform_indices = @transform_12, window_bounds = array<i64: 64, 128>}]} {
    %c0 = arith.constant 0 : index
    %c0_0 = arith.constant 0 : index
    %0 = vector.load %arg1[%c0, %c0_0] : memref<64x16xf32, #tpu.memory_space<vmem>>, vector<64x16xf32>
    %1 = tpu.iota {dimensions = array<i32: 1>} : vector<8x512xi32>
    %c256_i32 = arith.constant 256 : i32
    %2 = vector.broadcast %c256_i32 : i32 to vector<8x512xi32>
    %3 = arith.cmpi sge, %1, %2 : vector<8x512xi32>
    %c384_i32 = arith.constant 384 : i32
    %4 = vector.broadcast %c384_i32 : i32 to vector<8x512xi32>
    %5 = arith.cmpi slt, %1, %4 : vector<8x512xi32>
    %6 = arith.andi %3, %5 : vector<8x512xi1>
    "tpu.region"() ({
      %alloca = memref.alloca() : memref<64x512xf32, #tpu.memory_space<vmem>>
      %c0_18 = arith.constant 0 : index
      %c0_19 = arith.constant 0 : index
      %33 = vector.load %arg2[%c0_18, %c0_19] : memref<16x512xf32, #tpu.memory_space<vmem>>, vector<16x512xf32>
      %cst_20 = arith.constant dense<0.000000e+00> : vector<64x512xf32>
      %34 = tpu.matmul %0, %33, %cst_20 {dimension_numbers = #tpu.dot_dimension_numbers<[1], [0], [0], [1], [0, 0, 1, 1], [], []>} : vector<64x16xf32>, vector<16x512xf32>, vector<64x512xf32> -> vector<64x512xf32>
      %c0_21 = arith.constant 0 : index
      %c0_22 = arith.constant 0 : index
      %35 = vector.load %arg4[%c0_21, %c0_22] : memref<1x512xf32, #tpu.memory_space<vmem>>, vector<1x512xf32>
      %36 = vector.broadcast %35 : vector<1x512xf32> to vector<64x512xf32>
      %37 = arith.addf %34, %36 : vector<64x512xf32>
      %c0_23 = arith.constant 0 : index
      %c0_24 = arith.constant 0 : index
      %38 = vector.load %alloca[%c0_23, %c0_24] : memref<64x512xf32, #tpu.memory_space<vmem>>, vector<64x512xf32>
      tpu.vector_store %alloca[%c0_23, %c0_24], %37 {strides = array<i32>} : memref<64x512xf32, #tpu.memory_space<vmem>>, vector<64x512xf32>,
      %cst_25 = arith.constant 0.000000e+00 : f32
      %39 = vector.broadcast %cst_25 : f32 to vector<8x128xf32>
      %c0_i32 = arith.constant 0 : i32
      %c8_i32 = arith.constant 8 : i32
      %40 = arith.muli %c0_i32, %c8_i32 : i32
      %41 = tpu.assume_multiple %40, 8 : i32
      %42 = arith.index_cast %41 : i32 to index
      %c0_26 = arith.constant 0 : index
      %43 = vector.load %alloca[%42, %c0_26] : memref<64x512xf32, #tpu.memory_space<vmem>>, vector<8x512xf32>
      %c0_27 = arith.constant 0 : index
      %c0_28 = arith.constant 0 : index
      %44 = vector.load %arg3[%c0_27, %c0_28] : memref<128x512xf32, #tpu.memory_space<vmem>>, vector<128x512xf32>
      %cst_29 = arith.constant dense<0.000000e+00> : vector<8x512xf32>
      %45 = tpu.matmul %39, %44, %cst_29 {dimension_numbers = #tpu.dot_dimension_numbers<[1], [0], [0], [1], [0, 0, 1, 1], [], []>} : vector<8x128xf32>, vector<128x512xf32>, vector<8x512xf32> -> vector<8x512xf32>
      %46 = arith.addf %43, %45 : vector<8x512xf32>
      %47 = math.tanh %46 : vector<8x512xf32>
      %48 = arith.negf %46 : vector<8x512xf32>
      %49 = math.exp %48 : vector<8x512xf32>
      %cst_30 = arith.constant 1.000000e+00 : f32
      %50 = vector.broadcast %cst_30 : f32 to vector<8x512xf32>
      %51 = arith.addf %50, %49 : vector<8x512xf32>
      %52 = arith.divf %50, %51 : vector<8x512xf32>
      %53 = arith.select %6, %47, %52 : vector<8x512xi1>, vector<8x512xf32>
      %54 = vector.extract_strided_slice %53 {offsets = [0, 0], sizes = [8, 128], strides = [1, 1]} : vector<8x512xf32> to vector<8x128xf32>
      %55 = vector.extract_strided_slice %53 {offsets = [0, 128], sizes = [8, 128], strides = [1, 1]} : vector<8x512xf32> to vector<8x128xf32>
      %56 = vector.extract_strided_slice %53 {offsets = [0, 256], sizes = [8, 128], strides = [1, 1]} : vector<8x512xf32> to vector<8x128xf32>
      %57 = vector.extract_strided_slice %53 {offsets = [0, 384], sizes = [8, 128], strides = [1, 1]} : vector<8x512xf32> to vector<8x128xf32>
      %58 = arith.mulf %55, %39 : vector<8x128xf32>
      %59 = arith.mulf %54, %56 : vector<8x128xf32>
      %60 = arith.addf %58, %59 : vector<8x128xf32>
      %61 = math.tanh %60 : vector<8x128xf32>
      %62 = arith.mulf %57, %61 : vector<8x128xf32>
      %63 = arith.index_cast %41 : i32 to index
      %c0_31 = arith.constant 0 : index
      %64 = vector.load %arg14[%63, %c0_31] : memref<64x128xf32, #tpu.memory_space<vmem>>, vector<8x128xf32>
      tpu.vector_store %arg14[%63, %c0_31], %62 {strides = array<i32>} : memref<64x128xf32, #tpu.memory_space<vmem>>, vector<8x128xf32>,
      %c1_i32 = arith.constant 1 : i32
      %c8_i32_32 = arith.constant 8 : i32
      %65 = arith.muli %c1_i32, %c8_i32_32 : i32
      %66 = tpu.assume_multiple %65, 8 : i32
      %67 = arith.index_cast %66 : i32 to index
      %c0_33 = arith.constant 0 : index
      %68 = vector.load %alloca[%67, %c0_33] : memref<64x512xf32, #tpu.memory_space<vmem>>, vector<8x512xf32>
      %c0_34 = arith.constant 0 : index
      %c0_35 = arith.constant 0 : index
      %69 = vector.load %arg3[%c0_34, %c0_35] : memref<128x512xf32, #tpu.memory_space<vmem>>, vector<128x512xf32>
      %cst_36 = arith.constant dense<0.000000e+00> : vector<8x512xf32>
      %70 = tpu.matmul %62, %69, %cst_36 {dimension_numbers = #tpu.dot_dimension_numbers<[1], [0], [0], [1], [0, 0, 1, 1], [], []>} : vector<8x128xf32>, vector<128x512xf32>, vector<8x512xf32> -> vector<8x512xf32>
      %71 = arith.addf %68, %70 : vector<8x512xf32>
      %72 = math.tanh %71 : vector<8x512xf32>
      %73 = arith.negf %71 : vector<8x512xf32>
      %74 = math.exp %73 : vector<8x512xf32>
      %cst_37 = arith.constant 1.000000e+00 : f32
      %75 = vector.broadcast %cst_37 : f32 to vector<8x512xf32>
      %76 = arith.addf %75, %74 : vector<8x512xf32>
      %77 = arith.divf %75, %76 : vector<8x512xf32>
      %78 = arith.select %6, %72, %77 : vector<8x512xi1>, vector<8x512xf32>
      %79 = vector.extract_strided_slice %78 {offsets = [0, 0], sizes = [8, 128], strides = [1, 1]} : vector<8x512xf32> to vector<8x128xf32>
      %80 = vector.extract_strided_slice %78 {offsets = [0, 128], sizes = [8, 128], strides = [1, 1]} : vector<8x512xf32> to vector<8x128xf32>
      %81 = vector.extract_strided_slice %78 {offsets = [0, 256], sizes = [8, 128], strides = [1, 1]} : vector<8x512xf32> to vector<8x128xf32>
      %82 = vector.extract_strided_slice %78 {offsets = [0, 384], sizes = [8, 128], strides = [1, 1]} : vector<8x512xf32> to vector<8x128xf32>
      %83 = arith.mulf %80, %60 : vector<8x128xf32>
      %84 = arith.mulf %79, %81 : vector<8x128xf32>
      %85 = arith.addf %83, %84 : vector<8x128xf32>
      %86 = math.tanh %85 : vector<8x128xf32>
      %87 = arith.mulf %82, %86 : vector<8x128xf32>
      %88 = arith.index_cast %66 : i32 to index
      %c0_38 = arith.constant 0 : index
      %89 = vector.load %arg14[%88, %c0_38] : memref<64x128xf32, #tpu.memory_space<vmem>>, vector<8x128xf32>
      tpu.vector_store %arg14[%88, %c0_38], %87 {strides = array<i32>} : memref<64x128xf32, #tpu.memory_space<vmem>>, vector<8x128xf32>,
      %c2_i32 = arith.constant 2 : i32
      %c8_i32_39 = arith.constant 8 : i32
      %90 = arith.muli %c2_i32, %c8_i32_39 : i32
      %91 = tpu.assume_multiple %90, 8 : i32
      %92 = arith.index_cast %91 : i32 to index
      %c0_40 = arith.constant 0 : index
      %93 = vector.load %alloca[%92, %c0_40] : memref<64x512xf32, #tpu.memory_space<vmem>>, vector<8x512xf32>
      %c0_41 = arith.constant 0 : index
      %c0_42 = arith.constant 0 : index
      %94 = vector.load %arg3[%c0_41, %c0_42] : memref<128x512xf32, #tpu.memory_space<vmem>>, vector<128x512xf32>
      %cst_43 = arith.constant dense<0.000000e+00> : vector<8x512xf32>
      %95 = tpu.matmul %87, %94, %cst_43 {dimension_numbers = #tpu.dot_dimension_numbers<[1], [0], [0], [1], [0, 0, 1, 1], [], []>} : vector<8x128xf32>, vector<128x512xf32>, vector<8x512xf32> -> vector<8x512xf32>
      %96 = arith.addf %93, %95 : vector<8x512xf32>
      %97 = math.tanh %96 : vector<8x512xf32>
      %98 = arith.negf %96 : vector<8x512xf32>
      %99 = math.exp %98 : vector<8x512xf32>
      %cst_44 = arith.constant 1.000000e+00 : f32
      %100 = vector.broadcast %cst_44 : f32 to vector<8x512xf32>
      %101 = arith.addf %100, %99 : vector<8x512xf32>
      %102 = arith.divf %100, %101 : vector<8x512xf32>
      %103 = arith.select %6, %97, %102 : vector<8x512xi1>, vector<8x512xf32>
      %104 = vector.extract_strided_slice %103 {offsets = [0, 0], sizes = [8, 128], strides = [1, 1]} : vector<8x512xf32> to vector<8x128xf32>
      %105 = vector.extract_strided_slice %103 {offsets = [0, 128], sizes = [8, 128], strides = [1, 1]} : vector<8x512xf32> to vector<8x128xf32>
      %106 = vector.extract_strided_slice %103 {offsets = [0, 256], sizes = [8, 128], strides = [1, 1]} : vector<8x512xf32> to vector<8x128xf32>
      %107 = vector.extract_strided_slice %103 {offsets = [0, 384], sizes = [8, 128], strides = [1, 1]} : vector<8x512xf32> to vector<8x128xf32>
      %108 = arith.mulf %105, %85 : vector<8x128xf32>
      %109 = arith.mulf %104, %106 : vector<8x128xf32>
      %110 = arith.addf %108, %109 : vector<8x128xf32>
      %111 = math.tanh %110 : vector<8x128xf32>
      %112 = arith.mulf %107, %111 : vector<8x128xf32>
      %113 = arith.index_cast %91 : i32 to index
      %c0_45 = arith.constant 0 : index
      %114 = vector.load %arg14[%113, %c0_45] : memref<64x128xf32, #tpu.memory_space<vmem>>, vector<8x128xf32>
      tpu.vector_store %arg14[%113, %c0_45], %112 {strides = array<i32>} : memref<64x128xf32, #tpu.memory_space<vmem>>, vector<8x128xf32>,
      %c3_i32 = arith.constant 3 : i32
      %c8_i32_46 = arith.constant 8 : i32
      %115 = arith.muli %c3_i32, %c8_i32_46 : i32
      %116 = tpu.assume_multiple %115, 8 : i32
      %117 = arith.index_cast %116 : i32 to index
      %c0_47 = arith.constant 0 : index
      %118 = vector.load %alloca[%117, %c0_47] : memref<64x512xf32, #tpu.memory_space<vmem>>, vector<8x512xf32>
      %c0_48 = arith.constant 0 : index
      %c0_49 = arith.constant 0 : index
      %119 = vector.load %arg3[%c0_48, %c0_49] : memref<128x512xf32, #tpu.memory_space<vmem>>, vector<128x512xf32>
      %cst_50 = arith.constant dense<0.000000e+00> : vector<8x512xf32>
      %120 = tpu.matmul %112, %119, %cst_50 {dimension_numbers = #tpu.dot_dimension_numbers<[1], [0], [0], [1], [0, 0, 1, 1], [], []>} : vector<8x128xf32>, vector<128x512xf32>, vector<8x512xf32> -> vector<8x512xf32>
      %121 = arith.addf %118, %120 : vector<8x512xf32>
      %122 = math.tanh %121 : vector<8x512xf32>
      %123 = arith.negf %121 : vector<8x512xf32>
      %124 = math.exp %123 : vector<8x512xf32>
      %cst_51 = arith.constant 1.000000e+00 : f32
      %125 = vector.broadcast %cst_51 : f32 to vector<8x512xf32>
      %126 = arith.addf %125, %124 : vector<8x512xf32>
      %127 = arith.divf %125, %126 : vector<8x512xf32>
      %128 = arith.select %6, %122, %127 : vector<8x512xi1>, vector<8x512xf32>
      %129 = vector.extract_strided_slice %128 {offsets = [0, 0], sizes = [8, 128], strides = [1, 1]} : vector<8x512xf32> to vector<8x128xf32>
      %130 = vector.extract_strided_slice %128 {offsets = [0, 128], sizes = [8, 128], strides = [1, 1]} : vector<8x512xf32> to vector<8x128xf32>
      %131 = vector.extract_strided_slice %128 {offsets = [0, 256], sizes = [8, 128], strides = [1, 1]} : vector<8x512xf32> to vector<8x128xf32>
      %132 = vector.extract_strided_slice %128 {offsets = [0, 384], sizes = [8, 128], strides = [1, 1]} : vector<8x512xf32> to vector<8x128xf32>
      %133 = arith.mulf %130, %110 : vector<8x128xf32>
      %134 = arith.mulf %129, %131 : vector<8x128xf32>
      %135 = arith.addf %133, %134 : vector<8x128xf32>
      %136 = math.tanh %135 : vector<8x128xf32>
      %137 = arith.mulf %132, %136 : vector<8x128xf32>
      %138 = arith.index_cast %116 : i32 to index
      %c0_52 = arith.constant 0 : index
      %139 = vector.load %arg14[%138, %c0_52] : memref<64x128xf32, #tpu.memory_space<vmem>>, vector<8x128xf32>
      tpu.vector_store %arg14[%138, %c0_52], %137 {strides = array<i32>} : memref<64x128xf32, #tpu.memory_space<vmem>>, vector<8x128xf32>,
      %c4_i32 = arith.constant 4 : i32
      %c8_i32_53 = arith.constant 8 : i32
      %140 = arith.muli %c4_i32, %c8_i32_53 : i32
      %141 = tpu.assume_multiple %140, 8 : i32
      %142 = arith.index_cast %141 : i32 to index
      %c0_54 = arith.constant 0 : index
      %143 = vector.load %alloca[%142, %c0_54] : memref<64x512xf32, #tpu.memory_space<vmem>>, vector<8x512xf32>
      %c0_55 = arith.constant 0 : index
      %c0_56 = arith.constant 0 : index
      %144 = vector.load %arg3[%c0_55, %c0_56] : memref<128x512xf32, #tpu.memory_space<vmem>>, vector<128x512xf32>
      %cst_57 = arith.constant dense<0.000000e+00> : vector<8x512xf32>
      %145 = tpu.matmul %137, %144, %cst_57 {dimension_numbers = #tpu.dot_dimension_numbers<[1], [0], [0], [1], [0, 0, 1, 1], [], []>} : vector<8x128xf32>, vector<128x512xf32>, vector<8x512xf32> -> vector<8x512xf32>
      %146 = arith.addf %143, %145 : vector<8x512xf32>
      %147 = math.tanh %146 : vector<8x512xf32>
      %148 = arith.negf %146 : vector<8x512xf32>
      %149 = math.exp %148 : vector<8x512xf32>
      %cst_58 = arith.constant 1.000000e+00 : f32
      %150 = vector.broadcast %cst_58 : f32 to vector<8x512xf32>
      %151 = arith.addf %150, %149 : vector<8x512xf32>
      %152 = arith.divf %150, %151 : vector<8x512xf32>
      %153 = arith.select %6, %147, %152 : vector<8x512xi1>, vector<8x512xf32>
      %154 = vector.extract_strided_slice %153 {offsets = [0, 0], sizes = [8, 128], strides = [1, 1]} : vector<8x512xf32> to vector<8x128xf32>
      %155 = vector.extract_strided_slice %153 {offsets = [0, 128], sizes = [8, 128], strides = [1, 1]} : vector<8x512xf32> to vector<8x128xf32>
      %156 = vector.extract_strided_slice %153 {offsets = [0, 256], sizes = [8, 128], strides = [1, 1]} : vector<8x512xf32> to vector<8x128xf32>
      %157 = vector.extract_strided_slice %153 {offsets = [0, 384], sizes = [8, 128], strides = [1, 1]} : vector<8x512xf32> to vector<8x128xf32>
      %158 = arith.mulf %155, %135 : vector<8x128xf32>
      %159 = arith.mulf %154, %156 : vector<8x128xf32>
      %160 = arith.addf %158, %159 : vector<8x128xf32>
      %161 = math.tanh %160 : vector<8x128xf32>
      %162 = arith.mulf %157, %161 : vector<8x128xf32>
      %163 = arith.index_cast %141 : i32 to index
      %c0_59 = arith.constant 0 : index
      %164 = vector.load %arg14[%163, %c0_59] : memref<64x128xf32, #tpu.memory_space<vmem>>, vector<8x128xf32>
      tpu.vector_store %arg14[%163, %c0_59], %162 {strides = array<i32>} : memref<64x128xf32, #tpu.memory_space<vmem>>, vector<8x128xf32>,
      %c5_i32 = arith.constant 5 : i32
      %c8_i32_60 = arith.constant 8 : i32
      %165 = arith.muli %c5_i32, %c8_i32_60 : i32
      %166 = tpu.assume_multiple %165, 8 : i32
      %167 = arith.index_cast %166 : i32 to index
      %c0_61 = arith.constant 0 : index
      %168 = vector.load %alloca[%167, %c0_61] : memref<64x512xf32, #tpu.memory_space<vmem>>, vector<8x512xf32>
      %c0_62 = arith.constant 0 : index
      %c0_63 = arith.constant 0 : index
      %169 = vector.load %arg3[%c0_62, %c0_63] : memref<128x512xf32, #tpu.memory_space<vmem>>, vector<128x512xf32>
      %cst_64 = arith.constant dense<0.000000e+00> : vector<8x512xf32>
      %170 = tpu.matmul %162, %169, %cst_64 {dimension_numbers = #tpu.dot_dimension_numbers<[1], [0], [0], [1], [0, 0, 1, 1], [], []>} : vector<8x128xf32>, vector<128x512xf32>, vector<8x512xf32> -> vector<8x512xf32>
      %171 = arith.addf %168, %170 : vector<8x512xf32>
      %172 = math.tanh %171 : vector<8x512xf32>
      %173 = arith.negf %171 : vector<8x512xf32>
      %174 = math.exp %173 : vector<8x512xf32>
      %cst_65 = arith.constant 1.000000e+00 : f32
      %175 = vector.broadcast %cst_65 : f32 to vector<8x512xf32>
      %176 = arith.addf %175, %174 : vector<8x512xf32>
      %177 = arith.divf %175, %176 : vector<8x512xf32>
      %178 = arith.select %6, %172, %177 : vector<8x512xi1>, vector<8x512xf32>
      %179 = vector.extract_strided_slice %178 {offsets = [0, 0], sizes = [8, 128], strides = [1, 1]} : vector<8x512xf32> to vector<8x128xf32>
      %180 = vector.extract_strided_slice %178 {offsets = [0, 128], sizes = [8, 128], strides = [1, 1]} : vector<8x512xf32> to vector<8x128xf32>
      %181 = vector.extract_strided_slice %178 {offsets = [0, 256], sizes = [8, 128], strides = [1, 1]} : vector<8x512xf32> to vector<8x128xf32>
      %182 = vector.extract_strided_slice %178 {offsets = [0, 384], sizes = [8, 128], strides = [1, 1]} : vector<8x512xf32> to vector<8x128xf32>
      %183 = arith.mulf %180, %160 : vector<8x128xf32>
      %184 = arith.mulf %179, %181 : vector<8x128xf32>
      %185 = arith.addf %183, %184 : vector<8x128xf32>
      %186 = math.tanh %185 : vector<8x128xf32>
      %187 = arith.mulf %182, %186 : vector<8x128xf32>
      %188 = arith.index_cast %166 : i32 to index
      %c0_66 = arith.constant 0 : index
      %189 = vector.load %arg14[%188, %c0_66] : memref<64x128xf32, #tpu.memory_space<vmem>>, vector<8x128xf32>
      tpu.vector_store %arg14[%188, %c0_66], %187 {strides = array<i32>} : memref<64x128xf32, #tpu.memory_space<vmem>>, vector<8x128xf32>,
      %c6_i32 = arith.constant 6 : i32
      %c8_i32_67 = arith.constant 8 : i32
      %190 = arith.muli %c6_i32, %c8_i32_67 : i32
      %191 = tpu.assume_multiple %190, 8 : i32
      %192 = arith.index_cast %191 : i32 to index
      %c0_68 = arith.constant 0 : index
      %193 = vector.load %alloca[%192, %c0_68] : memref<64x512xf32, #tpu.memory_space<vmem>>, vector<8x512xf32>
      %c0_69 = arith.constant 0 : index
      %c0_70 = arith.constant 0 : index
      %194 = vector.load %arg3[%c0_69, %c0_70] : memref<128x512xf32, #tpu.memory_space<vmem>>, vector<128x512xf32>
      %cst_71 = arith.constant dense<0.000000e+00> : vector<8x512xf32>
      %195 = tpu.matmul %187, %194, %cst_71 {dimension_numbers = #tpu.dot_dimension_numbers<[1], [0], [0], [1], [0, 0, 1, 1], [], []>} : vector<8x128xf32>, vector<128x512xf32>, vector<8x512xf32> -> vector<8x512xf32>
      %196 = arith.addf %193, %195 : vector<8x512xf32>
      %197 = math.tanh %196 : vector<8x512xf32>
      %198 = arith.negf %196 : vector<8x512xf32>
      %199 = math.exp %198 : vector<8x512xf32>
      %cst_72 = arith.constant 1.000000e+00 : f32
      %200 = vector.broadcast %cst_72 : f32 to vector<8x512xf32>
      %201 = arith.addf %200, %199 : vector<8x512xf32>
      %202 = arith.divf %200, %201 : vector<8x512xf32>
      %203 = arith.select %6, %197, %202 : vector<8x512xi1>, vector<8x512xf32>
      %204 = vector.extract_strided_slice %203 {offsets = [0, 0], sizes = [8, 128], strides = [1, 1]} : vector<8x512xf32> to vector<8x128xf32>
      %205 = vector.extract_strided_slice %203 {offsets = [0, 128], sizes = [8, 128], strides = [1, 1]} : vector<8x512xf32> to vector<8x128xf32>
      %206 = vector.extract_strided_slice %203 {offsets = [0, 256], sizes = [8, 128], strides = [1, 1]} : vector<8x512xf32> to vector<8x128xf32>
      %207 = vector.extract_strided_slice %203 {offsets = [0, 384], sizes = [8, 128], strides = [1, 1]} : vector<8x512xf32> to vector<8x128xf32>
      %208 = arith.mulf %205, %185 : vector<8x128xf32>
      %209 = arith.mulf %204, %206 : vector<8x128xf32>
      %210 = arith.addf %208, %209 : vector<8x128xf32>
      %211 = math.tanh %210 : vector<8x128xf32>
      %212 = arith.mulf %207, %211 : vector<8x128xf32>
      %213 = arith.index_cast %191 : i32 to index
      %c0_73 = arith.constant 0 : index
      %214 = vector.load %arg14[%213, %c0_73] : memref<64x128xf32, #tpu.memory_space<vmem>>, vector<8x128xf32>
      tpu.vector_store %arg14[%213, %c0_73], %212 {strides = array<i32>} : memref<64x128xf32, #tpu.memory_space<vmem>>, vector<8x128xf32>,
      %c7_i32 = arith.constant 7 : i32
      %c8_i32_74 = arith.constant 8 : i32
      %215 = arith.muli %c7_i32, %c8_i32_74 : i32
      %216 = tpu.assume_multiple %215, 8 : i32
      %217 = arith.index_cast %216 : i32 to index
      %c0_75 = arith.constant 0 : index
      %218 = vector.load %alloca[%217, %c0_75] : memref<64x512xf32, #tpu.memory_space<vmem>>, vector<8x512xf32>
      %c0_76 = arith.constant 0 : index
      %c0_77 = arith.constant 0 : index
      %219 = vector.load %arg3[%c0_76, %c0_77] : memref<128x512xf32, #tpu.memory_space<vmem>>, vector<128x512xf32>
      %cst_78 = arith.constant dense<0.000000e+00> : vector<8x512xf32>
      %220 = tpu.matmul %212, %219, %cst_78 {dimension_numbers = #tpu.dot_dimension_numbers<[1], [0], [0], [1], [0, 0, 1, 1], [], []>} : vector<8x128xf32>, vector<128x512xf32>, vector<8x512xf32> -> vector<8x512xf32>
      %221 = arith.addf %218, %220 : vector<8x512xf32>
      %222 = math.tanh %221 : vector<8x512xf32>
      %223 = arith.negf %221 : vector<8x512xf32>
      %224 = math.exp %223 : vector<8x512xf32>
      %cst_79 = arith.constant 1.000000e+00 : f32
      %225 = vector.broadcast %cst_79 : f32 to vector<8x512xf32>
      %226 = arith.addf %225, %224 : vector<8x512xf32>
      %227 = arith.divf %225, %226 : vector<8x512xf32>
      %228 = arith.select %6, %222, %227 : vector<8x512xi1>, vector<8x512xf32>
      %229 = vector.extract_strided_slice %228 {offsets = [0, 0], sizes = [8, 128], strides = [1, 1]} : vector<8x512xf32> to vector<8x128xf32>
      %230 = vector.extract_strided_slice %228 {offsets = [0, 128], sizes = [8, 128], strides = [1, 1]} : vector<8x512xf32> to vector<8x128xf32>
      %231 = vector.extract_strided_slice %228 {offsets = [0, 256], sizes = [8, 128], strides = [1, 1]} : vector<8x512xf32> to vector<8x128xf32>
      %232 = vector.extract_strided_slice %228 {offsets = [0, 384], sizes = [8, 128], strides = [1, 1]} : vector<8x512xf32> to vector<8x128xf32>
      %233 = arith.mulf %230, %210 : vector<8x128xf32>
      %234 = arith.mulf %229, %231 : vector<8x128xf32>
      %235 = arith.addf %233, %234 : vector<8x128xf32>
      %236 = math.tanh %235 : vector<8x128xf32>
      %237 = arith.mulf %232, %236 : vector<8x128xf32>
      %238 = arith.index_cast %216 : i32 to index
      %c0_80 = arith.constant 0 : index
      %239 = vector.load %arg14[%238, %c0_80] : memref<64x128xf32, #tpu.memory_space<vmem>>, vector<8x128xf32>
      tpu.vector_store %arg14[%238, %c0_80], %237 {strides = array<i32>} : memref<64x128xf32, #tpu.memory_space<vmem>>, vector<8x128xf32>,
      %c8_i32_81 = arith.constant 8 : i32
      tpu.yield
    }) : () -> ()
    %c0_1 = arith.constant 0 : index
    %c0_2 = arith.constant 0 : index
    %7 = vector.load %arg14[%c0_1, %c0_2] : memref<64x128xf32, #tpu.memory_space<vmem>>, vector<64x128xf32>
    %8 = tpu.iota {dimensions = array<i32: 1>} : vector<8x512xi32>
    %c256_i32_3 = arith.constant 256 : i32
    %9 = vector.broadcast %c256_i32_3 : i32 to vector<8x512xi32>
    %10 = arith.cmpi sge, %8, %9 : vector<8x512xi32>
    %c384_i32_4 = arith.constant 384 : i32
    %11 = vector.broadcast %c384_i32_4 : i32 to vector<8x512xi32>
    %12 = arith.cmpi slt, %8, %11 : vector<8x512xi32>
    %13 = arith.andi %10, %12 : vector<8x512xi1>
    "tpu.region"() ({
      %alloca = memref.alloca() : memref<64x512xf32, #tpu.memory_space<vmem>>
      %c0_18 = arith.constant 0 : index
      %c0_19 = arith.constant 0 : index
      %33 = vector.load %arg5[%c0_18, %c0_19] : memref<128x512xf32, #tpu.memory_space<vmem>>, vector<128x512xf32>
      %cst_20 = arith.constant dense<0.000000e+00> : vector<64x512xf32>
      %34 = tpu.matmul %7, %33, %cst_20 {dimension_numbers = #tpu.dot_dimension_numbers<[1], [0], [0], [1], [0, 0, 1, 1], [], []>} : vector<64x128xf32>, vector<128x512xf32>, vector<64x512xf32> -> vector<64x512xf32>
      %c0_21 = arith.constant 0 : index
      %c0_22 = arith.constant 0 : index
      %35 = vector.load %arg7[%c0_21, %c0_22] : memref<1x512xf32, #tpu.memory_space<vmem>>, vector<1x512xf32>
      %36 = vector.broadcast %35 : vector<1x512xf32> to vector<64x512xf32>
      %37 = arith.addf %34, %36 : vector<64x512xf32>
      %c0_23 = arith.constant 0 : index
      %c0_24 = arith.constant 0 : index
      %38 = vector.load %alloca[%c0_23, %c0_24] : memref<64x512xf32, #tpu.memory_space<vmem>>, vector<64x512xf32>
      tpu.vector_store %alloca[%c0_23, %c0_24], %37 {strides = array<i32>} : memref<64x512xf32, #tpu.memory_space<vmem>>, vector<64x512xf32>,
      %cst_25 = arith.constant 0.000000e+00 : f32
      %39 = vector.broadcast %cst_25 : f32 to vector<8x128xf32>
      %c0_i32 = arith.constant 0 : i32
      %c8_i32 = arith.constant 8 : i32
      %40 = arith.muli %c0_i32, %c8_i32 : i32
      %41 = tpu.assume_multiple %40, 8 : i32
      %42 = arith.index_cast %41 : i32 to index
      %c0_26 = arith.constant 0 : index
      %43 = vector.load %alloca[%42, %c0_26] : memref<64x512xf32, #tpu.memory_space<vmem>>, vector<8x512xf32>
      %c0_27 = arith.constant 0 : index
      %c0_28 = arith.constant 0 : index
      %44 = vector.load %arg6[%c0_27, %c0_28] : memref<128x512xf32, #tpu.memory_space<vmem>>, vector<128x512xf32>
      %cst_29 = arith.constant dense<0.000000e+00> : vector<8x512xf32>
      %45 = tpu.matmul %39, %44, %cst_29 {dimension_numbers = #tpu.dot_dimension_numbers<[1], [0], [0], [1], [0, 0, 1, 1], [], []>} : vector<8x128xf32>, vector<128x512xf32>, vector<8x512xf32> -> vector<8x512xf32>
      %46 = arith.addf %43, %45 : vector<8x512xf32>
      %47 = math.tanh %46 : vector<8x512xf32>
      %48 = arith.negf %46 : vector<8x512xf32>
      %49 = math.exp %48 : vector<8x512xf32>
      %cst_30 = arith.constant 1.000000e+00 : f32
      %50 = vector.broadcast %cst_30 : f32 to vector<8x512xf32>
      %51 = arith.addf %50, %49 : vector<8x512xf32>
      %52 = arith.divf %50, %51 : vector<8x512xf32>
      %53 = arith.select %13, %47, %52 : vector<8x512xi1>, vector<8x512xf32>
      %54 = vector.extract_strided_slice %53 {offsets = [0, 0], sizes = [8, 128], strides = [1, 1]} : vector<8x512xf32> to vector<8x128xf32>
      %55 = vector.extract_strided_slice %53 {offsets = [0, 128], sizes = [8, 128], strides = [1, 1]} : vector<8x512xf32> to vector<8x128xf32>
      %56 = vector.extract_strided_slice %53 {offsets = [0, 256], sizes = [8, 128], strides = [1, 1]} : vector<8x512xf32> to vector<8x128xf32>
      %57 = vector.extract_strided_slice %53 {offsets = [0, 384], sizes = [8, 128], strides = [1, 1]} : vector<8x512xf32> to vector<8x128xf32>
      %58 = arith.mulf %55, %39 : vector<8x128xf32>
      %59 = arith.mulf %54, %56 : vector<8x128xf32>
      %60 = arith.addf %58, %59 : vector<8x128xf32>
      %61 = math.tanh %60 : vector<8x128xf32>
      %62 = arith.mulf %57, %61 : vector<8x128xf32>
      %63 = arith.index_cast %41 : i32 to index
      %c0_31 = arith.constant 0 : index
      %64 = vector.load %arg15[%63, %c0_31] : memref<64x128xf32, #tpu.memory_space<vmem>>, vector<8x128xf32>
      tpu.vector_store %arg15[%63, %c0_31], %62 {strides = array<i32>} : memref<64x128xf32, #tpu.memory_space<vmem>>, vector<8x128xf32>,
      %c1_i32 = arith.constant 1 : i32
      %c8_i32_32 = arith.constant 8 : i32
      %65 = arith.muli %c1_i32, %c8_i32_32 : i32
      %66 = tpu.assume_multiple %65, 8 : i32
      %67 = arith.index_cast %66 : i32 to index
      %c0_33 = arith.constant 0 : index
      %68 = vector.load %alloca[%67, %c0_33] : memref<64x512xf32, #tpu.memory_space<vmem>>, vector<8x512xf32>
      %c0_34 = arith.constant 0 : index
      %c0_35 = arith.constant 0 : index
      %69 = vector.load %arg6[%c0_34, %c0_35] : memref<128x512xf32, #tpu.memory_space<vmem>>, vector<128x512xf32>
      %cst_36 = arith.constant dense<0.000000e+00> : vector<8x512xf32>
      %70 = tpu.matmul %62, %69, %cst_36 {dimension_numbers = #tpu.dot_dimension_numbers<[1], [0], [0], [1], [0, 0, 1, 1], [], []>} : vector<8x128xf32>, vector<128x512xf32>, vector<8x512xf32> -> vector<8x512xf32>
      %71 = arith.addf %68, %70 : vector<8x512xf32>
      %72 = math.tanh %71 : vector<8x512xf32>
      %73 = arith.negf %71 : vector<8x512xf32>
      %74 = math.exp %73 : vector<8x512xf32>
      %cst_37 = arith.constant 1.000000e+00 : f32
      %75 = vector.broadcast %cst_37 : f32 to vector<8x512xf32>
      %76 = arith.addf %75, %74 : vector<8x512xf32>
      %77 = arith.divf %75, %76 : vector<8x512xf32>
      %78 = arith.select %13, %72, %77 : vector<8x512xi1>, vector<8x512xf32>
      %79 = vector.extract_strided_slice %78 {offsets = [0, 0], sizes = [8, 128], strides = [1, 1]} : vector<8x512xf32> to vector<8x128xf32>
      %80 = vector.extract_strided_slice %78 {offsets = [0, 128], sizes = [8, 128], strides = [1, 1]} : vector<8x512xf32> to vector<8x128xf32>
      %81 = vector.extract_strided_slice %78 {offsets = [0, 256], sizes = [8, 128], strides = [1, 1]} : vector<8x512xf32> to vector<8x128xf32>
      %82 = vector.extract_strided_slice %78 {offsets = [0, 384], sizes = [8, 128], strides = [1, 1]} : vector<8x512xf32> to vector<8x128xf32>
      %83 = arith.mulf %80, %60 : vector<8x128xf32>
      %84 = arith.mulf %79, %81 : vector<8x128xf32>
      %85 = arith.addf %83, %84 : vector<8x128xf32>
      %86 = math.tanh %85 : vector<8x128xf32>
      %87 = arith.mulf %82, %86 : vector<8x128xf32>
      %88 = arith.index_cast %66 : i32 to index
      %c0_38 = arith.constant 0 : index
      %89 = vector.load %arg15[%88, %c0_38] : memref<64x128xf32, #tpu.memory_space<vmem>>, vector<8x128xf32>
      tpu.vector_store %arg15[%88, %c0_38], %87 {strides = array<i32>} : memref<64x128xf32, #tpu.memory_space<vmem>>, vector<8x128xf32>,
      %c2_i32 = arith.constant 2 : i32
      %c8_i32_39 = arith.constant 8 : i32
      %90 = arith.muli %c2_i32, %c8_i32_39 : i32
      %91 = tpu.assume_multiple %90, 8 : i32
      %92 = arith.index_cast %91 : i32 to index
      %c0_40 = arith.constant 0 : index
      %93 = vector.load %alloca[%92, %c0_40] : memref<64x512xf32, #tpu.memory_space<vmem>>, vector<8x512xf32>
      %c0_41 = arith.constant 0 : index
      %c0_42 = arith.constant 0 : index
      %94 = vector.load %arg6[%c0_41, %c0_42] : memref<128x512xf32, #tpu.memory_space<vmem>>, vector<128x512xf32>
      %cst_43 = arith.constant dense<0.000000e+00> : vector<8x512xf32>
      %95 = tpu.matmul %87, %94, %cst_43 {dimension_numbers = #tpu.dot_dimension_numbers<[1], [0], [0], [1], [0, 0, 1, 1], [], []>} : vector<8x128xf32>, vector<128x512xf32>, vector<8x512xf32> -> vector<8x512xf32>
      %96 = arith.addf %93, %95 : vector<8x512xf32>
      %97 = math.tanh %96 : vector<8x512xf32>
      %98 = arith.negf %96 : vector<8x512xf32>
      %99 = math.exp %98 : vector<8x512xf32>
      %cst_44 = arith.constant 1.000000e+00 : f32
      %100 = vector.broadcast %cst_44 : f32 to vector<8x512xf32>
      %101 = arith.addf %100, %99 : vector<8x512xf32>
      %102 = arith.divf %100, %101 : vector<8x512xf32>
      %103 = arith.select %13, %97, %102 : vector<8x512xi1>, vector<8x512xf32>
      %104 = vector.extract_strided_slice %103 {offsets = [0, 0], sizes = [8, 128], strides = [1, 1]} : vector<8x512xf32> to vector<8x128xf32>
      %105 = vector.extract_strided_slice %103 {offsets = [0, 128], sizes = [8, 128], strides = [1, 1]} : vector<8x512xf32> to vector<8x128xf32>
      %106 = vector.extract_strided_slice %103 {offsets = [0, 256], sizes = [8, 128], strides = [1, 1]} : vector<8x512xf32> to vector<8x128xf32>
      %107 = vector.extract_strided_slice %103 {offsets = [0, 384], sizes = [8, 128], strides = [1, 1]} : vector<8x512xf32> to vector<8x128xf32>
      %108 = arith.mulf %105, %85 : vector<8x128xf32>
      %109 = arith.mulf %104, %106 : vector<8x128xf32>
      %110 = arith.addf %108, %109 : vector<8x128xf32>
      %111 = math.tanh %110 : vector<8x128xf32>
      %112 = arith.mulf %107, %111 : vector<8x128xf32>
      %113 = arith.index_cast %91 : i32 to index
      %c0_45 = arith.constant 0 : index
      %114 = vector.load %arg15[%113, %c0_45] : memref<64x128xf32, #tpu.memory_space<vmem>>, vector<8x128xf32>
      tpu.vector_store %arg15[%113, %c0_45], %112 {strides = array<i32>} : memref<64x128xf32, #tpu.memory_space<vmem>>, vector<8x128xf32>,
      %c3_i32 = arith.constant 3 : i32
      %c8_i32_46 = arith.constant 8 : i32
      %115 = arith.muli %c3_i32, %c8_i32_46 : i32
      %116 = tpu.assume_multiple %115, 8 : i32
      %117 = arith.index_cast %116 : i32 to index
      %c0_47 = arith.constant 0 : index
      %118 = vector.load %alloca[%117, %c0_47] : memref<64x512xf32, #tpu.memory_space<vmem>>, vector<8x512xf32>
      %c0_48 = arith.constant 0 : index
      %c0_49 = arith.constant 0 : index
      %119 = vector.load %arg6[%c0_48, %c0_49] : memref<128x512xf32, #tpu.memory_space<vmem>>, vector<128x512xf32>
      %cst_50 = arith.constant dense<0.000000e+00> : vector<8x512xf32>
      %120 = tpu.matmul %112, %119, %cst_50 {dimension_numbers = #tpu.dot_dimension_numbers<[1], [0], [0], [1], [0, 0, 1, 1], [], []>} : vector<8x128xf32>, vector<128x512xf32>, vector<8x512xf32> -> vector<8x512xf32>
      %121 = arith.addf %118, %120 : vector<8x512xf32>
      %122 = math.tanh %121 : vector<8x512xf32>
      %123 = arith.negf %121 : vector<8x512xf32>
      %124 = math.exp %123 : vector<8x512xf32>
      %cst_51 = arith.constant 1.000000e+00 : f32
      %125 = vector.broadcast %cst_51 : f32 to vector<8x512xf32>
      %126 = arith.addf %125, %124 : vector<8x512xf32>
      %127 = arith.divf %125, %126 : vector<8x512xf32>
      %128 = arith.select %13, %122, %127 : vector<8x512xi1>, vector<8x512xf32>
      %129 = vector.extract_strided_slice %128 {offsets = [0, 0], sizes = [8, 128], strides = [1, 1]} : vector<8x512xf32> to vector<8x128xf32>
      %130 = vector.extract_strided_slice %128 {offsets = [0, 128], sizes = [8, 128], strides = [1, 1]} : vector<8x512xf32> to vector<8x128xf32>
      %131 = vector.extract_strided_slice %128 {offsets = [0, 256], sizes = [8, 128], strides = [1, 1]} : vector<8x512xf32> to vector<8x128xf32>
      %132 = vector.extract_strided_slice %128 {offsets = [0, 384], sizes = [8, 128], strides = [1, 1]} : vector<8x512xf32> to vector<8x128xf32>
      %133 = arith.mulf %130, %110 : vector<8x128xf32>
      %134 = arith.mulf %129, %131 : vector<8x128xf32>
      %135 = arith.addf %133, %134 : vector<8x128xf32>
      %136 = math.tanh %135 : vector<8x128xf32>
      %137 = arith.mulf %132, %136 : vector<8x128xf32>
      %138 = arith.index_cast %116 : i32 to index
      %c0_52 = arith.constant 0 : index
      %139 = vector.load %arg15[%138, %c0_52] : memref<64x128xf32, #tpu.memory_space<vmem>>, vector<8x128xf32>
      tpu.vector_store %arg15[%138, %c0_52], %137 {strides = array<i32>} : memref<64x128xf32, #tpu.memory_space<vmem>>, vector<8x128xf32>,
      %c4_i32 = arith.constant 4 : i32
      %c8_i32_53 = arith.constant 8 : i32
      %140 = arith.muli %c4_i32, %c8_i32_53 : i32
      %141 = tpu.assume_multiple %140, 8 : i32
      %142 = arith.index_cast %141 : i32 to index
      %c0_54 = arith.constant 0 : index
      %143 = vector.load %alloca[%142, %c0_54] : memref<64x512xf32, #tpu.memory_space<vmem>>, vector<8x512xf32>
      %c0_55 = arith.constant 0 : index
      %c0_56 = arith.constant 0 : index
      %144 = vector.load %arg6[%c0_55, %c0_56] : memref<128x512xf32, #tpu.memory_space<vmem>>, vector<128x512xf32>
      %cst_57 = arith.constant dense<0.000000e+00> : vector<8x512xf32>
      %145 = tpu.matmul %137, %144, %cst_57 {dimension_numbers = #tpu.dot_dimension_numbers<[1], [0], [0], [1], [0, 0, 1, 1], [], []>} : vector<8x128xf32>, vector<128x512xf32>, vector<8x512xf32> -> vector<8x512xf32>
      %146 = arith.addf %143, %145 : vector<8x512xf32>
      %147 = math.tanh %146 : vector<8x512xf32>
      %148 = arith.negf %146 : vector<8x512xf32>
      %149 = math.exp %148 : vector<8x512xf32>
      %cst_58 = arith.constant 1.000000e+00 : f32
      %150 = vector.broadcast %cst_58 : f32 to vector<8x512xf32>
      %151 = arith.addf %150, %149 : vector<8x512xf32>
      %152 = arith.divf %150, %151 : vector<8x512xf32>
      %153 = arith.select %13, %147, %152 : vector<8x512xi1>, vector<8x512xf32>
      %154 = vector.extract_strided_slice %153 {offsets = [0, 0], sizes = [8, 128], strides = [1, 1]} : vector<8x512xf32> to vector<8x128xf32>
      %155 = vector.extract_strided_slice %153 {offsets = [0, 128], sizes = [8, 128], strides = [1, 1]} : vector<8x512xf32> to vector<8x128xf32>
      %156 = vector.extract_strided_slice %153 {offsets = [0, 256], sizes = [8, 128], strides = [1, 1]} : vector<8x512xf32> to vector<8x128xf32>
      %157 = vector.extract_strided_slice %153 {offsets = [0, 384], sizes = [8, 128], strides = [1, 1]} : vector<8x512xf32> to vector<8x128xf32>
      %158 = arith.mulf %155, %135 : vector<8x128xf32>
      %159 = arith.mulf %154, %156 : vector<8x128xf32>
      %160 = arith.addf %158, %159 : vector<8x128xf32>
      %161 = math.tanh %160 : vector<8x128xf32>
      %162 = arith.mulf %157, %161 : vector<8x128xf32>
      %163 = arith.index_cast %141 : i32 to index
      %c0_59 = arith.constant 0 : index
      %164 = vector.load %arg15[%163, %c0_59] : memref<64x128xf32, #tpu.memory_space<vmem>>, vector<8x128xf32>
      tpu.vector_store %arg15[%163, %c0_59], %162 {strides = array<i32>} : memref<64x128xf32, #tpu.memory_space<vmem>>, vector<8x128xf32>,
      %c5_i32 = arith.constant 5 : i32
      %c8_i32_60 = arith.constant 8 : i32
      %165 = arith.muli %c5_i32, %c8_i32_60 : i32
      %166 = tpu.assume_multiple %165, 8 : i32
      %167 = arith.index_cast %166 : i32 to index
      %c0_61 = arith.constant 0 : index
      %168 = vector.load %alloca[%167, %c0_61] : memref<64x512xf32, #tpu.memory_space<vmem>>, vector<8x512xf32>
      %c0_62 = arith.constant 0 : index
      %c0_63 = arith.constant 0 : index
      %169 = vector.load %arg6[%c0_62, %c0_63] : memref<128x512xf32, #tpu.memory_space<vmem>>, vector<128x512xf32>
      %cst_64 = arith.constant dense<0.000000e+00> : vector<8x512xf32>
      %170 = tpu.matmul %162, %169, %cst_64 {dimension_numbers = #tpu.dot_dimension_numbers<[1], [0], [0], [1], [0, 0, 1, 1], [], []>} : vector<8x128xf32>, vector<128x512xf32>, vector<8x512xf32> -> vector<8x512xf32>
      %171 = arith.addf %168, %170 : vector<8x512xf32>
      %172 = math.tanh %171 : vector<8x512xf32>
      %173 = arith.negf %171 : vector<8x512xf32>
      %174 = math.exp %173 : vector<8x512xf32>
      %cst_65 = arith.constant 1.000000e+00 : f32
      %175 = vector.broadcast %cst_65 : f32 to vector<8x512xf32>
      %176 = arith.addf %175, %174 : vector<8x512xf32>
      %177 = arith.divf %175, %176 : vector<8x512xf32>
      %178 = arith.select %13, %172, %177 : vector<8x512xi1>, vector<8x512xf32>
      %179 = vector.extract_strided_slice %178 {offsets = [0, 0], sizes = [8, 128], strides = [1, 1]} : vector<8x512xf32> to vector<8x128xf32>
      %180 = vector.extract_strided_slice %178 {offsets = [0, 128], sizes = [8, 128], strides = [1, 1]} : vector<8x512xf32> to vector<8x128xf32>
      %181 = vector.extract_strided_slice %178 {offsets = [0, 256], sizes = [8, 128], strides = [1, 1]} : vector<8x512xf32> to vector<8x128xf32>
      %182 = vector.extract_strided_slice %178 {offsets = [0, 384], sizes = [8, 128], strides = [1, 1]} : vector<8x512xf32> to vector<8x128xf32>
      %183 = arith.mulf %180, %160 : vector<8x128xf32>
      %184 = arith.mulf %179, %181 : vector<8x128xf32>
      %185 = arith.addf %183, %184 : vector<8x128xf32>
      %186 = math.tanh %185 : vector<8x128xf32>
      %187 = arith.mulf %182, %186 : vector<8x128xf32>
      %188 = arith.index_cast %166 : i32 to index
      %c0_66 = arith.constant 0 : index
      %189 = vector.load %arg15[%188, %c0_66] : memref<64x128xf32, #tpu.memory_space<vmem>>, vector<8x128xf32>
      tpu.vector_store %arg15[%188, %c0_66], %187 {strides = array<i32>} : memref<64x128xf32, #tpu.memory_space<vmem>>, vector<8x128xf32>,
      %c6_i32 = arith.constant 6 : i32
      %c8_i32_67 = arith.constant 8 : i32
      %190 = arith.muli %c6_i32, %c8_i32_67 : i32
      %191 = tpu.assume_multiple %190, 8 : i32
      %192 = arith.index_cast %191 : i32 to index
      %c0_68 = arith.constant 0 : index
      %193 = vector.load %alloca[%192, %c0_68] : memref<64x512xf32, #tpu.memory_space<vmem>>, vector<8x512xf32>
      %c0_69 = arith.constant 0 : index
      %c0_70 = arith.constant 0 : index
      %194 = vector.load %arg6[%c0_69, %c0_70] : memref<128x512xf32, #tpu.memory_space<vmem>>, vector<128x512xf32>
      %cst_71 = arith.constant dense<0.000000e+00> : vector<8x512xf32>
      %195 = tpu.matmul %187, %194, %cst_71 {dimension_numbers = #tpu.dot_dimension_numbers<[1], [0], [0], [1], [0, 0, 1, 1], [], []>} : vector<8x128xf32>, vector<128x512xf32>, vector<8x512xf32> -> vector<8x512xf32>
      %196 = arith.addf %193, %195 : vector<8x512xf32>
      %197 = math.tanh %196 : vector<8x512xf32>
      %198 = arith.negf %196 : vector<8x512xf32>
      %199 = math.exp %198 : vector<8x512xf32>
      %cst_72 = arith.constant 1.000000e+00 : f32
      %200 = vector.broadcast %cst_72 : f32 to vector<8x512xf32>
      %201 = arith.addf %200, %199 : vector<8x512xf32>
      %202 = arith.divf %200, %201 : vector<8x512xf32>
      %203 = arith.select %13, %197, %202 : vector<8x512xi1>, vector<8x512xf32>
      %204 = vector.extract_strided_slice %203 {offsets = [0, 0], sizes = [8, 128], strides = [1, 1]} : vector<8x512xf32> to vector<8x128xf32>
      %205 = vector.extract_strided_slice %203 {offsets = [0, 128], sizes = [8, 128], strides = [1, 1]} : vector<8x512xf32> to vector<8x128xf32>
      %206 = vector.extract_strided_slice %203 {offsets = [0, 256], sizes = [8, 128], strides = [1, 1]} : vector<8x512xf32> to vector<8x128xf32>
      %207 = vector.extract_strided_slice %203 {offsets = [0, 384], sizes = [8, 128], strides = [1, 1]} : vector<8x512xf32> to vector<8x128xf32>
      %208 = arith.mulf %205, %185 : vector<8x128xf32>
      %209 = arith.mulf %204, %206 : vector<8x128xf32>
      %210 = arith.addf %208, %209 : vector<8x128xf32>
      %211 = math.tanh %210 : vector<8x128xf32>
      %212 = arith.mulf %207, %211 : vector<8x128xf32>
      %213 = arith.index_cast %191 : i32 to index
      %c0_73 = arith.constant 0 : index
      %214 = vector.load %arg15[%213, %c0_73] : memref<64x128xf32, #tpu.memory_space<vmem>>, vector<8x128xf32>
      tpu.vector_store %arg15[%213, %c0_73], %212 {strides = array<i32>} : memref<64x128xf32, #tpu.memory_space<vmem>>, vector<8x128xf32>,
      %c7_i32 = arith.constant 7 : i32
      %c8_i32_74 = arith.constant 8 : i32
      %215 = arith.muli %c7_i32, %c8_i32_74 : i32
      %216 = tpu.assume_multiple %215, 8 : i32
      %217 = arith.index_cast %216 : i32 to index
      %c0_75 = arith.constant 0 : index
      %218 = vector.load %alloca[%217, %c0_75] : memref<64x512xf32, #tpu.memory_space<vmem>>, vector<8x512xf32>
      %c0_76 = arith.constant 0 : index
      %c0_77 = arith.constant 0 : index
      %219 = vector.load %arg6[%c0_76, %c0_77] : memref<128x512xf32, #tpu.memory_space<vmem>>, vector<128x512xf32>
      %cst_78 = arith.constant dense<0.000000e+00> : vector<8x512xf32>
      %220 = tpu.matmul %212, %219, %cst_78 {dimension_numbers = #tpu.dot_dimension_numbers<[1], [0], [0], [1], [0, 0, 1, 1], [], []>} : vector<8x128xf32>, vector<128x512xf32>, vector<8x512xf32> -> vector<8x512xf32>
      %221 = arith.addf %218, %220 : vector<8x512xf32>
      %222 = math.tanh %221 : vector<8x512xf32>
      %223 = arith.negf %221 : vector<8x512xf32>
      %224 = math.exp %223 : vector<8x512xf32>
      %cst_79 = arith.constant 1.000000e+00 : f32
      %225 = vector.broadcast %cst_79 : f32 to vector<8x512xf32>
      %226 = arith.addf %225, %224 : vector<8x512xf32>
      %227 = arith.divf %225, %226 : vector<8x512xf32>
      %228 = arith.select %13, %222, %227 : vector<8x512xi1>, vector<8x512xf32>
      %229 = vector.extract_strided_slice %228 {offsets = [0, 0], sizes = [8, 128], strides = [1, 1]} : vector<8x512xf32> to vector<8x128xf32>
      %230 = vector.extract_strided_slice %228 {offsets = [0, 128], sizes = [8, 128], strides = [1, 1]} : vector<8x512xf32> to vector<8x128xf32>
      %231 = vector.extract_strided_slice %228 {offsets = [0, 256], sizes = [8, 128], strides = [1, 1]} : vector<8x512xf32> to vector<8x128xf32>
      %232 = vector.extract_strided_slice %228 {offsets = [0, 384], sizes = [8, 128], strides = [1, 1]} : vector<8x512xf32> to vector<8x128xf32>
      %233 = arith.mulf %230, %210 : vector<8x128xf32>
      %234 = arith.mulf %229, %231 : vector<8x128xf32>
      %235 = arith.addf %233, %234 : vector<8x128xf32>
      %236 = math.tanh %235 : vector<8x128xf32>
      %237 = arith.mulf %232, %236 : vector<8x128xf32>
      %238 = arith.index_cast %216 : i32 to index
      %c0_80 = arith.constant 0 : index
      %239 = vector.load %arg15[%238, %c0_80] : memref<64x128xf32, #tpu.memory_space<vmem>>, vector<8x128xf32>
      tpu.vector_store %arg15[%238, %c0_80], %237 {strides = array<i32>} : memref<64x128xf32, #tpu.memory_space<vmem>>, vector<8x128xf32>,
      %c8_i32_81 = arith.constant 8 : i32
      tpu.yield
    }) : () -> ()
    %c0_5 = arith.constant 0 : index
    %c0_6 = arith.constant 0 : index
    %14 = vector.load %arg15[%c0_5, %c0_6] : memref<64x128xf32, #tpu.memory_space<vmem>>, vector<64x128xf32>
    %15 = tpu.iota {dimensions = array<i32: 1>} : vector<8x512xi32>
    %c256_i32_7 = arith.constant 256 : i32
    %16 = vector.broadcast %c256_i32_7 : i32 to vector<8x512xi32>
    %17 = arith.cmpi sge, %15, %16 : vector<8x512xi32>
    %c384_i32_8 = arith.constant 384 : i32
    %18 = vector.broadcast %c384_i32_8 : i32 to vector<8x512xi32>
    %19 = arith.cmpi slt, %15, %18 : vector<8x512xi32>
    %20 = arith.andi %17, %19 : vector<8x512xi1>
    "tpu.region"() ({
      %alloca = memref.alloca() : memref<64x512xf32, #tpu.memory_space<vmem>>
      %c0_18 = arith.constant 0 : index
      %c0_19 = arith.constant 0 : index
      %33 = vector.load %arg8[%c0_18, %c0_19] : memref<128x512xf32, #tpu.memory_space<vmem>>, vector<128x512xf32>
      %cst_20 = arith.constant dense<0.000000e+00> : vector<64x512xf32>
      %34 = tpu.matmul %14, %33, %cst_20 {dimension_numbers = #tpu.dot_dimension_numbers<[1], [0], [0], [1], [0, 0, 1, 1], [], []>} : vector<64x128xf32>, vector<128x512xf32>, vector<64x512xf32> -> vector<64x512xf32>
      %c0_21 = arith.constant 0 : index
      %c0_22 = arith.constant 0 : index
      %35 = vector.load %arg10[%c0_21, %c0_22] : memref<1x512xf32, #tpu.memory_space<vmem>>, vector<1x512xf32>
      %36 = vector.broadcast %35 : vector<1x512xf32> to vector<64x512xf32>
      %37 = arith.addf %34, %36 : vector<64x512xf32>
      %c0_23 = arith.constant 0 : index
      %c0_24 = arith.constant 0 : index
      %38 = vector.load %alloca[%c0_23, %c0_24] : memref<64x512xf32, #tpu.memory_space<vmem>>, vector<64x512xf32>
      tpu.vector_store %alloca[%c0_23, %c0_24], %37 {strides = array<i32>} : memref<64x512xf32, #tpu.memory_space<vmem>>, vector<64x512xf32>,
      %cst_25 = arith.constant 0.000000e+00 : f32
      %39 = vector.broadcast %cst_25 : f32 to vector<8x128xf32>
      %c0_i32 = arith.constant 0 : i32
      %c8_i32 = arith.constant 8 : i32
      %40 = arith.muli %c0_i32, %c8_i32 : i32
      %41 = tpu.assume_multiple %40, 8 : i32
      %42 = arith.index_cast %41 : i32 to index
      %c0_26 = arith.constant 0 : index
      %43 = vector.load %alloca[%42, %c0_26] : memref<64x512xf32, #tpu.memory_space<vmem>>, vector<8x512xf32>
      %c0_27 = arith.constant 0 : index
      %c0_28 = arith.constant 0 : index
      %44 = vector.load %arg9[%c0_27, %c0_28] : memref<128x512xf32, #tpu.memory_space<vmem>>, vector<128x512xf32>
      %cst_29 = arith.constant dense<0.000000e+00> : vector<8x512xf32>
      %45 = tpu.matmul %39, %44, %cst_29 {dimension_numbers = #tpu.dot_dimension_numbers<[1], [0], [0], [1], [0, 0, 1, 1], [], []>} : vector<8x128xf32>, vector<128x512xf32>, vector<8x512xf32> -> vector<8x512xf32>
      %46 = arith.addf %43, %45 : vector<8x512xf32>
      %47 = math.tanh %46 : vector<8x512xf32>
      %48 = arith.negf %46 : vector<8x512xf32>
      %49 = math.exp %48 : vector<8x512xf32>
      %cst_30 = arith.constant 1.000000e+00 : f32
      %50 = vector.broadcast %cst_30 : f32 to vector<8x512xf32>
      %51 = arith.addf %50, %49 : vector<8x512xf32>
      %52 = arith.divf %50, %51 : vector<8x512xf32>
      %53 = arith.select %20, %47, %52 : vector<8x512xi1>, vector<8x512xf32>
      %54 = vector.extract_strided_slice %53 {offsets = [0, 0], sizes = [8, 128], strides = [1, 1]} : vector<8x512xf32> to vector<8x128xf32>
      %55 = vector.extract_strided_slice %53 {offsets = [0, 128], sizes = [8, 128], strides = [1, 1]} : vector<8x512xf32> to vector<8x128xf32>
      %56 = vector.extract_strided_slice %53 {offsets = [0, 256], sizes = [8, 128], strides = [1, 1]} : vector<8x512xf32> to vector<8x128xf32>
      %57 = vector.extract_strided_slice %53 {offsets = [0, 384], sizes = [8, 128], strides = [1, 1]} : vector<8x512xf32> to vector<8x128xf32>
      %58 = arith.mulf %55, %39 : vector<8x128xf32>
      %59 = arith.mulf %54, %56 : vector<8x128xf32>
      %60 = arith.addf %58, %59 : vector<8x128xf32>
      %61 = math.tanh %60 : vector<8x128xf32>
      %62 = arith.mulf %57, %61 : vector<8x128xf32>
      %63 = arith.index_cast %41 : i32 to index
      %c0_31 = arith.constant 0 : index
      %64 = vector.load %arg16[%63, %c0_31] : memref<64x128xf32, #tpu.memory_space<vmem>>, vector<8x128xf32>
      tpu.vector_store %arg16[%63, %c0_31], %62 {strides = array<i32>} : memref<64x128xf32, #tpu.memory_space<vmem>>, vector<8x128xf32>,
      %c1_i32 = arith.constant 1 : i32
      %c8_i32_32 = arith.constant 8 : i32
      %65 = arith.muli %c1_i32, %c8_i32_32 : i32
      %66 = tpu.assume_multiple %65, 8 : i32
      %67 = arith.index_cast %66 : i32 to index
      %c0_33 = arith.constant 0 : index
      %68 = vector.load %alloca[%67, %c0_33] : memref<64x512xf32, #tpu.memory_space<vmem>>, vector<8x512xf32>
      %c0_34 = arith.constant 0 : index
      %c0_35 = arith.constant 0 : index
      %69 = vector.load %arg9[%c0_34, %c0_35] : memref<128x512xf32, #tpu.memory_space<vmem>>, vector<128x512xf32>
      %cst_36 = arith.constant dense<0.000000e+00> : vector<8x512xf32>
      %70 = tpu.matmul %62, %69, %cst_36 {dimension_numbers = #tpu.dot_dimension_numbers<[1], [0], [0], [1], [0, 0, 1, 1], [], []>} : vector<8x128xf32>, vector<128x512xf32>, vector<8x512xf32> -> vector<8x512xf32>
      %71 = arith.addf %68, %70 : vector<8x512xf32>
      %72 = math.tanh %71 : vector<8x512xf32>
      %73 = arith.negf %71 : vector<8x512xf32>
      %74 = math.exp %73 : vector<8x512xf32>
      %cst_37 = arith.constant 1.000000e+00 : f32
      %75 = vector.broadcast %cst_37 : f32 to vector<8x512xf32>
      %76 = arith.addf %75, %74 : vector<8x512xf32>
      %77 = arith.divf %75, %76 : vector<8x512xf32>
      %78 = arith.select %20, %72, %77 : vector<8x512xi1>, vector<8x512xf32>
      %79 = vector.extract_strided_slice %78 {offsets = [0, 0], sizes = [8, 128], strides = [1, 1]} : vector<8x512xf32> to vector<8x128xf32>
      %80 = vector.extract_strided_slice %78 {offsets = [0, 128], sizes = [8, 128], strides = [1, 1]} : vector<8x512xf32> to vector<8x128xf32>
      %81 = vector.extract_strided_slice %78 {offsets = [0, 256], sizes = [8, 128], strides = [1, 1]} : vector<8x512xf32> to vector<8x128xf32>
      %82 = vector.extract_strided_slice %78 {offsets = [0, 384], sizes = [8, 128], strides = [1, 1]} : vector<8x512xf32> to vector<8x128xf32>
      %83 = arith.mulf %80, %60 : vector<8x128xf32>
      %84 = arith.mulf %79, %81 : vector<8x128xf32>
      %85 = arith.addf %83, %84 : vector<8x128xf32>
      %86 = math.tanh %85 : vector<8x128xf32>
      %87 = arith.mulf %82, %86 : vector<8x128xf32>
      %88 = arith.index_cast %66 : i32 to index
      %c0_38 = arith.constant 0 : index
      %89 = vector.load %arg16[%88, %c0_38] : memref<64x128xf32, #tpu.memory_space<vmem>>, vector<8x128xf32>
      tpu.vector_store %arg16[%88, %c0_38], %87 {strides = array<i32>} : memref<64x128xf32, #tpu.memory_space<vmem>>, vector<8x128xf32>,
      %c2_i32 = arith.constant 2 : i32
      %c8_i32_39 = arith.constant 8 : i32
      %90 = arith.muli %c2_i32, %c8_i32_39 : i32
      %91 = tpu.assume_multiple %90, 8 : i32
      %92 = arith.index_cast %91 : i32 to index
      %c0_40 = arith.constant 0 : index
      %93 = vector.load %alloca[%92, %c0_40] : memref<64x512xf32, #tpu.memory_space<vmem>>, vector<8x512xf32>
      %c0_41 = arith.constant 0 : index
      %c0_42 = arith.constant 0 : index
      %94 = vector.load %arg9[%c0_41, %c0_42] : memref<128x512xf32, #tpu.memory_space<vmem>>, vector<128x512xf32>
      %cst_43 = arith.constant dense<0.000000e+00> : vector<8x512xf32>
      %95 = tpu.matmul %87, %94, %cst_43 {dimension_numbers = #tpu.dot_dimension_numbers<[1], [0], [0], [1], [0, 0, 1, 1], [], []>} : vector<8x128xf32>, vector<128x512xf32>, vector<8x512xf32> -> vector<8x512xf32>
      %96 = arith.addf %93, %95 : vector<8x512xf32>
      %97 = math.tanh %96 : vector<8x512xf32>
      %98 = arith.negf %96 : vector<8x512xf32>
      %99 = math.exp %98 : vector<8x512xf32>
      %cst_44 = arith.constant 1.000000e+00 : f32
      %100 = vector.broadcast %cst_44 : f32 to vector<8x512xf32>
      %101 = arith.addf %100, %99 : vector<8x512xf32>
      %102 = arith.divf %100, %101 : vector<8x512xf32>
      %103 = arith.select %20, %97, %102 : vector<8x512xi1>, vector<8x512xf32>
      %104 = vector.extract_strided_slice %103 {offsets = [0, 0], sizes = [8, 128], strides = [1, 1]} : vector<8x512xf32> to vector<8x128xf32>
      %105 = vector.extract_strided_slice %103 {offsets = [0, 128], sizes = [8, 128], strides = [1, 1]} : vector<8x512xf32> to vector<8x128xf32>
      %106 = vector.extract_strided_slice %103 {offsets = [0, 256], sizes = [8, 128], strides = [1, 1]} : vector<8x512xf32> to vector<8x128xf32>
      %107 = vector.extract_strided_slice %103 {offsets = [0, 384], sizes = [8, 128], strides = [1, 1]} : vector<8x512xf32> to vector<8x128xf32>
      %108 = arith.mulf %105, %85 : vector<8x128xf32>
      %109 = arith.mulf %104, %106 : vector<8x128xf32>
      %110 = arith.addf %108, %109 : vector<8x128xf32>
      %111 = math.tanh %110 : vector<8x128xf32>
      %112 = arith.mulf %107, %111 : vector<8x128xf32>
      %113 = arith.index_cast %91 : i32 to index
      %c0_45 = arith.constant 0 : index
      %114 = vector.load %arg16[%113, %c0_45] : memref<64x128xf32, #tpu.memory_space<vmem>>, vector<8x128xf32>
      tpu.vector_store %arg16[%113, %c0_45], %112 {strides = array<i32>} : memref<64x128xf32, #tpu.memory_space<vmem>>, vector<8x128xf32>,
      %c3_i32 = arith.constant 3 : i32
      %c8_i32_46 = arith.constant 8 : i32
      %115 = arith.muli %c3_i32, %c8_i32_46 : i32
      %116 = tpu.assume_multiple %115, 8 : i32
      %117 = arith.index_cast %116 : i32 to index
      %c0_47 = arith.constant 0 : index
      %118 = vector.load %alloca[%117, %c0_47] : memref<64x512xf32, #tpu.memory_space<vmem>>, vector<8x512xf32>
      %c0_48 = arith.constant 0 : index
      %c0_49 = arith.constant 0 : index
      %119 = vector.load %arg9[%c0_48, %c0_49] : memref<128x512xf32, #tpu.memory_space<vmem>>, vector<128x512xf32>
      %cst_50 = arith.constant dense<0.000000e+00> : vector<8x512xf32>
      %120 = tpu.matmul %112, %119, %cst_50 {dimension_numbers = #tpu.dot_dimension_numbers<[1], [0], [0], [1], [0, 0, 1, 1], [], []>} : vector<8x128xf32>, vector<128x512xf32>, vector<8x512xf32> -> vector<8x512xf32>
      %121 = arith.addf %118, %120 : vector<8x512xf32>
      %122 = math.tanh %121 : vector<8x512xf32>
      %123 = arith.negf %121 : vector<8x512xf32>
      %124 = math.exp %123 : vector<8x512xf32>
      %cst_51 = arith.constant 1.000000e+00 : f32
      %125 = vector.broadcast %cst_51 : f32 to vector<8x512xf32>
      %126 = arith.addf %125, %124 : vector<8x512xf32>
      %127 = arith.divf %125, %126 : vector<8x512xf32>
      %128 = arith.select %20, %122, %127 : vector<8x512xi1>, vector<8x512xf32>
      %129 = vector.extract_strided_slice %128 {offsets = [0, 0], sizes = [8, 128], strides = [1, 1]} : vector<8x512xf32> to vector<8x128xf32>
      %130 = vector.extract_strided_slice %128 {offsets = [0, 128], sizes = [8, 128], strides = [1, 1]} : vector<8x512xf32> to vector<8x128xf32>
      %131 = vector.extract_strided_slice %128 {offsets = [0, 256], sizes = [8, 128], strides = [1, 1]} : vector<8x512xf32> to vector<8x128xf32>
      %132 = vector.extract_strided_slice %128 {offsets = [0, 384], sizes = [8, 128], strides = [1, 1]} : vector<8x512xf32> to vector<8x128xf32>
      %133 = arith.mulf %130, %110 : vector<8x128xf32>
      %134 = arith.mulf %129, %131 : vector<8x128xf32>
      %135 = arith.addf %133, %134 : vector<8x128xf32>
      %136 = math.tanh %135 : vector<8x128xf32>
      %137 = arith.mulf %132, %136 : vector<8x128xf32>
      %138 = arith.index_cast %116 : i32 to index
      %c0_52 = arith.constant 0 : index
      %139 = vector.load %arg16[%138, %c0_52] : memref<64x128xf32, #tpu.memory_space<vmem>>, vector<8x128xf32>
      tpu.vector_store %arg16[%138, %c0_52], %137 {strides = array<i32>} : memref<64x128xf32, #tpu.memory_space<vmem>>, vector<8x128xf32>,
      %c4_i32 = arith.constant 4 : i32
      %c8_i32_53 = arith.constant 8 : i32
      %140 = arith.muli %c4_i32, %c8_i32_53 : i32
      %141 = tpu.assume_multiple %140, 8 : i32
      %142 = arith.index_cast %141 : i32 to index
      %c0_54 = arith.constant 0 : index
      %143 = vector.load %alloca[%142, %c0_54] : memref<64x512xf32, #tpu.memory_space<vmem>>, vector<8x512xf32>
      %c0_55 = arith.constant 0 : index
      %c0_56 = arith.constant 0 : index
      %144 = vector.load %arg9[%c0_55, %c0_56] : memref<128x512xf32, #tpu.memory_space<vmem>>, vector<128x512xf32>
      %cst_57 = arith.constant dense<0.000000e+00> : vector<8x512xf32>
      %145 = tpu.matmul %137, %144, %cst_57 {dimension_numbers = #tpu.dot_dimension_numbers<[1], [0], [0], [1], [0, 0, 1, 1], [], []>} : vector<8x128xf32>, vector<128x512xf32>, vector<8x512xf32> -> vector<8x512xf32>
      %146 = arith.addf %143, %145 : vector<8x512xf32>
      %147 = math.tanh %146 : vector<8x512xf32>
      %148 = arith.negf %146 : vector<8x512xf32>
      %149 = math.exp %148 : vector<8x512xf32>
      %cst_58 = arith.constant 1.000000e+00 : f32
      %150 = vector.broadcast %cst_58 : f32 to vector<8x512xf32>
      %151 = arith.addf %150, %149 : vector<8x512xf32>
      %152 = arith.divf %150, %151 : vector<8x512xf32>
      %153 = arith.select %20, %147, %152 : vector<8x512xi1>, vector<8x512xf32>
      %154 = vector.extract_strided_slice %153 {offsets = [0, 0], sizes = [8, 128], strides = [1, 1]} : vector<8x512xf32> to vector<8x128xf32>
      %155 = vector.extract_strided_slice %153 {offsets = [0, 128], sizes = [8, 128], strides = [1, 1]} : vector<8x512xf32> to vector<8x128xf32>
      %156 = vector.extract_strided_slice %153 {offsets = [0, 256], sizes = [8, 128], strides = [1, 1]} : vector<8x512xf32> to vector<8x128xf32>
      %157 = vector.extract_strided_slice %153 {offsets = [0, 384], sizes = [8, 128], strides = [1, 1]} : vector<8x512xf32> to vector<8x128xf32>
      %158 = arith.mulf %155, %135 : vector<8x128xf32>
      %159 = arith.mulf %154, %156 : vector<8x128xf32>
      %160 = arith.addf %158, %159 : vector<8x128xf32>
      %161 = math.tanh %160 : vector<8x128xf32>
      %162 = arith.mulf %157, %161 : vector<8x128xf32>
      %163 = arith.index_cast %141 : i32 to index
      %c0_59 = arith.constant 0 : index
      %164 = vector.load %arg16[%163, %c0_59] : memref<64x128xf32, #tpu.memory_space<vmem>>, vector<8x128xf32>
      tpu.vector_store %arg16[%163, %c0_59], %162 {strides = array<i32>} : memref<64x128xf32, #tpu.memory_space<vmem>>, vector<8x128xf32>,
      %c5_i32 = arith.constant 5 : i32
      %c8_i32_60 = arith.constant 8 : i32
      %165 = arith.muli %c5_i32, %c8_i32_60 : i32
      %166 = tpu.assume_multiple %165, 8 : i32
      %167 = arith.index_cast %166 : i32 to index
      %c0_61 = arith.constant 0 : index
      %168 = vector.load %alloca[%167, %c0_61] : memref<64x512xf32, #tpu.memory_space<vmem>>, vector<8x512xf32>
      %c0_62 = arith.constant 0 : index
      %c0_63 = arith.constant 0 : index
      %169 = vector.load %arg9[%c0_62, %c0_63] : memref<128x512xf32, #tpu.memory_space<vmem>>, vector<128x512xf32>
      %cst_64 = arith.constant dense<0.000000e+00> : vector<8x512xf32>
      %170 = tpu.matmul %162, %169, %cst_64 {dimension_numbers = #tpu.dot_dimension_numbers<[1], [0], [0], [1], [0, 0, 1, 1], [], []>} : vector<8x128xf32>, vector<128x512xf32>, vector<8x512xf32> -> vector<8x512xf32>
      %171 = arith.addf %168, %170 : vector<8x512xf32>
      %172 = math.tanh %171 : vector<8x512xf32>
      %173 = arith.negf %171 : vector<8x512xf32>
      %174 = math.exp %173 : vector<8x512xf32>
      %cst_65 = arith.constant 1.000000e+00 : f32
      %175 = vector.broadcast %cst_65 : f32 to vector<8x512xf32>
      %176 = arith.addf %175, %174 : vector<8x512xf32>
      %177 = arith.divf %175, %176 : vector<8x512xf32>
      %178 = arith.select %20, %172, %177 : vector<8x512xi1>, vector<8x512xf32>
      %179 = vector.extract_strided_slice %178 {offsets = [0, 0], sizes = [8, 128], strides = [1, 1]} : vector<8x512xf32> to vector<8x128xf32>
      %180 = vector.extract_strided_slice %178 {offsets = [0, 128], sizes = [8, 128], strides = [1, 1]} : vector<8x512xf32> to vector<8x128xf32>
      %181 = vector.extract_strided_slice %178 {offsets = [0, 256], sizes = [8, 128], strides = [1, 1]} : vector<8x512xf32> to vector<8x128xf32>
      %182 = vector.extract_strided_slice %178 {offsets = [0, 384], sizes = [8, 128], strides = [1, 1]} : vector<8x512xf32> to vector<8x128xf32>
      %183 = arith.mulf %180, %160 : vector<8x128xf32>
      %184 = arith.mulf %179, %181 : vector<8x128xf32>
      %185 = arith.addf %183, %184 : vector<8x128xf32>
      %186 = math.tanh %185 : vector<8x128xf32>
      %187 = arith.mulf %182, %186 : vector<8x128xf32>
      %188 = arith.index_cast %166 : i32 to index
      %c0_66 = arith.constant 0 : index
      %189 = vector.load %arg16[%188, %c0_66] : memref<64x128xf32, #tpu.memory_space<vmem>>, vector<8x128xf32>
      tpu.vector_store %arg16[%188, %c0_66], %187 {strides = array<i32>} : memref<64x128xf32, #tpu.memory_space<vmem>>, vector<8x128xf32>,
      %c6_i32 = arith.constant 6 : i32
      %c8_i32_67 = arith.constant 8 : i32
      %190 = arith.muli %c6_i32, %c8_i32_67 : i32
      %191 = tpu.assume_multiple %190, 8 : i32
      %192 = arith.index_cast %191 : i32 to index
      %c0_68 = arith.constant 0 : index
      %193 = vector.load %alloca[%192, %c0_68] : memref<64x512xf32, #tpu.memory_space<vmem>>, vector<8x512xf32>
      %c0_69 = arith.constant 0 : index
      %c0_70 = arith.constant 0 : index
      %194 = vector.load %arg9[%c0_69, %c0_70] : memref<128x512xf32, #tpu.memory_space<vmem>>, vector<128x512xf32>
      %cst_71 = arith.constant dense<0.000000e+00> : vector<8x512xf32>
      %195 = tpu.matmul %187, %194, %cst_71 {dimension_numbers = #tpu.dot_dimension_numbers<[1], [0], [0], [1], [0, 0, 1, 1], [], []>} : vector<8x128xf32>, vector<128x512xf32>, vector<8x512xf32> -> vector<8x512xf32>
      %196 = arith.addf %193, %195 : vector<8x512xf32>
      %197 = math.tanh %196 : vector<8x512xf32>
      %198 = arith.negf %196 : vector<8x512xf32>
      %199 = math.exp %198 : vector<8x512xf32>
      %cst_72 = arith.constant 1.000000e+00 : f32
      %200 = vector.broadcast %cst_72 : f32 to vector<8x512xf32>
      %201 = arith.addf %200, %199 : vector<8x512xf32>
      %202 = arith.divf %200, %201 : vector<8x512xf32>
      %203 = arith.select %20, %197, %202 : vector<8x512xi1>, vector<8x512xf32>
      %204 = vector.extract_strided_slice %203 {offsets = [0, 0], sizes = [8, 128], strides = [1, 1]} : vector<8x512xf32> to vector<8x128xf32>
      %205 = vector.extract_strided_slice %203 {offsets = [0, 128], sizes = [8, 128], strides = [1, 1]} : vector<8x512xf32> to vector<8x128xf32>
      %206 = vector.extract_strided_slice %203 {offsets = [0, 256], sizes = [8, 128], strides = [1, 1]} : vector<8x512xf32> to vector<8x128xf32>
      %207 = vector.extract_strided_slice %203 {offsets = [0, 384], sizes = [8, 128], strides = [1, 1]} : vector<8x512xf32> to vector<8x128xf32>
      %208 = arith.mulf %205, %185 : vector<8x128xf32>
      %209 = arith.mulf %204, %206 : vector<8x128xf32>
      %210 = arith.addf %208, %209 : vector<8x128xf32>
      %211 = math.tanh %210 : vector<8x128xf32>
      %212 = arith.mulf %207, %211 : vector<8x128xf32>
      %213 = arith.index_cast %191 : i32 to index
      %c0_73 = arith.constant 0 : index
      %214 = vector.load %arg16[%213, %c0_73] : memref<64x128xf32, #tpu.memory_space<vmem>>, vector<8x128xf32>
      tpu.vector_store %arg16[%213, %c0_73], %212 {strides = array<i32>} : memref<64x128xf32, #tpu.memory_space<vmem>>, vector<8x128xf32>,
      %c7_i32 = arith.constant 7 : i32
      %c8_i32_74 = arith.constant 8 : i32
      %215 = arith.muli %c7_i32, %c8_i32_74 : i32
      %216 = tpu.assume_multiple %215, 8 : i32
      %217 = arith.index_cast %216 : i32 to index
      %c0_75 = arith.constant 0 : index
      %218 = vector.load %alloca[%217, %c0_75] : memref<64x512xf32, #tpu.memory_space<vmem>>, vector<8x512xf32>
      %c0_76 = arith.constant 0 : index
      %c0_77 = arith.constant 0 : index
      %219 = vector.load %arg9[%c0_76, %c0_77] : memref<128x512xf32, #tpu.memory_space<vmem>>, vector<128x512xf32>
      %cst_78 = arith.constant dense<0.000000e+00> : vector<8x512xf32>
      %220 = tpu.matmul %212, %219, %cst_78 {dimension_numbers = #tpu.dot_dimension_numbers<[1], [0], [0], [1], [0, 0, 1, 1], [], []>} : vector<8x128xf32>, vector<128x512xf32>, vector<8x512xf32> -> vector<8x512xf32>
      %221 = arith.addf %218, %220 : vector<8x512xf32>
      %222 = math.tanh %221 : vector<8x512xf32>
      %223 = arith.negf %221 : vector<8x512xf32>
      %224 = math.exp %223 : vector<8x512xf32>
      %cst_79 = arith.constant 1.000000e+00 : f32
      %225 = vector.broadcast %cst_79 : f32 to vector<8x512xf32>
      %226 = arith.addf %225, %224 : vector<8x512xf32>
      %227 = arith.divf %225, %226 : vector<8x512xf32>
      %228 = arith.select %20, %222, %227 : vector<8x512xi1>, vector<8x512xf32>
      %229 = vector.extract_strided_slice %228 {offsets = [0, 0], sizes = [8, 128], strides = [1, 1]} : vector<8x512xf32> to vector<8x128xf32>
      %230 = vector.extract_strided_slice %228 {offsets = [0, 128], sizes = [8, 128], strides = [1, 1]} : vector<8x512xf32> to vector<8x128xf32>
      %231 = vector.extract_strided_slice %228 {offsets = [0, 256], sizes = [8, 128], strides = [1, 1]} : vector<8x512xf32> to vector<8x128xf32>
      %232 = vector.extract_strided_slice %228 {offsets = [0, 384], sizes = [8, 128], strides = [1, 1]} : vector<8x512xf32> to vector<8x128xf32>
      %233 = arith.mulf %230, %210 : vector<8x128xf32>
      %234 = arith.mulf %229, %231 : vector<8x128xf32>
      %235 = arith.addf %233, %234 : vector<8x128xf32>
      %236 = math.tanh %235 : vector<8x128xf32>
      %237 = arith.mulf %232, %236 : vector<8x128xf32>
      %238 = arith.index_cast %216 : i32 to index
      %c0_80 = arith.constant 0 : index
      %239 = vector.load %arg16[%238, %c0_80] : memref<64x128xf32, #tpu.memory_space<vmem>>, vector<8x128xf32>
      tpu.vector_store %arg16[%238, %c0_80], %237 {strides = array<i32>} : memref<64x128xf32, #tpu.memory_space<vmem>>, vector<8x128xf32>,
      %c8_i32_81 = arith.constant 8 : i32
      tpu.yield
    }) : () -> ()
    %c0_9 = arith.constant 0 : index
    %c0_10 = arith.constant 0 : index
    %21 = vector.load %arg16[%c0_9, %c0_10] : memref<64x128xf32, #tpu.memory_space<vmem>>, vector<64x128xf32>
    %c0_11 = arith.constant 0 : index
    %c0_12 = arith.constant 0 : index
    %22 = vector.load %arg11[%c0_11, %c0_12] : memref<128x128xf32, #tpu.memory_space<vmem>>, vector<128x128xf32>
    %cst = arith.constant dense<0.000000e+00> : vector<64x128xf32>
    %23 = tpu.matmul %21, %22, %cst {dimension_numbers = #tpu.dot_dimension_numbers<[1], [0], [0], [1], [0, 0, 1, 1], [], []>} : vector<64x128xf32>, vector<128x128xf32>, vector<64x128xf32> -> vector<64x128xf32>
    %c0_13 = arith.constant 0 : index
    %c0_14 = arith.constant 0 : index
    %24 = vector.load %arg12[%c0_13, %c0_14] : memref<1x128xf32, #tpu.memory_space<vmem>>, vector<1x128xf32>
    %25 = vector.broadcast %24 : vector<1x128xf32> to vector<64x128xf32>
    %26 = arith.addf %23, %25 : vector<64x128xf32>
    %27 = arith.negf %26 : vector<64x128xf32>
    %28 = math.exp %27 : vector<64x128xf32>
    %cst_15 = arith.constant 1.000000e+00 : f32
    %29 = vector.broadcast %cst_15 : f32 to vector<64x128xf32>
    %30 = arith.addf %29, %28 : vector<64x128xf32>
    %31 = arith.divf %29, %30 : vector<64x128xf32>
    %c0_16 = arith.constant 0 : index
    %c0_17 = arith.constant 0 : index
    %32 = vector.load %arg13[%c0_16, %c0_17] : memref<64x128xf32, #tpu.memory_space<vmem>>, vector<64x128xf32>
    tpu.vector_store %arg13[%c0_16, %c0_17], %31 {strides = array<i32>} : memref<64x128xf32, #tpu.memory_space<vmem>>, vector<64x128xf32>,
    return
  }
  func.func @transform_0(%arg0: i32) -> (i32, i32) {
    %c0_i32 = arith.constant 0 : i32
    %c0_i32_0 = arith.constant 0 : i32
    %c0_i32_1 = arith.constant 0 : i32
    return %c0_i32, %c0_i32_0 : i32, i32
  }
  func.func @transform_1(%arg0: i32) -> (i32, i32) {
    %c0_i32 = arith.constant 0 : i32
    %c0_i32_0 = arith.constant 0 : i32
    %c0_i32_1 = arith.constant 0 : i32
    return %c0_i32, %c0_i32_0 : i32, i32
  }
  func.func @transform_2(%arg0: i32) -> (i32, i32) {
    %c0_i32 = arith.constant 0 : i32
    %c0_i32_0 = arith.constant 0 : i32
    %c0_i32_1 = arith.constant 0 : i32
    return %c0_i32, %c0_i32_0 : i32, i32
  }
  func.func @transform_3(%arg0: i32) -> (i32, i32) {
    %c0_i32 = arith.constant 0 : i32
    %c0_i32_0 = arith.constant 0 : i32
    %c0_i32_1 = arith.constant 0 : i32
    return %c0_i32, %c0_i32_0 : i32, i32
  }
  func.func @transform_4(%arg0: i32) -> (i32, i32) {
    %c0_i32 = arith.constant 0 : i32
    %c0_i32_0 = arith.constant 0 : i32
    %c0_i32_1 = arith.constant 0 : i32
    return %c0_i32, %c0_i32_0 : i32, i32
  }
  func.func @transform_5(%arg0: i32) -> (i32, i32) {
    %c0_i32 = arith.constant 0 : i32
    %c0_i32_0 = arith.constant 0 : i32
    %c0_i32_1 = arith.constant 0 : i32
    return %c0_i32, %c0_i32_0 : i32, i32
  }
  func.func @transform_6(%arg0: i32) -> (i32, i32) {
    %c0_i32 = arith.constant 0 : i32
    %c0_i32_0 = arith.constant 0 : i32
    %c0_i32_1 = arith.constant 0 : i32
    return %c0_i32, %c0_i32_0 : i32, i32
  }
  func.func @transform_7(%arg0: i32) -> (i32, i32) {
    %c0_i32 = arith.constant 0 : i32
    %c0_i32_0 = arith.constant 0 : i32
    %c0_i32_1 = arith.constant 0 : i32
    return %c0_i32, %c0_i32_0 : i32, i32
  }
  func.func @transform_8(%arg0: i32) -> (i32, i32) {
    %c0_i32 = arith.constant 0 : i32
    %c0_i32_0 = arith.constant 0 : i32
    %c0_i32_1 = arith.constant 0 : i32
    return %c0_i32, %c0_i32_0 : i32, i32
  }
  func.func @transform_9(%arg0: i32) -> (i32, i32) {
    %c0_i32 = arith.constant 0 : i32
    %c0_i32_0 = arith.constant 0 : i32
    %c0_i32_1 = arith.constant 0 : i32
    return %c0_i32, %c0_i32_0 : i32, i32
  }
  func.func @transform_10(%arg0: i32) -> (i32, i32) {
    %c0_i32 = arith.constant 0 : i32
    %c0_i32_0 = arith.constant 0 : i32
    %c0_i32_1 = arith.constant 0 : i32
    return %c0_i32, %c0_i32_0 : i32, i32
  }
  func.func @transform_11(%arg0: i32) -> (i32, i32) {
    %c0_i32 = arith.constant 0 : i32
    %c0_i32_0 = arith.constant 0 : i32
    %c0_i32_1 = arith.constant 0 : i32
    return %c0_i32, %c0_i32_0 : i32, i32
  }
  func.func @transform_12(%arg0: i32) -> (i32, i32) {
    %c0_i32 = arith.constant 0 : i32
    %c0_i32_0 = arith.constant 0 : i32
    %c0_i32_1 = arith.constant 0 : i32
    return %c0_i32, %c0_i32_0 : i32, i32
  }
}

</mosaic_0001>

<llo_original>
// kernel: music_lstm_forward.1
$region0: #{music_lstm_forward.1}
  #allocation0 [shape = 'u32[]', space=smem, size = 0x4, offset = 0x4, fixed_abs, tag = 'smem constant byte address 0x4 - core index']
  #allocation1 [shape = 'u32[144,128]{1,0:T(1,128)}', space=vmem, size = 0x12000, scoped, tag = 'internal scratch']
  #allocation2 [shape = 'f32[64,128]{1,0:T(8,128)}', space=vmem, size = 0x8000, scoped, tag = 'scratch operand']
  #allocation3 [shape = 'f32[64,128]{1,0:T(8,128)}', space=vmem, size = 0x8000, scoped, tag = 'scratch operand']
  #allocation4 [shape = 'f32[64,128]{1,0:T(8,128)}', space=vmem, size = 0x8000, scoped, tag = 'scratch operand']
  %s0 = inlined_call_operand.vmem [shape: f32[64,16], index: 0, kind: input, shape index: {}]
  %s1 = inlined_call_operand.vmem [shape: f32[16,512], index: 1, kind: input, shape index: {}]
  %s2 = inlined_call_operand.hbm [shape: f32[128,512], index: 2, kind: input, shape index: {}]
  %s3 = inlined_call_operand.vmem [shape: f32[1,512], index: 3, kind: input, shape index: {}]
  %s4 = inlined_call_operand.hbm [shape: f32[128,512], index: 4, kind: input, shape index: {}]
  %s5 = inlined_call_operand.hbm [shape: f32[128,512], index: 5, kind: input, shape index: {}]
  %s6 = inlined_call_operand.vmem [shape: f32[1,512], index: 6, kind: input, shape index: {}]
  %s7 = inlined_call_operand.hbm [shape: f32[128,512], index: 7, kind: input, shape index: {}]
  %s8 = inlined_call_operand.hbm [shape: f32[128,512], index: 8, kind: input, shape index: {}]
  %s9 = inlined_call_operand.vmem [shape: f32[1,512], index: 9, kind: input, shape index: {}]
  %s10 = inlined_call_operand.hbm [shape: f32[128,128], index: 10, kind: input, shape index: {}]
  %s11 = inlined_call_operand.vmem [shape: f32[1,128], index: 11, kind: input, shape index: {}]
  %s12 = inlined_call_operand.vmem [shape: f32[64,128], index: 12, kind: output, shape index: {}]
  %s13 = sld [smem:[#allocation0]]
  $region85: #{music_lstm_forward.1} parent=0
    _
  %s15 = ssub.s32 1, %s13
  %s16 = scalar_select 0, %s15, %s13
  $region1: #{music_lstm_forward.1} parent=0
    #allocation5 [shape = 'u8[262144]{0}', space=vmem, size = 0x40000, scoped, tag = 'input window, operand 2, single buffered']
    #allocation6 [shape = 's32[1]{0}', space=sflag, size = 0x4, scoped, tag = 'scoped memory for music_lstm_forward.1']
    #allocation7 [shape = 'u8[262144]{0}', space=vmem, size = 0x40000, scoped, tag = 'input window, operand 4, single buffered']
    #allocation8 [shape = 's32[1]{0}', space=sflag, size = 0x4, scoped, tag = 'scoped memory for music_lstm_forward.1']
    #allocation9 [shape = 'u8[262144]{0}', space=vmem, size = 0x40000, scoped, tag = 'input window, operand 5, single buffered']
    #allocation10 [shape = 'u8[262144]{0}', space=vmem, size = 0x40000, scoped, tag = 'input window, operand 7, single buffered']
    #allocation11 [shape = 's32[1]{0}', space=sflag, size = 0x4, scoped, tag = 'scoped memory for music_lstm_forward.1']
    #allocation12 [shape = 'u8[262144]{0}', space=vmem, size = 0x40000, scoped, tag = 'input window, operand 8, single buffered']
    #allocation13 [shape = 'u8[65536]{0}', space=vmem, size = 0x10000, scoped, tag = 'input window, operand 10, single buffered']
    #allocation14 [shape = 's32[1]{0}', space=sflag, size = 0x4, scoped, tag = 'scoped memory for music_lstm_forward.1']
    %17 = vsyncpa [#allocation6], 0
    %18 = vsyncpa [#allocation8], 0
    %19 = vsyncpa [#allocation11], 0
    %20 = vsyncpa [#allocation14], 0
    // Predicated region
    $region2: #{music_lstm_forward.1} parent=1 // pred_check
      _
    $region3: #{music_lstm_forward.1} parent=1 // pred_check_branch
      %22 = sbr.rel (0) target = $region5
    $region4: #{music_lstm_forward.1} parent=1 // pred_region
      _
    $region5: #{music_lstm_forward.1} parent=1 // pred_fallthru
      _
    // Predicated region
    $region6: #{music_lstm_forward.1} parent=1 // pred_check
      _
    $region7: #{music_lstm_forward.1} parent=1 // pred_check_branch
      %24 = sbr.rel (0) target = $region9
    $region8: #{music_lstm_forward.1} parent=1 // pred_region
      _
    $region9: #{music_lstm_forward.1} parent=1 // pred_fallthru
      _
    // Predicated region
    $region10: #{music_lstm_forward.1} parent=1 // pred_check
      _
    $region11: #{music_lstm_forward.1} parent=1 // pred_check_branch
      %26 = sbr.rel (0) target = $region13
    $region12: #{music_lstm_forward.1} parent=1 // pred_region
      %s28 = ssub.s32 8192, 8192
      %29 = vsyncadd [#allocation6], %s28
      %s30 = sshll.u32 [#allocation5], 4
      %s31 = int_to_ptr.vmem [resolvable:$true] %s30
      %36 = dma.hbm_to_vmem [thread:$0]  %s2, 8192, %s31, [#allocation6], 512, 512, 32
    $region13: #{music_lstm_forward.1} parent=1 // pred_fallthru
      _
    // Predicated region
    $region14: #{music_lstm_forward.1} parent=1 // pred_check
      _
    $region15: #{music_lstm_forward.1} parent=1 // pred_check_branch
      %38 = sbr.rel (0) target = $region17
    $region16: #{music_lstm_forward.1} parent=1 // pred_region
      _
    $region17: #{music_lstm_forward.1} parent=1 // pred_fallthru
      _
    // Predicated region
    $region18: #{music_lstm_forward.1} parent=1 // pred_check
      _
    $region19: #{music_lstm_forward.1} parent=1 // pred_check_branch
      %40 = sbr.rel (0) target = $region21
    $region20: #{music_lstm_forward.1} parent=1 // pred_region
      %s42 = ssub.s32 8192, 8192
      %43 = vsyncadd [#allocation8], %s42
      %s44 = sshll.u32 [#allocation7], 4
      %s45 = int_to_ptr.vmem [resolvable:$true] %s44
      %50 = dma.hbm_to_vmem [thread:$0]  %s4, 8192, %s45, [#allocation8], 512, 512, 32
    $region21: #{music_lstm_forward.1} parent=1 // pred_fallthru
      _
    // Predicated region
    $region22: #{music_lstm_forward.1} parent=1 // pred_check
      _
    $region23: #{music_lstm_forward.1} parent=1 // pred_check_branch
      %52 = sbr.rel (0) target = $region25
    $region24: #{music_lstm_forward.1} parent=1 // pred_region
      %s54 = ssub.s32 8192, 8192
      %55 = vsyncadd [#allocation8], %s54
      %s56 = sshll.u32 [#allocation9], 4
      %s57 = int_to_ptr.vmem [resolvable:$true] %s56
      %62 = dma.hbm_to_vmem [thread:$0]  %s5, 8192, %s57, [#allocation8], 512, 512, 32
    $region25: #{music_lstm_forward.1} parent=1 // pred_fallthru
      _
    // Predicated region
    $region26: #{music_lstm_forward.1} parent=1 // pred_check
      _
    $region27: #{music_lstm_forward.1} parent=1 // pred_check_branch
      %64 = sbr.rel (0) target = $region29
    $region28: #{music_lstm_forward.1} parent=1 // pred_region
      _
    $region29: #{music_lstm_forward.1} parent=1 // pred_fallthru
      _
    // Predicated region
    $region30: #{music_lstm_forward.1} parent=1 // pred_check
      _
    $region31: #{music_lstm_forward.1} parent=1 // pred_check_branch
      %66 = sbr.rel (0) target = $region33
    $region32: #{music_lstm_forward.1} parent=1 // pred_region
      %s68 = ssub.s32 8192, 8192
      %69 = vsyncadd [#allocation11], %s68
      %s70 = sshll.u32 [#allocation10], 4
      %s71 = int_to_ptr.vmem [resolvable:$true] %s70
      %76 = dma.hbm_to_vmem [thread:$0]  %s7, 8192, %s71, [#allocation11], 512, 512, 32
    $region33: #{music_lstm_forward.1} parent=1 // pred_fallthru
      _
    // Predicated region
    $region34: #{music_lstm_forward.1} parent=1 // pred_check
      _
    $region35: #{music_lstm_forward.1} parent=1 // pred_check_branch
      %78 = sbr.rel (0) target = $region37
    $region36: #{music_lstm_forward.1} parent=1 // pred_region
      %s80 = ssub.s32 8192, 8192
      %81 = vsyncadd [#allocation11], %s80
      %s82 = sshll.u32 [#allocation12], 4
      %s83 = int_to_ptr.vmem [resolvable:$true] %s82
      %88 = dma.hbm_to_vmem [thread:$0]  %s8, 8192, %s83, [#allocation11], 512, 512, 32
    $region37: #{music_lstm_forward.1} parent=1 // pred_fallthru
      _
    // Predicated region
    $region38: #{music_lstm_forward.1} parent=1 // pred_check
      _
    $region39: #{music_lstm_forward.1} parent=1 // pred_check_branch
      %90 = sbr.rel (0) target = $region41
    $region40: #{music_lstm_forward.1} parent=1 // pred_region
      _
    $region41: #{music_lstm_forward.1} parent=1 // pred_fallthru
      _
    // Predicated region
    $region42: #{music_lstm_forward.1} parent=1 // pred_check
      _
    $region43: #{music_lstm_forward.1} parent=1 // pred_check_branch
      %92 = sbr.rel (0) target = $region45
    $region44: #{music_lstm_forward.1} parent=1 // pred_region
      %s94 = ssub.s32 2048, 2048
      %95 = vsyncadd [#allocation14], %s94
      %s96 = sshll.u32 [#allocation13], 4
      %s97 = int_to_ptr.vmem [resolvable:$true] %s96
      %102 = dma.hbm_to_vmem [thread:$0]  %s10, 2048, %s97, [#allocation14], 128, 128, 8
    $region45: #{music_lstm_forward.1} parent=1 // pred_fallthru
      _
    // Predicated region
    $region46: #{music_lstm_forward.1} parent=1 // pred_check
      _
    $region47: #{music_lstm_forward.1} parent=1 // pred_check_branch
      %104 = sbr.rel (0) target = $region49
    $region48: #{music_lstm_forward.1} parent=1 // pred_region
      _
    $region49: #{music_lstm_forward.1} parent=1 // pred_fallthru
      _
    // Predicated region
    $region50: #{music_lstm_forward.1} parent=1 // pred_check
      _
    $region51: #{music_lstm_forward.1} parent=1 // pred_check_branch
      %106 = sbr.rel (0) target = $region53
    $region52: #{music_lstm_forward.1} parent=1 // pred_region
      %107 = dma.done [#allocation6], 8192
    $region53: #{music_lstm_forward.1} parent=1 // pred_fallthru
      _
    // Predicated region
    $region54: #{music_lstm_forward.1} parent=1 // pred_check
      _
    $region55: #{music_lstm_forward.1} parent=1 // pred_check_branch
      %109 = sbr.rel (0) target = $region57
    $region56: #{music_lstm_forward.1} parent=1 // pred_region
      %110 = dma.done [#allocation8], 8192
    $region57: #{music_lstm_forward.1} parent=1 // pred_fallthru
      _
    // Predicated region
    $region58: #{music_lstm_forward.1} parent=1 // pred_check
      _
    $region59: #{music_lstm_forward.1} parent=1 // pred_check_branch
      %112 = sbr.rel (0) target = $region61
    $region60: #{music_lstm_forward.1} parent=1 // pred_region
      %113 = dma.done [#allocation8], 8192
    $region61: #{music_lstm_forward.1} parent=1 // pred_fallthru
      _
    // Predicated region
    $region62: #{music_lstm_forward.1} parent=1 // pred_check
      _
    $region63: #{music_lstm_forward.1} parent=1 // pred_check_branch
      %115 = sbr.rel (0) target = $region65
    $region64: #{music_lstm_forward.1} parent=1 // pred_region
      %116 = dma.done [#allocation11], 8192
    $region65: #{music_lstm_forward.1} parent=1 // pred_fallthru
      _
    // Predicated region
    $region66: #{music_lstm_forward.1} parent=1 // pred_check
      _
    $region67: #{music_lstm_forward.1} parent=1 // pred_check_branch
      %118 = sbr.rel (0) target = $region69
    $region68: #{music_lstm_forward.1} parent=1 // pred_region
      %119 = dma.done [#allocation11], 8192
    $region69: #{music_lstm_forward.1} parent=1 // pred_fallthru
      _
    // Predicated region
    $region70: #{music_lstm_forward.1} parent=1 // pred_check
      _
    $region71: #{music_lstm_forward.1} parent=1 // pred_check_branch
      %121 = sbr.rel (0) target = $region73
    $region72: #{music_lstm_forward.1} parent=1 // pred_region
      %122 = dma.done [#allocation14], 2048
    $region73: #{music_lstm_forward.1} parent=1 // pred_fallthru
      _
    %v123 = vld [vmem:[%s0] sm:$0xff]
    %v124 = vld [vmem:[%s0 + $0x8] sm:$0xff]
    %v125 = vld [vmem:[%s0 + $0x10] sm:$0xff]
    %v126 = vld [vmem:[%s0 + $0x18] sm:$0xff]
    %v127 = vld [vmem:[%s0 + $0x20] sm:$0xff]
    %v128 = vld [vmem:[%s0 + $0x28] sm:$0xff]
    %v129 = vld [vmem:[%s0 + $0x30] sm:$0xff]
    %v130 = vld [vmem:[%s0 + $0x38] sm:$0xff]
    %v131 = vlaneseq
    %v132 = vand.u32 %v131, 127
    %v133 = vadd.s32 %v132, 128
    %v134 = vadd.s32 %v132, 256
    %v135 = vadd.s32 %v132, 384
    %vm136 = vcmp.ge.s32.totalorder %v132, 256
    %vm137 = vcmp.ge.s32.totalorder %v133, 256
    %vm138 = vcmp.ge.s32.totalorder %v134, 256
    %vm139 = vcmp.ge.s32.totalorder %v135, 256
    %vm140 = vcmp.lt.s32.totalorder %v132, 384
    %vm141 = vcmp.lt.s32.totalorder %v133, 384
    %vm142 = vcmp.lt.s32.totalorder %v134, 384
    %vm143 = vcmp.lt.s32.totalorder %v135, 384
    %vm144 = vmand %vm136, %vm140
    %vm145 = vmand %vm137, %vm141
    %vm146 = vmand %vm138, %vm142
    %vm147 = vmand %vm139, %vm143
    $region74: #{music_lstm_forward.1} parent=1
      #allocation15 [shape = 'u8[131072]{0}', space=vmem, size = 0x20000, scoped, tag = 'scoped memory for music_lstm_forward.1']
      %v148 = vld [vmem:[%s1] sm:$0xff]
      %v149 = vld [vmem:[%s1 + $0x8] sm:$0xff]
      %v150 = vld [vmem:[%s1 + $0x10] sm:$0xff]
      %v151 = vld [vmem:[%s1 + $0x18] sm:$0xff]
      %v152 = vld [vmem:[%s1 + $0x20] sm:$0xff]
      %v153 = vld [vmem:[%s1 + $0x28] sm:$0xff]
      %v154 = vld [vmem:[%s1 + $0x30] sm:$0xff]
      %v155 = vld [vmem:[%s1 + $0x38] sm:$0xff]
      %v156 = vld [vmem:[%s3] sm:$0xf]
      %v158 = vlaneseq
      %v159 = vshrl.u32 %v158, 7
      %v160 = vsub.s32 0, %v159
      %v161 = vrot.slane %v156, %v160
      %v162 = vlaneseq
      %v163 = vshrl.u32 %v162, 7
      %v164 = vsub.s32 1, %v163
      %v165 = vrot.slane %v156, %v164
      %v166 = vlaneseq
      %v167 = vshrl.u32 %v166, 7
      %v168 = vsub.s32 2, %v167
      %v169 = vrot.slane %v156, %v168
      %v170 = vlaneseq
      %v171 = vshrl.u32 %v170, 7
      %v172 = vsub.s32 3, %v171
      %v173 = vrot.slane %v156, %v172
      %vm178 = vcmask 130048
      %v180 = vsel %vm178, %v123, 0
      %v183 = vsel %vm178, %v124, 0
      %v186 = vsel %vm178, %v125, 0
      %v189 = vsel %vm178, %v126, 0
      %v192 = vsel %vm178, %v127, 0
      %v195 = vsel %vm178, %v128, 0
      %v198 = vsel %vm178, %v129, 0
      %v201 = vsel %vm178, %v130, 0
      %203 = vmatprep.subr.mxu0 %v149
      %204 = vmatpush1.msra.mxu0 %v148
      %205 = vmatprep.subr.mxu0 %v153
      %206 = vmatpush1.msra.mxu0 %v152
      %207 = vmatprep.subr.mxu0 0.0
      %208 = vmatpush1.msra.mxu0 0.0
      %209 = vmatprep.subr.mxu0 0.0
      %210 = vmatpush1.msra.mxu0 0.0
      %211 = vmatprep.subr.mxu0 0.0
      %212 = vmatpush1.msra.mxu0 0.0
      %213 = vmatprep.subr.mxu0 0.0
      %214 = vmatpush1.msra.mxu0 0.0
      %215 = vmatprep.subr.mxu0 0.0
      %216 = vmatpush1.msra.mxu0 0.0
      %217 = vmatprep.subr.mxu0 0.0
      %218 = vmatpush1.msra.mxu0 0.0
      %219 = vmatprep.subr.mxu0 0.0
      %220 = vmatpush1.msra.mxu0 0.0
      %221 = vmatprep.subr.mxu0 0.0
      %222 = vmatpush1.msra.mxu0 0.0
      %223 = vmatprep.subr.mxu0 0.0
      %224 = vmatpush1.msra.mxu0 0.0
      %225 = vmatprep.subr.mxu0 0.0
      %226 = vmatpush1.msra.mxu0 0.0
      %227 = vmatprep.subr.mxu0 0.0
      %228 = vmatpush1.msra.mxu0 0.0
      %229 = vmatprep.subr.mxu0 0.0
      %230 = vmatpush1.msra.mxu0 0.0
      %231 = vmatprep.subr.mxu0 0.0
      %232 = vmatpush1.msra.mxu0 0.0
      %233 = vmatprep.subr.mxu0 0.0
      %234 = vmatpush1.msra.mxu0 0.0
      %235 = vmatprep.subr.mxu0 0.0
      %236 = vmatpush1.msra.mxu0 0.0
      %237 = vmatprep.subr.mxu0 0.0
      %238 = vmatpush1.msra.mxu0 0.0
      %239 = vmatprep.subr.mxu0 0.0
      %240 = vmatpush1.msra.mxu0 0.0
      %241 = vmatprep.subr.mxu0 0.0
      %242 = vmatpush1.msra.mxu0 0.0
      %243 = vmatprep.subr.mxu0 0.0
      %244 = vmatpush1.msra.mxu0 0.0
      %245 = vmatprep.subr.mxu0 0.0
      %246 = vmatpush1.msra.mxu0 0.0
      %247 = vmatprep.subr.mxu0 0.0
      %248 = vmatpush1.msra.mxu0 0.0
      %249 = vmatprep.subr.mxu0 0.0
      %250 = vmatpush1.msra.mxu0 0.0
      %251 = vmatprep.subr.mxu0 0.0
      %252 = vmatpush1.msra.mxu0 0.0
      %253 = vmatprep.subr.mxu0 0.0
      %254 = vmatpush1.msra.mxu0 0.0
      %255 = vmatprep.subr.mxu0 0.0
      %256 = vmatpush1.msra.mxu0 0.0
      %257 = vmatprep.subr.mxu0 0.0
      %258 = vmatpush1.msra.mxu0 0.0
      %259 = vmatprep.subr.mxu0 0.0
      %260 = vmatpush1.msra.mxu0 0.0
      %261 = vmatprep.subr.mxu0 0.0
      %262 = vmatpush1.msra.mxu0 0.0
      %263 = vmatprep.subr.mxu0 0.0
      %264 = vmatpush1.msra.mxu0 0.0
      %265 = vmatprep.subr.mxu0 0.0
      %266 = vmatpush1.msra.mxu0 0.0
      %267 = vmatprep.mubr.f32.mxu0 0.0
      %268 = vmatmul.mubr.f32.gmra.mrb[0].mxu0 %v180
      %v269 = vpop.f32.mrb[0].mxu0
      %v270 = vadd.f32 %v161, %v269
      %v271 = vpop.f32.mrb[0].mxu0
      %v272 = vadd.f32 %v165, %v271
      %273 = vmatprep.mubr.f32.mxu0 0.0
      %274 = vmatmul.mubr.f32.gmra.mrb[0].mxu0 %v183
      %v275 = vpop.f32.mrb[0].mxu0
      %v276 = vadd.f32 %v161, %v275
      %v277 = vpop.f32.mrb[0].mxu0
      %v278 = vadd.f32 %v165, %v277
      %279 = vmatprep.mubr.f32.mxu0 0.0
      %280 = vmatmul.mubr.f32.gmra.mrb[0].mxu0 %v186
      %v281 = vpop.f32.mrb[0].mxu0
      %v282 = vadd.f32 %v161, %v281
      %v283 = vpop.f32.mrb[0].mxu0
      %v284 = vadd.f32 %v165, %v283
      %285 = vmatprep.mubr.f32.mxu0 0.0
      %286 = vmatmul.mubr.f32.gmra.mrb[0].mxu0 %v189
      %v287 = vpop.f32.mrb[0].mxu0
      %v288 = vadd.f32 %v161, %v287
      %v289 = vpop.f32.mrb[0].mxu0
      %v290 = vadd.f32 %v165, %v289
      %291 = vmatprep.mubr.f32.mxu0 0.0
      %292 = vmatmul.mubr.f32.gmra.mrb[0].mxu0 %v192
      %v293 = vpop.f32.mrb[0].mxu0
      %v294 = vadd.f32 %v161, %v293
      %v295 = vpop.f32.mrb[0].mxu0
      %v296 = vadd.f32 %v165, %v295
      %297 = vmatprep.mubr.f32.mxu0 0.0
      %298 = vmatmul.mubr.f32.gmra.mrb[0].mxu0 %v195
      %v299 = vpop.f32.mrb[0].mxu0
      %v300 = vadd.f32 %v161, %v299
      %v301 = vpop.f32.mrb[0].mxu0
      %v302 = vadd.f32 %v165, %v301
      %303 = vmatprep.mubr.f32.mxu0 0.0
      %304 = vmatmul.mubr.f32.gmra.mrb[0].mxu0 %v198
      %v305 = vpop.f32.mrb[0].mxu0
      %v306 = vadd.f32 %v161, %v305
      %v307 = vpop.f32.mrb[0].mxu0
      %v308 = vadd.f32 %v165, %v307
      %309 = vmatprep.mubr.f32.mxu0 0.0
      %310 = vmatmul.mubr.f32.gmra.mrb[0].mxu0 %v201
      %v311 = vpop.f32.mrb[0].mxu0
      %v312 = vadd.f32 %v161, %v311
      %v313 = vpop.f32.mrb[0].mxu0
      %v314 = vadd.f32 %v165, %v313
      %315 = vdwg.mxu0
      %316 = vmatprep.subr.mxu0 %v151
      %317 = vmatpush1.msra.mxu0 %v150
      %318 = vmatprep.subr.mxu0 %v155
      %319 = vmatpush1.msra.mxu0 %v154
      %320 = vmatprep.subr.mxu0 0.0
      %321 = vmatpush1.msra.mxu0 0.0
      %322 = vmatprep.subr.mxu0 0.0
      %323 = vmatpush1.msra.mxu0 0.0
      %324 = vmatprep.subr.mxu0 0.0
      %325 = vmatpush1.msra.mxu0 0.0
      %326 = vmatprep.subr.mxu0 0.0
      %327 = vmatpush1.msra.mxu0 0.0
      %328 = vmatprep.subr.mxu0 0.0
      %329 = vmatpush1.msra.mxu0 0.0
      %330 = vmatprep.subr.mxu0 0.0
      %331 = vmatpush1.msra.mxu0 0.0
      %332 = vmatprep.subr.mxu0 0.0
      %333 = vmatpush1.msra.mxu0 0.0
      %334 = vmatprep.subr.mxu0 0.0
      %335 = vmatpush1.msra.mxu0 0.0
      %336 = vmatprep.subr.mxu0 0.0
      %337 = vmatpush1.msra.mxu0 0.0
      %338 = vmatprep.subr.mxu0 0.0
      %339 = vmatpush1.msra.mxu0 0.0
      %340 = vmatprep.subr.mxu0 0.0
      %341 = vmatpush1.msra.mxu0 0.0
      %342 = vmatprep.subr.mxu0 0.0
      %343 = vmatpush1.msra.mxu0 0.0
      %344 = vmatprep.subr.mxu0 0.0
      %345 = vmatpush1.msra.mxu0 0.0
      %346 = vmatprep.subr.mxu0 0.0
      %347 = vmatpush1.msra.mxu0 0.0
      %348 = vmatprep.subr.mxu0 0.0
      %349 = vmatpush1.msra.mxu0 0.0
      %350 = vmatprep.subr.mxu0 0.0
      %351 = vmatpush1.msra.mxu0 0.0
      %352 = vmatprep.subr.mxu0 0.0
      %353 = vmatpush1.msra.mxu0 0.0
      %354 = vmatprep.subr.mxu0 0.0
      %355 = vmatpush1.msra.mxu0 0.0
      %356 = vmatprep.subr.mxu0 0.0
      %357 = vmatpush1.msra.mxu0 0.0
      %358 = vmatprep.subr.mxu0 0.0
      %359 = vmatpush1.msra.mxu0 0.0
      %360 = vmatprep.subr.mxu0 0.0
      %361 = vmatpush1.msra.mxu0 0.0
      %362 = vmatprep.subr.mxu0 0.0
      %363 = vmatpush1.msra.mxu0 0.0
      %364 = vmatprep.subr.mxu0 0.0
      %365 = vmatpush1.msra.mxu0 0.0
      %366 = vmatprep.subr.mxu0 0.0
      %367 = vmatpush1.msra.mxu0 0.0
      %368 = vmatprep.subr.mxu0 0.0
      %369 = vmatpush1.msra.mxu0 0.0
      %370 = vmatprep.subr.mxu0 0.0
      %371 = vmatpush1.msra.mxu0 0.0
      %372 = vmatprep.subr.mxu0 0.0
      %373 = vmatpush1.msra.mxu0 0.0
      %374 = vmatprep.subr.mxu0 0.0
      %375 = vmatpush1.msra.mxu0 0.0
      %376 = vmatprep.subr.mxu0 0.0
      %377 = vmatpush1.msra.mxu0 0.0
      %378 = vmatprep.subr.mxu0 0.0
      %379 = vmatpush1.msra.mxu0 0.0
      %380 = vmatprep.mubr.f32.mxu0 0.0
      %381 = vmatmul.mubr.f32.gmra.mrb[0].mxu0 %v180
      %v382 = vpop.f32.mrb[0].mxu0
      %v383 = vadd.f32 %v169, %v382
      %v384 = vpop.f32.mrb[0].mxu0
      %v385 = vadd.f32 %v173, %v384
      %386 = vmatprep.mubr.f32.mxu0 0.0
      %387 = vmatmul.mubr.f32.gmra.mrb[0].mxu0 %v183
      %v388 = vpop.f32.mrb[0].mxu0
      %v389 = vadd.f32 %v169, %v388
      %v390 = vpop.f32.mrb[0].mxu0
      %v391 = vadd.f32 %v173, %v390
      %392 = vmatprep.mubr.f32.mxu0 0.0
      %393 = vmatmul.mubr.f32.gmra.mrb[0].mxu0 %v186
      %v394 = vpop.f32.mrb[0].mxu0
      %v395 = vadd.f32 %v169, %v394
      %v396 = vpop.f32.mrb[0].mxu0
      %v397 = vadd.f32 %v173, %v396
      %398 = vmatprep.mubr.f32.mxu0 0.0
      %399 = vmatmul.mubr.f32.gmra.mrb[0].mxu0 %v189
      %v400 = vpop.f32.mrb[0].mxu0
      %v401 = vadd.f32 %v169, %v400
      %v402 = vpop.f32.mrb[0].mxu0
      %v403 = vadd.f32 %v173, %v402
      %404 = vmatprep.mubr.f32.mxu0 0.0
      %405 = vmatmul.mubr.f32.gmra.mrb[0].mxu0 %v192
      %v406 = vpop.f32.mrb[0].mxu0
      %v407 = vadd.f32 %v169, %v406
      %v408 = vpop.f32.mrb[0].mxu0
      %v409 = vadd.f32 %v173, %v408
      %410 = vmatprep.mubr.f32.mxu0 0.0
      %411 = vmatmul.mubr.f32.gmra.mrb[0].mxu0 %v195
      %v412 = vpop.f32.mrb[0].mxu0
      %v413 = vadd.f32 %v169, %v412
      %v414 = vpop.f32.mrb[0].mxu0
      %v415 = vadd.f32 %v173, %v414
      %416 = vmatprep.mubr.f32.mxu0 0.0
      %417 = vmatmul.mubr.f32.gmra.mrb[0].mxu0 %v198
      %v418 = vpop.f32.mrb[0].mxu0
      %v419 = vadd.f32 %v169, %v418
      %v420 = vpop.f32.mrb[0].mxu0
      %v421 = vadd.f32 %v173, %v420
      %422 = vmatprep.mubr.f32.mxu0 0.0
      %423 = vmatmul.mubr.f32.gmra.mrb[0].mxu0 %v201
      %v424 = vpop.f32.mrb[0].mxu0
      %v425 = vadd.f32 %v169, %v424
      %v426 = vpop.f32.mrb[0].mxu0
      %v427 = vadd.f32 %v173, %v426
      %428 = vdwg.mxu0
      %429 = vst [vmem:[#allocation15] sm:$0xff] %v270
      %430 = vst [vmem:[#allocation15 + $0x8] sm:$0xff] %v272
      %431 = vst [vmem:[#allocation15 + $0x10] sm:$0xff] %v383
      %432 = vst [vmem:[#allocation15 + $0x18] sm:$0xff] %v385
      %433 = vst [vmem:[#allocation15 + $0x20] sm:$0xff] %v276
      %434 = vst [vmem:[#allocation15 + $0x28] sm:$0xff] %v278
      %435 = vst [vmem:[#allocation15 + $0x30] sm:$0xff] %v389
      %436 = vst [vmem:[#allocation15 + $0x38] sm:$0xff] %v391
      %437 = vst [vmem:[#allocation15 + $0x40] sm:$0xff] %v282
      %438 = vst [vmem:[#allocation15 + $0x48] sm:$0xff] %v284
      %439 = vst [vmem:[#allocation15 + $0x50] sm:$0xff] %v395
      %440 = vst [vmem:[#allocation15 + $0x58] sm:$0xff] %v397
      %441 = vst [vmem:[#allocation15 + $0x60] sm:$0xff] %v288
      %442 = vst [vmem:[#allocation15 + $0x68] sm:$0xff] %v290
      %443 = vst [vmem:[#allocation15 + $0x70] sm:$0xff] %v401
      %444 = vst [vmem:[#allocation15 + $0x78] sm:$0xff] %v403
      %445 = vst [vmem:[#allocation15 + $0x80] sm:$0xff] %v294
      %446 = vst [vmem:[#allocation15 + $0x88] sm:$0xff] %v296
      %447 = vst [vmem:[#allocation15 + $0x90] sm:$0xff] %v407
      %448 = vst [vmem:[#allocation15 + $0x98] sm:$0xff] %v409
      %449 = vst [vmem:[#allocation15 + $0xa0] sm:$0xff] %v300
      %450 = vst [vmem:[#allocation15 + $0xa8] sm:$0xff] %v302
      %451 = vst [vmem:[#allocation15 + $0xb0] sm:$0xff] %v413
      %452 = vst [vmem:[#allocation15 + $0xb8] sm:$0xff] %v415
      %453 = vst [vmem:[#allocation15 + $0xc0] sm:$0xff] %v306
      %454 = vst [vmem:[#allocation15 + $0xc8] sm:$0xff] %v308
      %455 = vst [vmem:[#allocation15 + $0xd0] sm:$0xff] %v419
      %456 = vst [vmem:[#allocation15 + $0xd8] sm:$0xff] %v421
      %457 = vst [vmem:[#allocation15 + $0xe0] sm:$0xff] %v312
      %458 = vst [vmem:[#allocation15 + $0xe8] sm:$0xff] %v314
      %459 = vst [vmem:[#allocation15 + $0xf0] sm:$0xff] %v425
      %460 = vst [vmem:[#allocation15 + $0xf8] sm:$0xff] %v427
      %s461 = smul.u32 0, 4
      %s462 = smul.addr %s461, 8
      %s463 = scalar_lea.vmem [#allocation15], %s462
      %v464 = vld [vmem:[%s463] sm:$0xff]
      %v465 = vld [vmem:[%s463 + $0x8] sm:$0xff]
      %v466 = vld [vmem:[%s463 + $0x10] sm:$0xff]
      %v467 = vld [vmem:[%s463 + $0x18] sm:$0xff]
      %v468 = vld [vmem:[#allocation5] sm:$0xff]
      %v469 = vld [vmem:[#allocation5 + $0x8] sm:$0xff]
      %v470 = vld [vmem:[#allocation5 + $0x10] sm:$0xff]
      %v471 = vld [vmem:[#allocation5 + $0x18] sm:$0xff]
      %v472 = vld [vmem:[#allocation5 + $0x20] sm:$0xff]
      %v473 = vld [vmem:[#allocation5 + $0x28] sm:$0xff]
      %v474 = vld [vmem:[#allocation5 + $0x30] sm:$0xff]
      %v475 = vld [vmem:[#allocation5 + $0x38] sm:$0xff]
      %v476 = vld [vmem:[#allocation5 + $0x40] sm:$0xff]
      %v477 = vld [vmem:[#allocation5 + $0x48] sm:$0xff]
      %v478 = vld [vmem:[#allocation5 + $0x50] sm:$0xff]
      %v479 = vld [vmem:[#allocation5 + $0x58] sm:$0xff]
      %v480 = vld [vmem:[#allocation5 + $0x60] sm:$0xff]
      %v481 = vld [vmem:[#allocation5 + $0x68] sm:$0xff]
      %v482 = vld [vmem:[#allocation5 + $0x70] sm:$0xff]
      %v483 = vld [vmem:[#allocation5 + $0x78] sm:$0xff]
      %v484 = vld [vmem:[#allocation5 + $0x80] sm:$0xff]
      %v485 = vld [vmem:[#allocation5 + $0x88] sm:$0xff]
      %v486 = vld [vmem:[#allocation5 + $0x90] sm:$0xff]
      %v487 = vld [vmem:[#allocation5 + $0x98] sm:$0xff]
      %v488 = vld [vmem:[#allocation5 + $0xa0] sm:$0xff]
      %v489 = vld [vmem:[#allocation5 + $0xa8] sm:$0xff]
      %v490 = vld [vmem:[#allocation5 + $0xb0] sm:$0xff]
      %v491 = vld [vmem:[#allocation5 + $0xb8] sm:$0xff]
      %v492 = vld [vmem:[#allocation5 + $0xc0] sm:$0xff]
      %v493 = vld [vmem:[#allocation5 + $0xc8] sm:$0xff]
      %v494 = vld [vmem:[#allocation5 + $0xd0] sm:$0xff]
      %v495 = vld [vmem:[#allocation5 + $0xd8] sm:$0xff]
      %v496 = vld [vmem:[#allocation5 + $0xe0] sm:$0xff]
      %v497 = vld [vmem:[#allocation5 + $0xe8] sm:$0xff]
      %v498 = vld [vmem:[#allocation5 + $0xf0] sm:$0xff]
      %v499 = vld [vmem:[#allocation5 + $0xf8] sm:$0xff]
      %v500 = vld [vmem:[#allocation5 + $0x100] sm:$0xff]
      %v501 = vld [vmem:[#allocation5 + $0x108] sm:$0xff]
      %v502 = vld [vmem:[#allocation5 + $0x110] sm:$0xff]
      %v503 = vld [vmem:[#allocation5 + $0x118] sm:$0xff]
      %v504 = vld [vmem:[#allocation5 + $0x120] sm:$0xff]
      %v505 = vld [vmem:[#allocation5 + $0x128] sm:$0xff]
      %v506 = vld [vmem:[#allocation5 + $0x130] sm:$0xff]
      %v507 = vld [vmem:[#allocation5 + $0x138] sm:$0xff]
      %v508 = vld [vmem:[#allocation5 + $0x140] sm:$0xff]
      %v509 = vld [vmem:[#allocation5 + $0x148] sm:$0xff]
      %v510 = vld [vmem:[#allocation5 + $0x150] sm:$0xff]
      %v511 = vld [vmem:[#allocation5 + $0x158] sm:$0xff]
      %v512 = vld [vmem:[#allocation5 + $0x160] sm:$0xff]
      %v513 = vld [vmem:[#allocation5 + $0x168] sm:$0xff]
      %v514 = vld [vmem:[#allocation5 + $0x170] sm:$0xff]
      %v515 = vld [vmem:[#allocation5 + $0x178] sm:$0xff]
      %v516 = vld [vmem:[#allocation5 + $0x180] sm:$0xff]
      %v517 = vld [vmem:[#allocation5 + $0x188] sm:$0xff]
      %v518 = vld [vmem:[#allocation5 + $0x190] sm:$0xff]
      %v519 = vld [vmem:[#allocation5 + $0x198] sm:$0xff]
      %v520 = vld [vmem:[#allocation5 + $0x1a0] sm:$0xff]
      %v521 = vld [vmem:[#allocation5 + $0x1a8] sm:$0xff]
      %v522 = vld [vmem:[#allocation5 + $0x1b0] sm:$0xff]
      %v523 = vld [vmem:[#allocation5 + $0x1b8] sm:$0xff]
      %v524 = vld [vmem:[#allocation5 + $0x1c0] sm:$0xff]
      %v525 = vld [vmem:[#allocation5 + $0x1c8] sm:$0xff]
      %v526 = vld [vmem:[#allocation5 + $0x1d0] sm:$0xff]
      %v527 = vld [vmem:[#allocation5 + $0x1d8] sm:$0xff]
      %v528 = vld [vmem:[#allocation5 + $0x1e0] sm:$0xff]
      %v529 = vld [vmem:[#allocation5 + $0x1e8] sm:$0xff]
      %v530 = vld [vmem:[#allocation5 + $0x1f0] sm:$0xff]
      %v531 = vld [vmem:[#allocation5 + $0x1f8] sm:$0xff]
      %532 = vmatprep.subr.mxu0 %v469
      %533 = vmatpush1.msra.mxu0 %v468
      %534 = vmatprep.subr.mxu0 %v473
      %535 = vmatpush1.msra.mxu0 %v472
      %536 = vmatprep.subr.mxu0 %v477
      %537 = vmatpush1.msra.mxu0 %v476
      %538 = vmatprep.subr.mxu0 %v481
      %539 = vmatpush1.msra.mxu0 %v480
      %540 = vmatprep.subr.mxu0 %v485
      %541 = vmatpush1.msra.mxu0 %v484
      %542 = vmatprep.subr.mxu0 %v489
      %543 = vmatpush1.msra.mxu0 %v488
      %544 = vmatprep.subr.mxu0 %v493
      %545 = vmatpush1.msra.mxu0 %v492
      %546 = vmatprep.subr.mxu0 %v497
      %547 = vmatpush1.msra.mxu0 %v496
      %548 = vmatprep.subr.mxu0 %v501
      %549 = vmatpush1.msra.mxu0 %v500
      %550 = vmatprep.subr.mxu0 %v505
      %551 = vmatpush1.msra.mxu0 %v504
      %552 = vmatprep.subr.mxu0 %v509
      %553 = vmatpush1.msra.mxu0 %v508
      %554 = vmatprep.subr.mxu0 %v513
      %555 = vmatpush1.msra.mxu0 %v512
      %556 = vmatprep.subr.mxu0 %v517
      %557 = vmatpush1.msra.mxu0 %v516
      %558 = vmatprep.subr.mxu0 %v521
      %559 = vmatpush1.msra.mxu0 %v520
      %560 = vmatprep.subr.mxu0 %v525
      %561 = vmatpush1.msra.mxu0 %v524
      %562 = vmatprep.subr.mxu0 %v529
      %563 = vmatpush1.msra.mxu0 %v528
      %564 = vmatprep.subr.mxu0 0.0
      %565 = vmatpush1.msra.mxu0 0.0
      %566 = vmatprep.subr.mxu0 0.0
      %567 = vmatpush1.msra.mxu0 0.0
      %568 = vmatprep.subr.mxu0 0.0
      %569 = vmatpush1.msra.mxu0 0.0
      %570 = vmatprep.subr.mxu0 0.0
      %571 = vmatpush1.msra.mxu0 0.0
      %572 = vmatprep.subr.mxu0 0.0
      %573 = vmatpush1.msra.mxu0 0.0
      %574 = vmatprep.subr.mxu0 0.0
      %575 = vmatpush1.msra.mxu0 0.0
      %576 = vmatprep.subr.mxu0 0.0
      %577 = vmatpush1.msra.mxu0 0.0
      %578 = vmatprep.subr.mxu0 0.0
      %579 = vmatpush1.msra.mxu0 0.0
      %580 = vmatprep.subr.mxu0 0.0
      %581 = vmatpush1.msra.mxu0 0.0
      %582 = vmatprep.subr.mxu0 0.0
      %583 = vmatpush1.msra.mxu0 0.0
      %584 = vmatprep.subr.mxu0 0.0
      %585 = vmatpush1.msra.mxu0 0.0
      %586 = vmatprep.subr.mxu0 0.0
      %587 = vmatpush1.msra.mxu0 0.0
      %588 = vmatprep.subr.mxu0 0.0
      %589 = vmatpush1.msra.mxu0 0.0
      %590 = vmatprep.subr.mxu0 0.0
      %591 = vmatpush1.msra.mxu0 0.0
      %592 = vmatprep.subr.mxu0 0.0
      %593 = vmatpush1.msra.mxu0 0.0
      %594 = vmatprep.subr.mxu0 0.0
      %595 = vmatpush1.msra.mxu0 0.0
      %596 = vmatprep.mubr.f32.mxu0 0.0
      %597 = vmatmul.mubr.f32.gmra.mrb[0].mxu0 0.0
      %v598 = vpop.f32.mrb[0].mxu0
      %v599 = vadd.f32 0.0, %v598
      %v600 = vpop.f32.mrb[0].mxu0
      %v601 = vadd.f32 0.0, %v600
      %602 = vdwg.mxu0
      %603 = vmatprep.subr.mxu0 %v471
      %604 = vmatpush1.msra.mxu0 %v470
      %605 = vmatprep.subr.mxu0 %v475
      %606 = vmatpush1.msra.mxu0 %v474
      %607 = vmatprep.subr.mxu0 %v479
      %608 = vmatpush1.msra.mxu0 %v478
      %609 = vmatprep.subr.mxu0 %v483
      %610 = vmatpush1.msra.mxu0 %v482
      %611 = vmatprep.subr.mxu0 %v487
      %612 = vmatpush1.msra.mxu0 %v486
      %613 = vmatprep.subr.mxu0 %v491
      %614 = vmatpush1.msra.mxu0 %v490
      %615 = vmatprep.subr.mxu0 %v495
      %616 = vmatpush1.msra.mxu0 %v494
      %617 = vmatprep.subr.mxu0 %v499
      %618 = vmatpush1.msra.mxu0 %v498
      %619 = vmatprep.subr.mxu0 %v503
      %620 = vmatpush1.msra.mxu0 %v502
      %621 = vmatprep.subr.mxu0 %v507
      %622 = vmatpush1.msra.mxu0 %v506
      %623 = vmatprep.subr.mxu0 %v511
      %624 = vmatpush1.msra.mxu0 %v510
      %625 = vmatprep.subr.mxu0 %v515
      %626 = vmatpush1.msra.mxu0 %v514
      %627 = vmatprep.subr.mxu0 %v519
      %628 = vmatpush1.msra.mxu0 %v518
      %629 = vmatprep.subr.mxu0 %v523
      %630 = vmatpush1.msra.mxu0 %v522
      %631 = vmatprep.subr.mxu0 %v527
      %632 = vmatpush1.msra.mxu0 %v526
      %633 = vmatprep.subr.mxu0 %v531
      %634 = vmatpush1.msra.mxu0 %v530
      %635 = vmatprep.subr.mxu0 0.0
      %636 = vmatpush1.msra.mxu0 0.0
      %637 = vmatprep.subr.mxu0 0.0
      %638 = vmatpush1.msra.mxu0 0.0
      %639 = vmatprep.subr.mxu0 0.0
      %640 = vmatpush1.msra.mxu0 0.0
      %641 = vmatprep.subr.mxu0 0.0
      %642 = vmatpush1.msra.mxu0 0.0
      %643 = vmatprep.subr.mxu0 0.0
      %644 = vmatpush1.msra.mxu0 0.0
      %645 = vmatprep.subr.mxu0 0.0
      %646 = vmatpush1.msra.mxu0 0.0
      %647 = vmatprep.subr.mxu0 0.0
      %648 = vmatpush1.msra.mxu0 0.0
      %649 = vmatprep.subr.mxu0 0.0
      %650 = vmatpush1.msra.mxu0 0.0
      %651 = vmatprep.subr.mxu0 0.0
      %652 = vmatpush1.msra.mxu0 0.0
      %653 = vmatprep.subr.mxu0 0.0
      %654 = vmatpush1.msra.mxu0 0.0
      %655 = vmatprep.subr.mxu0 0.0
      %656 = vmatpush1.msra.mxu0 0.0
      %657 = vmatprep.subr.mxu0 0.0
      %658 = vmatpush1.msra.mxu0 0.0
      %659 = vmatprep.subr.mxu0 0.0
      %660 = vmatpush1.msra.mxu0 0.0
      %661 = vmatprep.subr.mxu0 0.0
      %662 = vmatpush1.msra.mxu0 0.0
      %663 = vmatprep.subr.mxu0 0.0
      %664 = vmatpush1.msra.mxu0 0.0
      %665 = vmatprep.subr.mxu0 0.0
      %666 = vmatpush1.msra.mxu0 0.0
      %667 = vmatprep.mubr.f32.mxu0 0.0
      %668 = vmatmul.mubr.f32.gmra.mrb[0].mxu0 0.0
      %v669 = vpop.f32.mrb[0].mxu0
      %v670 = vadd.f32 0.0, %v669
      %v671 = vpop.f32.mrb[0].mxu0
      %v672 = vadd.f32 0.0, %v671
      %673 = vdwg.mxu0
      %v674 = vadd.f32 %v464, %v599
      %v675 = vadd.f32 %v465, %v601
      %v676 = vadd.f32 %v466, %v670
      %v677 = vadd.f32 %v467, %v672
      %v678 = vtanh.pop %v674
      %v679 = vtanh.pop %v675
      %v680 = vtanh.pop %v676
      %v681 = vtanh.pop %v677
      %v682 = vxor.u32 %v674, 2147483648
      %v683 = vxor.u32 %v675, 2147483648
      %v684 = vxor.u32 %v676, 2147483648
      %v685 = vxor.u32 %v677, 2147483648
      %v686 = vmul.f32 %v682, 1.442695
      %v687 = vpow.pop %v686
      %v688 = vmul.f32 %v683, 1.442695
      %v689 = vpow.pop %v688
      %v690 = vmul.f32 %v684, 1.442695
      %v691 = vpow.pop %v690
      %v692 = vmul.f32 %v685, 1.442695
      %v693 = vpow.pop %v692
      %v694 = vadd.f32 %v687, 1.0
      %v695 = vadd.f32 %v689, 1.0
      %v696 = vadd.f32 %v691, 1.0
      %v697 = vadd.f32 %v693, 1.0
      %v698 = vrcp.pop %v694
      %v699 = vmul.f32 1.0, %v698
      %v700 = vrcp.pop %v695
      %v701 = vmul.f32 1.0, %v700
      %v702 = vrcp.pop %v696
      %v703 = vmul.f32 1.0, %v702
      %v704 = vrcp.pop %v697
      %v705 = vmul.f32 1.0, %v704
      %v706 = vsel %vm144, %v678, %v699
      %v707 = vsel %vm145, %v679, %v701
      %v708 = vsel %vm146, %v680, %v703
      %v709 = vsel %vm147, %v681, %v705
      %v710 = vmul.f32 %v707, 0.0
      %v711 = vmul.f32 %v706, %v708
      %v712 = vadd.f32 %v710, %v711
      %v713 = vtanh.pop %v712
      %v714 = vmul.f32 %v709, %v713
      %715 = vst [vmem:[#allocation2] sm:$0xff] %v714
      %s716 = smul.u32 1, 4
      %s717 = smul.addr %s716, 8
      %s718 = scalar_lea.vmem [#allocation15], %s717
      %v719 = vld [vmem:[%s718] sm:$0xff]
      %v720 = vld [vmem:[%s718 + $0x8] sm:$0xff]
      %v721 = vld [vmem:[%s718 + $0x10] sm:$0xff]
      %v722 = vld [vmem:[%s718 + $0x18] sm:$0xff]
      %v723 = vld [vmem:[#allocation5] sm:$0xff]
      %v724 = vld [vmem:[#allocation5 + $0x8] sm:$0xff]
      %v725 = vld [vmem:[#allocation5 + $0x10] sm:$0xff]
      %v726 = vld [vmem:[#allocation5 + $0x18] sm:$0xff]
      %v727 = vld [vmem:[#allocation5 + $0x20] sm:$0xff]
      %v728 = vld [vmem:[#allocation5 + $0x28] sm:$0xff]
      %v729 = vld [vmem:[#allocation5 + $0x30] sm:$0xff]
      %v730 = vld [vmem:[#allocation5 + $0x38] sm:$0xff]
      %v731 = vld [vmem:[#allocation5 + $0x40] sm:$0xff]
      %v732 = vld [vmem:[#allocation5 + $0x48] sm:$0xff]
      %v733 = vld [vmem:[#allocation5 + $0x50] sm:$0xff]
      %v734 = vld [vmem:[#allocation5 + $0x58] sm:$0xff]
      %v735 = vld [vmem:[#allocation5 + $0x60] sm:$0xff]
      %v736 = vld [vmem:[#allocation5 + $0x68] sm:$0xff]
      %v737 = vld [vmem:[#allocation5 + $0x70] sm:$0xff]
      %v738 = vld [vmem:[#allocation5 + $0x78] sm:$0xff]
      %v739 = vld [vmem:[#allocation5 + $0x80] sm:$0xff]
      %v740 = vld [vmem:[#allocation5 + $0x88] sm:$0xff]
      %v741 = vld [vmem:[#allocation5 + $0x90] sm:$0xff]
      %v742 = vld [vmem:[#allocation5 + $0x98] sm:$0xff]
      %v743 = vld [vmem:[#allocation5 + $0xa0] sm:$0xff]
      %v744 = vld [vmem:[#allocation5 + $0xa8] sm:$0xff]
      %v745 = vld [vmem:[#allocation5 + $0xb0] sm:$0xff]
      %v746 = vld [vmem:[#allocation5 + $0xb8] sm:$0xff]
      %v747 = vld [vmem:[#allocation5 + $0xc0] sm:$0xff]
      %v748 = vld [vmem:[#allocation5 + $0xc8] sm:$0xff]
      %v749 = vld [vmem:[#allocation5 + $0xd0] sm:$0xff]
      %v750 = vld [vmem:[#allocation5 + $0xd8] sm:$0xff]
      %v751 = vld [vmem:[#allocation5 + $0xe0] sm:$0xff]
      %v752 = vld [vmem:[#allocation5 + $0xe8] sm:$0xff]
      %v753 = vld [vmem:[#allocation5 + $0xf0] sm:$0xff]
      %v754 = vld [vmem:[#allocation5 + $0xf8] sm:$0xff]
      %v755 = vld [vmem:[#allocation5 + $0x100] sm:$0xff]
      %v756 = vld [vmem:[#allocation5 + $0x108] sm:$0xff]
      %v757 = vld [vmem:[#allocation5 + $0x110] sm:$0xff]
      %v758 = vld [vmem:[#allocation5 + $0x118] sm:$0xff]
      %v759 = vld [vmem:[#allocation5 + $0x120] sm:$0xff]
      %v760 = vld [vmem:[#allocation5 + $0x128] sm:$0xff]
      %v761 = vld [vmem:[#allocation5 + $0x130] sm:$0xff]
      %v762 = vld [vmem:[#allocation5 + $0x138] sm:$0xff]
      %v763 = vld [vmem:[#allocation5 + $0x140] sm:$0xff]
      %v764 = vld [vmem:[#allocation5 + $0x148] sm:$0xff]
      %v765 = vld [vmem:[#allocation5 + $0x150] sm:$0xff]
      %v766 = vld [vmem:[#allocation5 + $0x158] sm:$0xff]
      %v767 = vld [vmem:[#allocation5 + $0x160] sm:$0xff]
      %v768 = vld [vmem:[#allocation5 + $0x168] sm:$0xff]
      %v769 = vld [vmem:[#allocation5 + $0x170] sm:$0xff]
      %v770 = vld [vmem:[#allocation5 + $0x178] sm:$0xff]
      %v771 = vld [vmem:[#allocation5 + $0x180] sm:$0xff]
      %v772 = vld [vmem:[#allocation5 + $0x188] sm:$0xff]
      %v773 = vld [vmem:[#allocation5 + $0x190] sm:$0xff]
      %v774 = vld [vmem:[#allocation5 + $0x198] sm:$0xff]
      %v775 = vld [vmem:[#allocation5 + $0x1a0] sm:$0xff]
      %v776 = vld [vmem:[#allocation5 + $0x1a8] sm:$0xff]
      %v777 = vld [vmem:[#allocation5 + $0x1b0] sm:$0xff]
      %v778 = vld [vmem:[#allocation5 + $0x1b8] sm:$0xff]
      %v779 = vld [vmem:[#allocation5 + $0x1c0] sm:$0xff]
      %v780 = vld [vmem:[#allocation5 + $0x1c8] sm:$0xff]
      %v781 = vld [vmem:[#allocation5 + $0x1d0] sm:$0xff]
      %v782 = vld [vmem:[#allocation5 + $0x1d8] sm:$0xff]
      %v783 = vld [vmem:[#allocation5 + $0x1e0] sm:$0xff]
      %v784 = vld [vmem:[#allocation5 + $0x1e8] sm:$0xff]
      %v785 = vld [vmem:[#allocation5 + $0x1f0] sm:$0xff]
      %v786 = vld [vmem:[#allocation5 + $0x1f8] sm:$0xff]
      %787 = vmatprep.subr.mxu0 %v724
      %788 = vmatpush1.msra.mxu0 %v723
      %789 = vmatprep.subr.mxu0 %v728
      %790 = vmatpush1.msra.mxu0 %v727
      %791 = vmatprep.subr.mxu0 %v732
      %792 = vmatpush1.msra.mxu0 %v731
      %793 = vmatprep.subr.mxu0 %v736
      %794 = vmatpush1.msra.mxu0 %v735
      %795 = vmatprep.subr.mxu0 %v740
      %796 = vmatpush1.msra.mxu0 %v739
      %797 = vmatprep.subr.mxu0 %v744
      %798 = vmatpush1.msra.mxu0 %v743
      %799 = vmatprep.subr.mxu0 %v748
      %800 = vmatpush1.msra.mxu0 %v747
      %801 = vmatprep.subr.mxu0 %v752
      %802 = vmatpush1.msra.mxu0 %v751
      %803 = vmatprep.subr.mxu0 %v756
      %804 = vmatpush1.msra.mxu0 %v755
      %805 = vmatprep.subr.mxu0 %v760
      %806 = vmatpush1.msra.mxu0 %v759
      %807 = vmatprep.subr.mxu0 %v764
      %808 = vmatpush1.msra.mxu0 %v763
      %809 = vmatprep.subr.mxu0 %v768
      %810 = vmatpush1.msra.mxu0 %v767
      %811 = vmatprep.subr.mxu0 %v772
      %812 = vmatpush1.msra.mxu0 %v771
      %813 = vmatprep.subr.mxu0 %v776
      %814 = vmatpush1.msra.mxu0 %v775
      %815 = vmatprep.subr.mxu0 %v780
      %816 = vmatpush1.msra.mxu0 %v779
      %817 = vmatprep.subr.mxu0 %v784
      %818 = vmatpush1.msra.mxu0 %v783
      %819 = vmatprep.subr.mxu0 0.0
      %820 = vmatpush1.msra.mxu0 0.0
      %821 = vmatprep.subr.mxu0 0.0
      %822 = vmatpush1.msra.mxu0 0.0
      %823 = vmatprep.subr.mxu0 0.0
      %824 = vmatpush1.msra.mxu0 0.0
      %825 = vmatprep.subr.mxu0 0.0
      %826 = vmatpush1.msra.mxu0 0.0
      %827 = vmatprep.subr.mxu0 0.0
      %828 = vmatpush1.msra.mxu0 0.0
      %829 = vmatprep.subr.mxu0 0.0
      %830 = vmatpush1.msra.mxu0 0.0
      %831 = vmatprep.subr.mxu0 0.0
      %832 = vmatpush1.msra.mxu0 0.0
      %833 = vmatprep.subr.mxu0 0.0
      %834 = vmatpush1.msra.mxu0 0.0
      %835 = vmatprep.subr.mxu0 0.0
      %836 = vmatpush1.msra.mxu0 0.0
      %837 = vmatprep.subr.mxu0 0.0
      %838 = vmatpush1.msra.mxu0 0.0
      %839 = vmatprep.subr.mxu0 0.0
      %840 = vmatpush1.msra.mxu0 0.0
      %841 = vmatprep.subr.mxu0 0.0
      %842 = vmatpush1.msra.mxu0 0.0
      %843 = vmatprep.subr.mxu0 0.0
      %844 = vmatpush1.msra.mxu0 0.0
      %845 = vmatprep.subr.mxu0 0.0
      %846 = vmatpush1.msra.mxu0 0.0
      %847 = vmatprep.subr.mxu0 0.0
      %848 = vmatpush1.msra.mxu0 0.0
      %849 = vmatprep.subr.mxu0 0.0
      %850 = vmatpush1.msra.mxu0 0.0
      %851 = vmatprep.mubr.f32.mxu0 0.0
      %852 = vmatmul.mubr.f32.gmra.mrb[0].mxu0 %v714
      %v853 = vpop.f32.mrb[0].mxu0
      %v854 = vadd.f32 0.0, %v853
      %v855 = vpop.f32.mrb[0].mxu0
      %v856 = vadd.f32 0.0, %v855
      %857 = vdwg.mxu0
      %858 = vmatprep.subr.mxu0 %v726
      %859 = vmatpush1.msra.mxu0 %v725
      %860 = vmatprep.subr.mxu0 %v730
      %861 = vmatpush1.msra.mxu0 %v729
      %862 = vmatprep.subr.mxu0 %v734
      %863 = vmatpush1.msra.mxu0 %v733
      %864 = vmatprep.subr.mxu0 %v738
      %865 = vmatpush1.msra.mxu0 %v737
      %866 = vmatprep.subr.mxu0 %v742
      %867 = vmatpush1.msra.mxu0 %v741
      %868 = vmatprep.subr.mxu0 %v746
      %869 = vmatpush1.msra.mxu0 %v745
      %870 = vmatprep.subr.mxu0 %v750
      %871 = vmatpush1.msra.mxu0 %v749
      %872 = vmatprep.subr.mxu0 %v754
      %873 = vmatpush1.msra.mxu0 %v753
      %874 = vmatprep.subr.mxu0 %v758
      %875 = vmatpush1.msra.mxu0 %v757
      %876 = vmatprep.subr.mxu0 %v762
      %877 = vmatpush1.msra.mxu0 %v761
      %878 = vmatprep.subr.mxu0 %v766
      %879 = vmatpush1.msra.mxu0 %v765
      %880 = vmatprep.subr.mxu0 %v770
      %881 = vmatpush1.msra.mxu0 %v769
      %882 = vmatprep.subr.mxu0 %v774
      %883 = vmatpush1.msra.mxu0 %v773
      %884 = vmatprep.subr.mxu0 %v778
      %885 = vmatpush1.msra.mxu0 %v777
      %886 = vmatprep.subr.mxu0 %v782
      %887 = vmatpush1.msra.mxu0 %v781
      %888 = vmatprep.subr.mxu0 %v786
      %889 = vmatpush1.msra.mxu0 %v785
      %890 = vmatprep.subr.mxu0 0.0
      %891 = vmatpush1.msra.mxu0 0.0
      %892 = vmatprep.subr.mxu0 0.0
      %893 = vmatpush1.msra.mxu0 0.0
      %894 = vmatprep.subr.mxu0 0.0
      %895 = vmatpush1.msra.mxu0 0.0
      %896 = vmatprep.subr.mxu0 0.0
      %897 = vmatpush1.msra.mxu0 0.0
      %898 = vmatprep.subr.mxu0 0.0
      %899 = vmatpush1.msra.mxu0 0.0
      %900 = vmatprep.subr.mxu0 0.0
      %901 = vmatpush1.msra.mxu0 0.0
      %902 = vmatprep.subr.mxu0 0.0
      %903 = vmatpush1.msra.mxu0 0.0
      %904 = vmatprep.subr.mxu0 0.0
      %905 = vmatpush1.msra.mxu0 0.0
      %906 = vmatprep.subr.mxu0 0.0
      %907 = vmatpush1.msra.mxu0 0.0
      %908 = vmatprep.subr.mxu0 0.0
      %909 = vmatpush1.msra.mxu0 0.0
      %910 = vmatprep.subr.mxu0 0.0
      %911 = vmatpush1.msra.mxu0 0.0
      %912 = vmatprep.subr.mxu0 0.0
      %913 = vmatpush1.msra.mxu0 0.0
      %914 = vmatprep.subr.mxu0 0.0
      %915 = vmatpush1.msra.mxu0 0.0
      %916 = vmatprep.subr.mxu0 0.0
      %917 = vmatpush1.msra.mxu0 0.0
      %918 = vmatprep.subr.mxu0 0.0
      %919 = vmatpush1.msra.mxu0 0.0
      %920 = vmatprep.subr.mxu0 0.0
      %921 = vmatpush1.msra.mxu0 0.0
      %922 = vmatprep.mubr.f32.mxu0 0.0
      %923 = vmatmul.mubr.f32.gmra.mrb[0].mxu0 %v714
      %v924 = vpop.f32.mrb[0].mxu0
      %v925 = vadd.f32 0.0, %v924
      %v926 = vpop.f32.mrb[0].mxu0
      %v927 = vadd.f32 0.0, %v926
      %928 = vdwg.mxu0
      %v929 = vadd.f32 %v719, %v854
      %v930 = vadd.f32 %v720, %v856
      %v931 = vadd.f32 %v721, %v925
      %v932 = vadd.f32 %v722, %v927
      %v933 = vtanh.pop %v929
      %v934 = vtanh.pop %v930
      %v935 = vtanh.pop %v931
      %v936 = vtanh.pop %v932
      %v937 = vxor.u32 %v929, 2147483648
      %v938 = vxor.u32 %v930, 2147483648
      %v939 = vxor.u32 %v931, 2147483648
      %v940 = vxor.u32 %v932, 2147483648
      %v941 = vmul.f32 %v937, 1.442695
      %v942 = vpow.pop %v941
      %v943 = vmul.f32 %v938, 1.442695
      %v944 = vpow.pop %v943
      %v945 = vmul.f32 %v939, 1.442695
      %v946 = vpow.pop %v945
      %v947 = vmul.f32 %v940, 1.442695
      %v948 = vpow.pop %v947
      %v949 = vadd.f32 %v942, 1.0
      %v950 = vadd.f32 %v944, 1.0
      %v951 = vadd.f32 %v946, 1.0
      %v952 = vadd.f32 %v948, 1.0
      %v953 = vrcp.pop %v949
      %v954 = vmul.f32 1.0, %v953
      %v955 = vrcp.pop %v950
      %v956 = vmul.f32 1.0, %v955
      %v957 = vrcp.pop %v951
      %v958 = vmul.f32 1.0, %v957
      %v959 = vrcp.pop %v952
      %v960 = vmul.f32 1.0, %v959
      %v961 = vsel %vm144, %v933, %v954
      %v962 = vsel %vm145, %v934, %v956
      %v963 = vsel %vm146, %v935, %v958
      %v964 = vsel %vm147, %v936, %v960
      %v965 = vmul.f32 %v962, %v712
      %v966 = vmul.f32 %v961, %v963
      %v967 = vadd.f32 %v965, %v966
      %v968 = vtanh.pop %v967
      %v969 = vmul.f32 %v964, %v968
      %s970 = scalar_lea.vmem [#allocation2], 8
      %971 = vst [vmem:[%s970] sm:$0xff] %v969
      %s972 = smul.u32 2, 4
      %s973 = smul.addr %s972, 8
      %s974 = scalar_lea.vmem [#allocation15], %s973
      %v975 = vld [vmem:[%s974] sm:$0xff]
      %v976 = vld [vmem:[%s974 + $0x8] sm:$0xff]
      %v977 = vld [vmem:[%s974 + $0x10] sm:$0xff]
      %v978 = vld [vmem:[%s974 + $0x18] sm:$0xff]
      %v979 = vld [vmem:[#allocation5] sm:$0xff]
      %v980 = vld [vmem:[#allocation5 + $0x8] sm:$0xff]
      %v981 = vld [vmem:[#allocation5 + $0x10] sm:$0xff]
      %v982 = vld [vmem:[#allocation5 + $0x18] sm:$0xff]
      %v983 = vld [vmem:[#allocation5 + $0x20] sm:$0xff]
      %v984 = vld [vmem:[#allocation5 + $0x28] sm:$0xff]
      %v985 = vld [vmem:[#allocation5 + $0x30] sm:$0xff]
      %v986 = vld [vmem:[#allocation5 + $0x38] sm:$0xff]
      %v987 = vld [vmem:[#allocation5 + $0x40] sm:$0xff]
      %v988 = vld [vmem:[#allocation5 + $0x48] sm:$0xff]
      %v989 = vld [vmem:[#allocation5 + $0x50] sm:$0xff]
      %v990 = vld [vmem:[#allocation5 + $0x58] sm:$0xff]
      %v991 = vld [vmem:[#allocation5 + $0x60] sm:$0xff]
      %v992 = vld [vmem:[#allocation5 + $0x68] sm:$0xff]
      %v993 = vld [vmem:[#allocation5 + $0x70] sm:$0xff]
      %v994 = vld [vmem:[#allocation5 + $0x78] sm:$0xff]
      %v995 = vld [vmem:[#allocation5 + $0x80] sm:$0xff]
      %v996 = vld [vmem:[#allocation5 + $0x88] sm:$0xff]
      %v997 = vld [vmem:[#allocation5 + $0x90] sm:$0xff]
      %v998 = vld [vmem:[#allocation5 + $0x98] sm:$0xff]
      %v999 = vld [vmem:[#allocation5 + $0xa0] sm:$0xff]
      %v1000 = vld [vmem:[#allocation5 + $0xa8] sm:$0xff]
      %v1001 = vld [vmem:[#allocation5 + $0xb0] sm:$0xff]
      %v1002 = vld [vmem:[#allocation5 + $0xb8] sm:$0xff]
      %v1003 = vld [vmem:[#allocation5 + $0xc0] sm:$0xff]
      %v1004 = vld [vmem:[#allocation5 + $0xc8] sm:$0xff]
      %v1005 = vld [vmem:[#allocation5 + $0xd0] sm:$0xff]
      %v1006 = vld [vmem:[#allocation5 + $0xd8] sm:$0xff]
      %v1007 = vld [vmem:[#allocation5 + $0xe0] sm:$0xff]
      %v1008 = vld [vmem:[#allocation5 + $0xe8] sm:$0xff]
      %v1009 = vld [vmem:[#allocation5 + $0xf0] sm:$0xff]
      %v1010 = vld [vmem:[#allocation5 + $0xf8] sm:$0xff]
      %v1011 = vld [vmem:[#allocation5 + $0x100] sm:$0xff]
      %v1012 = vld [vmem:[#allocation5 + $0x108] sm:$0xff]
      %v1013 = vld [vmem:[#allocation5 + $0x110] sm:$0xff]
      %v1014 = vld [vmem:[#allocation5 + $0x118] sm:$0xff]
      %v1015 = vld [vmem:[#allocation5 + $0x120] sm:$0xff]
      %v1016 = vld [vmem:[#allocation5 + $0x128] sm:$0xff]
      %v1017 = vld [vmem:[#allocation5 + $0x130] sm:$0xff]
      %v1018 = vld [vmem:[#allocation5 + $0x138] sm:$0xff]
      %v1019 = vld [vmem:[#allocation5 + $0x140] sm:$0xff]
      %v1020 = vld [vmem:[#allocation5 + $0x148] sm:$0xff]
      %v1021 = vld [vmem:[#allocation5 + $0x150] sm:$0xff]
      %v1022 = vld [vmem:[#allocation5 + $0x158] sm:$0xff]
      %v1023 = vld [vmem:[#allocation5 + $0x160] sm:$0xff]
      %v1024 = vld [vmem:[#allocation5 + $0x168] sm:$0xff]
      %v1025 = vld [vmem:[#allocation5 + $0x170] sm:$0xff]
      %v1026 = vld [vmem:[#allocation5 + $0x178] sm:$0xff]
      %v1027 = vld [vmem:[#allocation5 + $0x180] sm:$0xff]
      %v1028 = vld [vmem:[#allocation5 + $0x188] sm:$0xff]
      %v1029 = vld [vmem:[#allocation5 + $0x190] sm:$0xff]
      %v1030 = vld [vmem:[#allocation5 + $0x198] sm:$0xff]
      %v1031 = vld [vmem:[#allocation5 + $0x1a0] sm:$0xff]
      %v1032 = vld [vmem:[#allocation5 + $0x1a8] sm:$0xff]
      %v1033 = vld [vmem:[#allocation5 + $0x1b0] sm:$0xff]
      %v1034 = vld [vmem:[#allocation5 + $0x1b8] sm:$0xff]
      %v1035 = vld [vmem:[#allocation5 + $0x1c0] sm:$0xff]
      %v1036 = vld [vmem:[#allocation5 + $0x1c8] sm:$0xff]
      %v1037 = vld [vmem:[#allocation5 + $0x1d0] sm:$0xff]
      %v1038 = vld [vmem:[#allocation5 + $0x1d8] sm:$0xff]
      %v1039 = vld [vmem:[#allocation5 + $0x1e0] sm:$0xff]
      %v1040 = vld [vmem:[#allocation5 + $0x1e8] sm:$0xff]
      %v1041 = vld [vmem:[#allocation5 + $0x1f0] sm:$0xff]
      %v1042 = vld [vmem:[#allocation5 + $0x1f8] sm:$0xff]
      %1043 = vmatprep.subr.mxu0 %v980
      %1044 = vmatpush1.msra.mxu0 %v979
      %1045 = vmatprep.subr.mxu0 %v984
      %1046 = vmatpush1.msra.mxu0 %v983
      %1047 = vmatprep.subr.mxu0 %v988
      %1048 = vmatpush1.msra.mxu0 %v987
      %1049 = vmatprep.subr.mxu0 %v992
      %1050 = vmatpush1.msra.mxu0 %v991
      %1051 = vmatprep.subr.mxu0 %v996
      %1052 = vmatpush1.msra.mxu0 %v995
      %1053 = vmatprep.subr.mxu0 %v1000
      %1054 = vmatpush1.msra.mxu0 %v999
      %1055 = vmatprep.subr.mxu0 %v1004
      %1056 = vmatpush1.msra.mxu0 %v1003
      %1057 = vmatprep.subr.mxu0 %v1008
      %1058 = vmatpush1.msra.mxu0 %v1007
      %1059 = vmatprep.subr.mxu0 %v1012
      %1060 = vmatpush1.msra.mxu0 %v1011
      %1061 = vmatprep.subr.mxu0 %v1016
      %1062 = vmatpush1.msra.mxu0 %v1015
      %1063 = vmatprep.subr.mxu0 %v1020
      %1064 = vmatpush1.msra.mxu0 %v1019
      %1065 = vmatprep.subr.mxu0 %v1024
      %1066 = vmatpush1.msra.mxu0 %v1023
      %1067 = vmatprep.subr.mxu0 %v1028
      %1068 = vmatpush1.msra.mxu0 %v1027
      %1069 = vmatprep.subr.mxu0 %v1032
      %1070 = vmatpush1.msra.mxu0 %v1031
      %1071 = vmatprep.subr.mxu0 %v1036
      %1072 = vmatpush1.msra.mxu0 %v1035
      %1073 = vmatprep.subr.mxu0 %v1040
      %1074 = vmatpush1.msra.mxu0 %v1039
      %1075 = vmatprep.subr.mxu0 0.0
      %1076 = vmatpush1.msra.mxu0 0.0
      %1077 = vmatprep.subr.mxu0 0.0
      %1078 = vmatpush1.msra.mxu0 0.0
      %1079 = vmatprep.subr.mxu0 0.0
      %1080 = vmatpush1.msra.mxu0 0.0
      %1081 = vmatprep.subr.mxu0 0.0
      %1082 = vmatpush1.msra.mxu0 0.0
      %1083 = vmatprep.subr.mxu0 0.0
      %1084 = vmatpush1.msra.mxu0 0.0
      %1085 = vmatprep.subr.mxu0 0.0
      %1086 = vmatpush1.msra.mxu0 0.0
      %1087 = vmatprep.subr.mxu0 0.0
      %1088 = vmatpush1.msra.mxu0 0.0
      %1089 = vmatprep.subr.mxu0 0.0
      %1090 = vmatpush1.msra.mxu0 0.0
      %1091 = vmatprep.subr.mxu0 0.0
      %1092 = vmatpush1.msra.mxu0 0.0
      %1093 = vmatprep.subr.mxu0 0.0
      %1094 = vmatpush1.msra.mxu0 0.0
      %1095 = vmatprep.subr.mxu0 0.0
      %1096 = vmatpush1.msra.mxu0 0.0
      %1097 = vmatprep.subr.mxu0 0.0
      %1098 = vmatpush1.msra.mxu0 0.0
      %1099 = vmatprep.subr.mxu0 0.0
      %1100 = vmatpush1.msra.mxu0 0.0
      %1101 = vmatprep.subr.mxu0 0.0
      %1102 = vmatpush1.msra.mxu0 0.0
      %1103 = vmatprep.subr.mxu0 0.0
      %1104 = vmatpush1.msra.mxu0 0.0
      %1105 = vmatprep.subr.mxu0 0.0
      %1106 = vmatpush1.msra.mxu0 0.0
      %1107 = vmatprep.mubr.f32.mxu0 0.0
      %1108 = vmatmul.mubr.f32.gmra.mrb[0].mxu0 %v969
      %v1109 = vpop.f32.mrb[0].mxu0
      %v1110 = vadd.f32 0.0, %v1109
      %v1111 = vpop.f32.mrb[0].mxu0
      %v1112 = vadd.f32 0.0, %v1111
      %1113 = vdwg.mxu0
      %1114 = vmatprep.subr.mxu0 %v982
      %1115 = vmatpush1.msra.mxu0 %v981
      %1116 = vmatprep.subr.mxu0 %v986
      %1117 = vmatpush1.msra.mxu0 %v985
      %1118 = vmatprep.subr.mxu0 %v990
      %1119 = vmatpush1.msra.mxu0 %v989
      %1120 = vmatprep.subr.mxu0 %v994
      %1121 = vmatpush1.msra.mxu0 %v993
      %1122 = vmatprep.subr.mxu0 %v998
      %1123 = vmatpush1.msra.mxu0 %v997
      %1124 = vmatprep.subr.mxu0 %v1002
      %1125 = vmatpush1.msra.mxu0 %v1001
      %1126 = vmatprep.subr.mxu0 %v1006
      %1127 = vmatpush1.msra.mxu0 %v1005
      %1128 = vmatprep.subr.mxu0 %v1010
      %1129 = vmatpush1.msra.mxu0 %v1009
      %1130 = vmatprep.subr.mxu0 %v1014
      %1131 = vmatpush1.msra.mxu0 %v1013
      %1132 = vmatprep.subr.mxu0 %v1018
      %1133 = vmatpush1.msra.mxu0 %v1017
      %1134 = vmatprep.subr.mxu0 %v1022
      %1135 = vmatpush1.msra.mxu0 %v1021
      %1136 = vmatprep.subr.mxu0 %v1026
      %1137 = vmatpush1.msra.mxu0 %v1025
      %1138 = vmatprep.subr.mxu0 %v1030
      %1139 = vmatpush1.msra.mxu0 %v1029
      %1140 = vmatprep.subr.mxu0 %v1034
      %1141 = vmatpush1.msra.mxu0 %v1033
      %1142 = vmatprep.subr.mxu0 %v1038
      %1143 = vmatpush1.msra.mxu0 %v1037
      %1144 = vmatprep.subr.mxu0 %v1042
      %1145 = vmatpush1.msra.mxu0 %v1041
      %1146 = vmatprep.subr.mxu0 0.0
      %1147 = vmatpush1.msra.mxu0 0.0
      %1148 = vmatprep.subr.mxu0 0.0
      %1149 = vmatpush1.msra.mxu0 0.0
      %1150 = vmatprep.subr.mxu0 0.0
      %1151 = vmatpush1.msra.mxu0 0.0
      %1152 = vmatprep.subr.mxu0 0.0
      %1153 = vmatpush1.msra.mxu0 0.0
      %1154 = vmatprep.subr.mxu0 0.0
      %1155 = vmatpush1.msra.mxu0 0.0
      %1156 = vmatprep.subr.mxu0 0.0
      %1157 = vmatpush1.msra.mxu0 0.0
      %1158 = vmatprep.subr.mxu0 0.0
      %1159 = vmatpush1.msra.mxu0 0.0
      %1160 = vmatprep.subr.mxu0 0.0
      %1161 = vmatpush1.msra.mxu0 0.0
      %1162 = vmatprep.subr.mxu0 0.0
      %1163 = vmatpush1.msra.mxu0 0.0
      %1164 = vmatprep.subr.mxu0 0.0
      %1165 = vmatpush1.msra.mxu0 0.0
      %1166 = vmatprep.subr.mxu0 0.0
      %1167 = vmatpush1.msra.mxu0 0.0
      %1168 = vmatprep.subr.mxu0 0.0
      %1169 = vmatpush1.msra.mxu0 0.0
      %1170 = vmatprep.subr.mxu0 0.0
      %1171 = vmatpush1.msra.mxu0 0.0
      %1172 = vmatprep.subr.mxu0 0.0
      %1173 = vmatpush1.msra.mxu0 0.0
      %1174 = vmatprep.subr.mxu0 0.0
      %1175 = vmatpush1.msra.mxu0 0.0
      %1176 = vmatprep.subr.mxu0 0.0
      %1177 = vmatpush1.msra.mxu0 0.0
      %1178 = vmatprep.mubr.f32.mxu0 0.0
      %1179 = vmatmul.mubr.f32.gmra.mrb[0].mxu0 %v969
      %v1180 = vpop.f32.mrb[0].mxu0
      %v1181 = vadd.f32 0.0, %v1180
      %v1182 = vpop.f32.mrb[0].mxu0
      %v1183 = vadd.f32 0.0, %v1182
      %1184 = vdwg.mxu0
      %v1185 = vadd.f32 %v975, %v1110
      %v1186 = vadd.f32 %v976, %v1112
      %v1187 = vadd.f32 %v977, %v1181
      %v1188 = vadd.f32 %v978, %v1183
      %v1189 = vtanh.pop %v1185
      %v1190 = vtanh.pop %v1186
      %v1191 = vtanh.pop %v1187
      %v1192 = vtanh.pop %v1188
      %v1193 = vxor.u32 %v1185, 2147483648
      %v1194 = vxor.u32 %v1186, 2147483648
      %v1195 = vxor.u32 %v1187, 2147483648
      %v1196 = vxor.u32 %v1188, 2147483648
      %v1197 = vmul.f32 %v1193, 1.442695
      %v1198 = vpow.pop %v1197
      %v1199 = vmul.f32 %v1194, 1.442695
      %v1200 = vpow.pop %v1199
      %v1201 = vmul.f32 %v1195, 1.442695
      %v1202 = vpow.pop %v1201
      %v1203 = vmul.f32 %v1196, 1.442695
      %v1204 = vpow.pop %v1203
      %v1205 = vadd.f32 %v1198, 1.0
      %v1206 = vadd.f32 %v1200, 1.0
      %v1207 = vadd.f32 %v1202, 1.0
      %v1208 = vadd.f32 %v1204, 1.0
      %v1209 = vrcp.pop %v1205
      %v1210 = vmul.f32 1.0, %v1209
      %v1211 = vrcp.pop %v1206
      %v1212 = vmul.f32 1.0, %v1211
      %v1213 = vrcp.pop %v1207
      %v1214 = vmul.f32 1.0, %v1213
      %v1215 = vrcp.pop %v1208
      %v1216 = vmul.f32 1.0, %v1215
      %v1217 = vsel %vm144, %v1189, %v1210
      %v1218 = vsel %vm145, %v1190, %v1212
      %v1219 = vsel %vm146, %v1191, %v1214
      %v1220 = vsel %vm147, %v1192, %v1216
      %v1221 = vmul.f32 %v1218, %v967
      %v1222 = vmul.f32 %v1217, %v1219
      %v1223 = vadd.f32 %v1221, %v1222
      %v1224 = vtanh.pop %v1223
      %v1225 = vmul.f32 %v1220, %v1224
      %s1226 = scalar_lea.vmem [#allocation2], 16
      %1227 = vst [vmem:[%s1226] sm:$0xff] %v1225
      %s1228 = smul.u32 3, 4
      %s1229 = smul.addr %s1228, 8
      %s1230 = scalar_lea.vmem [#allocation15], %s1229
      %v1231 = vld [vmem:[%s1230] sm:$0xff]
      %v1232 = vld [vmem:[%s1230 + $0x8] sm:$0xff]
      %v1233 = vld [vmem:[%s1230 + $0x10] sm:$0xff]
      %v1234 = vld [vmem:[%s1230 + $0x18] sm:$0xff]
      %v1235 = vld [vmem:[#allocation5] sm:$0xff]
      %v1236 = vld [vmem:[#allocation5 + $0x8] sm:$0xff]
      %v1237 = vld [vmem:[#allocation5 + $0x10] sm:$0xff]
      %v1238 = vld [vmem:[#allocation5 + $0x18] sm:$0xff]
      %v1239 = vld [vmem:[#allocation5 + $0x20] sm:$0xff]
      %v1240 = vld [vmem:[#allocation5 + $0x28] sm:$0xff]
      %v1241 = vld [vmem:[#allocation5 + $0x30] sm:$0xff]
      %v1242 = vld [vmem:[#allocation5 + $0x38] sm:$0xff]
      %v1243 = vld [vmem:[#allocation5 + $0x40] sm:$0xff]
      %v1244 = vld [vmem:[#allocation5 + $0x48] sm:$0xff]
      %v1245 = vld [vmem:[#allocation5 + $0x50] sm:$0xff]
      %v1246 = vld [vmem:[#allocation5 + $0x58] sm:$0xff]
      %v1247 = vld [vmem:[#allocation5 + $0x60] sm:$0xff]
      %v1248 = vld [vmem:[#allocation5 + $0x68] sm:$0xff]
      %v1249 = vld [vmem:[#allocation5 + $0x70] sm:$0xff]
      %v1250 = vld [vmem:[#allocation5 + $0x78] sm:$0xff]
      %v1251 = vld [vmem:[#allocation5 + $0x80] sm:$0xff]
      %v1252 = vld [vmem:[#allocation5 + $0x88] sm:$0xff]
      %v1253 = vld [vmem:[#allocation5 + $0x90] sm:$0xff]
      %v1254 = vld [vmem:[#allocation5 + $0x98] sm:$0xff]
      %v1255 = vld [vmem:[#allocation5 + $0xa0] sm:$0xff]
      %v1256 = vld [vmem:[#allocation5 + $0xa8] sm:$0xff]
      %v1257 = vld [vmem:[#allocation5 + $0xb0] sm:$0xff]
      %v1258 = vld [vmem:[#allocation5 + $0xb8] sm:$0xff]
      %v1259 = vld [vmem:[#allocation5 + $0xc0] sm:$0xff]
      %v1260 = vld [vmem:[#allocation5 + $0xc8] sm:$0xff]
      %v1261 = vld [vmem:[#allocation5 + $0xd0] sm:$0xff]
      %v1262 = vld [vmem:[#allocation5 + $0xd8] sm:$0xff]
      %v1263 = vld [vmem:[#allocation5 + $0xe0] sm:$0xff]
      %v1264 = vld [vmem:[#allocation5 + $0xe8] sm:$0xff]
      %v1265 = vld [vmem:[#allocation5 + $0xf0] sm:$0xff]
      %v1266 = vld [vmem:[#allocation5 + $0xf8] sm:$0xff]
      %v1267 = vld [vmem:[#allocation5 + $0x100] sm:$0xff]
      %v1268 = vld [vmem:[#allocation5 + $0x108] sm:$0xff]
      %v1269 = vld [vmem:[#allocation5 + $0x110] sm:$0xff]
      %v1270 = vld [vmem:[#allocation5 + $0x118] sm:$0xff]
      %v1271 = vld [vmem:[#allocation5 + $0x120] sm:$0xff]
      %v1272 = vld [vmem:[#allocation5 + $0x128] sm:$0xff]
      %v1273 = vld [vmem:[#allocation5 + $0x130] sm:$0xff]
      %v1274 = vld [vmem:[#allocation5 + $0x138] sm:$0xff]
      %v1275 = vld [vmem:[#allocation5 + $0x140] sm:$0xff]
      %v1276 = vld [vmem:[#allocation5 + $0x148] sm:$0xff]
      %v1277 = vld [vmem:[#allocation5 + $0x150] sm:$0xff]
      %v1278 = vld [vmem:[#allocation5 + $0x158] sm:$0xff]
      %v1279 = vld [vmem:[#allocation5 + $0x160] sm:$0xff]
      %v1280 = vld [vmem:[#allocation5 + $0x168] sm:$0xff]
      %v1281 = vld [vmem:[#allocation5 + $0x170] sm:$0xff]
      %v1282 = vld [vmem:[#allocation5 + $0x178] sm:$0xff]
      %v1283 = vld [vmem:[#allocation5 + $0x180] sm:$0xff]
      %v1284 = vld [vmem:[#allocation5 + $0x188] sm:$0xff]
      %v1285 = vld [vmem:[#allocation5 + $0x190] sm:$0xff]
      %v1286 = vld [vmem:[#allocation5 + $0x198] sm:$0xff]
      %v1287 = vld [vmem:[#allocation5 + $0x1a0] sm:$0xff]
      %v1288 = vld [vmem:[#allocation5 + $0x1a8] sm:$0xff]
      %v1289 = vld [vmem:[#allocation5 + $0x1b0] sm:$0xff]
      %v1290 = vld [vmem:[#allocation5 + $0x1b8] sm:$0xff]
      %v1291 = vld [vmem:[#allocation5 + $0x1c0] sm:$0xff]
      %v1292 = vld [vmem:[#allocation5 + $0x1c8] sm:$0xff]
      %v1293 = vld [vmem:[#allocation5 + $0x1d0] sm:$0xff]
      %v1294 = vld [vmem:[#allocation5 + $0x1d8] sm:$0xff]
      %v1295 = vld [vmem:[#allocation5 + $0x1e0] sm:$0xff]
      %v1296 = vld [vmem:[#allocation5 + $0x1e8] sm:$0xff]
      %v1297 = vld [vmem:[#allocation5 + $0x1f0] sm:$0xff]
      %v1298 = vld [vmem:[#allocation5 + $0x1f8] sm:$0xff]
      %1299 = vmatprep.subr.mxu0 %v1236
      %1300 = vmatpush1.msra.mxu0 %v1235
      %1301 = vmatprep.subr.mxu0 %v1240
      %1302 = vmatpush1.msra.mxu0 %v1239
      %1303 = vmatprep.subr.mxu0 %v1244
      %1304 = vmatpush1.msra.mxu0 %v1243
      %1305 = vmatprep.subr.mxu0 %v1248
      %1306 = vmatpush1.msra.mxu0 %v1247
      %1307 = vmatprep.subr.mxu0 %v1252
      %1308 = vmatpush1.msra.mxu0 %v1251
      %1309 = vmatprep.subr.mxu0 %v1256
      %1310 = vmatpush1.msra.mxu0 %v1255
      %1311 = vmatprep.subr.mxu0 %v1260
      %1312 = vmatpush1.msra.mxu0 %v1259
      %1313 = vmatprep.subr.mxu0 %v1264
      %1314 = vmatpush1.msra.mxu0 %v1263
      %1315 = vmatprep.subr.mxu0 %v1268
      %1316 = vmatpush1.msra.mxu0 %v1267
      %1317 = vmatprep.subr.mxu0 %v1272
      %1318 = vmatpush1.msra.mxu0 %v1271
      %1319 = vmatprep.subr.mxu0 %v1276
      %1320 = vmatpush1.msra.mxu0 %v1275
      %1321 = vmatprep.subr.mxu0 %v1280
      %1322 = vmatpush1.msra.mxu0 %v1279
      %1323 = vmatprep.subr.mxu0 %v1284
      %1324 = vmatpush1.msra.mxu0 %v1283
      %1325 = vmatprep.subr.mxu0 %v1288
      %1326 = vmatpush1.msra.mxu0 %v1287
      %1327 = vmatprep.subr.mxu0 %v1292
      %1328 = vmatpush1.msra.mxu0 %v1291
      %1329 = vmatprep.subr.mxu0 %v1296
      %1330 = vmatpush1.msra.mxu0 %v1295
      %1331 = vmatprep.subr.mxu0 0.0
      %1332 = vmatpush1.msra.mxu0 0.0
      %1333 = vmatprep.subr.mxu0 0.0
      %1334 = vmatpush1.msra.mxu0 0.0
      %1335 = vmatprep.subr.mxu0 0.0
      %1336 = vmatpush1.msra.mxu0 0.0
      %1337 = vmatprep.subr.mxu0 0.0
      %1338 = vmatpush1.msra.mxu0 0.0
      %1339 = vmatprep.subr.mxu0 0.0
      %1340 = vmatpush1.msra.mxu0 0.0
      %1341 = vmatprep.subr.mxu0 0.0
      %1342 = vmatpush1.msra.mxu0 0.0
      %1343 = vmatprep.subr.mxu0 0.0
      %1344 = vmatpush1.msra.mxu0 0.0
      %1345 = vmatprep.subr.mxu0 0.0
      %1346 = vmatpush1.msra.mxu0 0.0
      %1347 = vmatprep.subr.mxu0 0.0
      %1348 = vmatpush1.msra.mxu0 0.0
      %1349 = vmatprep.subr.mxu0 0.0
      %1350 = vmatpush1.msra.mxu0 0.0
      %1351 = vmatprep.subr.mxu0 0.0
      %1352 = vmatpush1.msra.mxu0 0.0
      %1353 = vmatprep.subr.mxu0 0.0
      %1354 = vmatpush1.msra.mxu0 0.0
      %1355 = vmatprep.subr.mxu0 0.0
      %1356 = vmatpush1.msra.mxu0 0.0
      %1357 = vmatprep.subr.mxu0 0.0
      %1358 = vmatpush1.msra.mxu0 0.0
      %1359 = vmatprep.subr.mxu0 0.0
      %1360 = vmatpush1.msra.mxu0 0.0
      %1361 = vmatprep.subr.mxu0 0.0
      %1362 = vmatpush1.msra.mxu0 0.0
      %1363 = vmatprep.mubr.f32.mxu0 0.0
      %1364 = vmatmul.mubr.f32.gmra.mrb[0].mxu0 %v1225
      %v1365 = vpop.f32.mrb[0].mxu0
      %v1366 = vadd.f32 0.0, %v1365
      %v1367 = vpop.f32.mrb[0].mxu0
      %v1368 = vadd.f32 0.0, %v1367
      %1369 = vdwg.mxu0
      %1370 = vmatprep.subr.mxu0 %v1238
      %1371 = vmatpush1.msra.mxu0 %v1237
      %1372 = vmatprep.subr.mxu0 %v1242
      %1373 = vmatpush1.msra.mxu0 %v1241
      %1374 = vmatprep.subr.mxu0 %v1246
      %1375 = vmatpush1.msra.mxu0 %v1245
      %1376 = vmatprep.subr.mxu0 %v1250
      %1377 = vmatpush1.msra.mxu0 %v1249
      %1378 = vmatprep.subr.mxu0 %v1254
      %1379 = vmatpush1.msra.mxu0 %v1253
      %1380 = vmatprep.subr.mxu0 %v1258
      %1381 = vmatpush1.msra.mxu0 %v1257
      %1382 = vmatprep.subr.mxu0 %v1262
      %1383 = vmatpush1.msra.mxu0 %v1261
      %1384 = vmatprep.subr.mxu0 %v1266
      %1385 = vmatpush1.msra.mxu0 %v1265
      %1386 = vmatprep.subr.mxu0 %v1270
      %1387 = vmatpush1.msra.mxu0 %v1269
      %1388 = vmatprep.subr.mxu0 %v1274
      %1389 = vmatpush1.msra.mxu0 %v1273
      %1390 = vmatprep.subr.mxu0 %v1278
      %1391 = vmatpush1.msra.mxu0 %v1277
      %1392 = vmatprep.subr.mxu0 %v1282
      %1393 = vmatpush1.msra.mxu0 %v1281
      %1394 = vmatprep.subr.mxu0 %v1286
      %1395 = vmatpush1.msra.mxu0 %v1285
      %1396 = vmatprep.subr.mxu0 %v1290
      %1397 = vmatpush1.msra.mxu0 %v1289
      %1398 = vmatprep.subr.mxu0 %v1294
      %1399 = vmatpush1.msra.mxu0 %v1293
      %1400 = vmatprep.subr.mxu0 %v1298
      %1401 = vmatpush1.msra.mxu0 %v1297
      %1402 = vmatprep.subr.mxu0 0.0
      %1403 = vmatpush1.msra.mxu0 0.0
      %1404 = vmatprep.subr.mxu0 0.0
      %1405 = vmatpush1.msra.mxu0 0.0
      %1406 = vmatprep.subr.mxu0 0.0
      %1407 = vmatpush1.msra.mxu0 0.0
      %1408 = vmatprep.subr.mxu0 0.0
      %1409 = vmatpush1.msra.mxu0 0.0
      %1410 = vmatprep.subr.mxu0 0.0
      %1411 = vmatpush1.msra.mxu0 0.0
      %1412 = vmatprep.subr.mxu0 0.0
      %1413 = vmatpush1.msra.mxu0 0.0
      %1414 = vmatprep.subr.mxu0 0.0
      %1415 = vmatpush1.msra.mxu0 0.0
      %1416 = vmatprep.subr.mxu0 0.0
      %1417 = vmatpush1.msra.mxu0 0.0
      %1418 = vmatprep.subr.mxu0 0.0
      %1419 = vmatpush1.msra.mxu0 0.0
      %1420 = vmatprep.subr.mxu0 0.0
      %1421 = vmatpush1.msra.mxu0 0.0
      %1422 = vmatprep.subr.mxu0 0.0
      %1423 = vmatpush1.msra.mxu0 0.0
      %1424 = vmatprep.subr.mxu0 0.0
      %1425 = vmatpush1.msra.mxu0 0.0
      %1426 = vmatprep.subr.mxu0 0.0
      %1427 = vmatpush1.msra.mxu0 0.0
      %1428 = vmatprep.subr.mxu0 0.0
      %1429 = vmatpush1.msra.mxu0 0.0
      %1430 = vmatprep.subr.mxu0 0.0
      %1431 = vmatpush1.msra.mxu0 0.0
      %1432 = vmatprep.subr.mxu0 0.0
      %1433 = vmatpush1.msra.mxu0 0.0
      %1434 = vmatprep.mubr.f32.mxu0 0.0
      %1435 = vmatmul.mubr.f32.gmra.mrb[0].mxu0 %v1225
      %v1436 = vpop.f32.mrb[0].mxu0
      %v1437 = vadd.f32 0.0, %v1436
      %v1438 = vpop.f32.mrb[0].mxu0
      %v1439 = vadd.f32 0.0, %v1438
      %1440 = vdwg.mxu0
      %v1441 = vadd.f32 %v1231, %v1366
      %v1442 = vadd.f32 %v1232, %v1368
      %v1443 = vadd.f32 %v1233, %v1437
      %v1444 = vadd.f32 %v1234, %v1439
      %v1445 = vtanh.pop %v1441
      %v1446 = vtanh.pop %v1442
      %v1447 = vtanh.pop %v1443
      %v1448 = vtanh.pop %v1444
      %v1449 = vxor.u32 %v1441, 2147483648
      %v1450 = vxor.u32 %v1442, 2147483648
      %v1451 = vxor.u32 %v1443, 2147483648
      %v1452 = vxor.u32 %v1444, 2147483648
      %v1453 = vmul.f32 %v1449, 1.442695
      %v1454 = vpow.pop %v1453
      %v1455 = vmul.f32 %v1450, 1.442695
      %v1456 = vpow.pop %v1455
      %v1457 = vmul.f32 %v1451, 1.442695
      %v1458 = vpow.pop %v1457
      %v1459 = vmul.f32 %v1452, 1.442695
      %v1460 = vpow.pop %v1459
      %v1461 = vadd.f32 %v1454, 1.0
      %v1462 = vadd.f32 %v1456, 1.0
      %v1463 = vadd.f32 %v1458, 1.0
      %v1464 = vadd.f32 %v1460, 1.0
      %v1465 = vrcp.pop %v1461
      %v1466 = vmul.f32 1.0, %v1465
      %v1467 = vrcp.pop %v1462
      %v1468 = vmul.f32 1.0, %v1467
      %v1469 = vrcp.pop %v1463
      %v1470 = vmul.f32 1.0, %v1469
      %v1471 = vrcp.pop %v1464
      %v1472 = vmul.f32 1.0, %v1471
      %v1473 = vsel %vm144, %v1445, %v1466
      %v1474 = vsel %vm145, %v1446, %v1468
      %v1475 = vsel %vm146, %v1447, %v1470
      %v1476 = vsel %vm147, %v1448, %v1472
      %v1477 = vmul.f32 %v1474, %v1223
      %v1478 = vmul.f32 %v1473, %v1475
      %v1479 = vadd.f32 %v1477, %v1478
      %v1480 = vtanh.pop %v1479
      %v1481 = vmul.f32 %v1476, %v1480
      %s1482 = scalar_lea.vmem [#allocation2], 24
      %1483 = vst [vmem:[%s1482] sm:$0xff] %v1481
      %s1484 = smul.u32 4, 4
      %s1485 = smul.addr %s1484, 8
      %s1486 = scalar_lea.vmem [#allocation15], %s1485
      %v1487 = vld [vmem:[%s1486] sm:$0xff]
      %v1488 = vld [vmem:[%s1486 + $0x8] sm:$0xff]
      %v1489 = vld [vmem:[%s1486 + $0x10] sm:$0xff]
      %v1490 = vld [vmem:[%s1486 + $0x18] sm:$0xff]
      %v1491 = vld [vmem:[#allocation5] sm:$0xff]
      %v1492 = vld [vmem:[#allocation5 + $0x8] sm:$0xff]
      %v1493 = vld [vmem:[#allocation5 + $0x10] sm:$0xff]
      %v1494 = vld [vmem:[#allocation5 + $0x18] sm:$0xff]
      %v1495 = vld [vmem:[#allocation5 + $0x20] sm:$0xff]
      %v1496 = vld [vmem:[#allocation5 + $0x28] sm:$0xff]
      %v1497 = vld [vmem:[#allocation5 + $0x30] sm:$0xff]
      %v1498 = vld [vmem:[#allocation5 + $0x38] sm:$0xff]
      %v1499 = vld [vmem:[#allocation5 + $0x40] sm:$0xff]
      %v1500 = vld [vmem:[#allocation5 + $0x48] sm:$0xff]
      %v1501 = vld [vmem:[#allocation5 + $0x50] sm:$0xff]
      %v1502 = vld [vmem:[#allocation5 + $0x58] sm:$0xff]
      %v1503 = vld [vmem:[#allocation5 + $0x60] sm:$0xff]
      %v1504 = vld [vmem:[#allocation5 + $0x68] sm:$0xff]
      %v1505 = vld [vmem:[#allocation5 + $0x70] sm:$0xff]
      %v1506 = vld [vmem:[#allocation5 + $0x78] sm:$0xff]
      %v1507 = vld [vmem:[#allocation5 + $0x80] sm:$0xff]
      %v1508 = vld [vmem:[#allocation5 + $0x88] sm:$0xff]
      %v1509 = vld [vmem:[#allocation5 + $0x90] sm:$0xff]
      %v1510 = vld [vmem:[#allocation5 + $0x98] sm:$0xff]
      %v1511 = vld [vmem:[#allocation5 + $0xa0] sm:$0xff]
      %v1512 = vld [vmem:[#allocation5 + $0xa8] sm:$0xff]
      %v1513 = vld [vmem:[#allocation5 + $0xb0] sm:$0xff]
      %v1514 = vld [vmem:[#allocation5 + $0xb8] sm:$0xff]
      %v1515 = vld [vmem:[#allocation5 + $0xc0] sm:$0xff]
      %v1516 = vld [vmem:[#allocation5 + $0xc8] sm:$0xff]
      %v1517 = vld [vmem:[#allocation5 + $0xd0] sm:$0xff]
      %v1518 = vld [vmem:[#allocation5 + $0xd8] sm:$0xff]
      %v1519 = vld [vmem:[#allocation5 + $0xe0] sm:$0xff]
      %v1520 = vld [vmem:[#allocation5 + $0xe8] sm:$0xff]
      %v1521 = vld [vmem:[#allocation5 + $0xf0] sm:$0xff]
      %v1522 = vld [vmem:[#allocation5 + $0xf8] sm:$0xff]
      %v1523 = vld [vmem:[#allocation5 + $0x100] sm:$0xff]
      %v1524 = vld [vmem:[#allocation5 + $0x108] sm:$0xff]
      %v1525 = vld [vmem:[#allocation5 + $0x110] sm:$0xff]
      %v1526 = vld [vmem:[#allocation5 + $0x118] sm:$0xff]
      %v1527 = vld [vmem:[#allocation5 + $0x120] sm:$0xff]
      %v1528 = vld [vmem:[#allocation5 + $0x128] sm:$0xff]
      %v1529 = vld [vmem:[#allocation5 + $0x130] sm:$0xff]
      %v1530 = vld [vmem:[#allocation5 + $0x138] sm:$0xff]
      %v1531 = vld [vmem:[#allocation5 + $0x140] sm:$0xff]
      %v1532 = vld [vmem:[#allocation5 + $0x148] sm:$0xff]
      %v1533 = vld [vmem:[#allocation5 + $0x150] sm:$0xff]
      %v1534 = vld [vmem:[#allocation5 + $0x158] sm:$0xff]
      %v1535 = vld [vmem:[#allocation5 + $0x160] sm:$0xff]
      %v1536 = vld [vmem:[#allocation5 + $0x168] sm:$0xff]
      %v1537 = vld [vmem:[#allocation5 + $0x170] sm:$0xff]
      %v1538 = vld [vmem:[#allocation5 + $0x178] sm:$0xff]
      %v1539 = vld [vmem:[#allocation5 + $0x180] sm:$0xff]
      %v1540 = vld [vmem:[#allocation5 + $0x188] sm:$0xff]
      %v1541 = vld [vmem:[#allocation5 + $0x190] sm:$0xff]
      %v1542 = vld [vmem:[#allocation5 + $0x198] sm:$0xff]
      %v1543 = vld [vmem:[#allocation5 + $0x1a0] sm:$0xff]
      %v1544 = vld [vmem:[#allocation5 + $0x1a8] sm:$0xff]
      %v1545 = vld [vmem:[#allocation5 + $0x1b0] sm:$0xff]
      %v1546 = vld [vmem:[#allocation5 + $0x1b8] sm:$0xff]
      %v1547 = vld [vmem:[#allocation5 + $0x1c0] sm:$0xff]
      %v1548 = vld [vmem:[#allocation5 + $0x1c8] sm:$0xff]
      %v1549 = vld [vmem:[#allocation5 + $0x1d0] sm:$0xff]
      %v1550 = vld [vmem:[#allocation5 + $0x1d8] sm:$0xff]
      %v1551 = vld [vmem:[#allocation5 + $0x1e0] sm:$0xff]
      %v1552 = vld [vmem:[#allocation5 + $0x1e8] sm:$0xff]
      %v1553 = vld [vmem:[#allocation5 + $0x1f0] sm:$0xff]
      %v1554 = vld [vmem:[#allocation5 + $0x1f8] sm:$0xff]
      %1555 = vmatprep.subr.mxu0 %v1492
      %1556 = vmatpush1.msra.mxu0 %v1491
      %1557 = vmatprep.subr.mxu0 %v1496
      %1558 = vmatpush1.msra.mxu0 %v1495
      %1559 = vmatprep.subr.mxu0 %v1500
      %1560 = vmatpush1.msra.mxu0 %v1499
      %1561 = vmatprep.subr.mxu0 %v1504
      %1562 = vmatpush1.msra.mxu0 %v1503
      %1563 = vmatprep.subr.mxu0 %v1508
      %1564 = vmatpush1.msra.mxu0 %v1507
      %1565 = vmatprep.subr.mxu0 %v1512
      %1566 = vmatpush1.msra.mxu0 %v1511
      %1567 = vmatprep.subr.mxu0 %v1516
      %1568 = vmatpush1.msra.mxu0 %v1515
      %1569 = vmatprep.subr.mxu0 %v1520
      %1570 = vmatpush1.msra.mxu0 %v1519
      %1571 = vmatprep.subr.mxu0 %v1524
      %1572 = vmatpush1.msra.mxu0 %v1523
      %1573 = vmatprep.subr.mxu0 %v1528
      %1574 = vmatpush1.msra.mxu0 %v1527
      %1575 = vmatprep.subr.mxu0 %v1532
      %1576 = vmatpush1.msra.mxu0 %v1531
      %1577 = vmatprep.subr.mxu0 %v1536
      %1578 = vmatpush1.msra.mxu0 %v1535
      %1579 = vmatprep.subr.mxu0 %v1540
      %1580 = vmatpush1.msra.mxu0 %v1539
      %1581 = vmatprep.subr.mxu0 %v1544
      %1582 = vmatpush1.msra.mxu0 %v1543
      %1583 = vmatprep.subr.mxu0 %v1548
      %1584 = vmatpush1.msra.mxu0 %v1547
      %1585 = vmatprep.subr.mxu0 %v1552
      %1586 = vmatpush1.msra.mxu0 %v1551
      %1587 = vmatprep.subr.mxu0 0.0
      %1588 = vmatpush1.msra.mxu0 0.0
      %1589 = vmatprep.subr.mxu0 0.0
      %1590 = vmatpush1.msra.mxu0 0.0
      %1591 = vmatprep.subr.mxu0 0.0
      %1592 = vmatpush1.msra.mxu0 0.0
      %1593 = vmatprep.subr.mxu0 0.0
      %1594 = vmatpush1.msra.mxu0 0.0
      %1595 = vmatprep.subr.mxu0 0.0
      %1596 = vmatpush1.msra.mxu0 0.0
      %1597 = vmatprep.subr.mxu0 0.0
      %1598 = vmatpush1.msra.mxu0 0.0
      %1599 = vmatprep.subr.mxu0 0.0
      %1600 = vmatpush1.msra.mxu0 0.0
      %1601 = vmatprep.subr.mxu0 0.0
      %1602 = vmatpush1.msra.mxu0 0.0
      %1603 = vmatprep.subr.mxu0 0.0
      %1604 = vmatpush1.msra.mxu0 0.0
      %1605 = vmatprep.subr.mxu0 0.0
      %1606 = vmatpush1.msra.mxu0 0.0
      %1607 = vmatprep.subr.mxu0 0.0
      %1608 = vmatpush1.msra.mxu0 0.0
      %1609 = vmatprep.subr.mxu0 0.0
      %1610 = vmatpush1.msra.mxu0 0.0
      %1611 = vmatprep.subr.mxu0 0.0
      %1612 = vmatpush1.msra.mxu0 0.0
      %1613 = vmatprep.subr.mxu0 0.0
      %1614 = vmatpush1.msra.mxu0 0.0
      %1615 = vmatprep.subr.mxu0 0.0
      %1616 = vmatpush1.msra.mxu0 0.0
      %1617 = vmatprep.subr.mxu0 0.0
      %1618 = vmatpush1.msra.mxu0 0.0
      %1619 = vmatprep.mubr.f32.mxu0 0.0
      %1620 = vmatmul.mubr.f32.gmra.mrb[0].mxu0 %v1481
      %v1621 = vpop.f32.mrb[0].mxu0
      %v1622 = vadd.f32 0.0, %v1621
      %v1623 = vpop.f32.mrb[0].mxu0
      %v1624 = vadd.f32 0.0, %v1623
      %1625 = vdwg.mxu0
      %1626 = vmatprep.subr.mxu0 %v1494
      %1627 = vmatpush1.msra.mxu0 %v1493
      %1628 = vmatprep.subr.mxu0 %v1498
      %1629 = vmatpush1.msra.mxu0 %v1497
      %1630 = vmatprep.subr.mxu0 %v1502
      %1631 = vmatpush1.msra.mxu0 %v1501
      %1632 = vmatprep.subr.mxu0 %v1506
      %1633 = vmatpush1.msra.mxu0 %v1505
      %1634 = vmatprep.subr.mxu0 %v1510
      %1635 = vmatpush1.msra.mxu0 %v1509
      %1636 = vmatprep.subr.mxu0 %v1514
      %1637 = vmatpush1.msra.mxu0 %v1513
      %1638 = vmatprep.subr.mxu0 %v1518
      %1639 = vmatpush1.msra.mxu0 %v1517
      %1640 = vmatprep.subr.mxu0 %v1522
      %1641 = vmatpush1.msra.mxu0 %v1521
      %1642 = vmatprep.subr.mxu0 %v1526
      %1643 = vmatpush1.msra.mxu0 %v1525
      %1644 = vmatprep.subr.mxu0 %v1530
      %1645 = vmatpush1.msra.mxu0 %v1529
      %1646 = vmatprep.subr.mxu0 %v1534
      %1647 = vmatpush1.msra.mxu0 %v1533
      %1648 = vmatprep.subr.mxu0 %v1538
      %1649 = vmatpush1.msra.mxu0 %v1537
      %1650 = vmatprep.subr.mxu0 %v1542
      %1651 = vmatpush1.msra.mxu0 %v1541
      %1652 = vmatprep.subr.mxu0 %v1546
      %1653 = vmatpush1.msra.mxu0 %v1545
      %1654 = vmatprep.subr.mxu0 %v1550
      %1655 = vmatpush1.msra.mxu0 %v1549
      %1656 = vmatprep.subr.mxu0 %v1554
      %1657 = vmatpush1.msra.mxu0 %v1553
      %1658 = vmatprep.subr.mxu0 0.0
      %1659 = vmatpush1.msra.mxu0 0.0
      %1660 = vmatprep.subr.mxu0 0.0
      %1661 = vmatpush1.msra.mxu0 0.0
      %1662 = vmatprep.subr.mxu0 0.0
      %1663 = vmatpush1.msra.mxu0 0.0
      %1664 = vmatprep.subr.mxu0 0.0
      %1665 = vmatpush1.msra.mxu0 0.0
      %1666 = vmatprep.subr.mxu0 0.0
      %1667 = vmatpush1.msra.mxu0 0.0
      %1668 = vmatprep.subr.mxu0 0.0
      %1669 = vmatpush1.msra.mxu0 0.0
      %1670 = vmatprep.subr.mxu0 0.0
      %1671 = vmatpush1.msra.mxu0 0.0
      %1672 = vmatprep.subr.mxu0 0.0
      %1673 = vmatpush1.msra.mxu0 0.0
      %1674 = vmatprep.subr.mxu0 0.0
      %1675 = vmatpush1.msra.mxu0 0.0
      %1676 = vmatprep.subr.mxu0 0.0
      %1677 = vmatpush1.msra.mxu0 0.0
      %1678 = vmatprep.subr.mxu0 0.0
      %1679 = vmatpush1.msra.mxu0 0.0
      %1680 = vmatprep.subr.mxu0 0.0
      %1681 = vmatpush1.msra.mxu0 0.0
      %1682 = vmatprep.subr.mxu0 0.0
      %1683 = vmatpush1.msra.mxu0 0.0
      %1684 = vmatprep.subr.mxu0 0.0
      %1685 = vmatpush1.msra.mxu0 0.0
      %1686 = vmatprep.subr.mxu0 0.0
      %1687 = vmatpush1.msra.mxu0 0.0
      %1688 = vmatprep.subr.mxu0 0.0
      %1689 = vmatpush1.msra.mxu0 0.0
      %1690 = vmatprep.mubr.f32.mxu0 0.0
      %1691 = vmatmul.mubr.f32.gmra.mrb[0].mxu0 %v1481
      %v1692 = vpop.f32.mrb[0].mxu0
      %v1693 = vadd.f32 0.0, %v1692
      %v1694 = vpop.f32.mrb[0].mxu0
      %v1695 = vadd.f32 0.0, %v1694
      %1696 = vdwg.mxu0
      %v1697 = vadd.f32 %v1487, %v1622
      %v1698 = vadd.f32 %v1488, %v1624
      %v1699 = vadd.f32 %v1489, %v1693
      %v1700 = vadd.f32 %v1490, %v1695
      %v1701 = vtanh.pop %v1697
      %v1702 = vtanh.pop %v1698
      %v1703 = vtanh.pop %v1699
      %v1704 = vtanh.pop %v1700
      %v1705 = vxor.u32 %v1697, 2147483648
      %v1706 = vxor.u32 %v1698, 2147483648
      %v1707 = vxor.u32 %v1699, 2147483648
      %v1708 = vxor.u32 %v1700, 2147483648
      %v1709 = vmul.f32 %v1705, 1.442695
      %v1710 = vpow.pop %v1709
      %v1711 = vmul.f32 %v1706, 1.442695
      %v1712 = vpow.pop %v1711
      %v1713 = vmul.f32 %v1707, 1.442695
      %v1714 = vpow.pop %v1713
      %v1715 = vmul.f32 %v1708, 1.442695
      %v1716 = vpow.pop %v1715
      %v1717 = vadd.f32 %v1710, 1.0
      %v1718 = vadd.f32 %v1712, 1.0
      %v1719 = vadd.f32 %v1714, 1.0
      %v1720 = vadd.f32 %v1716, 1.0
      %v1721 = vrcp.pop %v1717
      %v1722 = vmul.f32 1.0, %v1721
      %v1723 = vrcp.pop %v1718
      %v1724 = vmul.f32 1.0, %v1723
      %v1725 = vrcp.pop %v1719
      %v1726 = vmul.f32 1.0, %v1725
      %v1727 = vrcp.pop %v1720
      %v1728 = vmul.f32 1.0, %v1727
      %v1729 = vsel %vm144, %v1701, %v1722
      %v1730 = vsel %vm145, %v1702, %v1724
      %v1731 = vsel %vm146, %v1703, %v1726
      %v1732 = vsel %vm147, %v1704, %v1728
      %v1733 = vmul.f32 %v1730, %v1479
      %v1734 = vmul.f32 %v1729, %v1731
      %v1735 = vadd.f32 %v1733, %v1734
      %v1736 = vtanh.pop %v1735
      %v1737 = vmul.f32 %v1732, %v1736
      %s1738 = scalar_lea.vmem [#allocation2], 32
      %1739 = vst [vmem:[%s1738] sm:$0xff] %v1737
      %s1740 = smul.u32 5, 4
      %s1741 = smul.addr %s1740, 8
      %s1742 = scalar_lea.vmem [#allocation15], %s1741
      %v1743 = vld [vmem:[%s1742] sm:$0xff]
      %v1744 = vld [vmem:[%s1742 + $0x8] sm:$0xff]
      %v1745 = vld [vmem:[%s1742 + $0x10] sm:$0xff]
      %v1746 = vld [vmem:[%s1742 + $0x18] sm:$0xff]
      %v1747 = vld [vmem:[#allocation5] sm:$0xff]
      %v1748 = vld [vmem:[#allocation5 + $0x8] sm:$0xff]
      %v1749 = vld [vmem:[#allocation5 + $0x10] sm:$0xff]
      %v1750 = vld [vmem:[#allocation5 + $0x18] sm:$0xff]
      %v1751 = vld [vmem:[#allocation5 + $0x20] sm:$0xff]
      %v1752 = vld [vmem:[#allocation5 + $0x28] sm:$0xff]
      %v1753 = vld [vmem:[#allocation5 + $0x30] sm:$0xff]
      %v1754 = vld [vmem:[#allocation5 + $0x38] sm:$0xff]
      %v1755 = vld [vmem:[#allocation5 + $0x40] sm:$0xff]
      %v1756 = vld [vmem:[#allocation5 + $0x48] sm:$0xff]
      %v1757 = vld [vmem:[#allocation5 + $0x50] sm:$0xff]
      %v1758 = vld [vmem:[#allocation5 + $0x58] sm:$0xff]
      %v1759 = vld [vmem:[#allocation5 + $0x60] sm:$0xff]
      %v1760 = vld [vmem:[#allocation5 + $0x68] sm:$0xff]
      %v1761 = vld [vmem:[#allocation5 + $0x70] sm:$0xff]
      %v1762 = vld [vmem:[#allocation5 + $0x78] sm:$0xff]
      %v1763 = vld [vmem:[#allocation5 + $0x80] sm:$0xff]
      %v1764 = vld [vmem:[#allocation5 + $0x88] sm:$0xff]
      %v1765 = vld [vmem:[#allocation5 + $0x90] sm:$0xff]
      %v1766 = vld [vmem:[#allocation5 + $0x98] sm:$0xff]
      %v1767 = vld [vmem:[#allocation5 + $0xa0] sm:$0xff]
      %v1768 = vld [vmem:[#allocation5 + $0xa8] sm:$0xff]
      %v1769 = vld [vmem:[#allocation5 + $0xb0] sm:$0xff]
      %v1770 = vld [vmem:[#allocation5 + $0xb8] sm:$0xff]
      %v1771 = vld [vmem:[#allocation5 + $0xc0] sm:$0xff]
      %v1772 = vld [vmem:[#allocation5 + $0xc8] sm:$0xff]
      %v1773 = vld [vmem:[#allocation5 + $0xd0] sm:$0xff]
      %v1774 = vld [vmem:[#allocation5 + $0xd8] sm:$0xff]
      %v1775 = vld [vmem:[#allocation5 + $0xe0] sm:$0xff]
      %v1776 = vld [vmem:[#allocation5 + $0xe8] sm:$0xff]
      %v1777 = vld [vmem:[#allocation5 + $0xf0] sm:$0xff]
      %v1778 = vld [vmem:[#allocation5 + $0xf8] sm:$0xff]
      %v1779 = vld [vmem:[#allocation5 + $0x100] sm:$0xff]
      %v1780 = vld [vmem:[#allocation5 + $0x108] sm:$0xff]
      %v1781 = vld [vmem:[#allocation5 + $0x110] sm:$0xff]
      %v1782 = vld [vmem:[#allocation5 + $0x118] sm:$0xff]
      %v1783 = vld [vmem:[#allocation5 + $0x120] sm:$0xff]
      %v1784 = vld [vmem:[#allocation5 + $0x128] sm:$0xff]
      %v1785 = vld [vmem:[#allocation5 + $0x130] sm:$0xff]
      %v1786 = vld [vmem:[#allocation5 + $0x138] sm:$0xff]
      %v1787 = vld [vmem:[#allocation5 + $0x140] sm:$0xff]
      %v1788 = vld [vmem:[#allocation5 + $0x148] sm:$0xff]
      %v1789 = vld [vmem:[#allocation5 + $0x150] sm:$0xff]
      %v1790 = vld [vmem:[#allocation5 + $0x158] sm:$0xff]
      %v1791 = vld [vmem:[#allocation5 + $0x160] sm:$0xff]
      %v1792 = vld [vmem:[#allocation5 + $0x168] sm:$0xff]
      %v1793 = vld [vmem:[#allocation5 + $0x170] sm:$0xff]
      %v1794 = vld [vmem:[#allocation5 + $0x178] sm:$0xff]
      %v1795 = vld [vmem:[#allocation5 + $0x180] sm:$0xff]
      %v1796 = vld [vmem:[#allocation5 + $0x188] sm:$0xff]
      %v1797 = vld [vmem:[#allocation5 + $0x190] sm:$0xff]
      %v1798 = vld [vmem:[#allocation5 + $0x198] sm:$0xff]
      %v1799 = vld [vmem:[#allocation5 + $0x1a0] sm:$0xff]
      %v1800 = vld [vmem:[#allocation5 + $0x1a8] sm:$0xff]
      %v1801 = vld [vmem:[#allocation5 + $0x1b0] sm:$0xff]
      %v1802 = vld [vmem:[#allocation5 + $0x1b8] sm:$0xff]
      %v1803 = vld [vmem:[#allocation5 + $0x1c0] sm:$0xff]
      %v1804 = vld [vmem:[#allocation5 + $0x1c8] sm:$0xff]
      %v1805 = vld [vmem:[#allocation5 + $0x1d0] sm:$0xff]
      %v1806 = vld [vmem:[#allocation5 + $0x1d8] sm:$0xff]
      %v1807 = vld [vmem:[#allocation5 + $0x1e0] sm:$0xff]
      %v1808 = vld [vmem:[#allocation5 + $0x1e8] sm:$0xff]
      %v1809 = vld [vmem:[#allocation5 + $0x1f0] sm:$0xff]
      %v1810 = vld [vmem:[#allocation5 + $0x1f8] sm:$0xff]
      %1811 = vmatprep.subr.mxu0 %v1748
      %1812 = vmatpush1.msra.mxu0 %v1747
      %1813 = vmatprep.subr.mxu0 %v1752
      %1814 = vmatpush1.msra.mxu0 %v1751
      %1815 = vmatprep.subr.mxu0 %v1756
      %1816 = vmatpush1.msra.mxu0 %v1755
      %1817 = vmatprep.subr.mxu0 %v1760
      %1818 = vmatpush1.msra.mxu0 %v1759
      %1819 = vmatprep.subr.mxu0 %v1764
      %1820 = vmatpush1.msra.mxu0 %v1763
      %1821 = vmatprep.subr.mxu0 %v1768
      %1822 = vmatpush1.msra.mxu0 %v1767
      %1823 = vmatprep.subr.mxu0 %v1772
      %1824 = vmatpush1.msra.mxu0 %v1771
      %1825 = vmatprep.subr.mxu0 %v1776
      %1826 = vmatpush1.msra.mxu0 %v1775
      %1827 = vmatprep.subr.mxu0 %v1780
      %1828 = vmatpush1.msra.mxu0 %v1779
      %1829 = vmatprep.subr.mxu0 %v1784
      %1830 = vmatpush1.msra.mxu0 %v1783
      %1831 = vmatprep.subr.mxu0 %v1788
      %1832 = vmatpush1.msra.mxu0 %v1787
      %1833 = vmatprep.subr.mxu0 %v1792
      %1834 = vmatpush1.msra.mxu0 %v1791
      %1835 = vmatprep.subr.mxu0 %v1796
      %1836 = vmatpush1.msra.mxu0 %v1795
      %1837 = vmatprep.subr.mxu0 %v1800
      %1838 = vmatpush1.msra.mxu0 %v1799
      %1839 = vmatprep.subr.mxu0 %v1804
      %1840 = vmatpush1.msra.mxu0 %v1803
      %1841 = vmatprep.subr.mxu0 %v1808
      %1842 = vmatpush1.msra.mxu0 %v1807
      %1843 = vmatprep.subr.mxu0 0.0
      %1844 = vmatpush1.msra.mxu0 0.0
      %1845 = vmatprep.subr.mxu0 0.0
      %1846 = vmatpush1.msra.mxu0 0.0
      %1847 = vmatprep.subr.mxu0 0.0
      %1848 = vmatpush1.msra.mxu0 0.0
      %1849 = vmatprep.subr.mxu0 0.0
      %1850 = vmatpush1.msra.mxu0 0.0
      %1851 = vmatprep.subr.mxu0 0.0
      %1852 = vmatpush1.msra.mxu0 0.0
      %1853 = vmatprep.subr.mxu0 0.0
      %1854 = vmatpush1.msra.mxu0 0.0
      %1855 = vmatprep.subr.mxu0 0.0
      %1856 = vmatpush1.msra.mxu0 0.0
      %1857 = vmatprep.subr.mxu0 0.0
      %1858 = vmatpush1.msra.mxu0 0.0
      %1859 = vmatprep.subr.mxu0 0.0
      %1860 = vmatpush1.msra.mxu0 0.0
      %1861 = vmatprep.subr.mxu0 0.0
      %1862 = vmatpush1.msra.mxu0 0.0
      %1863 = vmatprep.subr.mxu0 0.0
      %1864 = vmatpush1.msra.mxu0 0.0
      %1865 = vmatprep.subr.mxu0 0.0
      %1866 = vmatpush1.msra.mxu0 0.0
      %1867 = vmatprep.subr.mxu0 0.0
      %1868 = vmatpush1.msra.mxu0 0.0
      %1869 = vmatprep.subr.mxu0 0.0
      %1870 = vmatpush1.msra.mxu0 0.0
      %1871 = vmatprep.subr.mxu0 0.0
      %1872 = vmatpush1.msra.mxu0 0.0
      %1873 = vmatprep.subr.mxu0 0.0
      %1874 = vmatpush1.msra.mxu0 0.0
      %1875 = vmatprep.mubr.f32.mxu0 0.0
      %1876 = vmatmul.mubr.f32.gmra.mrb[0].mxu0 %v1737
      %v1877 = vpop.f32.mrb[0].mxu0
      %v1878 = vadd.f32 0.0, %v1877
      %v1879 = vpop.f32.mrb[0].mxu0
      %v1880 = vadd.f32 0.0, %v1879
      %1881 = vdwg.mxu0
      %1882 = vmatprep.subr.mxu0 %v1750
      %1883 = vmatpush1.msra.mxu0 %v1749
      %1884 = vmatprep.subr.mxu0 %v1754
      %1885 = vmatpush1.msra.mxu0 %v1753
      %1886 = vmatprep.subr.mxu0 %v1758
      %1887 = vmatpush1.msra.mxu0 %v1757
      %1888 = vmatprep.subr.mxu0 %v1762
      %1889 = vmatpush1.msra.mxu0 %v1761
      %1890 = vmatprep.subr.mxu0 %v1766
      %1891 = vmatpush1.msra.mxu0 %v1765
      %1892 = vmatprep.subr.mxu0 %v1770
      %1893 = vmatpush1.msra.mxu0 %v1769
      %1894 = vmatprep.subr.mxu0 %v1774
      %1895 = vmatpush1.msra.mxu0 %v1773
      %1896 = vmatprep.subr.mxu0 %v1778
      %1897 = vmatpush1.msra.mxu0 %v1777
      %1898 = vmatprep.subr.mxu0 %v1782
      %1899 = vmatpush1.msra.mxu0 %v1781
      %1900 = vmatprep.subr.mxu0 %v1786
      %1901 = vmatpush1.msra.mxu0 %v1785
      %1902 = vmatprep.subr.mxu0 %v1790
      %1903 = vmatpush1.msra.mxu0 %v1789
      %1904 = vmatprep.subr.mxu0 %v1794
      %1905 = vmatpush1.msra.mxu0 %v1793
      %1906 = vmatprep.subr.mxu0 %v1798
      %1907 = vmatpush1.msra.mxu0 %v1797
      %1908 = vmatprep.subr.mxu0 %v1802
      %1909 = vmatpush1.msra.mxu0 %v1801
      %1910 = vmatprep.subr.mxu0 %v1806
      %1911 = vmatpush1.msra.mxu0 %v1805
      %1912 = vmatprep.subr.mxu0 %v1810
      %1913 = vmatpush1.msra.mxu0 %v1809
      %1914 = vmatprep.subr.mxu0 0.0
      %1915 = vmatpush1.msra.mxu0 0.0
      %1916 = vmatprep.subr.mxu0 0.0
      %1917 = vmatpush1.msra.mxu0 0.0
      %1918 = vmatprep.subr.mxu0 0.0
      %1919 = vmatpush1.msra.mxu0 0.0
      %1920 = vmatprep.subr.mxu0 0.0
      %1921 = vmatpush1.msra.mxu0 0.0
      %1922 = vmatprep.subr.mxu0 0.0
      %1923 = vmatpush1.msra.mxu0 0.0
      %1924 = vmatprep.subr.mxu0 0.0
      %1925 = vmatpush1.msra.mxu0 0.0
      %1926 = vmatprep.subr.mxu0 0.0
      %1927 = vmatpush1.msra.mxu0 0.0
      %1928 = vmatprep.subr.mxu0 0.0
      %1929 = vmatpush1.msra.mxu0 0.0
      %1930 = vmatprep.subr.mxu0 0.0
      %1931 = vmatpush1.msra.mxu0 0.0
      %1932 = vmatprep.subr.mxu0 0.0
      %1933 = vmatpush1.msra.mxu0 0.0
      %1934 = vmatprep.subr.mxu0 0.0
      %1935 = vmatpush1.msra.mxu0 0.0
      %1936 = vmatprep.subr.mxu0 0.0
      %1937 = vmatpush1.msra.mxu0 0.0
      %1938 = vmatprep.subr.mxu0 0.0
      %1939 = vmatpush1.msra.mxu0 0.0
      %1940 = vmatprep.subr.mxu0 0.0
      %1941 = vmatpush1.msra.mxu0 0.0
      %1942 = vmatprep.subr.mxu0 0.0
      %1943 = vmatpush1.msra.mxu0 0.0
      %1944 = vmatprep.subr.mxu0 0.0
      %1945 = vmatpush1.msra.mxu0 0.0
      %1946 = vmatprep.mubr.f32.mxu0 0.0
      %1947 = vmatmul.mubr.f32.gmra.mrb[0].mxu0 %v1737
      %v1948 = vpop.f32.mrb[0].mxu0
      %v1949 = vadd.f32 0.0, %v1948
      %v1950 = vpop.f32.mrb[0].mxu0
      %v1951 = vadd.f32 0.0, %v1950
      %1952 = vdwg.mxu0
      %v1953 = vadd.f32 %v1743, %v1878
      %v1954 = vadd.f32 %v1744, %v1880
      %v1955 = vadd.f32 %v1745, %v1949
      %v1956 = vadd.f32 %v1746, %v1951
      %v1957 = vtanh.pop %v1953
      %v1958 = vtanh.pop %v1954
      %v1959 = vtanh.pop %v1955
      %v1960 = vtanh.pop %v1956
      %v1961 = vxor.u32 %v1953, 2147483648
      %v1962 = vxor.u32 %v1954, 2147483648
      %v1963 = vxor.u32 %v1955, 2147483648
      %v1964 = vxor.u32 %v1956, 2147483648
      %v1965 = vmul.f32 %v1961, 1.442695
      %v1966 = vpow.pop %v1965
      %v1967 = vmul.f32 %v1962, 1.442695
      %v1968 = vpow.pop %v1967
      %v1969 = vmul.f32 %v1963, 1.442695
      %v1970 = vpow.pop %v1969
      %v1971 = vmul.f32 %v1964, 1.442695
      %v1972 = vpow.pop %v1971
      %v1973 = vadd.f32 %v1966, 1.0
      %v1974 = vadd.f32 %v1968, 1.0
      %v1975 = vadd.f32 %v1970, 1.0
      %v1976 = vadd.f32 %v1972, 1.0
      %v1977 = vrcp.pop %v1973
      %v1978 = vmul.f32 1.0, %v1977
      %v1979 = vrcp.pop %v1974
      %v1980 = vmul.f32 1.0, %v1979
      %v1981 = vrcp.pop %v1975
      %v1982 = vmul.f32 1.0, %v1981
      %v1983 = vrcp.pop %v1976
      %v1984 = vmul.f32 1.0, %v1983
      %v1985 = vsel %vm144, %v1957, %v1978
      %v1986 = vsel %vm145, %v1958, %v1980
      %v1987 = vsel %vm146, %v1959, %v1982
      %v1988 = vsel %vm147, %v1960, %v1984
      %v1989 = vmul.f32 %v1986, %v1735
      %v1990 = vmul.f32 %v1985, %v1987
      %v1991 = vadd.f32 %v1989, %v1990
      %v1992 = vtanh.pop %v1991
      %v1993 = vmul.f32 %v1988, %v1992
      %s1994 = scalar_lea.vmem [#allocation2], 40
      %1995 = vst [vmem:[%s1994] sm:$0xff] %v1993
      %s1996 = smul.u32 6, 4
      %s1997 = smul.addr %s1996, 8
      %s1998 = scalar_lea.vmem [#allocation15], %s1997
      %v1999 = vld [vmem:[%s1998] sm:$0xff]
      %v2000 = vld [vmem:[%s1998 + $0x8] sm:$0xff]
      %v2001 = vld [vmem:[%s1998 + $0x10] sm:$0xff]
      %v2002 = vld [vmem:[%s1998 + $0x18] sm:$0xff]
      %v2003 = vld [vmem:[#allocation5] sm:$0xff]
      %v2004 = vld [vmem:[#allocation5 + $0x8] sm:$0xff]
      %v2005 = vld [vmem:[#allocation5 + $0x10] sm:$0xff]
      %v2006 = vld [vmem:[#allocation5 + $0x18] sm:$0xff]
      %v2007 = vld [vmem:[#allocation5 + $0x20] sm:$0xff]
      %v2008 = vld [vmem:[#allocation5 + $0x28] sm:$0xff]
      %v2009 = vld [vmem:[#allocation5 + $0x30] sm:$0xff]
      %v2010 = vld [vmem:[#allocation5 + $0x38] sm:$0xff]
      %v2011 = vld [vmem:[#allocation5 + $0x40] sm:$0xff]
      %v2012 = vld [vmem:[#allocation5 + $0x48] sm:$0xff]
      %v2013 = vld [vmem:[#allocation5 + $0x50] sm:$0xff]
      %v2014 = vld [vmem:[#allocation5 + $0x58] sm:$0xff]
      %v2015 = vld [vmem:[#allocation5 + $0x60] sm:$0xff]
      %v2016 = vld [vmem:[#allocation5 + $0x68] sm:$0xff]
      %v2017 = vld [vmem:[#allocation5 + $0x70] sm:$0xff]
      %v2018 = vld [vmem:[#allocation5 + $0x78] sm:$0xff]
      %v2019 = vld [vmem:[#allocation5 + $0x80] sm:$0xff]
      %v2020 = vld [vmem:[#allocation5 + $0x88] sm:$0xff]
      %v2021 = vld [vmem:[#allocation5 + $0x90] sm:$0xff]
      %v2022 = vld [vmem:[#allocation5 + $0x98] sm:$0xff]
      %v2023 = vld [vmem:[#allocation5 + $0xa0] sm:$0xff]
      %v2024 = vld [vmem:[#allocation5 + $0xa8] sm:$0xff]
      %v2025 = vld [vmem:[#allocation5 + $0xb0] sm:$0xff]
      %v2026 = vld [vmem:[#allocation5 + $0xb8] sm:$0xff]
      %v2027 = vld [vmem:[#allocation5 + $0xc0] sm:$0xff]
      %v2028 = vld [vmem:[#allocation5 + $0xc8] sm:$0xff]
      %v2029 = vld [vmem:[#allocation5 + $0xd0] sm:$0xff]
      %v2030 = vld [vmem:[#allocation5 + $0xd8] sm:$0xff]
      %v2031 = vld [vmem:[#allocation5 + $0xe0] sm:$0xff]
      %v2032 = vld [vmem:[#allocation5 + $0xe8] sm:$0xff]
      %v2033 = vld [vmem:[#allocation5 + $0xf0] sm:$0xff]
      %v2034 = vld [vmem:[#allocation5 + $0xf8] sm:$0xff]
      %v2035 = vld [vmem:[#allocation5 + $0x100] sm:$0xff]
      %v2036 = vld [vmem:[#allocation5 + $0x108] sm:$0xff]
      %v2037 = vld [vmem:[#allocation5 + $0x110] sm:$0xff]
      %v2038 = vld [vmem:[#allocation5 + $0x118] sm:$0xff]
      %v2039 = vld [vmem:[#allocation5 + $0x120] sm:$0xff]
      %v2040 = vld [vmem:[#allocation5 + $0x128] sm:$0xff]
      %v2041 = vld [vmem:[#allocation5 + $0x130] sm:$0xff]
      %v2042 = vld [vmem:[#allocation5 + $0x138] sm:$0xff]
      %v2043 = vld [vmem:[#allocation5 + $0x140] sm:$0xff]
      %v2044 = vld [vmem:[#allocation5 + $0x148] sm:$0xff]
      %v2045 = vld [vmem:[#allocation5 + $0x150] sm:$0xff]
      %v2046 = vld [vmem:[#allocation5 + $0x158] sm:$0xff]
      %v2047 = vld [vmem:[#allocation5 + $0x160] sm:$0xff]
      %v2048 = vld [vmem:[#allocation5 + $0x168] sm:$0xff]
      %v2049 = vld [vmem:[#allocation5 + $0x170] sm:$0xff]
      %v2050 = vld [vmem:[#allocation5 + $0x178] sm:$0xff]
      %v2051 = vld [vmem:[#allocation5 + $0x180] sm:$0xff]
      %v2052 = vld [vmem:[#allocation5 + $0x188] sm:$0xff]
      %v2053 = vld [vmem:[#allocation5 + $0x190] sm:$0xff]
      %v2054 = vld [vmem:[#allocation5 + $0x198] sm:$0xff]
      %v2055 = vld [vmem:[#allocation5 + $0x1a0] sm:$0xff]
      %v2056 = vld [vmem:[#allocation5 + $0x1a8] sm:$0xff]
      %v2057 = vld [vmem:[#allocation5 + $0x1b0] sm:$0xff]
      %v2058 = vld [vmem:[#allocation5 + $0x1b8] sm:$0xff]
      %v2059 = vld [vmem:[#allocation5 + $0x1c0] sm:$0xff]
      %v2060 = vld [vmem:[#allocation5 + $0x1c8] sm:$0xff]
      %v2061 = vld [vmem:[#allocation5 + $0x1d0] sm:$0xff]
      %v2062 = vld [vmem:[#allocation5 + $0x1d8] sm:$0xff]
      %v2063 = vld [vmem:[#allocation5 + $0x1e0] sm:$0xff]
      %v2064 = vld [vmem:[#allocation5 + $0x1e8] sm:$0xff]
      %v2065 = vld [vmem:[#allocation5 + $0x1f0] sm:$0xff]
      %v2066 = vld [vmem:[#allocation5 + $0x1f8] sm:$0xff]
      %2067 = vmatprep.subr.mxu0 %v2004
      %2068 = vmatpush1.msra.mxu0 %v2003
      %2069 = vmatprep.subr.mxu0 %v2008
      %2070 = vmatpush1.msra.mxu0 %v2007
      %2071 = vmatprep.subr.mxu0 %v2012
      %2072 = vmatpush1.msra.mxu0 %v2011
      %2073 = vmatprep.subr.mxu0 %v2016
      %2074 = vmatpush1.msra.mxu0 %v2015
      %2075 = vmatprep.subr.mxu0 %v2020
      %2076 = vmatpush1.msra.mxu0 %v2019
      %2077 = vmatprep.subr.mxu0 %v2024
      %2078 = vmatpush1.msra.mxu0 %v2023
      %2079 = vmatprep.subr.mxu0 %v2028
      %2080 = vmatpush1.msra.mxu0 %v2027
      %2081 = vmatprep.subr.mxu0 %v2032
      %2082 = vmatpush1.msra.mxu0 %v2031
      %2083 = vmatprep.subr.mxu0 %v2036
      %2084 = vmatpush1.msra.mxu0 %v2035
      %2085 = vmatprep.subr.mxu0 %v2040
      %2086 = vmatpush1.msra.mxu0 %v2039
      %2087 = vmatprep.subr.mxu0 %v2044
      %2088 = vmatpush1.msra.mxu0 %v2043
      %2089 = vmatprep.subr.mxu0 %v2048
      %2090 = vmatpush1.msra.mxu0 %v2047
      %2091 = vmatprep.subr.mxu0 %v2052
      %2092 = vmatpush1.msra.mxu0 %v2051
      %2093 = vmatprep.subr.mxu0 %v2056
      %2094 = vmatpush1.msra.mxu0 %v2055
      %2095 = vmatprep.subr.mxu0 %v2060
      %2096 = vmatpush1.msra.mxu0 %v2059
      %2097 = vmatprep.subr.mxu0 %v2064
      %2098 = vmatpush1.msra.mxu0 %v2063
      %2099 = vmatprep.subr.mxu0 0.0
      %2100 = vmatpush1.msra.mxu0 0.0
      %2101 = vmatprep.subr.mxu0 0.0
      %2102 = vmatpush1.msra.mxu0 0.0
      %2103 = vmatprep.subr.mxu0 0.0
      %2104 = vmatpush1.msra.mxu0 0.0
      %2105 = vmatprep.subr.mxu0 0.0
      %2106 = vmatpush1.msra.mxu0 0.0
      %2107 = vmatprep.subr.mxu0 0.0
      %2108 = vmatpush1.msra.mxu0 0.0
      %2109 = vmatprep.subr.mxu0 0.0
      %2110 = vmatpush1.msra.mxu0 0.0
      %2111 = vmatprep.subr.mxu0 0.0
      %2112 = vmatpush1.msra.mxu0 0.0
      %2113 = vmatprep.subr.mxu0 0.0
      %2114 = vmatpush1.msra.mxu0 0.0
      %2115 = vmatprep.subr.mxu0 0.0
      %2116 = vmatpush1.msra.mxu0 0.0
      %2117 = vmatprep.subr.mxu0 0.0
      %2118 = vmatpush1.msra.mxu0 0.0
      %2119 = vmatprep.subr.mxu0 0.0
      %2120 = vmatpush1.msra.mxu0 0.0
      %2121 = vmatprep.subr.mxu0 0.0
      %2122 = vmatpush1.msra.mxu0 0.0
      %2123 = vmatprep.subr.mxu0 0.0
      %2124 = vmatpush1.msra.mxu0 0.0
      %2125 = vmatprep.subr.mxu0 0.0
      %2126 = vmatpush1.msra.mxu0 0.0
      %2127 = vmatprep.subr.mxu0 0.0
      %2128 = vmatpush1.msra.mxu0 0.0
      %2129 = vmatprep.subr.mxu0 0.0
      %2130 = vmatpush1.msra.mxu0 0.0
      %2131 = vmatprep.mubr.f32.mxu0 0.0
      %2132 = vmatmul.mubr.f32.gmra.mrb[0].mxu0 %v1993
      %v2133 = vpop.f32.mrb[0].mxu0
      %v2134 = vadd.f32 0.0, %v2133
      %v2135 = vpop.f32.mrb[0].mxu0
      %v2136 = vadd.f32 0.0, %v2135
      %2137 = vdwg.mxu0
      %2138 = vmatprep.subr.mxu0 %v2006
      %2139 = vmatpush1.msra.mxu0 %v2005
      %2140 = vmatprep.subr.mxu0 %v2010
      %2141 = vmatpush1.msra.mxu0 %v2009
      %2142 = vmatprep.subr.mxu0 %v2014
      %2143 = vmatpush1.msra.mxu0 %v2013
      %2144 = vmatprep.subr.mxu0 %v2018
      %2145 = vmatpush1.msra.mxu0 %v2017
      %2146 = vmatprep.subr.mxu0 %v2022
      %2147 = vmatpush1.msra.mxu0 %v2021
      %2148 = vmatprep.subr.mxu0 %v2026
      %2149 = vmatpush1.msra.mxu0 %v2025
      %2150 = vmatprep.subr.mxu0 %v2030
      %2151 = vmatpush1.msra.mxu0 %v2029
      %2152 = vmatprep.subr.mxu0 %v2034
      %2153 = vmatpush1.msra.mxu0 %v2033
      %2154 = vmatprep.subr.mxu0 %v2038
      %2155 = vmatpush1.msra.mxu0 %v2037
      %2156 = vmatprep.subr.mxu0 %v2042
      %2157 = vmatpush1.msra.mxu0 %v2041
      %2158 = vmatprep.subr.mxu0 %v2046
      %2159 = vmatpush1.msra.mxu0 %v2045
      %2160 = vmatprep.subr.mxu0 %v2050
      %2161 = vmatpush1.msra.mxu0 %v2049
      %2162 = vmatprep.subr.mxu0 %v2054
      %2163 = vmatpush1.msra.mxu0 %v2053
      %2164 = vmatprep.subr.mxu0 %v2058
      %2165 = vmatpush1.msra.mxu0 %v2057
      %2166 = vmatprep.subr.mxu0 %v2062
      %2167 = vmatpush1.msra.mxu0 %v2061
      %2168 = vmatprep.subr.mxu0 %v2066
      %2169 = vmatpush1.msra.mxu0 %v2065
      %2170 = vmatprep.subr.mxu0 0.0
      %2171 = vmatpush1.msra.mxu0 0.0
      %2172 = vmatprep.subr.mxu0 0.0
      %2173 = vmatpush1.msra.mxu0 0.0
      %2174 = vmatprep.subr.mxu0 0.0
      %2175 = vmatpush1.msra.mxu0 0.0
      %2176 = vmatprep.subr.mxu0 0.0
      %2177 = vmatpush1.msra.mxu0 0.0
      %2178 = vmatprep.subr.mxu0 0.0
      %2179 = vmatpush1.msra.mxu0 0.0
      %2180 = vmatprep.subr.mxu0 0.0
      %2181 = vmatpush1.msra.mxu0 0.0
      %2182 = vmatprep.subr.mxu0 0.0
      %2183 = vmatpush1.msra.mxu0 0.0
      %2184 = vmatprep.subr.mxu0 0.0
      %2185 = vmatpush1.msra.mxu0 0.0
      %2186 = vmatprep.subr.mxu0 0.0
      %2187 = vmatpush1.msra.mxu0 0.0
      %2188 = vmatprep.subr.mxu0 0.0
      %2189 = vmatpush1.msra.mxu0 0.0
      %2190 = vmatprep.subr.mxu0 0.0
      %2191 = vmatpush1.msra.mxu0 0.0
      %2192 = vmatprep.subr.mxu0 0.0
      %2193 = vmatpush1.msra.mxu0 0.0
      %2194 = vmatprep.subr.mxu0 0.0
      %2195 = vmatpush1.msra.mxu0 0.0
      %2196 = vmatprep.subr.mxu0 0.0
      %2197 = vmatpush1.msra.mxu0 0.0
      %2198 = vmatprep.subr.mxu0 0.0
      %2199 = vmatpush1.msra.mxu0 0.0
      %2200 = vmatprep.subr.mxu0 0.0
      %2201 = vmatpush1.msra.mxu0 0.0
      %2202 = vmatprep.mubr.f32.mxu0 0.0
      %2203 = vmatmul.mubr.f32.gmra.mrb[0].mxu0 %v1993
      %v2204 = vpop.f32.mrb[0].mxu0
      %v2205 = vadd.f32 0.0, %v2204
      %v2206 = vpop.f32.mrb[0].mxu0
      %v2207 = vadd.f32 0.0, %v2206
      %2208 = vdwg.mxu0
      %v2209 = vadd.f32 %v1999, %v2134
      %v2210 = vadd.f32 %v2000, %v2136
      %v2211 = vadd.f32 %v2001, %v2205
      %v2212 = vadd.f32 %v2002, %v2207
      %v2213 = vtanh.pop %v2209
      %v2214 = vtanh.pop %v2210
      %v2215 = vtanh.pop %v2211
      %v2216 = vtanh.pop %v2212
      %v2217 = vxor.u32 %v2209, 2147483648
      %v2218 = vxor.u32 %v2210, 2147483648
      %v2219 = vxor.u32 %v2211, 2147483648
      %v2220 = vxor.u32 %v2212, 2147483648
      %v2221 = vmul.f32 %v2217, 1.442695
      %v2222 = vpow.pop %v2221
      %v2223 = vmul.f32 %v2218, 1.442695
      %v2224 = vpow.pop %v2223
      %v2225 = vmul.f32 %v2219, 1.442695
      %v2226 = vpow.pop %v2225
      %v2227 = vmul.f32 %v2220, 1.442695
      %v2228 = vpow.pop %v2227
      %v2229 = vadd.f32 %v2222, 1.0
      %v2230 = vadd.f32 %v2224, 1.0
      %v2231 = vadd.f32 %v2226, 1.0
      %v2232 = vadd.f32 %v2228, 1.0
      %v2233 = vrcp.pop %v2229
      %v2234 = vmul.f32 1.0, %v2233
      %v2235 = vrcp.pop %v2230
      %v2236 = vmul.f32 1.0, %v2235
      %v2237 = vrcp.pop %v2231
      %v2238 = vmul.f32 1.0, %v2237
      %v2239 = vrcp.pop %v2232
      %v2240 = vmul.f32 1.0, %v2239
      %v2241 = vsel %vm144, %v2213, %v2234
      %v2242 = vsel %vm145, %v2214, %v2236
      %v2243 = vsel %vm146, %v2215, %v2238
      %v2244 = vsel %vm147, %v2216, %v2240
      %v2245 = vmul.f32 %v2242, %v1991
      %v2246 = vmul.f32 %v2241, %v2243
      %v2247 = vadd.f32 %v2245, %v2246
      %v2248 = vtanh.pop %v2247
      %v2249 = vmul.f32 %v2244, %v2248
      %s2250 = scalar_lea.vmem [#allocation2], 48
      %2251 = vst [vmem:[%s2250] sm:$0xff] %v2249
      %s2252 = smul.u32 7, 4
      %s2253 = smul.addr %s2252, 8
      %s2254 = scalar_lea.vmem [#allocation15], %s2253
      %v2255 = vld [vmem:[%s2254] sm:$0xff]
      %v2256 = vld [vmem:[%s2254 + $0x8] sm:$0xff]
      %v2257 = vld [vmem:[%s2254 + $0x10] sm:$0xff]
      %v2258 = vld [vmem:[%s2254 + $0x18] sm:$0xff]
      %v2259 = vld [vmem:[#allocation5] sm:$0xff]
      %v2260 = vld [vmem:[#allocation5 + $0x8] sm:$0xff]
      %v2261 = vld [vmem:[#allocation5 + $0x10] sm:$0xff]
      %v2262 = vld [vmem:[#allocation5 + $0x18] sm:$0xff]
      %v2263 = vld [vmem:[#allocation5 + $0x20] sm:$0xff]
      %v2264 = vld [vmem:[#allocation5 + $0x28] sm:$0xff]
      %v2265 = vld [vmem:[#allocation5 + $0x30] sm:$0xff]
      %v2266 = vld [vmem:[#allocation5 + $0x38] sm:$0xff]
      %v2267 = vld [vmem:[#allocation5 + $0x40] sm:$0xff]
      %v2268 = vld [vmem:[#allocation5 + $0x48] sm:$0xff]
      %v2269 = vld [vmem:[#allocation5 + $0x50] sm:$0xff]
      %v2270 = vld [vmem:[#allocation5 + $0x58] sm:$0xff]
      %v2271 = vld [vmem:[#allocation5 + $0x60] sm:$0xff]
      %v2272 = vld [vmem:[#allocation5 + $0x68] sm:$0xff]
      %v2273 = vld [vmem:[#allocation5 + $0x70] sm:$0xff]
      %v2274 = vld [vmem:[#allocation5 + $0x78] sm:$0xff]
      %v2275 = vld [vmem:[#allocation5 + $0x80] sm:$0xff]
      %v2276 = vld [vmem:[#allocation5 + $0x88] sm:$0xff]
      %v2277 = vld [vmem:[#allocation5 + $0x90] sm:$0xff]
      %v2278 = vld [vmem:[#allocation5 + $0x98] sm:$0xff]
      %v2279 = vld [vmem:[#allocation5 + $0xa0] sm:$0xff]
      %v2280 = vld [vmem:[#allocation5 + $0xa8] sm:$0xff]
      %v2281 = vld [vmem:[#allocation5 + $0xb0] sm:$0xff]
      %v2282 = vld [vmem:[#allocation5 + $0xb8] sm:$0xff]
      %v2283 = vld [vmem:[#allocation5 + $0xc0] sm:$0xff]
      %v2284 = vld [vmem:[#allocation5 + $0xc8] sm:$0xff]
      %v2285 = vld [vmem:[#allocation5 + $0xd0] sm:$0xff]
      %v2286 = vld [vmem:[#allocation5 + $0xd8] sm:$0xff]
      %v2287 = vld [vmem:[#allocation5 + $0xe0] sm:$0xff]
      %v2288 = vld [vmem:[#allocation5 + $0xe8] sm:$0xff]
      %v2289 = vld [vmem:[#allocation5 + $0xf0] sm:$0xff]
      %v2290 = vld [vmem:[#allocation5 + $0xf8] sm:$0xff]
      %v2291 = vld [vmem:[#allocation5 + $0x100] sm:$0xff]
      %v2292 = vld [vmem:[#allocation5 + $0x108] sm:$0xff]
      %v2293 = vld [vmem:[#allocation5 + $0x110] sm:$0xff]
      %v2294 = vld [vmem:[#allocation5 + $0x118] sm:$0xff]
      %v2295 = vld [vmem:[#allocation5 + $0x120] sm:$0xff]
      %v2296 = vld [vmem:[#allocation5 + $0x128] sm:$0xff]
      %v2297 = vld [vmem:[#allocation5 + $0x130] sm:$0xff]
      %v2298 = vld [vmem:[#allocation5 + $0x138] sm:$0xff]
      %v2299 = vld [vmem:[#allocation5 + $0x140] sm:$0xff]
      %v2300 = vld [vmem:[#allocation5 + $0x148] sm:$0xff]
      %v2301 = vld [vmem:[#allocation5 + $0x150] sm:$0xff]
      %v2302 = vld [vmem:[#allocation5 + $0x158] sm:$0xff]
      %v2303 = vld [vmem:[#allocation5 + $0x160] sm:$0xff]
      %v2304 = vld [vmem:[#allocation5 + $0x168] sm:$0xff]
      %v2305 = vld [vmem:[#allocation5 + $0x170] sm:$0xff]
      %v2306 = vld [vmem:[#allocation5 + $0x178] sm:$0xff]
      %v2307 = vld [vmem:[#allocation5 + $0x180] sm:$0xff]
      %v2308 = vld [vmem:[#allocation5 + $0x188] sm:$0xff]
      %v2309 = vld [vmem:[#allocation5 + $0x190] sm:$0xff]
      %v2310 = vld [vmem:[#allocation5 + $0x198] sm:$0xff]
      %v2311 = vld [vmem:[#allocation5 + $0x1a0] sm:$0xff]
      %v2312 = vld [vmem:[#allocation5 + $0x1a8] sm:$0xff]
      %v2313 = vld [vmem:[#allocation5 + $0x1b0] sm:$0xff]
      %v2314 = vld [vmem:[#allocation5 + $0x1b8] sm:$0xff]
      %v2315 = vld [vmem:[#allocation5 + $0x1c0] sm:$0xff]
      %v2316 = vld [vmem:[#allocation5 + $0x1c8] sm:$0xff]
      %v2317 = vld [vmem:[#allocation5 + $0x1d0] sm:$0xff]
      %v2318 = vld [vmem:[#allocation5 + $0x1d8] sm:$0xff]
      %v2319 = vld [vmem:[#allocation5 + $0x1e0] sm:$0xff]
      %v2320 = vld [vmem:[#allocation5 + $0x1e8] sm:$0xff]
      %v2321 = vld [vmem:[#allocation5 + $0x1f0] sm:$0xff]
      %v2322 = vld [vmem:[#allocation5 + $0x1f8] sm:$0xff]
      %2323 = vmatprep.subr.mxu0 %v2260
      %2324 = vmatpush1.msra.mxu0 %v2259
      %2325 = vmatprep.subr.mxu0 %v2264
      %2326 = vmatpush1.msra.mxu0 %v2263
      %2327 = vmatprep.subr.mxu0 %v2268
      %2328 = vmatpush1.msra.mxu0 %v2267
      %2329 = vmatprep.subr.mxu0 %v2272
      %2330 = vmatpush1.msra.mxu0 %v2271
      %2331 = vmatprep.subr.mxu0 %v2276
      %2332 = vmatpush1.msra.mxu0 %v2275
      %2333 = vmatprep.subr.mxu0 %v2280
      %2334 = vmatpush1.msra.mxu0 %v2279
      %2335 = vmatprep.subr.mxu0 %v2284
      %2336 = vmatpush1.msra.mxu0 %v2283
      %2337 = vmatprep.subr.mxu0 %v2288
      %2338 = vmatpush1.msra.mxu0 %v2287
      %2339 = vmatprep.subr.mxu0 %v2292
      %2340 = vmatpush1.msra.mxu0 %v2291
      %2341 = vmatprep.subr.mxu0 %v2296
      %2342 = vmatpush1.msra.mxu0 %v2295
      %2343 = vmatprep.subr.mxu0 %v2300
      %2344 = vmatpush1.msra.mxu0 %v2299
      %2345 = vmatprep.subr.mxu0 %v2304
      %2346 = vmatpush1.msra.mxu0 %v2303
      %2347 = vmatprep.subr.mxu0 %v2308
      %2348 = vmatpush1.msra.mxu0 %v2307
      %2349 = vmatprep.subr.mxu0 %v2312
      %2350 = vmatpush1.msra.mxu0 %v2311
      %2351 = vmatprep.subr.mxu0 %v2316
      %2352 = vmatpush1.msra.mxu0 %v2315
      %2353 = vmatprep.subr.mxu0 %v2320
      %2354 = vmatpush1.msra.mxu0 %v2319
      %2355 = vmatprep.subr.mxu0 0.0
      %2356 = vmatpush1.msra.mxu0 0.0
      %2357 = vmatprep.subr.mxu0 0.0
      %2358 = vmatpush1.msra.mxu0 0.0
      %2359 = vmatprep.subr.mxu0 0.0
      %2360 = vmatpush1.msra.mxu0 0.0
      %2361 = vmatprep.subr.mxu0 0.0
      %2362 = vmatpush1.msra.mxu0 0.0
      %2363 = vmatprep.subr.mxu0 0.0
      %2364 = vmatpush1.msra.mxu0 0.0
      %2365 = vmatprep.subr.mxu0 0.0
      %2366 = vmatpush1.msra.mxu0 0.0
      %2367 = vmatprep.subr.mxu0 0.0
      %2368 = vmatpush1.msra.mxu0 0.0
      %2369 = vmatprep.subr.mxu0 0.0
      %2370 = vmatpush1.msra.mxu0 0.0
      %2371 = vmatprep.subr.mxu0 0.0
      %2372 = vmatpush1.msra.mxu0 0.0
      %2373 = vmatprep.subr.mxu0 0.0
      %2374 = vmatpush1.msra.mxu0 0.0
      %2375 = vmatprep.subr.mxu0 0.0
      %2376 = vmatpush1.msra.mxu0 0.0
      %2377 = vmatprep.subr.mxu0 0.0
      %2378 = vmatpush1.msra.mxu0 0.0
      %2379 = vmatprep.subr.mxu0 0.0
      %2380 = vmatpush1.msra.mxu0 0.0
      %2381 = vmatprep.subr.mxu0 0.0
      %2382 = vmatpush1.msra.mxu0 0.0
      %2383 = vmatprep.subr.mxu0 0.0
      %2384 = vmatpush1.msra.mxu0 0.0
      %2385 = vmatprep.subr.mxu0 0.0
      %2386 = vmatpush1.msra.mxu0 0.0
      %2387 = vmatprep.mubr.f32.mxu0 0.0
      %2388 = vmatmul.mubr.f32.gmra.mrb[0].mxu0 %v2249
      %v2389 = vpop.f32.mrb[0].mxu0
      %v2390 = vadd.f32 0.0, %v2389
      %v2391 = vpop.f32.mrb[0].mxu0
      %v2392 = vadd.f32 0.0, %v2391
      %2393 = vdwg.mxu0
      %2394 = vmatprep.subr.mxu0 %v2262
      %2395 = vmatpush1.msra.mxu0 %v2261
      %2396 = vmatprep.subr.mxu0 %v2266
      %2397 = vmatpush1.msra.mxu0 %v2265
      %2398 = vmatprep.subr.mxu0 %v2270
      %2399 = vmatpush1.msra.mxu0 %v2269
      %2400 = vmatprep.subr.mxu0 %v2274
      %2401 = vmatpush1.msra.mxu0 %v2273
      %2402 = vmatprep.subr.mxu0 %v2278
      %2403 = vmatpush1.msra.mxu0 %v2277
      %2404 = vmatprep.subr.mxu0 %v2282
      %2405 = vmatpush1.msra.mxu0 %v2281
      %2406 = vmatprep.subr.mxu0 %v2286
      %2407 = vmatpush1.msra.mxu0 %v2285
      %2408 = vmatprep.subr.mxu0 %v2290
      %2409 = vmatpush1.msra.mxu0 %v2289
      %2410 = vmatprep.subr.mxu0 %v2294
      %2411 = vmatpush1.msra.mxu0 %v2293
      %2412 = vmatprep.subr.mxu0 %v2298
      %2413 = vmatpush1.msra.mxu0 %v2297
      %2414 = vmatprep.subr.mxu0 %v2302
      %2415 = vmatpush1.msra.mxu0 %v2301
      %2416 = vmatprep.subr.mxu0 %v2306
      %2417 = vmatpush1.msra.mxu0 %v2305
      %2418 = vmatprep.subr.mxu0 %v2310
      %2419 = vmatpush1.msra.mxu0 %v2309
      %2420 = vmatprep.subr.mxu0 %v2314
      %2421 = vmatpush1.msra.mxu0 %v2313
      %2422 = vmatprep.subr.mxu0 %v2318
      %2423 = vmatpush1.msra.mxu0 %v2317
      %2424 = vmatprep.subr.mxu0 %v2322
      %2425 = vmatpush1.msra.mxu0 %v2321
      %2426 = vmatprep.subr.mxu0 0.0
      %2427 = vmatpush1.msra.mxu0 0.0
      %2428 = vmatprep.subr.mxu0 0.0
      %2429 = vmatpush1.msra.mxu0 0.0
      %2430 = vmatprep.subr.mxu0 0.0
      %2431 = vmatpush1.msra.mxu0 0.0
      %2432 = vmatprep.subr.mxu0 0.0
      %2433 = vmatpush1.msra.mxu0 0.0
      %2434 = vmatprep.subr.mxu0 0.0
      %2435 = vmatpush1.msra.mxu0 0.0
      %2436 = vmatprep.subr.mxu0 0.0
      %2437 = vmatpush1.msra.mxu0 0.0
      %2438 = vmatprep.subr.mxu0 0.0
      %2439 = vmatpush1.msra.mxu0 0.0
      %2440 = vmatprep.subr.mxu0 0.0
      %2441 = vmatpush1.msra.mxu0 0.0
      %2442 = vmatprep.subr.mxu0 0.0
      %2443 = vmatpush1.msra.mxu0 0.0
      %2444 = vmatprep.subr.mxu0 0.0
      %2445 = vmatpush1.msra.mxu0 0.0
      %2446 = vmatprep.subr.mxu0 0.0
      %2447 = vmatpush1.msra.mxu0 0.0
      %2448 = vmatprep.subr.mxu0 0.0
      %2449 = vmatpush1.msra.mxu0 0.0
      %2450 = vmatprep.subr.mxu0 0.0
      %2451 = vmatpush1.msra.mxu0 0.0
      %2452 = vmatprep.subr.mxu0 0.0
      %2453 = vmatpush1.msra.mxu0 0.0
      %2454 = vmatprep.subr.mxu0 0.0
      %2455 = vmatpush1.msra.mxu0 0.0
      %2456 = vmatprep.subr.mxu0 0.0
      %2457 = vmatpush1.msra.mxu0 0.0
      %2458 = vmatprep.mubr.f32.mxu0 0.0
      %2459 = vmatmul.mubr.f32.gmra.mrb[0].mxu0 %v2249
      %v2460 = vpop.f32.mrb[0].mxu0
      %v2461 = vadd.f32 0.0, %v2460
      %v2462 = vpop.f32.mrb[0].mxu0
      %v2463 = vadd.f32 0.0, %v2462
      %2464 = vdwg.mxu0
      %v2465 = vadd.f32 %v2255, %v2390
      %v2466 = vadd.f32 %v2256, %v2392
      %v2467 = vadd.f32 %v2257, %v2461
      %v2468 = vadd.f32 %v2258, %v2463
      %v2469 = vtanh.pop %v2465
      %v2470 = vtanh.pop %v2466
      %v2471 = vtanh.pop %v2467
      %v2472 = vtanh.pop %v2468
      %v2473 = vxor.u32 %v2465, 2147483648
      %v2474 = vxor.u32 %v2466, 2147483648
      %v2475 = vxor.u32 %v2467, 2147483648
      %v2476 = vxor.u32 %v2468, 2147483648
      %v2477 = vmul.f32 %v2473, 1.442695
      %v2478 = vpow.pop %v2477
      %v2479 = vmul.f32 %v2474, 1.442695
      %v2480 = vpow.pop %v2479
      %v2481 = vmul.f32 %v2475, 1.442695
      %v2482 = vpow.pop %v2481
      %v2483 = vmul.f32 %v2476, 1.442695
      %v2484 = vpow.pop %v2483
      %v2485 = vadd.f32 %v2478, 1.0
      %v2486 = vadd.f32 %v2480, 1.0
      %v2487 = vadd.f32 %v2482, 1.0
      %v2488 = vadd.f32 %v2484, 1.0
      %v2489 = vrcp.pop %v2485
      %v2490 = vmul.f32 1.0, %v2489
      %v2491 = vrcp.pop %v2486
      %v2492 = vmul.f32 1.0, %v2491
      %v2493 = vrcp.pop %v2487
      %v2494 = vmul.f32 1.0, %v2493
      %v2495 = vrcp.pop %v2488
      %v2496 = vmul.f32 1.0, %v2495
      %v2497 = vsel %vm144, %v2469, %v2490
      %v2498 = vsel %vm145, %v2470, %v2492
      %v2499 = vsel %vm146, %v2471, %v2494
      %v2500 = vsel %vm147, %v2472, %v2496
      %v2501 = vmul.f32 %v2498, %v2247
      %v2502 = vmul.f32 %v2497, %v2499
      %v2503 = vadd.f32 %v2501, %v2502
      %v2504 = vtanh.pop %v2503
      %v2505 = vmul.f32 %v2500, %v2504
      %s2506 = scalar_lea.vmem [#allocation2], 56
      %2507 = vst [vmem:[%s2506] sm:$0xff] %v2505
    %v2508 = vld [vmem:[#allocation2] sm:$0xff]
    %v2509 = vld [vmem:[#allocation2 + $0x8] sm:$0xff]
    %v2510 = vld [vmem:[#allocation2 + $0x10] sm:$0xff]
    %v2511 = vld [vmem:[#allocation2 + $0x18] sm:$0xff]
    %v2512 = vld [vmem:[#allocation2 + $0x20] sm:$0xff]
    %v2513 = vld [vmem:[#allocation2 + $0x28] sm:$0xff]
    %v2514 = vld [vmem:[#allocation2 + $0x30] sm:$0xff]
    %v2515 = vld [vmem:[#allocation2 + $0x38] sm:$0xff]
    $region75: #{music_lstm_forward.1} parent=1
      #allocation16 [shape = 'u8[131072]{0}', space=vmem, size = 0x20000, scoped, tag = 'scoped memory for music_lstm_forward.1']
      %v2516 = vld [vmem:[#allocation7] sm:$0xff]
      %v2517 = vld [vmem:[#allocation7 + $0x8] sm:$0xff]
      %v2518 = vld [vmem:[#allocation7 + $0x10] sm:$0xff]
      %v2519 = vld [vmem:[#allocation7 + $0x18] sm:$0xff]
      %v2520 = vld [vmem:[#allocation7 + $0x20] sm:$0xff]
      %v2521 = vld [vmem:[#allocation7 + $0x28] sm:$0xff]
      %v2522 = vld [vmem:[#allocation7 + $0x30] sm:$0xff]
      %v2523 = vld [vmem:[#allocation7 + $0x38] sm:$0xff]
      %v2524 = vld [vmem:[#allocation7 + $0x40] sm:$0xff]
      %v2525 = vld [vmem:[#allocation7 + $0x48] sm:$0xff]
      %v2526 = vld [vmem:[#allocation7 + $0x50] sm:$0xff]
      %v2527 = vld [vmem:[#allocation7 + $0x58] sm:$0xff]
      %v2528 = vld [vmem:[#allocation7 + $0x60] sm:$0xff]
      %v2529 = vld [vmem:[#allocation7 + $0x68] sm:$0xff]
      %v2530 = vld [vmem:[#allocation7 + $0x70] sm:$0xff]
      %v2531 = vld [vmem:[#allocation7 + $0x78] sm:$0xff]
      %v2532 = vld [vmem:[#allocation7 + $0x80] sm:$0xff]
      %v2533 = vld [vmem:[#allocation7 + $0x88] sm:$0xff]
      %v2534 = vld [vmem:[#allocation7 + $0x90] sm:$0xff]
      %v2535 = vld [vmem:[#allocation7 + $0x98] sm:$0xff]
      %v2536 = vld [vmem:[#allocation7 + $0xa0] sm:$0xff]
      %v2537 = vld [vmem:[#allocation7 + $0xa8] sm:$0xff]
      %v2538 = vld [vmem:[#allocation7 + $0xb0] sm:$0xff]
      %v2539 = vld [vmem:[#allocation7 + $0xb8] sm:$0xff]
      %v2540 = vld [vmem:[#allocation7 + $0xc0] sm:$0xff]
      %v2541 = vld [vmem:[#allocation7 + $0xc8] sm:$0xff]
      %v2542 = vld [vmem:[#allocation7 + $0xd0] sm:$0xff]
      %v2543 = vld [vmem:[#allocation7 + $0xd8] sm:$0xff]
      %v2544 = vld [vmem:[#allocation7 + $0xe0] sm:$0xff]
      %v2545 = vld [vmem:[#allocation7 + $0xe8] sm:$0xff]
      %v2546 = vld [vmem:[#allocation7 + $0xf0] sm:$0xff]
      %v2547 = vld [vmem:[#allocation7 + $0xf8] sm:$0xff]
      %v2548 = vld [vmem:[#allocation7 + $0x100] sm:$0xff]
      %v2549 = vld [vmem:[#allocation7 + $0x108] sm:$0xff]
      %v2550 = vld [vmem:[#allocation7 + $0x110] sm:$0xff]
      %v2551 = vld [vmem:[#allocation7 + $0x118] sm:$0xff]
      %v2552 = vld [vmem:[#allocation7 + $0x120] sm:$0xff]
      %v2553 = vld [vmem:[#allocation7 + $0x128] sm:$0xff]
      %v2554 = vld [vmem:[#allocation7 + $0x130] sm:$0xff]
      %v2555 = vld [vmem:[#allocation7 + $0x138] sm:$0xff]
      %v2556 = vld [vmem:[#allocation7 + $0x140] sm:$0xff]
      %v2557 = vld [vmem:[#allocation7 + $0x148] sm:$0xff]
      %v2558 = vld [vmem:[#allocation7 + $0x150] sm:$0xff]
      %v2559 = vld [vmem:[#allocation7 + $0x158] sm:$0xff]
      %v2560 = vld [vmem:[#allocation7 + $0x160] sm:$0xff]
      %v2561 = vld [vmem:[#allocation7 + $0x168] sm:$0xff]
      %v2562 = vld [vmem:[#allocation7 + $0x170] sm:$0xff]
      %v2563 = vld [vmem:[#allocation7 + $0x178] sm:$0xff]
      %v2564 = vld [vmem:[#allocation7 + $0x180] sm:$0xff]
      %v2565 = vld [vmem:[#allocation7 + $0x188] sm:$0xff]
      %v2566 = vld [vmem:[#allocation7 + $0x190] sm:$0xff]
      %v2567 = vld [vmem:[#allocation7 + $0x198] sm:$0xff]
      %v2568 = vld [vmem:[#allocation7 + $0x1a0] sm:$0xff]
      %v2569 = vld [vmem:[#allocation7 + $0x1a8] sm:$0xff]
      %v2570 = vld [vmem:[#allocation7 + $0x1b0] sm:$0xff]
      %v2571 = vld [vmem:[#allocation7 + $0x1b8] sm:$0xff]
      %v2572 = vld [vmem:[#allocation7 + $0x1c0] sm:$0xff]
      %v2573 = vld [vmem:[#allocation7 + $0x1c8] sm:$0xff]
      %v2574 = vld [vmem:[#allocation7 + $0x1d0] sm:$0xff]
      %v2575 = vld [vmem:[#allocation7 + $0x1d8] sm:$0xff]
      %v2576 = vld [vmem:[#allocation7 + $0x1e0] sm:$0xff]
      %v2577 = vld [vmem:[#allocation7 + $0x1e8] sm:$0xff]
      %v2578 = vld [vmem:[#allocation7 + $0x1f0] sm:$0xff]
      %v2579 = vld [vmem:[#allocation7 + $0x1f8] sm:$0xff]
      %v2580 = vld [vmem:[%s6] sm:$0xf]
      %v2582 = vlaneseq
      %v2583 = vshrl.u32 %v2582, 7
      %v2584 = vsub.s32 0, %v2583
      %v2585 = vrot.slane %v2580, %v2584
      %v2586 = vlaneseq
      %v2587 = vshrl.u32 %v2586, 7
      %v2588 = vsub.s32 1, %v2587
      %v2589 = vrot.slane %v2580, %v2588
      %v2590 = vlaneseq
      %v2591 = vshrl.u32 %v2590, 7
      %v2592 = vsub.s32 2, %v2591
      %v2593 = vrot.slane %v2580, %v2592
      %v2594 = vlaneseq
      %v2595 = vshrl.u32 %v2594, 7
      %v2596 = vsub.s32 3, %v2595
      %v2597 = vrot.slane %v2580, %v2596
      %2602 = vmatprep.subr.mxu0 %v2517
      %2603 = vmatpush1.msra.mxu0 %v2516
      %2604 = vmatprep.subr.mxu0 %v2521
      %2605 = vmatpush1.msra.mxu0 %v2520
      %2606 = vmatprep.subr.mxu0 %v2525
      %2607 = vmatpush1.msra.mxu0 %v2524
      %2608 = vmatprep.subr.mxu0 %v2529
      %2609 = vmatpush1.msra.mxu0 %v2528
      %2610 = vmatprep.subr.mxu0 %v2533
      %2611 = vmatpush1.msra.mxu0 %v2532
      %2612 = vmatprep.subr.mxu0 %v2537
      %2613 = vmatpush1.msra.mxu0 %v2536
      %2614 = vmatprep.subr.mxu0 %v2541
      %2615 = vmatpush1.msra.mxu0 %v2540
      %2616 = vmatprep.subr.mxu0 %v2545
      %2617 = vmatpush1.msra.mxu0 %v2544
      %2618 = vmatprep.subr.mxu0 %v2549
      %2619 = vmatpush1.msra.mxu0 %v2548
      %2620 = vmatprep.subr.mxu0 %v2553
      %2621 = vmatpush1.msra.mxu0 %v2552
      %2622 = vmatprep.subr.mxu0 %v2557
      %2623 = vmatpush1.msra.mxu0 %v2556
      %2624 = vmatprep.subr.mxu0 %v2561
      %2625 = vmatpush1.msra.mxu0 %v2560
      %2626 = vmatprep.subr.mxu0 %v2565
      %2627 = vmatpush1.msra.mxu0 %v2564
      %2628 = vmatprep.subr.mxu0 %v2569
      %2629 = vmatpush1.msra.mxu0 %v2568
      %2630 = vmatprep.subr.mxu0 %v2573
      %2631 = vmatpush1.msra.mxu0 %v2572
      %2632 = vmatprep.subr.mxu0 %v2577
      %2633 = vmatpush1.msra.mxu0 %v2576
      %2634 = vmatprep.subr.mxu0 0.0
      %2635 = vmatpush1.msra.mxu0 0.0
      %2636 = vmatprep.subr.mxu0 0.0
      %2637 = vmatpush1.msra.mxu0 0.0
      %2638 = vmatprep.subr.mxu0 0.0
      %2639 = vmatpush1.msra.mxu0 0.0
      %2640 = vmatprep.subr.mxu0 0.0
      %2641 = vmatpush1.msra.mxu0 0.0
      %2642 = vmatprep.subr.mxu0 0.0
      %2643 = vmatpush1.msra.mxu0 0.0
      %2644 = vmatprep.subr.mxu0 0.0
      %2645 = vmatpush1.msra.mxu0 0.0
      %2646 = vmatprep.subr.mxu0 0.0
      %2647 = vmatpush1.msra.mxu0 0.0
      %2648 = vmatprep.subr.mxu0 0.0
      %2649 = vmatpush1.msra.mxu0 0.0
      %2650 = vmatprep.subr.mxu0 0.0
      %2651 = vmatpush1.msra.mxu0 0.0
      %2652 = vmatprep.subr.mxu0 0.0
      %2653 = vmatpush1.msra.mxu0 0.0
      %2654 = vmatprep.subr.mxu0 0.0
      %2655 = vmatpush1.msra.mxu0 0.0
      %2656 = vmatprep.subr.mxu0 0.0
      %2657 = vmatpush1.msra.mxu0 0.0
      %2658 = vmatprep.subr.mxu0 0.0
      %2659 = vmatpush1.msra.mxu0 0.0
      %2660 = vmatprep.subr.mxu0 0.0
      %2661 = vmatpush1.msra.mxu0 0.0
      %2662 = vmatprep.subr.mxu0 0.0
      %2663 = vmatpush1.msra.mxu0 0.0
      %2664 = vmatprep.subr.mxu0 0.0
      %2665 = vmatpush1.msra.mxu0 0.0
      %2666 = vmatprep.mubr.f32.mxu0 0.0
      %2667 = vmatmul.mubr.f32.gmra.mrb[0].mxu0 %v2508
      %v2668 = vpop.f32.mrb[0].mxu0
      %v2669 = vadd.f32 %v2585, %v2668
      %v2670 = vpop.f32.mrb[0].mxu0
      %v2671 = vadd.f32 %v2589, %v2670
      %2672 = vmatprep.mubr.f32.mxu0 0.0
      %2673 = vmatmul.mubr.f32.gmra.mrb[0].mxu0 %v2509
      %v2674 = vpop.f32.mrb[0].mxu0
      %v2675 = vadd.f32 %v2585, %v2674
      %v2676 = vpop.f32.mrb[0].mxu0
      %v2677 = vadd.f32 %v2589, %v2676
      %2678 = vmatprep.mubr.f32.mxu0 0.0
      %2679 = vmatmul.mubr.f32.gmra.mrb[0].mxu0 %v2510
      %v2680 = vpop.f32.mrb[0].mxu0
      %v2681 = vadd.f32 %v2585, %v2680
      %v2682 = vpop.f32.mrb[0].mxu0
      %v2683 = vadd.f32 %v2589, %v2682
      %2684 = vmatprep.mubr.f32.mxu0 0.0
      %2685 = vmatmul.mubr.f32.gmra.mrb[0].mxu0 %v2511
      %v2686 = vpop.f32.mrb[0].mxu0
      %v2687 = vadd.f32 %v2585, %v2686
      %v2688 = vpop.f32.mrb[0].mxu0
      %v2689 = vadd.f32 %v2589, %v2688
      %2690 = vmatprep.mubr.f32.mxu0 0.0
      %2691 = vmatmul.mubr.f32.gmra.mrb[0].mxu0 %v2512
      %v2692 = vpop.f32.mrb[0].mxu0
      %v2693 = vadd.f32 %v2585, %v2692
      %v2694 = vpop.f32.mrb[0].mxu0
      %v2695 = vadd.f32 %v2589, %v2694
      %2696 = vmatprep.mubr.f32.mxu0 0.0
      %2697 = vmatmul.mubr.f32.gmra.mrb[0].mxu0 %v2513
      %v2698 = vpop.f32.mrb[0].mxu0
      %v2699 = vadd.f32 %v2585, %v2698
      %v2700 = vpop.f32.mrb[0].mxu0
      %v2701 = vadd.f32 %v2589, %v2700
      %2702 = vmatprep.mubr.f32.mxu0 0.0
      %2703 = vmatmul.mubr.f32.gmra.mrb[0].mxu0 %v2514
      %v2704 = vpop.f32.mrb[0].mxu0
      %v2705 = vadd.f32 %v2585, %v2704
      %v2706 = vpop.f32.mrb[0].mxu0
      %v2707 = vadd.f32 %v2589, %v2706
      %2708 = vmatprep.mubr.f32.mxu0 0.0
      %2709 = vmatmul.mubr.f32.gmra.mrb[0].mxu0 %v2515
      %v2710 = vpop.f32.mrb[0].mxu0
      %v2711 = vadd.f32 %v2585, %v2710
      %v2712 = vpop.f32.mrb[0].mxu0
      %v2713 = vadd.f32 %v2589, %v2712
      %2714 = vdwg.mxu0
      %2715 = vmatprep.subr.mxu0 %v2519
      %2716 = vmatpush1.msra.mxu0 %v2518
      %2717 = vmatprep.subr.mxu0 %v2523
      %2718 = vmatpush1.msra.mxu0 %v2522
      %2719 = vmatprep.subr.mxu0 %v2527
      %2720 = vmatpush1.msra.mxu0 %v2526
      %2721 = vmatprep.subr.mxu0 %v2531
      %2722 = vmatpush1.msra.mxu0 %v2530
      %2723 = vmatprep.subr.mxu0 %v2535
      %2724 = vmatpush1.msra.mxu0 %v2534
      %2725 = vmatprep.subr.mxu0 %v2539
      %2726 = vmatpush1.msra.mxu0 %v2538
      %2727 = vmatprep.subr.mxu0 %v2543
      %2728 = vmatpush1.msra.mxu0 %v2542
      %2729 = vmatprep.subr.mxu0 %v2547
      %2730 = vmatpush1.msra.mxu0 %v2546
      %2731 = vmatprep.subr.mxu0 %v2551
      %2732 = vmatpush1.msra.mxu0 %v2550
      %2733 = vmatprep.subr.mxu0 %v2555
      %2734 = vmatpush1.msra.mxu0 %v2554
      %2735 = vmatprep.subr.mxu0 %v2559
      %2736 = vmatpush1.msra.mxu0 %v2558
      %2737 = vmatprep.subr.mxu0 %v2563
      %2738 = vmatpush1.msra.mxu0 %v2562
      %2739 = vmatprep.subr.mxu0 %v2567
      %2740 = vmatpush1.msra.mxu0 %v2566
      %2741 = vmatprep.subr.mxu0 %v2571
      %2742 = vmatpush1.msra.mxu0 %v2570
      %2743 = vmatprep.subr.mxu0 %v2575
      %2744 = vmatpush1.msra.mxu0 %v2574
      %2745 = vmatprep.subr.mxu0 %v2579
      %2746 = vmatpush1.msra.mxu0 %v2578
      %2747 = vmatprep.subr.mxu0 0.0
      %2748 = vmatpush1.msra.mxu0 0.0
      %2749 = vmatprep.subr.mxu0 0.0
      %2750 = vmatpush1.msra.mxu0 0.0
      %2751 = vmatprep.subr.mxu0 0.0
      %2752 = vmatpush1.msra.mxu0 0.0
      %2753 = vmatprep.subr.mxu0 0.0
      %2754 = vmatpush1.msra.mxu0 0.0
      %2755 = vmatprep.subr.mxu0 0.0
      %2756 = vmatpush1.msra.mxu0 0.0
      %2757 = vmatprep.subr.mxu0 0.0
      %2758 = vmatpush1.msra.mxu0 0.0
      %2759 = vmatprep.subr.mxu0 0.0
      %2760 = vmatpush1.msra.mxu0 0.0
      %2761 = vmatprep.subr.mxu0 0.0
      %2762 = vmatpush1.msra.mxu0 0.0
      %2763 = vmatprep.subr.mxu0 0.0
      %2764 = vmatpush1.msra.mxu0 0.0
      %2765 = vmatprep.subr.mxu0 0.0
      %2766 = vmatpush1.msra.mxu0 0.0
      %2767 = vmatprep.subr.mxu0 0.0
      %2768 = vmatpush1.msra.mxu0 0.0
      %2769 = vmatprep.subr.mxu0 0.0
      %2770 = vmatpush1.msra.mxu0 0.0
      %2771 = vmatprep.subr.mxu0 0.0
      %2772 = vmatpush1.msra.mxu0 0.0
      %2773 = vmatprep.subr.mxu0 0.0
      %2774 = vmatpush1.msra.mxu0 0.0
      %2775 = vmatprep.subr.mxu0 0.0
      %2776 = vmatpush1.msra.mxu0 0.0
      %2777 = vmatprep.subr.mxu0 0.0
      %2778 = vmatpush1.msra.mxu0 0.0
      %2779 = vmatprep.mubr.f32.mxu0 0.0
      %2780 = vmatmul.mubr.f32.gmra.mrb[0].mxu0 %v2508
      %v2781 = vpop.f32.mrb[0].mxu0
      %v2782 = vadd.f32 %v2593, %v2781
      %v2783 = vpop.f32.mrb[0].mxu0
      %v2784 = vadd.f32 %v2597, %v2783
      %2785 = vmatprep.mubr.f32.mxu0 0.0
      %2786 = vmatmul.mubr.f32.gmra.mrb[0].mxu0 %v2509
      %v2787 = vpop.f32.mrb[0].mxu0
      %v2788 = vadd.f32 %v2593, %v2787
      %v2789 = vpop.f32.mrb[0].mxu0
      %v2790 = vadd.f32 %v2597, %v2789
      %2791 = vmatprep.mubr.f32.mxu0 0.0
      %2792 = vmatmul.mubr.f32.gmra.mrb[0].mxu0 %v2510
      %v2793 = vpop.f32.mrb[0].mxu0
      %v2794 = vadd.f32 %v2593, %v2793
      %v2795 = vpop.f32.mrb[0].mxu0
      %v2796 = vadd.f32 %v2597, %v2795
      %2797 = vmatprep.mubr.f32.mxu0 0.0
      %2798 = vmatmul.mubr.f32.gmra.mrb[0].mxu0 %v2511
      %v2799 = vpop.f32.mrb[0].mxu0
      %v2800 = vadd.f32 %v2593, %v2799
      %v2801 = vpop.f32.mrb[0].mxu0
      %v2802 = vadd.f32 %v2597, %v2801
      %2803 = vmatprep.mubr.f32.mxu0 0.0
      %2804 = vmatmul.mubr.f32.gmra.mrb[0].mxu0 %v2512
      %v2805 = vpop.f32.mrb[0].mxu0
      %v2806 = vadd.f32 %v2593, %v2805
      %v2807 = vpop.f32.mrb[0].mxu0
      %v2808 = vadd.f32 %v2597, %v2807
      %2809 = vmatprep.mubr.f32.mxu0 0.0
      %2810 = vmatmul.mubr.f32.gmra.mrb[0].mxu0 %v2513
      %v2811 = vpop.f32.mrb[0].mxu0
      %v2812 = vadd.f32 %v2593, %v2811
      %v2813 = vpop.f32.mrb[0].mxu0
      %v2814 = vadd.f32 %v2597, %v2813
      %2815 = vmatprep.mubr.f32.mxu0 0.0
      %2816 = vmatmul.mubr.f32.gmra.mrb[0].mxu0 %v2514
      %v2817 = vpop.f32.mrb[0].mxu0
      %v2818 = vadd.f32 %v2593, %v2817
      %v2819 = vpop.f32.mrb[0].mxu0
      %v2820 = vadd.f32 %v2597, %v2819
      %2821 = vmatprep.mubr.f32.mxu0 0.0
      %2822 = vmatmul.mubr.f32.gmra.mrb[0].mxu0 %v2515
      %v2823 = vpop.f32.mrb[0].mxu0
      %v2824 = vadd.f32 %v2593, %v2823
      %v2825 = vpop.f32.mrb[0].mxu0
      %v2826 = vadd.f32 %v2597, %v2825
      %2827 = vdwg.mxu0
      %2828 = vst [vmem:[#allocation16] sm:$0xff] %v2669
      %2829 = vst [vmem:[#allocation16 + $0x8] sm:$0xff] %v2671
      %2830 = vst [vmem:[#allocation16 + $0x10] sm:$0xff] %v2782
      %2831 = vst [vmem:[#allocation16 + $0x18] sm:$0xff] %v2784
      %2832 = vst [vmem:[#allocation16 + $0x20] sm:$0xff] %v2675
      %2833 = vst [vmem:[#allocation16 + $0x28] sm:$0xff] %v2677
      %2834 = vst [vmem:[#allocation16 + $0x30] sm:$0xff] %v2788
      %2835 = vst [vmem:[#allocation16 + $0x38] sm:$0xff] %v2790
      %2836 = vst [vmem:[#allocation16 + $0x40] sm:$0xff] %v2681
      %2837 = vst [vmem:[#allocation16 + $0x48] sm:$0xff] %v2683
      %2838 = vst [vmem:[#allocation16 + $0x50] sm:$0xff] %v2794
      %2839 = vst [vmem:[#allocation16 + $0x58] sm:$0xff] %v2796
      %2840 = vst [vmem:[#allocation16 + $0x60] sm:$0xff] %v2687
      %2841 = vst [vmem:[#allocation16 + $0x68] sm:$0xff] %v2689
      %2842 = vst [vmem:[#allocation16 + $0x70] sm:$0xff] %v2800
      %2843 = vst [vmem:[#allocation16 + $0x78] sm:$0xff] %v2802
      %2844 = vst [vmem:[#allocation16 + $0x80] sm:$0xff] %v2693
      %2845 = vst [vmem:[#allocation16 + $0x88] sm:$0xff] %v2695
      %2846 = vst [vmem:[#allocation16 + $0x90] sm:$0xff] %v2806
      %2847 = vst [vmem:[#allocation16 + $0x98] sm:$0xff] %v2808
      %2848 = vst [vmem:[#allocation16 + $0xa0] sm:$0xff] %v2699
      %2849 = vst [vmem:[#allocation16 + $0xa8] sm:$0xff] %v2701
      %2850 = vst [vmem:[#allocation16 + $0xb0] sm:$0xff] %v2812
      %2851 = vst [vmem:[#allocation16 + $0xb8] sm:$0xff] %v2814
      %2852 = vst [vmem:[#allocation16 + $0xc0] sm:$0xff] %v2705
      %2853 = vst [vmem:[#allocation16 + $0xc8] sm:$0xff] %v2707
      %2854 = vst [vmem:[#allocation16 + $0xd0] sm:$0xff] %v2818
      %2855 = vst [vmem:[#allocation16 + $0xd8] sm:$0xff] %v2820
      %2856 = vst [vmem:[#allocation16 + $0xe0] sm:$0xff] %v2711
      %2857 = vst [vmem:[#allocation16 + $0xe8] sm:$0xff] %v2713
      %2858 = vst [vmem:[#allocation16 + $0xf0] sm:$0xff] %v2824
      %2859 = vst [vmem:[#allocation16 + $0xf8] sm:$0xff] %v2826
      %s2860 = smul.u32 0, 4
      %s2861 = smul.addr %s2860, 8
      %s2862 = scalar_lea.vmem [#allocation16], %s2861
      %v2863 = vld [vmem:[%s2862] sm:$0xff]
      %v2864 = vld [vmem:[%s2862 + $0x8] sm:$0xff]
      %v2865 = vld [vmem:[%s2862 + $0x10] sm:$0xff]
      %v2866 = vld [vmem:[%s2862 + $0x18] sm:$0xff]
      %v2867 = vld [vmem:[#allocation9] sm:$0xff]
      %v2868 = vld [vmem:[#allocation9 + $0x8] sm:$0xff]
      %v2869 = vld [vmem:[#allocation9 + $0x10] sm:$0xff]
      %v2870 = vld [vmem:[#allocation9 + $0x18] sm:$0xff]
      %v2871 = vld [vmem:[#allocation9 + $0x20] sm:$0xff]
      %v2872 = vld [vmem:[#allocation9 + $0x28] sm:$0xff]
      %v2873 = vld [vmem:[#allocation9 + $0x30] sm:$0xff]
      %v2874 = vld [vmem:[#allocation9 + $0x38] sm:$0xff]
      %v2875 = vld [vmem:[#allocation9 + $0x40] sm:$0xff]
      %v2876 = vld [vmem:[#allocation9 + $0x48] sm:$0xff]
      %v2877 = vld [vmem:[#allocation9 + $0x50] sm:$0xff]
      %v2878 = vld [vmem:[#allocation9 + $0x58] sm:$0xff]
      %v2879 = vld [vmem:[#allocation9 + $0x60] sm:$0xff]
      %v2880 = vld [vmem:[#allocation9 + $0x68] sm:$0xff]
      %v2881 = vld [vmem:[#allocation9 + $0x70] sm:$0xff]
      %v2882 = vld [vmem:[#allocation9 + $0x78] sm:$0xff]
      %v2883 = vld [vmem:[#allocation9 + $0x80] sm:$0xff]
      %v2884 = vld [vmem:[#allocation9 + $0x88] sm:$0xff]
      %v2885 = vld [vmem:[#allocation9 + $0x90] sm:$0xff]
      %v2886 = vld [vmem:[#allocation9 + $0x98] sm:$0xff]
      %v2887 = vld [vmem:[#allocation9 + $0xa0] sm:$0xff]
      %v2888 = vld [vmem:[#allocation9 + $0xa8] sm:$0xff]
      %v2889 = vld [vmem:[#allocation9 + $0xb0] sm:$0xff]
      %v2890 = vld [vmem:[#allocation9 + $0xb8] sm:$0xff]
      %v2891 = vld [vmem:[#allocation9 + $0xc0] sm:$0xff]
      %v2892 = vld [vmem:[#allocation9 + $0xc8] sm:$0xff]
      %v2893 = vld [vmem:[#allocation9 + $0xd0] sm:$0xff]
      %v2894 = vld [vmem:[#allocation9 + $0xd8] sm:$0xff]
      %v2895 = vld [vmem:[#allocation9 + $0xe0] sm:$0xff]
      %v2896 = vld [vmem:[#allocation9 + $0xe8] sm:$0xff]
      %v2897 = vld [vmem:[#allocation9 + $0xf0] sm:$0xff]
      %v2898 = vld [vmem:[#allocation9 + $0xf8] sm:$0xff]
      %v2899 = vld [vmem:[#allocation9 + $0x100] sm:$0xff]
      %v2900 = vld [vmem:[#allocation9 + $0x108] sm:$0xff]
      %v2901 = vld [vmem:[#allocation9 + $0x110] sm:$0xff]
      %v2902 = vld [vmem:[#allocation9 + $0x118] sm:$0xff]
      %v2903 = vld [vmem:[#allocation9 + $0x120] sm:$0xff]
      %v2904 = vld [vmem:[#allocation9 + $0x128] sm:$0xff]
      %v2905 = vld [vmem:[#allocation9 + $0x130] sm:$0xff]
      %v2906 = vld [vmem:[#allocation9 + $0x138] sm:$0xff]
      %v2907 = vld [vmem:[#allocation9 + $0x140] sm:$0xff]
      %v2908 = vld [vmem:[#allocation9 + $0x148] sm:$0xff]
      %v2909 = vld [vmem:[#allocation9 + $0x150] sm:$0xff]
      %v2910 = vld [vmem:[#allocation9 + $0x158] sm:$0xff]
      %v2911 = vld [vmem:[#allocation9 + $0x160] sm:$0xff]
      %v2912 = vld [vmem:[#allocation9 + $0x168] sm:$0xff]
      %v2913 = vld [vmem:[#allocation9 + $0x170] sm:$0xff]
      %v2914 = vld [vmem:[#allocation9 + $0x178] sm:$0xff]
      %v2915 = vld [vmem:[#allocation9 + $0x180] sm:$0xff]
      %v2916 = vld [vmem:[#allocation9 + $0x188] sm:$0xff]
      %v2917 = vld [vmem:[#allocation9 + $0x190] sm:$0xff]
      %v2918 = vld [vmem:[#allocation9 + $0x198] sm:$0xff]
      %v2919 = vld [vmem:[#allocation9 + $0x1a0] sm:$0xff]
      %v2920 = vld [vmem:[#allocation9 + $0x1a8] sm:$0xff]
      %v2921 = vld [vmem:[#allocation9 + $0x1b0] sm:$0xff]
      %v2922 = vld [vmem:[#allocation9 + $0x1b8] sm:$0xff]
      %v2923 = vld [vmem:[#allocation9 + $0x1c0] sm:$0xff]
      %v2924 = vld [vmem:[#allocation9 + $0x1c8] sm:$0xff]
      %v2925 = vld [vmem:[#allocation9 + $0x1d0] sm:$0xff]
      %v2926 = vld [vmem:[#allocation9 + $0x1d8] sm:$0xff]
      %v2927 = vld [vmem:[#allocation9 + $0x1e0] sm:$0xff]
      %v2928 = vld [vmem:[#allocation9 + $0x1e8] sm:$0xff]
      %v2929 = vld [vmem:[#allocation9 + $0x1f0] sm:$0xff]
      %v2930 = vld [vmem:[#allocation9 + $0x1f8] sm:$0xff]
      %2931 = vmatprep.subr.mxu0 %v2868
      %2932 = vmatpush1.msra.mxu0 %v2867
      %2933 = vmatprep.subr.mxu0 %v2872
      %2934 = vmatpush1.msra.mxu0 %v2871
      %2935 = vmatprep.subr.mxu0 %v2876
      %2936 = vmatpush1.msra.mxu0 %v2875
      %2937 = vmatprep.subr.mxu0 %v2880
      %2938 = vmatpush1.msra.mxu0 %v2879
      %2939 = vmatprep.subr.mxu0 %v2884
      %2940 = vmatpush1.msra.mxu0 %v2883
      %2941 = vmatprep.subr.mxu0 %v2888
      %2942 = vmatpush1.msra.mxu0 %v2887
      %2943 = vmatprep.subr.mxu0 %v2892
      %2944 = vmatpush1.msra.mxu0 %v2891
      %2945 = vmatprep.subr.mxu0 %v2896
      %2946 = vmatpush1.msra.mxu0 %v2895
      %2947 = vmatprep.subr.mxu0 %v2900
      %2948 = vmatpush1.msra.mxu0 %v2899
      %2949 = vmatprep.subr.mxu0 %v2904
      %2950 = vmatpush1.msra.mxu0 %v2903
      %2951 = vmatprep.subr.mxu0 %v2908
      %2952 = vmatpush1.msra.mxu0 %v2907
      %2953 = vmatprep.subr.mxu0 %v2912
      %2954 = vmatpush1.msra.mxu0 %v2911
      %2955 = vmatprep.subr.mxu0 %v2916
      %2956 = vmatpush1.msra.mxu0 %v2915
      %2957 = vmatprep.subr.mxu0 %v2920
      %2958 = vmatpush1.msra.mxu0 %v2919
      %2959 = vmatprep.subr.mxu0 %v2924
      %2960 = vmatpush1.msra.mxu0 %v2923
      %2961 = vmatprep.subr.mxu0 %v2928
      %2962 = vmatpush1.msra.mxu0 %v2927
      %2963 = vmatprep.subr.mxu0 0.0
      %2964 = vmatpush1.msra.mxu0 0.0
      %2965 = vmatprep.subr.mxu0 0.0
      %2966 = vmatpush1.msra.mxu0 0.0
      %2967 = vmatprep.subr.mxu0 0.0
      %2968 = vmatpush1.msra.mxu0 0.0
      %2969 = vmatprep.subr.mxu0 0.0
      %2970 = vmatpush1.msra.mxu0 0.0
      %2971 = vmatprep.subr.mxu0 0.0
      %2972 = vmatpush1.msra.mxu0 0.0
      %2973 = vmatprep.subr.mxu0 0.0
      %2974 = vmatpush1.msra.mxu0 0.0
      %2975 = vmatprep.subr.mxu0 0.0
      %2976 = vmatpush1.msra.mxu0 0.0
      %2977 = vmatprep.subr.mxu0 0.0
      %2978 = vmatpush1.msra.mxu0 0.0
      %2979 = vmatprep.subr.mxu0 0.0
      %2980 = vmatpush1.msra.mxu0 0.0
      %2981 = vmatprep.subr.mxu0 0.0
      %2982 = vmatpush1.msra.mxu0 0.0
      %2983 = vmatprep.subr.mxu0 0.0
      %2984 = vmatpush1.msra.mxu0 0.0
      %2985 = vmatprep.subr.mxu0 0.0
      %2986 = vmatpush1.msra.mxu0 0.0
      %2987 = vmatprep.subr.mxu0 0.0
      %2988 = vmatpush1.msra.mxu0 0.0
      %2989 = vmatprep.subr.mxu0 0.0
      %2990 = vmatpush1.msra.mxu0 0.0
      %2991 = vmatprep.subr.mxu0 0.0
      %2992 = vmatpush1.msra.mxu0 0.0
      %2993 = vmatprep.subr.mxu0 0.0
      %2994 = vmatpush1.msra.mxu0 0.0
      %2995 = vmatprep.mubr.f32.mxu0 0.0
      %2996 = vmatmul.mubr.f32.gmra.mrb[0].mxu0 0.0
      %v2997 = vpop.f32.mrb[0].mxu0
      %v2998 = vadd.f32 0.0, %v2997
      %v2999 = vpop.f32.mrb[0].mxu0
      %v3000 = vadd.f32 0.0, %v2999
      %3001 = vdwg.mxu0
      %3002 = vmatprep.subr.mxu0 %v2870
      %3003 = vmatpush1.msra.mxu0 %v2869
      %3004 = vmatprep.subr.mxu0 %v2874
      %3005 = vmatpush1.msra.mxu0 %v2873
      %3006 = vmatprep.subr.mxu0 %v2878
      %3007 = vmatpush1.msra.mxu0 %v2877
      %3008 = vmatprep.subr.mxu0 %v2882
      %3009 = vmatpush1.msra.mxu0 %v2881
      %3010 = vmatprep.subr.mxu0 %v2886
      %3011 = vmatpush1.msra.mxu0 %v2885
      %3012 = vmatprep.subr.mxu0 %v2890
      %3013 = vmatpush1.msra.mxu0 %v2889
      %3014 = vmatprep.subr.mxu0 %v2894
      %3015 = vmatpush1.msra.mxu0 %v2893
      %3016 = vmatprep.subr.mxu0 %v2898
      %3017 = vmatpush1.msra.mxu0 %v2897
      %3018 = vmatprep.subr.mxu0 %v2902
      %3019 = vmatpush1.msra.mxu0 %v2901
      %3020 = vmatprep.subr.mxu0 %v2906
      %3021 = vmatpush1.msra.mxu0 %v2905
      %3022 = vmatprep.subr.mxu0 %v2910
      %3023 = vmatpush1.msra.mxu0 %v2909
      %3024 = vmatprep.subr.mxu0 %v2914
      %3025 = vmatpush1.msra.mxu0 %v2913
      %3026 = vmatprep.subr.mxu0 %v2918
      %3027 = vmatpush1.msra.mxu0 %v2917
      %3028 = vmatprep.subr.mxu0 %v2922
      %3029 = vmatpush1.msra.mxu0 %v2921
      %3030 = vmatprep.subr.mxu0 %v2926
      %3031 = vmatpush1.msra.mxu0 %v2925
      %3032 = vmatprep.subr.mxu0 %v2930
      %3033 = vmatpush1.msra.mxu0 %v2929
      %3034 = vmatprep.subr.mxu0 0.0
      %3035 = vmatpush1.msra.mxu0 0.0
      %3036 = vmatprep.subr.mxu0 0.0
      %3037 = vmatpush1.msra.mxu0 0.0
      %3038 = vmatprep.subr.mxu0 0.0
      %3039 = vmatpush1.msra.mxu0 0.0
      %3040 = vmatprep.subr.mxu0 0.0
      %3041 = vmatpush1.msra.mxu0 0.0
      %3042 = vmatprep.subr.mxu0 0.0
      %3043 = vmatpush1.msra.mxu0 0.0
      %3044 = vmatprep.subr.mxu0 0.0
      %3045 = vmatpush1.msra.mxu0 0.0
      %3046 = vmatprep.subr.mxu0 0.0
      %3047 = vmatpush1.msra.mxu0 0.0
      %3048 = vmatprep.subr.mxu0 0.0
      %3049 = vmatpush1.msra.mxu0 0.0
      %3050 = vmatprep.subr.mxu0 0.0
      %3051 = vmatpush1.msra.mxu0 0.0
      %3052 = vmatprep.subr.mxu0 0.0
      %3053 = vmatpush1.msra.mxu0 0.0
      %3054 = vmatprep.subr.mxu0 0.0
      %3055 = vmatpush1.msra.mxu0 0.0
      %3056 = vmatprep.subr.mxu0 0.0
      %3057 = vmatpush1.msra.mxu0 0.0
      %3058 = vmatprep.subr.mxu0 0.0
      %3059 = vmatpush1.msra.mxu0 0.0
      %3060 = vmatprep.subr.mxu0 0.0
      %3061 = vmatpush1.msra.mxu0 0.0
      %3062 = vmatprep.subr.mxu0 0.0
      %3063 = vmatpush1.msra.mxu0 0.0
      %3064 = vmatprep.subr.mxu0 0.0
      %3065 = vmatpush1.msra.mxu0 0.0
      %3066 = vmatprep.mubr.f32.mxu0 0.0
      %3067 = vmatmul.mubr.f32.gmra.mrb[0].mxu0 0.0
      %v3068 = vpop.f32.mrb[0].mxu0
      %v3069 = vadd.f32 0.0, %v3068
      %v3070 = vpop.f32.mrb[0].mxu0
      %v3071 = vadd.f32 0.0, %v3070
      %3072 = vdwg.mxu0
      %v3073 = vadd.f32 %v2863, %v2998
      %v3074 = vadd.f32 %v2864, %v3000
      %v3075 = vadd.f32 %v2865, %v3069
      %v3076 = vadd.f32 %v2866, %v3071
      %v3077 = vtanh.pop %v3073
      %v3078 = vtanh.pop %v3074
      %v3079 = vtanh.pop %v3075
      %v3080 = vtanh.pop %v3076
      %v3081 = vxor.u32 %v3073, 2147483648
      %v3082 = vxor.u32 %v3074, 2147483648
      %v3083 = vxor.u32 %v3075, 2147483648
      %v3084 = vxor.u32 %v3076, 2147483648
      %v3085 = vmul.f32 %v3081, 1.442695
      %v3086 = vpow.pop %v3085
      %v3087 = vmul.f32 %v3082, 1.442695
      %v3088 = vpow.pop %v3087
      %v3089 = vmul.f32 %v3083, 1.442695
      %v3090 = vpow.pop %v3089
      %v3091 = vmul.f32 %v3084, 1.442695
      %v3092 = vpow.pop %v3091
      %v3093 = vadd.f32 %v3086, 1.0
      %v3094 = vadd.f32 %v3088, 1.0
      %v3095 = vadd.f32 %v3090, 1.0
      %v3096 = vadd.f32 %v3092, 1.0
      %v3097 = vrcp.pop %v3093
      %v3098 = vmul.f32 1.0, %v3097
      %v3099 = vrcp.pop %v3094
      %v3100 = vmul.f32 1.0, %v3099
      %v3101 = vrcp.pop %v3095
      %v3102 = vmul.f32 1.0, %v3101
      %v3103 = vrcp.pop %v3096
      %v3104 = vmul.f32 1.0, %v3103
      %v3105 = vsel %vm144, %v3077, %v3098
      %v3106 = vsel %vm145, %v3078, %v3100
      %v3107 = vsel %vm146, %v3079, %v3102
      %v3108 = vsel %vm147, %v3080, %v3104
      %v3109 = vmul.f32 %v3106, 0.0
      %v3110 = vmul.f32 %v3105, %v3107
      %v3111 = vadd.f32 %v3109, %v3110
      %v3112 = vtanh.pop %v3111
      %v3113 = vmul.f32 %v3108, %v3112
      %3114 = vst [vmem:[#allocation3] sm:$0xff] %v3113
      %s3115 = smul.u32 1, 4
      %s3116 = smul.addr %s3115, 8
      %s3117 = scalar_lea.vmem [#allocation16], %s3116
      %v3118 = vld [vmem:[%s3117] sm:$0xff]
      %v3119 = vld [vmem:[%s3117 + $0x8] sm:$0xff]
      %v3120 = vld [vmem:[%s3117 + $0x10] sm:$0xff]
      %v3121 = vld [vmem:[%s3117 + $0x18] sm:$0xff]
      %v3122 = vld [vmem:[#allocation9] sm:$0xff]
      %v3123 = vld [vmem:[#allocation9 + $0x8] sm:$0xff]
      %v3124 = vld [vmem:[#allocation9 + $0x10] sm:$0xff]
      %v3125 = vld [vmem:[#allocation9 + $0x18] sm:$0xff]
      %v3126 = vld [vmem:[#allocation9 + $0x20] sm:$0xff]
      %v3127 = vld [vmem:[#allocation9 + $0x28] sm:$0xff]
      %v3128 = vld [vmem:[#allocation9 + $0x30] sm:$0xff]
      %v3129 = vld [vmem:[#allocation9 + $0x38] sm:$0xff]
      %v3130 = vld [vmem:[#allocation9 + $0x40] sm:$0xff]
      %v3131 = vld [vmem:[#allocation9 + $0x48] sm:$0xff]
      %v3132 = vld [vmem:[#allocation9 + $0x50] sm:$0xff]
      %v3133 = vld [vmem:[#allocation9 + $0x58] sm:$0xff]
      %v3134 = vld [vmem:[#allocation9 + $0x60] sm:$0xff]
      %v3135 = vld [vmem:[#allocation9 + $0x68] sm:$0xff]
      %v3136 = vld [vmem:[#allocation9 + $0x70] sm:$0xff]
      %v3137 = vld [vmem:[#allocation9 + $0x78] sm:$0xff]
      %v3138 = vld [vmem:[#allocation9 + $0x80] sm:$0xff]
      %v3139 = vld [vmem:[#allocation9 + $0x88] sm:$0xff]
      %v3140 = vld [vmem:[#allocation9 + $0x90] sm:$0xff]
      %v3141 = vld [vmem:[#allocation9 + $0x98] sm:$0xff]
      %v3142 = vld [vmem:[#allocation9 + $0xa0] sm:$0xff]
      %v3143 = vld [vmem:[#allocation9 + $0xa8] sm:$0xff]
      %v3144 = vld [vmem:[#allocation9 + $0xb0] sm:$0xff]
      %v3145 = vld [vmem:[#allocation9 + $0xb8] sm:$0xff]
      %v3146 = vld [vmem:[#allocation9 + $0xc0] sm:$0xff]
      %v3147 = vld [vmem:[#allocation9 + $0xc8] sm:$0xff]
      %v3148 = vld [vmem:[#allocation9 + $0xd0] sm:$0xff]
      %v3149 = vld [vmem:[#allocation9 + $0xd8] sm:$0xff]
      %v3150 = vld [vmem:[#allocation9 + $0xe0] sm:$0xff]
      %v3151 = vld [vmem:[#allocation9 + $0xe8] sm:$0xff]
      %v3152 = vld [vmem:[#allocation9 + $0xf0] sm:$0xff]
      %v3153 = vld [vmem:[#allocation9 + $0xf8] sm:$0xff]
      %v3154 = vld [vmem:[#allocation9 + $0x100] sm:$0xff]
      %v3155 = vld [vmem:[#allocation9 + $0x108] sm:$0xff]
      %v3156 = vld [vmem:[#allocation9 + $0x110] sm:$0xff]
      %v3157 = vld [vmem:[#allocation9 + $0x118] sm:$0xff]
      %v3158 = vld [vmem:[#allocation9 + $0x120] sm:$0xff]
      %v3159 = vld [vmem:[#allocation9 + $0x128] sm:$0xff]
      %v3160 = vld [vmem:[#allocation9 + $0x130] sm:$0xff]
      %v3161 = vld [vmem:[#allocation9 + $0x138] sm:$0xff]
      %v3162 = vld [vmem:[#allocation9 + $0x140] sm:$0xff]
      %v3163 = vld [vmem:[#allocation9 + $0x148] sm:$0xff]
      %v3164 = vld [vmem:[#allocation9 + $0x150] sm:$0xff]
      %v3165 = vld [vmem:[#allocation9 + $0x158] sm:$0xff]
      %v3166 = vld [vmem:[#allocation9 + $0x160] sm:$0xff]
      %v3167 = vld [vmem:[#allocation9 + $0x168] sm:$0xff]
      %v3168 = vld [vmem:[#allocation9 + $0x170] sm:$0xff]
      %v3169 = vld [vmem:[#allocation9 + $0x178] sm:$0xff]
      %v3170 = vld [vmem:[#allocation9 + $0x180] sm:$0xff]
      %v3171 = vld [vmem:[#allocation9 + $0x188] sm:$0xff]
      %v3172 = vld [vmem:[#allocation9 + $0x190] sm:$0xff]
      %v3173 = vld [vmem:[#allocation9 + $0x198] sm:$0xff]
      %v3174 = vld [vmem:[#allocation9 + $0x1a0] sm:$0xff]
      %v3175 = vld [vmem:[#allocation9 + $0x1a8] sm:$0xff]
      %v3176 = vld [vmem:[#allocation9 + $0x1b0] sm:$0xff]
      %v3177 = vld [vmem:[#allocation9 + $0x1b8] sm:$0xff]
      %v3178 = vld [vmem:[#allocation9 + $0x1c0] sm:$0xff]
      %v3179 = vld [vmem:[#allocation9 + $0x1c8] sm:$0xff]
      %v3180 = vld [vmem:[#allocation9 + $0x1d0] sm:$0xff]
      %v3181 = vld [vmem:[#allocation9 + $0x1d8] sm:$0xff]
      %v3182 = vld [vmem:[#allocation9 + $0x1e0] sm:$0xff]
      %v3183 = vld [vmem:[#allocation9 + $0x1e8] sm:$0xff]
      %v3184 = vld [vmem:[#allocation9 + $0x1f0] sm:$0xff]
      %v3185 = vld [vmem:[#allocation9 + $0x1f8] sm:$0xff]
      %3186 = vmatprep.subr.mxu0 %v3123
      %3187 = vmatpush1.msra.mxu0 %v3122
      %3188 = vmatprep.subr.mxu0 %v3127
      %3189 = vmatpush1.msra.mxu0 %v3126
      %3190 = vmatprep.subr.mxu0 %v3131
      %3191 = vmatpush1.msra.mxu0 %v3130
      %3192 = vmatprep.subr.mxu0 %v3135
      %3193 = vmatpush1.msra.mxu0 %v3134
      %3194 = vmatprep.subr.mxu0 %v3139
      %3195 = vmatpush1.msra.mxu0 %v3138
      %3196 = vmatprep.subr.mxu0 %v3143
      %3197 = vmatpush1.msra.mxu0 %v3142
      %3198 = vmatprep.subr.mxu0 %v3147
      %3199 = vmatpush1.msra.mxu0 %v3146
      %3200 = vmatprep.subr.mxu0 %v3151
      %3201 = vmatpush1.msra.mxu0 %v3150
      %3202 = vmatprep.subr.mxu0 %v3155
      %3203 = vmatpush1.msra.mxu0 %v3154
      %3204 = vmatprep.subr.mxu0 %v3159
      %3205 = vmatpush1.msra.mxu0 %v3158
      %3206 = vmatprep.subr.mxu0 %v3163
      %3207 = vmatpush1.msra.mxu0 %v3162
      %3208 = vmatprep.subr.mxu0 %v3167
      %3209 = vmatpush1.msra.mxu0 %v3166
      %3210 = vmatprep.subr.mxu0 %v3171
      %3211 = vmatpush1.msra.mxu0 %v3170
      %3212 = vmatprep.subr.mxu0 %v3175
      %3213 = vmatpush1.msra.mxu0 %v3174
      %3214 = vmatprep.subr.mxu0 %v3179
      %3215 = vmatpush1.msra.mxu0 %v3178
      %3216 = vmatprep.subr.mxu0 %v3183
      %3217 = vmatpush1.msra.mxu0 %v3182
      %3218 = vmatprep.subr.mxu0 0.0
      %3219 = vmatpush1.msra.mxu0 0.0
      %3220 = vmatprep.subr.mxu0 0.0
      %3221 = vmatpush1.msra.mxu0 0.0
      %3222 = vmatprep.subr.mxu0 0.0
      %3223 = vmatpush1.msra.mxu0 0.0
      %3224 = vmatprep.subr.mxu0 0.0
      %3225 = vmatpush1.msra.mxu0 0.0
      %3226 = vmatprep.subr.mxu0 0.0
      %3227 = vmatpush1.msra.mxu0 0.0
      %3228 = vmatprep.subr.mxu0 0.0
      %3229 = vmatpush1.msra.mxu0 0.0
      %3230 = vmatprep.subr.mxu0 0.0
      %3231 = vmatpush1.msra.mxu0 0.0
      %3232 = vmatprep.subr.mxu0 0.0
      %3233 = vmatpush1.msra.mxu0 0.0
      %3234 = vmatprep.subr.mxu0 0.0
      %3235 = vmatpush1.msra.mxu0 0.0
      %3236 = vmatprep.subr.mxu0 0.0
      %3237 = vmatpush1.msra.mxu0 0.0
      %3238 = vmatprep.subr.mxu0 0.0
      %3239 = vmatpush1.msra.mxu0 0.0
      %3240 = vmatprep.subr.mxu0 0.0
      %3241 = vmatpush1.msra.mxu0 0.0
      %3242 = vmatprep.subr.mxu0 0.0
      %3243 = vmatpush1.msra.mxu0 0.0
      %3244 = vmatprep.subr.mxu0 0.0
      %3245 = vmatpush1.msra.mxu0 0.0
      %3246 = vmatprep.subr.mxu0 0.0
      %3247 = vmatpush1.msra.mxu0 0.0
      %3248 = vmatprep.subr.mxu0 0.0
      %3249 = vmatpush1.msra.mxu0 0.0
      %3250 = vmatprep.mubr.f32.mxu0 0.0
      %3251 = vmatmul.mubr.f32.gmra.mrb[0].mxu0 %v3113
      %v3252 = vpop.f32.mrb[0].mxu0
      %v3253 = vadd.f32 0.0, %v3252
      %v3254 = vpop.f32.mrb[0].mxu0
      %v3255 = vadd.f32 0.0, %v3254
      %3256 = vdwg.mxu0
      %3257 = vmatprep.subr.mxu0 %v3125
      %3258 = vmatpush1.msra.mxu0 %v3124
      %3259 = vmatprep.subr.mxu0 %v3129
      %3260 = vmatpush1.msra.mxu0 %v3128
      %3261 = vmatprep.subr.mxu0 %v3133
      %3262 = vmatpush1.msra.mxu0 %v3132
      %3263 = vmatprep.subr.mxu0 %v3137
      %3264 = vmatpush1.msra.mxu0 %v3136
      %3265 = vmatprep.subr.mxu0 %v3141
      %3266 = vmatpush1.msra.mxu0 %v3140
      %3267 = vmatprep.subr.mxu0 %v3145
      %3268 = vmatpush1.msra.mxu0 %v3144
      %3269 = vmatprep.subr.mxu0 %v3149
      %3270 = vmatpush1.msra.mxu0 %v3148
      %3271 = vmatprep.subr.mxu0 %v3153
      %3272 = vmatpush1.msra.mxu0 %v3152
      %3273 = vmatprep.subr.mxu0 %v3157
      %3274 = vmatpush1.msra.mxu0 %v3156
      %3275 = vmatprep.subr.mxu0 %v3161
      %3276 = vmatpush1.msra.mxu0 %v3160
      %3277 = vmatprep.subr.mxu0 %v3165
      %3278 = vmatpush1.msra.mxu0 %v3164
      %3279 = vmatprep.subr.mxu0 %v3169
      %3280 = vmatpush1.msra.mxu0 %v3168
      %3281 = vmatprep.subr.mxu0 %v3173
      %3282 = vmatpush1.msra.mxu0 %v3172
      %3283 = vmatprep.subr.mxu0 %v3177
      %3284 = vmatpush1.msra.mxu0 %v3176
      %3285 = vmatprep.subr.mxu0 %v3181
      %3286 = vmatpush1.msra.mxu0 %v3180
      %3287 = vmatprep.subr.mxu0 %v3185
      %3288 = vmatpush1.msra.mxu0 %v3184
      %3289 = vmatprep.subr.mxu0 0.0
      %3290 = vmatpush1.msra.mxu0 0.0
      %3291 = vmatprep.subr.mxu0 0.0
      %3292 = vmatpush1.msra.mxu0 0.0
      %3293 = vmatprep.subr.mxu0 0.0
      %3294 = vmatpush1.msra.mxu0 0.0
      %3295 = vmatprep.subr.mxu0 0.0
      %3296 = vmatpush1.msra.mxu0 0.0
      %3297 = vmatprep.subr.mxu0 0.0
      %3298 = vmatpush1.msra.mxu0 0.0
      %3299 = vmatprep.subr.mxu0 0.0
      %3300 = vmatpush1.msra.mxu0 0.0
      %3301 = vmatprep.subr.mxu0 0.0
      %3302 = vmatpush1.msra.mxu0 0.0
      %3303 = vmatprep.subr.mxu0 0.0
      %3304 = vmatpush1.msra.mxu0 0.0
      %3305 = vmatprep.subr.mxu0 0.0
      %3306 = vmatpush1.msra.mxu0 0.0
      %3307 = vmatprep.subr.mxu0 0.0
      %3308 = vmatpush1.msra.mxu0 0.0
      %3309 = vmatprep.subr.mxu0 0.0
      %3310 = vmatpush1.msra.mxu0 0.0
      %3311 = vmatprep.subr.mxu0 0.0
      %3312 = vmatpush1.msra.mxu0 0.0
      %3313 = vmatprep.subr.mxu0 0.0
      %3314 = vmatpush1.msra.mxu0 0.0
      %3315 = vmatprep.subr.mxu0 0.0
      %3316 = vmatpush1.msra.mxu0 0.0
      %3317 = vmatprep.subr.mxu0 0.0
      %3318 = vmatpush1.msra.mxu0 0.0
      %3319 = vmatprep.subr.mxu0 0.0
      %3320 = vmatpush1.msra.mxu0 0.0
      %3321 = vmatprep.mubr.f32.mxu0 0.0
      %3322 = vmatmul.mubr.f32.gmra.mrb[0].mxu0 %v3113
      %v3323 = vpop.f32.mrb[0].mxu0
      %v3324 = vadd.f32 0.0, %v3323
      %v3325 = vpop.f32.mrb[0].mxu0
      %v3326 = vadd.f32 0.0, %v3325
      %3327 = vdwg.mxu0
      %v3328 = vadd.f32 %v3118, %v3253
      %v3329 = vadd.f32 %v3119, %v3255
      %v3330 = vadd.f32 %v3120, %v3324
      %v3331 = vadd.f32 %v3121, %v3326
      %v3332 = vtanh.pop %v3328
      %v3333 = vtanh.pop %v3329
      %v3334 = vtanh.pop %v3330
      %v3335 = vtanh.pop %v3331
      %v3336 = vxor.u32 %v3328, 2147483648
      %v3337 = vxor.u32 %v3329, 2147483648
      %v3338 = vxor.u32 %v3330, 2147483648
      %v3339 = vxor.u32 %v3331, 2147483648
      %v3340 = vmul.f32 %v3336, 1.442695
      %v3341 = vpow.pop %v3340
      %v3342 = vmul.f32 %v3337, 1.442695
      %v3343 = vpow.pop %v3342
      %v3344 = vmul.f32 %v3338, 1.442695
      %v3345 = vpow.pop %v3344
      %v3346 = vmul.f32 %v3339, 1.442695
      %v3347 = vpow.pop %v3346
      %v3348 = vadd.f32 %v3341, 1.0
      %v3349 = vadd.f32 %v3343, 1.0
      %v3350 = vadd.f32 %v3345, 1.0
      %v3351 = vadd.f32 %v3347, 1.0
      %v3352 = vrcp.pop %v3348
      %v3353 = vmul.f32 1.0, %v3352
      %v3354 = vrcp.pop %v3349
      %v3355 = vmul.f32 1.0, %v3354
      %v3356 = vrcp.pop %v3350
      %v3357 = vmul.f32 1.0, %v3356
      %v3358 = vrcp.pop %v3351
      %v3359 = vmul.f32 1.0, %v3358
      %v3360 = vsel %vm144, %v3332, %v3353
      %v3361 = vsel %vm145, %v3333, %v3355
      %v3362 = vsel %vm146, %v3334, %v3357
      %v3363 = vsel %vm147, %v3335, %v3359
      %v3364 = vmul.f32 %v3361, %v3111
      %v3365 = vmul.f32 %v3360, %v3362
      %v3366 = vadd.f32 %v3364, %v3365
      %v3367 = vtanh.pop %v3366
      %v3368 = vmul.f32 %v3363, %v3367
      %s3369 = scalar_lea.vmem [#allocation3], 8
      %3370 = vst [vmem:[%s3369] sm:$0xff] %v3368
      %s3371 = smul.u32 2, 4
      %s3372 = smul.addr %s3371, 8
      %s3373 = scalar_lea.vmem [#allocation16], %s3372
      %v3374 = vld [vmem:[%s3373] sm:$0xff]
      %v3375 = vld [vmem:[%s3373 + $0x8] sm:$0xff]
      %v3376 = vld [vmem:[%s3373 + $0x10] sm:$0xff]
      %v3377 = vld [vmem:[%s3373 + $0x18] sm:$0xff]
      %v3378 = vld [vmem:[#allocation9] sm:$0xff]
      %v3379 = vld [vmem:[#allocation9 + $0x8] sm:$0xff]
      %v3380 = vld [vmem:[#allocation9 + $0x10] sm:$0xff]
      %v3381 = vld [vmem:[#allocation9 + $0x18] sm:$0xff]
      %v3382 = vld [vmem:[#allocation9 + $0x20] sm:$0xff]
      %v3383 = vld [vmem:[#allocation9 + $0x28] sm:$0xff]
      %v3384 = vld [vmem:[#allocation9 + $0x30] sm:$0xff]
      %v3385 = vld [vmem:[#allocation9 + $0x38] sm:$0xff]
      %v3386 = vld [vmem:[#allocation9 + $0x40] sm:$0xff]
      %v3387 = vld [vmem:[#allocation9 + $0x48] sm:$0xff]
      %v3388 = vld [vmem:[#allocation9 + $0x50] sm:$0xff]
      %v3389 = vld [vmem:[#allocation9 + $0x58] sm:$0xff]
      %v3390 = vld [vmem:[#allocation9 + $0x60] sm:$0xff]
      %v3391 = vld [vmem:[#allocation9 + $0x68] sm:$0xff]
      %v3392 = vld [vmem:[#allocation9 + $0x70] sm:$0xff]
      %v3393 = vld [vmem:[#allocation9 + $0x78] sm:$0xff]
      %v3394 = vld [vmem:[#allocation9 + $0x80] sm:$0xff]
      %v3395 = vld [vmem:[#allocation9 + $0x88] sm:$0xff]
      %v3396 = vld [vmem:[#allocation9 + $0x90] sm:$0xff]
      %v3397 = vld [vmem:[#allocation9 + $0x98] sm:$0xff]
      %v3398 = vld [vmem:[#allocation9 + $0xa0] sm:$0xff]
      %v3399 = vld [vmem:[#allocation9 + $0xa8] sm:$0xff]
      %v3400 = vld [vmem:[#allocation9 + $0xb0] sm:$0xff]
      %v3401 = vld [vmem:[#allocation9 + $0xb8] sm:$0xff]
      %v3402 = vld [vmem:[#allocation9 + $0xc0] sm:$0xff]
      %v3403 = vld [vmem:[#allocation9 + $0xc8] sm:$0xff]
      %v3404 = vld [vmem:[#allocation9 + $0xd0] sm:$0xff]
      %v3405 = vld [vmem:[#allocation9 + $0xd8] sm:$0xff]
      %v3406 = vld [vmem:[#allocation9 + $0xe0] sm:$0xff]
      %v3407 = vld [vmem:[#allocation9 + $0xe8] sm:$0xff]
      %v3408 = vld [vmem:[#allocation9 + $0xf0] sm:$0xff]
      %v3409 = vld [vmem:[#allocation9 + $0xf8] sm:$0xff]
      %v3410 = vld [vmem:[#allocation9 + $0x100] sm:$0xff]
      %v3411 = vld [vmem:[#allocation9 + $0x108] sm:$0xff]
      %v3412 = vld [vmem:[#allocation9 + $0x110] sm:$0xff]
      %v3413 = vld [vmem:[#allocation9 + $0x118] sm:$0xff]
      %v3414 = vld [vmem:[#allocation9 + $0x120] sm:$0xff]
      %v3415 = vld [vmem:[#allocation9 + $0x128] sm:$0xff]
      %v3416 = vld [vmem:[#allocation9 + $0x130] sm:$0xff]
      %v3417 = vld [vmem:[#allocation9 + $0x138] sm:$0xff]
      %v3418 = vld [vmem:[#allocation9 + $0x140] sm:$0xff]
      %v3419 = vld [vmem:[#allocation9 + $0x148] sm:$0xff]
      %v3420 = vld [vmem:[#allocation9 + $0x150] sm:$0xff]
      %v3421 = vld [vmem:[#allocation9 + $0x158] sm:$0xff]
      %v3422 = vld [vmem:[#allocation9 + $0x160] sm:$0xff]
      %v3423 = vld [vmem:[#allocation9 + $0x168] sm:$0xff]
      %v3424 = vld [vmem:[#allocation9 + $0x170] sm:$0xff]
      %v3425 = vld [vmem:[#allocation9 + $0x178] sm:$0xff]
      %v3426 = vld [vmem:[#allocation9 + $0x180] sm:$0xff]
      %v3427 = vld [vmem:[#allocation9 + $0x188] sm:$0xff]
      %v3428 = vld [vmem:[#allocation9 + $0x190] sm:$0xff]
      %v3429 = vld [vmem:[#allocation9 + $0x198] sm:$0xff]
      %v3430 = vld [vmem:[#allocation9 + $0x1a0] sm:$0xff]
      %v3431 = vld [vmem:[#allocation9 + $0x1a8] sm:$0xff]
      %v3432 = vld [vmem:[#allocation9 + $0x1b0] sm:$0xff]
      %v3433 = vld [vmem:[#allocation9 + $0x1b8] sm:$0xff]
      %v3434 = vld [vmem:[#allocation9 + $0x1c0] sm:$0xff]
      %v3435 = vld [vmem:[#allocation9 + $0x1c8] sm:$0xff]
      %v3436 = vld [vmem:[#allocation9 + $0x1d0] sm:$0xff]
      %v3437 = vld [vmem:[#allocation9 + $0x1d8] sm:$0xff]
      %v3438 = vld [vmem:[#allocation9 + $0x1e0] sm:$0xff]
      %v3439 = vld [vmem:[#allocation9 + $0x1e8] sm:$0xff]
      %v3440 = vld [vmem:[#allocation9 + $0x1f0] sm:$0xff]
      %v3441 = vld [vmem:[#allocation9 + $0x1f8] sm:$0xff]
      %3442 = vmatprep.subr.mxu0 %v3379
      %3443 = vmatpush1.msra.mxu0 %v3378
      %3444 = vmatprep.subr.mxu0 %v3383
      %3445 = vmatpush1.msra.mxu0 %v3382
      %3446 = vmatprep.subr.mxu0 %v3387
      %3447 = vmatpush1.msra.mxu0 %v3386
      %3448 = vmatprep.subr.mxu0 %v3391
      %3449 = vmatpush1.msra.mxu0 %v3390
      %3450 = vmatprep.subr.mxu0 %v3395
      %3451 = vmatpush1.msra.mxu0 %v3394
      %3452 = vmatprep.subr.mxu0 %v3399
      %3453 = vmatpush1.msra.mxu0 %v3398
      %3454 = vmatprep.subr.mxu0 %v3403
      %3455 = vmatpush1.msra.mxu0 %v3402
      %3456 = vmatprep.subr.mxu0 %v3407
      %3457 = vmatpush1.msra.mxu0 %v3406
      %3458 = vmatprep.subr.mxu0 %v3411
      %3459 = vmatpush1.msra.mxu0 %v3410
      %3460 = vmatprep.subr.mxu0 %v3415
      %3461 = vmatpush1.msra.mxu0 %v3414
      %3462 = vmatprep.subr.mxu0 %v3419
      %3463 = vmatpush1.msra.mxu0 %v3418
      %3464 = vmatprep.subr.mxu0 %v3423
      %3465 = vmatpush1.msra.mxu0 %v3422
      %3466 = vmatprep.subr.mxu0 %v3427
      %3467 = vmatpush1.msra.mxu0 %v3426
      %3468 = vmatprep.subr.mxu0 %v3431
      %3469 = vmatpush1.msra.mxu0 %v3430
      %3470 = vmatprep.subr.mxu0 %v3435
      %3471 = vmatpush1.msra.mxu0 %v3434
      %3472 = vmatprep.subr.mxu0 %v3439
      %3473 = vmatpush1.msra.mxu0 %v3438
      %3474 = vmatprep.subr.mxu0 0.0
      %3475 = vmatpush1.msra.mxu0 0.0
      %3476 = vmatprep.subr.mxu0 0.0
      %3477 = vmatpush1.msra.mxu0 0.0
      %3478 = vmatprep.subr.mxu0 0.0
      %3479 = vmatpush1.msra.mxu0 0.0
      %3480 = vmatprep.subr.mxu0 0.0
      %3481 = vmatpush1.msra.mxu0 0.0
      %3482 = vmatprep.subr.mxu0 0.0
      %3483 = vmatpush1.msra.mxu0 0.0
      %3484 = vmatprep.subr.mxu0 0.0
      %3485 = vmatpush1.msra.mxu0 0.0
      %3486 = vmatprep.subr.mxu0 0.0
      %3487 = vmatpush1.msra.mxu0 0.0
      %3488 = vmatprep.subr.mxu0 0.0
      %3489 = vmatpush1.msra.mxu0 0.0
      %3490 = vmatprep.subr.mxu0 0.0
      %3491 = vmatpush1.msra.mxu0 0.0
      %3492 = vmatprep.subr.mxu0 0.0
      %3493 = vmatpush1.msra.mxu0 0.0
      %3494 = vmatprep.subr.mxu0 0.0
      %3495 = vmatpush1.msra.mxu0 0.0
      %3496 = vmatprep.subr.mxu0 0.0
      %3497 = vmatpush1.msra.mxu0 0.0
      %3498 = vmatprep.subr.mxu0 0.0
      %3499 = vmatpush1.msra.mxu0 0.0
      %3500 = vmatprep.subr.mxu0 0.0
      %3501 = vmatpush1.msra.mxu0 0.0
      %3502 = vmatprep.subr.mxu0 0.0
      %3503 = vmatpush1.msra.mxu0 0.0
      %3504 = vmatprep.subr.mxu0 0.0
      %3505 = vmatpush1.msra.mxu0 0.0
      %3506 = vmatprep.mubr.f32.mxu0 0.0
      %3507 = vmatmul.mubr.f32.gmra.mrb[0].mxu0 %v3368
      %v3508 = vpop.f32.mrb[0].mxu0
      %v3509 = vadd.f32 0.0, %v3508
      %v3510 = vpop.f32.mrb[0].mxu0
      %v3511 = vadd.f32 0.0, %v3510
      %3512 = vdwg.mxu0
      %3513 = vmatprep.subr.mxu0 %v3381
      %3514 = vmatpush1.msra.mxu0 %v3380
      %3515 = vmatprep.subr.mxu0 %v3385
      %3516 = vmatpush1.msra.mxu0 %v3384
      %3517 = vmatprep.subr.mxu0 %v3389
      %3518 = vmatpush1.msra.mxu0 %v3388
      %3519 = vmatprep.subr.mxu0 %v3393
      %3520 = vmatpush1.msra.mxu0 %v3392
      %3521 = vmatprep.subr.mxu0 %v3397
      %3522 = vmatpush1.msra.mxu0 %v3396
      %3523 = vmatprep.subr.mxu0 %v3401
      %3524 = vmatpush1.msra.mxu0 %v3400
      %3525 = vmatprep.subr.mxu0 %v3405
      %3526 = vmatpush1.msra.mxu0 %v3404
      %3527 = vmatprep.subr.mxu0 %v3409
      %3528 = vmatpush1.msra.mxu0 %v3408
      %3529 = vmatprep.subr.mxu0 %v3413
      %3530 = vmatpush1.msra.mxu0 %v3412
      %3531 = vmatprep.subr.mxu0 %v3417
      %3532 = vmatpush1.msra.mxu0 %v3416
      %3533 = vmatprep.subr.mxu0 %v3421
      %3534 = vmatpush1.msra.mxu0 %v3420
      %3535 = vmatprep.subr.mxu0 %v3425
      %3536 = vmatpush1.msra.mxu0 %v3424
      %3537 = vmatprep.subr.mxu0 %v3429
      %3538 = vmatpush1.msra.mxu0 %v3428
      %3539 = vmatprep.subr.mxu0 %v3433
      %3540 = vmatpush1.msra.mxu0 %v3432
      %3541 = vmatprep.subr.mxu0 %v3437
      %3542 = vmatpush1.msra.mxu0 %v3436
      %3543 = vmatprep.subr.mxu0 %v3441
      %3544 = vmatpush1.msra.mxu0 %v3440
      %3545 = vmatprep.subr.mxu0 0.0
      %3546 = vmatpush1.msra.mxu0 0.0
      %3547 = vmatprep.subr.mxu0 0.0
      %3548 = vmatpush1.msra.mxu0 0.0
      %3549 = vmatprep.subr.mxu0 0.0
      %3550 = vmatpush1.msra.mxu0 0.0
      %3551 = vmatprep.subr.mxu0 0.0
      %3552 = vmatpush1.msra.mxu0 0.0
      %3553 = vmatprep.subr.mxu0 0.0
      %3554 = vmatpush1.msra.mxu0 0.0
      %3555 = vmatprep.subr.mxu0 0.0
      %3556 = vmatpush1.msra.mxu0 0.0
      %3557 = vmatprep.subr.mxu0 0.0
      %3558 = vmatpush1.msra.mxu0 0.0
      %3559 = vmatprep.subr.mxu0 0.0
      %3560 = vmatpush1.msra.mxu0 0.0
      %3561 = vmatprep.subr.mxu0 0.0
      %3562 = vmatpush1.msra.mxu0 0.0
      %3563 = vmatprep.subr.mxu0 0.0
      %3564 = vmatpush1.msra.mxu0 0.0
      %3565 = vmatprep.subr.mxu0 0.0
      %3566 = vmatpush1.msra.mxu0 0.0
      %3567 = vmatprep.subr.mxu0 0.0
      %3568 = vmatpush1.msra.mxu0 0.0
      %3569 = vmatprep.subr.mxu0 0.0
      %3570 = vmatpush1.msra.mxu0 0.0
      %3571 = vmatprep.subr.mxu0 0.0
      %3572 = vmatpush1.msra.mxu0 0.0
      %3573 = vmatprep.subr.mxu0 0.0
      %3574 = vmatpush1.msra.mxu0 0.0
      %3575 = vmatprep.subr.mxu0 0.0
      %3576 = vmatpush1.msra.mxu0 0.0
      %3577 = vmatprep.mubr.f32.mxu0 0.0
      %3578 = vmatmul.mubr.f32.gmra.mrb[0].mxu0 %v3368
      %v3579 = vpop.f32.mrb[0].mxu0
      %v3580 = vadd.f32 0.0, %v3579
      %v3581 = vpop.f32.mrb[0].mxu0
      %v3582 = vadd.f32 0.0, %v3581
      %3583 = vdwg.mxu0
      %v3584 = vadd.f32 %v3374, %v3509
      %v3585 = vadd.f32 %v3375, %v3511
      %v3586 = vadd.f32 %v3376, %v3580
      %v3587 = vadd.f32 %v3377, %v3582
      %v3588 = vtanh.pop %v3584
      %v3589 = vtanh.pop %v3585
      %v3590 = vtanh.pop %v3586
      %v3591 = vtanh.pop %v3587
      %v3592 = vxor.u32 %v3584, 2147483648
      %v3593 = vxor.u32 %v3585, 2147483648
      %v3594 = vxor.u32 %v3586, 2147483648
      %v3595 = vxor.u32 %v3587, 2147483648
      %v3596 = vmul.f32 %v3592, 1.442695
      %v3597 = vpow.pop %v3596
      %v3598 = vmul.f32 %v3593, 1.442695
      %v3599 = vpow.pop %v3598
      %v3600 = vmul.f32 %v3594, 1.442695
      %v3601 = vpow.pop %v3600
      %v3602 = vmul.f32 %v3595, 1.442695
      %v3603 = vpow.pop %v3602
      %v3604 = vadd.f32 %v3597, 1.0
      %v3605 = vadd.f32 %v3599, 1.0
      %v3606 = vadd.f32 %v3601, 1.0
      %v3607 = vadd.f32 %v3603, 1.0
      %v3608 = vrcp.pop %v3604
      %v3609 = vmul.f32 1.0, %v3608
      %v3610 = vrcp.pop %v3605
      %v3611 = vmul.f32 1.0, %v3610
      %v3612 = vrcp.pop %v3606
      %v3613 = vmul.f32 1.0, %v3612
      %v3614 = vrcp.pop %v3607
      %v3615 = vmul.f32 1.0, %v3614
      %v3616 = vsel %vm144, %v3588, %v3609
      %v3617 = vsel %vm145, %v3589, %v3611
      %v3618 = vsel %vm146, %v3590, %v3613
      %v3619 = vsel %vm147, %v3591, %v3615
      %v3620 = vmul.f32 %v3617, %v3366
      %v3621 = vmul.f32 %v3616, %v3618
      %v3622 = vadd.f32 %v3620, %v3621
      %v3623 = vtanh.pop %v3622
      %v3624 = vmul.f32 %v3619, %v3623
      %s3625 = scalar_lea.vmem [#allocation3], 16
      %3626 = vst [vmem:[%s3625] sm:$0xff] %v3624
      %s3627 = smul.u32 3, 4
      %s3628 = smul.addr %s3627, 8
      %s3629 = scalar_lea.vmem [#allocation16], %s3628
      %v3630 = vld [vmem:[%s3629] sm:$0xff]
      %v3631 = vld [vmem:[%s3629 + $0x8] sm:$0xff]
      %v3632 = vld [vmem:[%s3629 + $0x10] sm:$0xff]
      %v3633 = vld [vmem:[%s3629 + $0x18] sm:$0xff]
      %v3634 = vld [vmem:[#allocation9] sm:$0xff]
      %v3635 = vld [vmem:[#allocation9 + $0x8] sm:$0xff]
      %v3636 = vld [vmem:[#allocation9 + $0x10] sm:$0xff]
      %v3637 = vld [vmem:[#allocation9 + $0x18] sm:$0xff]
      %v3638 = vld [vmem:[#allocation9 + $0x20] sm:$0xff]
      %v3639 = vld [vmem:[#allocation9 + $0x28] sm:$0xff]
      %v3640 = vld [vmem:[#allocation9 + $0x30] sm:$0xff]
      %v3641 = vld [vmem:[#allocation9 + $0x38] sm:$0xff]
      %v3642 = vld [vmem:[#allocation9 + $0x40] sm:$0xff]
      %v3643 = vld [vmem:[#allocation9 + $0x48] sm:$0xff]
      %v3644 = vld [vmem:[#allocation9 + $0x50] sm:$0xff]
      %v3645 = vld [vmem:[#allocation9 + $0x58] sm:$0xff]
      %v3646 = vld [vmem:[#allocation9 + $0x60] sm:$0xff]
      %v3647 = vld [vmem:[#allocation9 + $0x68] sm:$0xff]
      %v3648 = vld [vmem:[#allocation9 + $0x70] sm:$0xff]
      %v3649 = vld [vmem:[#allocation9 + $0x78] sm:$0xff]
      %v3650 = vld [vmem:[#allocation9 + $0x80] sm:$0xff]
      %v3651 = vld [vmem:[#allocation9 + $0x88] sm:$0xff]
      %v3652 = vld [vmem:[#allocation9 + $0x90] sm:$0xff]
      %v3653 = vld [vmem:[#allocation9 + $0x98] sm:$0xff]
      %v3654 = vld [vmem:[#allocation9 + $0xa0] sm:$0xff]
      %v3655 = vld [vmem:[#allocation9 + $0xa8] sm:$0xff]
      %v3656 = vld [vmem:[#allocation9 + $0xb0] sm:$0xff]
      %v3657 = vld [vmem:[#allocation9 + $0xb8] sm:$0xff]
      %v3658 = vld [vmem:[#allocation9 + $0xc0] sm:$0xff]
      %v3659 = vld [vmem:[#allocation9 + $0xc8] sm:$0xff]
      %v3660 = vld [vmem:[#allocation9 + $0xd0] sm:$0xff]
      %v3661 = vld [vmem:[#allocation9 + $0xd8] sm:$0xff]
      %v3662 = vld [vmem:[#allocation9 + $0xe0] sm:$0xff]
      %v3663 = vld [vmem:[#allocation9 + $0xe8] sm:$0xff]
      %v3664 = vld [vmem:[#allocation9 + $0xf0] sm:$0xff]
      %v3665 = vld [vmem:[#allocation9 + $0xf8] sm:$0xff]
      %v3666 = vld [vmem:[#allocation9 + $0x100] sm:$0xff]
      %v3667 = vld [vmem:[#allocation9 + $0x108] sm:$0xff]
      %v3668 = vld [vmem:[#allocation9 + $0x110] sm:$0xff]
      %v3669 = vld [vmem:[#allocation9 + $0x118] sm:$0xff]
      %v3670 = vld [vmem:[#allocation9 + $0x120] sm:$0xff]
      %v3671 = vld [vmem:[#allocation9 + $0x128] sm:$0xff]
      %v3672 = vld [vmem:[#allocation9 + $0x130] sm:$0xff]
      %v3673 = vld [vmem:[#allocation9 + $0x138] sm:$0xff]
      %v3674 = vld [vmem:[#allocation9 + $0x140] sm:$0xff]
      %v3675 = vld [vmem:[#allocation9 + $0x148] sm:$0xff]
      %v3676 = vld [vmem:[#allocation9 + $0x150] sm:$0xff]
      %v3677 = vld [vmem:[#allocation9 + $0x158] sm:$0xff]
      %v3678 = vld [vmem:[#allocation9 + $0x160] sm:$0xff]
      %v3679 = vld [vmem:[#allocation9 + $0x168] sm:$0xff]
      %v3680 = vld [vmem:[#allocation9 + $0x170] sm:$0xff]
      %v3681 = vld [vmem:[#allocation9 + $0x178] sm:$0xff]
      %v3682 = vld [vmem:[#allocation9 + $0x180] sm:$0xff]
      %v3683 = vld [vmem:[#allocation9 + $0x188] sm:$0xff]
      %v3684 = vld [vmem:[#allocation9 + $0x190] sm:$0xff]
      %v3685 = vld [vmem:[#allocation9 + $0x198] sm:$0xff]
      %v3686 = vld [vmem:[#allocation9 + $0x1a0] sm:$0xff]
      %v3687 = vld [vmem:[#allocation9 + $0x1a8] sm:$0xff]
      %v3688 = vld [vmem:[#allocation9 + $0x1b0] sm:$0xff]
      %v3689 = vld [vmem:[#allocation9 + $0x1b8] sm:$0xff]
      %v3690 = vld [vmem:[#allocation9 + $0x1c0] sm:$0xff]
      %v3691 = vld [vmem:[#allocation9 + $0x1c8] sm:$0xff]
      %v3692 = vld [vmem:[#allocation9 + $0x1d0] sm:$0xff]
      %v3693 = vld [vmem:[#allocation9 + $0x1d8] sm:$0xff]
      %v3694 = vld [vmem:[#allocation9 + $0x1e0] sm:$0xff]
      %v3695 = vld [vmem:[#allocation9 + $0x1e8] sm:$0xff]
      %v3696 = vld [vmem:[#allocation9 + $0x1f0] sm:$0xff]
      %v3697 = vld [vmem:[#allocation9 + $0x1f8] sm:$0xff]
      %3698 = vmatprep.subr.mxu0 %v3635
      %3699 = vmatpush1.msra.mxu0 %v3634
      %3700 = vmatprep.subr.mxu0 %v3639
      %3701 = vmatpush1.msra.mxu0 %v3638
      %3702 = vmatprep.subr.mxu0 %v3643
      %3703 = vmatpush1.msra.mxu0 %v3642
      %3704 = vmatprep.subr.mxu0 %v3647
      %3705 = vmatpush1.msra.mxu0 %v3646
      %3706 = vmatprep.subr.mxu0 %v3651
      %3707 = vmatpush1.msra.mxu0 %v3650
      %3708 = vmatprep.subr.mxu0 %v3655
      %3709 = vmatpush1.msra.mxu0 %v3654
      %3710 = vmatprep.subr.mxu0 %v3659
      %3711 = vmatpush1.msra.mxu0 %v3658
      %3712 = vmatprep.subr.mxu0 %v3663
      %3713 = vmatpush1.msra.mxu0 %v3662
      %3714 = vmatprep.subr.mxu0 %v3667
      %3715 = vmatpush1.msra.mxu0 %v3666
      %3716 = vmatprep.subr.mxu0 %v3671
      %3717 = vmatpush1.msra.mxu0 %v3670
      %3718 = vmatprep.subr.mxu0 %v3675
      %3719 = vmatpush1.msra.mxu0 %v3674
      %3720 = vmatprep.subr.mxu0 %v3679
      %3721 = vmatpush1.msra.mxu0 %v3678
      %3722 = vmatprep.subr.mxu0 %v3683
      %3723 = vmatpush1.msra.mxu0 %v3682
      %3724 = vmatprep.subr.mxu0 %v3687
      %3725 = vmatpush1.msra.mxu0 %v3686
      %3726 = vmatprep.subr.mxu0 %v3691
      %3727 = vmatpush1.msra.mxu0 %v3690
      %3728 = vmatprep.subr.mxu0 %v3695
      %3729 = vmatpush1.msra.mxu0 %v3694
      %3730 = vmatprep.subr.mxu0 0.0
      %3731 = vmatpush1.msra.mxu0 0.0
      %3732 = vmatprep.subr.mxu0 0.0
      %3733 = vmatpush1.msra.mxu0 0.0
      %3734 = vmatprep.subr.mxu0 0.0
      %3735 = vmatpush1.msra.mxu0 0.0
      %3736 = vmatprep.subr.mxu0 0.0
      %3737 = vmatpush1.msra.mxu0 0.0
      %3738 = vmatprep.subr.mxu0 0.0
      %3739 = vmatpush1.msra.mxu0 0.0
      %3740 = vmatprep.subr.mxu0 0.0
      %3741 = vmatpush1.msra.mxu0 0.0
      %3742 = vmatprep.subr.mxu0 0.0
      %3743 = vmatpush1.msra.mxu0 0.0
      %3744 = vmatprep.subr.mxu0 0.0
      %3745 = vmatpush1.msra.mxu0 0.0
      %3746 = vmatprep.subr.mxu0 0.0
      %3747 = vmatpush1.msra.mxu0 0.0
      %3748 = vmatprep.subr.mxu0 0.0
      %3749 = vmatpush1.msra.mxu0 0.0
      %3750 = vmatprep.subr.mxu0 0.0
      %3751 = vmatpush1.msra.mxu0 0.0
      %3752 = vmatprep.subr.mxu0 0.0
      %3753 = vmatpush1.msra.mxu0 0.0
      %3754 = vmatprep.subr.mxu0 0.0
      %3755 = vmatpush1.msra.mxu0 0.0
      %3756 = vmatprep.subr.mxu0 0.0
      %3757 = vmatpush1.msra.mxu0 0.0
      %3758 = vmatprep.subr.mxu0 0.0
      %3759 = vmatpush1.msra.mxu0 0.0
      %3760 = vmatprep.subr.mxu0 0.0
      %3761 = vmatpush1.msra.mxu0 0.0
      %3762 = vmatprep.mubr.f32.mxu0 0.0
      %3763 = vmatmul.mubr.f32.gmra.mrb[0].mxu0 %v3624
      %v3764 = vpop.f32.mrb[0].mxu0
      %v3765 = vadd.f32 0.0, %v3764
      %v3766 = vpop.f32.mrb[0].mxu0
      %v3767 = vadd.f32 0.0, %v3766
      %3768 = vdwg.mxu0
      %3769 = vmatprep.subr.mxu0 %v3637
      %3770 = vmatpush1.msra.mxu0 %v3636
      %3771 = vmatprep.subr.mxu0 %v3641
      %3772 = vmatpush1.msra.mxu0 %v3640
      %3773 = vmatprep.subr.mxu0 %v3645
      %3774 = vmatpush1.msra.mxu0 %v3644
      %3775 = vmatprep.subr.mxu0 %v3649
      %3776 = vmatpush1.msra.mxu0 %v3648
      %3777 = vmatprep.subr.mxu0 %v3653
      %3778 = vmatpush1.msra.mxu0 %v3652
      %3779 = vmatprep.subr.mxu0 %v3657
      %3780 = vmatpush1.msra.mxu0 %v3656
      %3781 = vmatprep.subr.mxu0 %v3661
      %3782 = vmatpush1.msra.mxu0 %v3660
      %3783 = vmatprep.subr.mxu0 %v3665
      %3784 = vmatpush1.msra.mxu0 %v3664
      %3785 = vmatprep.subr.mxu0 %v3669
      %3786 = vmatpush1.msra.mxu0 %v3668
      %3787 = vmatprep.subr.mxu0 %v3673
      %3788 = vmatpush1.msra.mxu0 %v3672
      %3789 = vmatprep.subr.mxu0 %v3677
      %3790 = vmatpush1.msra.mxu0 %v3676
      %3791 = vmatprep.subr.mxu0 %v3681
      %3792 = vmatpush1.msra.mxu0 %v3680
      %3793 = vmatprep.subr.mxu0 %v3685
      %3794 = vmatpush1.msra.mxu0 %v3684
      %3795 = vmatprep.subr.mxu0 %v3689
      %3796 = vmatpush1.msra.mxu0 %v3688
      %3797 = vmatprep.subr.mxu0 %v3693
      %3798 = vmatpush1.msra.mxu0 %v3692
      %3799 = vmatprep.subr.mxu0 %v3697
      %3800 = vmatpush1.msra.mxu0 %v3696
      %3801 = vmatprep.subr.mxu0 0.0
      %3802 = vmatpush1.msra.mxu0 0.0
      %3803 = vmatprep.subr.mxu0 0.0
      %3804 = vmatpush1.msra.mxu0 0.0
      %3805 = vmatprep.subr.mxu0 0.0
      %3806 = vmatpush1.msra.mxu0 0.0
      %3807 = vmatprep.subr.mxu0 0.0
      %3808 = vmatpush1.msra.mxu0 0.0
      %3809 = vmatprep.subr.mxu0 0.0
      %3810 = vmatpush1.msra.mxu0 0.0
      %3811 = vmatprep.subr.mxu0 0.0
      %3812 = vmatpush1.msra.mxu0 0.0
      %3813 = vmatprep.subr.mxu0 0.0
      %3814 = vmatpush1.msra.mxu0 0.0
      %3815 = vmatprep.subr.mxu0 0.0
      %3816 = vmatpush1.msra.mxu0 0.0
      %3817 = vmatprep.subr.mxu0 0.0
      %3818 = vmatpush1.msra.mxu0 0.0
      %3819 = vmatprep.subr.mxu0 0.0
      %3820 = vmatpush1.msra.mxu0 0.0
      %3821 = vmatprep.subr.mxu0 0.0
      %3822 = vmatpush1.msra.mxu0 0.0
      %3823 = vmatprep.subr.mxu0 0.0
      %3824 = vmatpush1.msra.mxu0 0.0
      %3825 = vmatprep.subr.mxu0 0.0
      %3826 = vmatpush1.msra.mxu0 0.0
      %3827 = vmatprep.subr.mxu0 0.0
      %3828 = vmatpush1.msra.mxu0 0.0
      %3829 = vmatprep.subr.mxu0 0.0
      %3830 = vmatpush1.msra.mxu0 0.0
      %3831 = vmatprep.subr.mxu0 0.0
      %3832 = vmatpush1.msra.mxu0 0.0
      %3833 = vmatprep.mubr.f32.mxu0 0.0
      %3834 = vmatmul.mubr.f32.gmra.mrb[0].mxu0 %v3624
      %v3835 = vpop.f32.mrb[0].mxu0
      %v3836 = vadd.f32 0.0, %v3835
      %v3837 = vpop.f32.mrb[0].mxu0
      %v3838 = vadd.f32 0.0, %v3837
      %3839 = vdwg.mxu0
      %v3840 = vadd.f32 %v3630, %v3765
      %v3841 = vadd.f32 %v3631, %v3767
      %v3842 = vadd.f32 %v3632, %v3836
      %v3843 = vadd.f32 %v3633, %v3838
      %v3844 = vtanh.pop %v3840
      %v3845 = vtanh.pop %v3841
      %v3846 = vtanh.pop %v3842
      %v3847 = vtanh.pop %v3843
      %v3848 = vxor.u32 %v3840, 2147483648
      %v3849 = vxor.u32 %v3841, 2147483648
      %v3850 = vxor.u32 %v3842, 2147483648
      %v3851 = vxor.u32 %v3843, 2147483648
      %v3852 = vmul.f32 %v3848, 1.442695
      %v3853 = vpow.pop %v3852
      %v3854 = vmul.f32 %v3849, 1.442695
      %v3855 = vpow.pop %v3854
      %v3856 = vmul.f32 %v3850, 1.442695
      %v3857 = vpow.pop %v3856
      %v3858 = vmul.f32 %v3851, 1.442695
      %v3859 = vpow.pop %v3858
      %v3860 = vadd.f32 %v3853, 1.0
      %v3861 = vadd.f32 %v3855, 1.0
      %v3862 = vadd.f32 %v3857, 1.0
      %v3863 = vadd.f32 %v3859, 1.0
      %v3864 = vrcp.pop %v3860
      %v3865 = vmul.f32 1.0, %v3864
      %v3866 = vrcp.pop %v3861
      %v3867 = vmul.f32 1.0, %v3866
      %v3868 = vrcp.pop %v3862
      %v3869 = vmul.f32 1.0, %v3868
      %v3870 = vrcp.pop %v3863
      %v3871 = vmul.f32 1.0, %v3870
      %v3872 = vsel %vm144, %v3844, %v3865
      %v3873 = vsel %vm145, %v3845, %v3867
      %v3874 = vsel %vm146, %v3846, %v3869
      %v3875 = vsel %vm147, %v3847, %v3871
      %v3876 = vmul.f32 %v3873, %v3622
      %v3877 = vmul.f32 %v3872, %v3874
      %v3878 = vadd.f32 %v3876, %v3877
      %v3879 = vtanh.pop %v3878
      %v3880 = vmul.f32 %v3875, %v3879
      %s3881 = scalar_lea.vmem [#allocation3], 24
      %3882 = vst [vmem:[%s3881] sm:$0xff] %v3880
      %s3883 = smul.u32 4, 4
      %s3884 = smul.addr %s3883, 8
      %s3885 = scalar_lea.vmem [#allocation16], %s3884
      %v3886 = vld [vmem:[%s3885] sm:$0xff]
      %v3887 = vld [vmem:[%s3885 + $0x8] sm:$0xff]
      %v3888 = vld [vmem:[%s3885 + $0x10] sm:$0xff]
      %v3889 = vld [vmem:[%s3885 + $0x18] sm:$0xff]
      %v3890 = vld [vmem:[#allocation9] sm:$0xff]
      %v3891 = vld [vmem:[#allocation9 + $0x8] sm:$0xff]
      %v3892 = vld [vmem:[#allocation9 + $0x10] sm:$0xff]
      %v3893 = vld [vmem:[#allocation9 + $0x18] sm:$0xff]
      %v3894 = vld [vmem:[#allocation9 + $0x20] sm:$0xff]
      %v3895 = vld [vmem:[#allocation9 + $0x28] sm:$0xff]
      %v3896 = vld [vmem:[#allocation9 + $0x30] sm:$0xff]
      %v3897 = vld [vmem:[#allocation9 + $0x38] sm:$0xff]
      %v3898 = vld [vmem:[#allocation9 + $0x40] sm:$0xff]
      %v3899 = vld [vmem:[#allocation9 + $0x48] sm:$0xff]
      %v3900 = vld [vmem:[#allocation9 + $0x50] sm:$0xff]
      %v3901 = vld [vmem:[#allocation9 + $0x58] sm:$0xff]
      %v3902 = vld [vmem:[#allocation9 + $0x60] sm:$0xff]
      %v3903 = vld [vmem:[#allocation9 + $0x68] sm:$0xff]
      %v3904 = vld [vmem:[#allocation9 + $0x70] sm:$0xff]
      %v3905 = vld [vmem:[#allocation9 + $0x78] sm:$0xff]
      %v3906 = vld [vmem:[#allocation9 + $0x80] sm:$0xff]
      %v3907 = vld [vmem:[#allocation9 + $0x88] sm:$0xff]
      %v3908 = vld [vmem:[#allocation9 + $0x90] sm:$0xff]
      %v3909 = vld [vmem:[#allocation9 + $0x98] sm:$0xff]
      %v3910 = vld [vmem:[#allocation9 + $0xa0] sm:$0xff]
      %v3911 = vld [vmem:[#allocation9 + $0xa8] sm:$0xff]
      %v3912 = vld [vmem:[#allocation9 + $0xb0] sm:$0xff]
      %v3913 = vld [vmem:[#allocation9 + $0xb8] sm:$0xff]
      %v3914 = vld [vmem:[#allocation9 + $0xc0] sm:$0xff]
      %v3915 = vld [vmem:[#allocation9 + $0xc8] sm:$0xff]
      %v3916 = vld [vmem:[#allocation9 + $0xd0] sm:$0xff]
      %v3917 = vld [vmem:[#allocation9 + $0xd8] sm:$0xff]
      %v3918 = vld [vmem:[#allocation9 + $0xe0] sm:$0xff]
      %v3919 = vld [vmem:[#allocation9 + $0xe8] sm:$0xff]
      %v3920 = vld [vmem:[#allocation9 + $0xf0] sm:$0xff]
      %v3921 = vld [vmem:[#allocation9 + $0xf8] sm:$0xff]
      %v3922 = vld [vmem:[#allocation9 + $0x100] sm:$0xff]
      %v3923 = vld [vmem:[#allocation9 + $0x108] sm:$0xff]
      %v3924 = vld [vmem:[#allocation9 + $0x110] sm:$0xff]
      %v3925 = vld [vmem:[#allocation9 + $0x118] sm:$0xff]
      %v3926 = vld [vmem:[#allocation9 + $0x120] sm:$0xff]
      %v3927 = vld [vmem:[#allocation9 + $0x128] sm:$0xff]
      %v3928 = vld [vmem:[#allocation9 + $0x130] sm:$0xff]
      %v3929 = vld [vmem:[#allocation9 + $0x138] sm:$0xff]
      %v3930 = vld [vmem:[#allocation9 + $0x140] sm:$0xff]
      %v3931 = vld [vmem:[#allocation9 + $0x148] sm:$0xff]
      %v3932 = vld [vmem:[#allocation9 + $0x150] sm:$0xff]
      %v3933 = vld [vmem:[#allocation9 + $0x158] sm:$0xff]
      %v3934 = vld [vmem:[#allocation9 + $0x160] sm:$0xff]
      %v3935 = vld [vmem:[#allocation9 + $0x168] sm:$0xff]
      %v3936 = vld [vmem:[#allocation9 + $0x170] sm:$0xff]
      %v3937 = vld [vmem:[#allocation9 + $0x178] sm:$0xff]
      %v3938 = vld [vmem:[#allocation9 + $0x180] sm:$0xff]
      %v3939 = vld [vmem:[#allocation9 + $0x188] sm:$0xff]
      %v3940 = vld [vmem:[#allocation9 + $0x190] sm:$0xff]
      %v3941 = vld [vmem:[#allocation9 + $0x198] sm:$0xff]
      %v3942 = vld [vmem:[#allocation9 + $0x1a0] sm:$0xff]
      %v3943 = vld [vmem:[#allocation9 + $0x1a8] sm:$0xff]
      %v3944 = vld [vmem:[#allocation9 + $0x1b0] sm:$0xff]
      %v3945 = vld [vmem:[#allocation9 + $0x1b8] sm:$0xff]
      %v3946 = vld [vmem:[#allocation9 + $0x1c0] sm:$0xff]
      %v3947 = vld [vmem:[#allocation9 + $0x1c8] sm:$0xff]
      %v3948 = vld [vmem:[#allocation9 + $0x1d0] sm:$0xff]
      %v3949 = vld [vmem:[#allocation9 + $0x1d8] sm:$0xff]
      %v3950 = vld [vmem:[#allocation9 + $0x1e0] sm:$0xff]
      %v3951 = vld [vmem:[#allocation9 + $0x1e8] sm:$0xff]
      %v3952 = vld [vmem:[#allocation9 + $0x1f0] sm:$0xff]
      %v3953 = vld [vmem:[#allocation9 + $0x1f8] sm:$0xff]
      %3954 = vmatprep.subr.mxu0 %v3891
      %3955 = vmatpush1.msra.mxu0 %v3890
      %3956 = vmatprep.subr.mxu0 %v3895
      %3957 = vmatpush1.msra.mxu0 %v3894
      %3958 = vmatprep.subr.mxu0 %v3899
      %3959 = vmatpush1.msra.mxu0 %v3898
      %3960 = vmatprep.subr.mxu0 %v3903
      %3961 = vmatpush1.msra.mxu0 %v3902
      %3962 = vmatprep.subr.mxu0 %v3907
      %3963 = vmatpush1.msra.mxu0 %v3906
      %3964 = vmatprep.subr.mxu0 %v3911
      %3965 = vmatpush1.msra.mxu0 %v3910
      %3966 = vmatprep.subr.mxu0 %v3915
      %3967 = vmatpush1.msra.mxu0 %v3914
      %3968 = vmatprep.subr.mxu0 %v3919
      %3969 = vmatpush1.msra.mxu0 %v3918
      %3970 = vmatprep.subr.mxu0 %v3923
      %3971 = vmatpush1.msra.mxu0 %v3922
      %3972 = vmatprep.subr.mxu0 %v3927
      %3973 = vmatpush1.msra.mxu0 %v3926
      %3974 = vmatprep.subr.mxu0 %v3931
      %3975 = vmatpush1.msra.mxu0 %v3930
      %3976 = vmatprep.subr.mxu0 %v3935
      %3977 = vmatpush1.msra.mxu0 %v3934
      %3978 = vmatprep.subr.mxu0 %v3939
      %3979 = vmatpush1.msra.mxu0 %v3938
      %3980 = vmatprep.subr.mxu0 %v3943
      %3981 = vmatpush1.msra.mxu0 %v3942
      %3982 = vmatprep.subr.mxu0 %v3947
      %3983 = vmatpush1.msra.mxu0 %v3946
      %3984 = vmatprep.subr.mxu0 %v3951
      %3985 = vmatpush1.msra.mxu0 %v3950
      %3986 = vmatprep.subr.mxu0 0.0
      %3987 = vmatpush1.msra.mxu0 0.0
      %3988 = vmatprep.subr.mxu0 0.0
      %3989 = vmatpush1.msra.mxu0 0.0
      %3990 = vmatprep.subr.mxu0 0.0
      %3991 = vmatpush1.msra.mxu0 0.0
      %3992 = vmatprep.subr.mxu0 0.0
      %3993 = vmatpush1.msra.mxu0 0.0
      %3994 = vmatprep.subr.mxu0 0.0
      %3995 = vmatpush1.msra.mxu0 0.0
      %3996 = vmatprep.subr.mxu0 0.0
      %3997 = vmatpush1.msra.mxu0 0.0
      %3998 = vmatprep.subr.mxu0 0.0
      %3999 = vmatpush1.msra.mxu0 0.0
      %4000 = vmatprep.subr.mxu0 0.0
      %4001 = vmatpush1.msra.mxu0 0.0
      %4002 = vmatprep.subr.mxu0 0.0
      %4003 = vmatpush1.msra.mxu0 0.0
      %4004 = vmatprep.subr.mxu0 0.0
      %4005 = vmatpush1.msra.mxu0 0.0
      %4006 = vmatprep.subr.mxu0 0.0
      %4007 = vmatpush1.msra.mxu0 0.0
      %4008 = vmatprep.subr.mxu0 0.0
      %4009 = vmatpush1.msra.mxu0 0.0
      %4010 = vmatprep.subr.mxu0 0.0
      %4011 = vmatpush1.msra.mxu0 0.0
      %4012 = vmatprep.subr.mxu0 0.0
      %4013 = vmatpush1.msra.mxu0 0.0
      %4014 = vmatprep.subr.mxu0 0.0
      %4015 = vmatpush1.msra.mxu0 0.0
      %4016 = vmatprep.subr.mxu0 0.0
      %4017 = vmatpush1.msra.mxu0 0.0
      %4018 = vmatprep.mubr.f32.mxu0 0.0
      %4019 = vmatmul.mubr.f32.gmra.mrb[0].mxu0 %v3880
      %v4020 = vpop.f32.mrb[0].mxu0
      %v4021 = vadd.f32 0.0, %v4020
      %v4022 = vpop.f32.mrb[0].mxu0
      %v4023 = vadd.f32 0.0, %v4022
      %4024 = vdwg.mxu0
      %4025 = vmatprep.subr.mxu0 %v3893
      %4026 = vmatpush1.msra.mxu0 %v3892
      %4027 = vmatprep.subr.mxu0 %v3897
      %4028 = vmatpush1.msra.mxu0 %v3896
      %4029 = vmatprep.subr.mxu0 %v3901
      %4030 = vmatpush1.msra.mxu0 %v3900
      %4031 = vmatprep.subr.mxu0 %v3905
      %4032 = vmatpush1.msra.mxu0 %v3904
      %4033 = vmatprep.subr.mxu0 %v3909
      %4034 = vmatpush1.msra.mxu0 %v3908
      %4035 = vmatprep.subr.mxu0 %v3913
      %4036 = vmatpush1.msra.mxu0 %v3912
      %4037 = vmatprep.subr.mxu0 %v3917
      %4038 = vmatpush1.msra.mxu0 %v3916
      %4039 = vmatprep.subr.mxu0 %v3921
      %4040 = vmatpush1.msra.mxu0 %v3920
      %4041 = vmatprep.subr.mxu0 %v3925
      %4042 = vmatpush1.msra.mxu0 %v3924
      %4043 = vmatprep.subr.mxu0 %v3929
      %4044 = vmatpush1.msra.mxu0 %v3928
      %4045 = vmatprep.subr.mxu0 %v3933
      %4046 = vmatpush1.msra.mxu0 %v3932
      %4047 = vmatprep.subr.mxu0 %v3937
      %4048 = vmatpush1.msra.mxu0 %v3936
      %4049 = vmatprep.subr.mxu0 %v3941
      %4050 = vmatpush1.msra.mxu0 %v3940
      %4051 = vmatprep.subr.mxu0 %v3945
      %4052 = vmatpush1.msra.mxu0 %v3944
      %4053 = vmatprep.subr.mxu0 %v3949
      %4054 = vmatpush1.msra.mxu0 %v3948
      %4055 = vmatprep.subr.mxu0 %v3953
      %4056 = vmatpush1.msra.mxu0 %v3952
      %4057 = vmatprep.subr.mxu0 0.0
      %4058 = vmatpush1.msra.mxu0 0.0
      %4059 = vmatprep.subr.mxu0 0.0
      %4060 = vmatpush1.msra.mxu0 0.0
      %4061 = vmatprep.subr.mxu0 0.0
      %4062 = vmatpush1.msra.mxu0 0.0
      %4063 = vmatprep.subr.mxu0 0.0
      %4064 = vmatpush1.msra.mxu0 0.0
      %4065 = vmatprep.subr.mxu0 0.0
      %4066 = vmatpush1.msra.mxu0 0.0
      %4067 = vmatprep.subr.mxu0 0.0
      %4068 = vmatpush1.msra.mxu0 0.0
      %4069 = vmatprep.subr.mxu0 0.0
      %4070 = vmatpush1.msra.mxu0 0.0
      %4071 = vmatprep.subr.mxu0 0.0
      %4072 = vmatpush1.msra.mxu0 0.0
      %4073 = vmatprep.subr.mxu0 0.0
      %4074 = vmatpush1.msra.mxu0 0.0
      %4075 = vmatprep.subr.mxu0 0.0
      %4076 = vmatpush1.msra.mxu0 0.0
      %4077 = vmatprep.subr.mxu0 0.0
      %4078 = vmatpush1.msra.mxu0 0.0
      %4079 = vmatprep.subr.mxu0 0.0
      %4080 = vmatpush1.msra.mxu0 0.0
      %4081 = vmatprep.subr.mxu0 0.0
      %4082 = vmatpush1.msra.mxu0 0.0
      %4083 = vmatprep.subr.mxu0 0.0
      %4084 = vmatpush1.msra.mxu0 0.0
      %4085 = vmatprep.subr.mxu0 0.0
      %4086 = vmatpush1.msra.mxu0 0.0
      %4087 = vmatprep.subr.mxu0 0.0
      %4088 = vmatpush1.msra.mxu0 0.0
      %4089 = vmatprep.mubr.f32.mxu0 0.0
      %4090 = vmatmul.mubr.f32.gmra.mrb[0].mxu0 %v3880
      %v4091 = vpop.f32.mrb[0].mxu0
      %v4092 = vadd.f32 0.0, %v4091
      %v4093 = vpop.f32.mrb[0].mxu0
      %v4094 = vadd.f32 0.0, %v4093
      %4095 = vdwg.mxu0
      %v4096 = vadd.f32 %v3886, %v4021
      %v4097 = vadd.f32 %v3887, %v4023
      %v4098 = vadd.f32 %v3888, %v4092
      %v4099 = vadd.f32 %v3889, %v4094
      %v4100 = vtanh.pop %v4096
      %v4101 = vtanh.pop %v4097
      %v4102 = vtanh.pop %v4098
      %v4103 = vtanh.pop %v4099
      %v4104 = vxor.u32 %v4096, 2147483648
      %v4105 = vxor.u32 %v4097, 2147483648
      %v4106 = vxor.u32 %v4098, 2147483648
      %v4107 = vxor.u32 %v4099, 2147483648
      %v4108 = vmul.f32 %v4104, 1.442695
      %v4109 = vpow.pop %v4108
      %v4110 = vmul.f32 %v4105, 1.442695
      %v4111 = vpow.pop %v4110
      %v4112 = vmul.f32 %v4106, 1.442695
      %v4113 = vpow.pop %v4112
      %v4114 = vmul.f32 %v4107, 1.442695
      %v4115 = vpow.pop %v4114
      %v4116 = vadd.f32 %v4109, 1.0
      %v4117 = vadd.f32 %v4111, 1.0
      %v4118 = vadd.f32 %v4113, 1.0
      %v4119 = vadd.f32 %v4115, 1.0
      %v4120 = vrcp.pop %v4116
      %v4121 = vmul.f32 1.0, %v4120
      %v4122 = vrcp.pop %v4117
      %v4123 = vmul.f32 1.0, %v4122
      %v4124 = vrcp.pop %v4118
      %v4125 = vmul.f32 1.0, %v4124
      %v4126 = vrcp.pop %v4119
      %v4127 = vmul.f32 1.0, %v4126
      %v4128 = vsel %vm144, %v4100, %v4121
      %v4129 = vsel %vm145, %v4101, %v4123
      %v4130 = vsel %vm146, %v4102, %v4125
      %v4131 = vsel %vm147, %v4103, %v4127
      %v4132 = vmul.f32 %v4129, %v3878
      %v4133 = vmul.f32 %v4128, %v4130
      %v4134 = vadd.f32 %v4132, %v4133
      %v4135 = vtanh.pop %v4134
      %v4136 = vmul.f32 %v4131, %v4135
      %s4137 = scalar_lea.vmem [#allocation3], 32
      %4138 = vst [vmem:[%s4137] sm:$0xff] %v4136
      %s4139 = smul.u32 5, 4
      %s4140 = smul.addr %s4139, 8
      %s4141 = scalar_lea.vmem [#allocation16], %s4140
      %v4142 = vld [vmem:[%s4141] sm:$0xff]
      %v4143 = vld [vmem:[%s4141 + $0x8] sm:$0xff]
      %v4144 = vld [vmem:[%s4141 + $0x10] sm:$0xff]
      %v4145 = vld [vmem:[%s4141 + $0x18] sm:$0xff]
      %v4146 = vld [vmem:[#allocation9] sm:$0xff]
      %v4147 = vld [vmem:[#allocation9 + $0x8] sm:$0xff]
      %v4148 = vld [vmem:[#allocation9 + $0x10] sm:$0xff]
      %v4149 = vld [vmem:[#allocation9 + $0x18] sm:$0xff]
      %v4150 = vld [vmem:[#allocation9 + $0x20] sm:$0xff]
      %v4151 = vld [vmem:[#allocation9 + $0x28] sm:$0xff]
      %v4152 = vld [vmem:[#allocation9 + $0x30] sm:$0xff]
      %v4153 = vld [vmem:[#allocation9 + $0x38] sm:$0xff]
      %v4154 = vld [vmem:[#allocation9 + $0x40] sm:$0xff]
      %v4155 = vld [vmem:[#allocation9 + $0x48] sm:$0xff]
      %v4156 = vld [vmem:[#allocation9 + $0x50] sm:$0xff]
      %v4157 = vld [vmem:[#allocation9 + $0x58] sm:$0xff]
      %v4158 = vld [vmem:[#allocation9 + $0x60] sm:$0xff]
      %v4159 = vld [vmem:[#allocation9 + $0x68] sm:$0xff]
      %v4160 = vld [vmem:[#allocation9 + $0x70] sm:$0xff]
      %v4161 = vld [vmem:[#allocation9 + $0x78] sm:$0xff]
      %v4162 = vld [vmem:[#allocation9 + $0x80] sm:$0xff]
      %v4163 = vld [vmem:[#allocation9 + $0x88] sm:$0xff]
      %v4164 = vld [vmem:[#allocation9 + $0x90] sm:$0xff]
      %v4165 = vld [vmem:[#allocation9 + $0x98] sm:$0xff]
      %v4166 = vld [vmem:[#allocation9 + $0xa0] sm:$0xff]
      %v4167 = vld [vmem:[#allocation9 + $0xa8] sm:$0xff]
      %v4168 = vld [vmem:[#allocation9 + $0xb0] sm:$0xff]
      %v4169 = vld [vmem:[#allocation9 + $0xb8] sm:$0xff]
      %v4170 = vld [vmem:[#allocation9 + $0xc0] sm:$0xff]
      %v4171 = vld [vmem:[#allocation9 + $0xc8] sm:$0xff]
      %v4172 = vld [vmem:[#allocation9 + $0xd0] sm:$0xff]
      %v4173 = vld [vmem:[#allocation9 + $0xd8] sm:$0xff]
      %v4174 = vld [vmem:[#allocation9 + $0xe0] sm:$0xff]
      %v4175 = vld [vmem:[#allocation9 + $0xe8] sm:$0xff]
      %v4176 = vld [vmem:[#allocation9 + $0xf0] sm:$0xff]
      %v4177 = vld [vmem:[#allocation9 + $0xf8] sm:$0xff]
      %v4178 = vld [vmem:[#allocation9 + $0x100] sm:$0xff]
      %v4179 = vld [vmem:[#allocation9 + $0x108] sm:$0xff]
      %v4180 = vld [vmem:[#allocation9 + $0x110] sm:$0xff]
      %v4181 = vld [vmem:[#allocation9 + $0x118] sm:$0xff]
      %v4182 = vld [vmem:[#allocation9 + $0x120] sm:$0xff]
      %v4183 = vld [vmem:[#allocation9 + $0x128] sm:$0xff]
      %v4184 = vld [vmem:[#allocation9 + $0x130] sm:$0xff]
      %v4185 = vld [vmem:[#allocation9 + $0x138] sm:$0xff]
      %v4186 = vld [vmem:[#allocation9 + $0x140] sm:$0xff]
      %v4187 = vld [vmem:[#allocation9 + $0x148] sm:$0xff]
      %v4188 = vld [vmem:[#allocation9 + $0x150] sm:$0xff]
      %v4189 = vld [vmem:[#allocation9 + $0x158] sm:$0xff]
      %v4190 = vld [vmem:[#allocation9 + $0x160] sm:$0xff]
      %v4191 = vld [vmem:[#allocation9 + $0x168] sm:$0xff]
      %v4192 = vld [vmem:[#allocation9 + $0x170] sm:$0xff]
      %v4193 = vld [vmem:[#allocation9 + $0x178] sm:$0xff]
      %v4194 = vld [vmem:[#allocation9 + $0x180] sm:$0xff]
      %v4195 = vld [vmem:[#allocation9 + $0x188] sm:$0xff]
      %v4196 = vld [vmem:[#allocation9 + $0x190] sm:$0xff]
      %v4197 = vld [vmem:[#allocation9 + $0x198] sm:$0xff]
      %v4198 = vld [vmem:[#allocation9 + $0x1a0] sm:$0xff]
      %v4199 = vld [vmem:[#allocation9 + $0x1a8] sm:$0xff]
      %v4200 = vld [vmem:[#allocation9 + $0x1b0] sm:$0xff]
      %v4201 = vld [vmem:[#allocation9 + $0x1b8] sm:$0xff]
      %v4202 = vld [vmem:[#allocation9 + $0x1c0] sm:$0xff]
      %v4203 = vld [vmem:[#allocation9 + $0x1c8] sm:$0xff]
      %v4204 = vld [vmem:[#allocation9 + $0x1d0] sm:$0xff]
      %v4205 = vld [vmem:[#allocation9 + $0x1d8] sm:$0xff]
      %v4206 = vld [vmem:[#allocation9 + $0x1e0] sm:$0xff]
      %v4207 = vld [vmem:[#allocation9 + $0x1e8] sm:$0xff]
      %v4208 = vld [vmem:[#allocation9 + $0x1f0] sm:$0xff]
      %v4209 = vld [vmem:[#allocation9 + $0x1f8] sm:$0xff]
      %4210 = vmatprep.subr.mxu0 %v4147
      %4211 = vmatpush1.msra.mxu0 %v4146
      %4212 = vmatprep.subr.mxu0 %v4151
      %4213 = vmatpush1.msra.mxu0 %v4150
      %4214 = vmatprep.subr.mxu0 %v4155
      %4215 = vmatpush1.msra.mxu0 %v4154
      %4216 = vmatprep.subr.mxu0 %v4159
      %4217 = vmatpush1.msra.mxu0 %v4158
      %4218 = vmatprep.subr.mxu0 %v4163
      %4219 = vmatpush1.msra.mxu0 %v4162
      %4220 = vmatprep.subr.mxu0 %v4167
      %4221 = vmatpush1.msra.mxu0 %v4166
      %4222 = vmatprep.subr.mxu0 %v4171
      %4223 = vmatpush1.msra.mxu0 %v4170
      %4224 = vmatprep.subr.mxu0 %v4175
      %4225 = vmatpush1.msra.mxu0 %v4174
      %4226 = vmatprep.subr.mxu0 %v4179
      %4227 = vmatpush1.msra.mxu0 %v4178
      %4228 = vmatprep.subr.mxu0 %v4183
      %4229 = vmatpush1.msra.mxu0 %v4182
      %4230 = vmatprep.subr.mxu0 %v4187
      %4231 = vmatpush1.msra.mxu0 %v4186
      %4232 = vmatprep.subr.mxu0 %v4191
      %4233 = vmatpush1.msra.mxu0 %v4190
      %4234 = vmatprep.subr.mxu0 %v4195
      %4235 = vmatpush1.msra.mxu0 %v4194
      %4236 = vmatprep.subr.mxu0 %v4199
      %4237 = vmatpush1.msra.mxu0 %v4198
      %4238 = vmatprep.subr.mxu0 %v4203
      %4239 = vmatpush1.msra.mxu0 %v4202
      %4240 = vmatprep.subr.mxu0 %v4207
      %4241 = vmatpush1.msra.mxu0 %v4206
      %4242 = vmatprep.subr.mxu0 0.0
      %4243 = vmatpush1.msra.mxu0 0.0
      %4244 = vmatprep.subr.mxu0 0.0
      %4245 = vmatpush1.msra.mxu0 0.0
      %4246 = vmatprep.subr.mxu0 0.0
      %4247 = vmatpush1.msra.mxu0 0.0
      %4248 = vmatprep.subr.mxu0 0.0
      %4249 = vmatpush1.msra.mxu0 0.0
      %4250 = vmatprep.subr.mxu0 0.0
      %4251 = vmatpush1.msra.mxu0 0.0
      %4252 = vmatprep.subr.mxu0 0.0
      %4253 = vmatpush1.msra.mxu0 0.0
      %4254 = vmatprep.subr.mxu0 0.0
      %4255 = vmatpush1.msra.mxu0 0.0
      %4256 = vmatprep.subr.mxu0 0.0
      %4257 = vmatpush1.msra.mxu0 0.0
      %4258 = vmatprep.subr.mxu0 0.0
      %4259 = vmatpush1.msra.mxu0 0.0
      %4260 = vmatprep.subr.mxu0 0.0
      %4261 = vmatpush1.msra.mxu0 0.0
      %4262 = vmatprep.subr.mxu0 0.0
      %4263 = vmatpush1.msra.mxu0 0.0
      %4264 = vmatprep.subr.mxu0 0.0
      %4265 = vmatpush1.msra.mxu0 0.0
      %4266 = vmatprep.subr.mxu0 0.0
      %4267 = vmatpush1.msra.mxu0 0.0
      %4268 = vmatprep.subr.mxu0 0.0
      %4269 = vmatpush1.msra.mxu0 0.0
      %4270 = vmatprep.subr.mxu0 0.0
      %4271 = vmatpush1.msra.mxu0 0.0
      %4272 = vmatprep.subr.mxu0 0.0
      %4273 = vmatpush1.msra.mxu0 0.0
      %4274 = vmatprep.mubr.f32.mxu0 0.0
      %4275 = vmatmul.mubr.f32.gmra.mrb[0].mxu0 %v4136
      %v4276 = vpop.f32.mrb[0].mxu0
      %v4277 = vadd.f32 0.0, %v4276
      %v4278 = vpop.f32.mrb[0].mxu0
      %v4279 = vadd.f32 0.0, %v4278
      %4280 = vdwg.mxu0
      %4281 = vmatprep.subr.mxu0 %v4149
      %4282 = vmatpush1.msra.mxu0 %v4148
      %4283 = vmatprep.subr.mxu0 %v4153
      %4284 = vmatpush1.msra.mxu0 %v4152
      %4285 = vmatprep.subr.mxu0 %v4157
      %4286 = vmatpush1.msra.mxu0 %v4156
      %4287 = vmatprep.subr.mxu0 %v4161
      %4288 = vmatpush1.msra.mxu0 %v4160
      %4289 = vmatprep.subr.mxu0 %v4165
      %4290 = vmatpush1.msra.mxu0 %v4164
      %4291 = vmatprep.subr.mxu0 %v4169
      %4292 = vmatpush1.msra.mxu0 %v4168
      %4293 = vmatprep.subr.mxu0 %v4173
      %4294 = vmatpush1.msra.mxu0 %v4172
      %4295 = vmatprep.subr.mxu0 %v4177
      %4296 = vmatpush1.msra.mxu0 %v4176
      %4297 = vmatprep.subr.mxu0 %v4181
      %4298 = vmatpush1.msra.mxu0 %v4180
      %4299 = vmatprep.subr.mxu0 %v4185
      %4300 = vmatpush1.msra.mxu0 %v4184
      %4301 = vmatprep.subr.mxu0 %v4189
      %4302 = vmatpush1.msra.mxu0 %v4188
      %4303 = vmatprep.subr.mxu0 %v4193
      %4304 = vmatpush1.msra.mxu0 %v4192
      %4305 = vmatprep.subr.mxu0 %v4197
      %4306 = vmatpush1.msra.mxu0 %v4196
      %4307 = vmatprep.subr.mxu0 %v4201
      %4308 = vmatpush1.msra.mxu0 %v4200
      %4309 = vmatprep.subr.mxu0 %v4205
      %4310 = vmatpush1.msra.mxu0 %v4204
      %4311 = vmatprep.subr.mxu0 %v4209
      %4312 = vmatpush1.msra.mxu0 %v4208
      %4313 = vmatprep.subr.mxu0 0.0
      %4314 = vmatpush1.msra.mxu0 0.0
      %4315 = vmatprep.subr.mxu0 0.0
      %4316 = vmatpush1.msra.mxu0 0.0
      %4317 = vmatprep.subr.mxu0 0.0
      %4318 = vmatpush1.msra.mxu0 0.0
      %4319 = vmatprep.subr.mxu0 0.0
      %4320 = vmatpush1.msra.mxu0 0.0
      %4321 = vmatprep.subr.mxu0 0.0
      %4322 = vmatpush1.msra.mxu0 0.0
      %4323 = vmatprep.subr.mxu0 0.0
      %4324 = vmatpush1.msra.mxu0 0.0
      %4325 = vmatprep.subr.mxu0 0.0
      %4326 = vmatpush1.msra.mxu0 0.0
      %4327 = vmatprep.subr.mxu0 0.0
      %4328 = vmatpush1.msra.mxu0 0.0
      %4329 = vmatprep.subr.mxu0 0.0
      %4330 = vmatpush1.msra.mxu0 0.0
      %4331 = vmatprep.subr.mxu0 0.0
      %4332 = vmatpush1.msra.mxu0 0.0
      %4333 = vmatprep.subr.mxu0 0.0
      %4334 = vmatpush1.msra.mxu0 0.0
      %4335 = vmatprep.subr.mxu0 0.0
      %4336 = vmatpush1.msra.mxu0 0.0
      %4337 = vmatprep.subr.mxu0 0.0
      %4338 = vmatpush1.msra.mxu0 0.0
      %4339 = vmatprep.subr.mxu0 0.0
      %4340 = vmatpush1.msra.mxu0 0.0
      %4341 = vmatprep.subr.mxu0 0.0
      %4342 = vmatpush1.msra.mxu0 0.0
      %4343 = vmatprep.subr.mxu0 0.0
      %4344 = vmatpush1.msra.mxu0 0.0
      %4345 = vmatprep.mubr.f32.mxu0 0.0
      %4346 = vmatmul.mubr.f32.gmra.mrb[0].mxu0 %v4136
      %v4347 = vpop.f32.mrb[0].mxu0
      %v4348 = vadd.f32 0.0, %v4347
      %v4349 = vpop.f32.mrb[0].mxu0
      %v4350 = vadd.f32 0.0, %v4349
      %4351 = vdwg.mxu0
      %v4352 = vadd.f32 %v4142, %v4277
      %v4353 = vadd.f32 %v4143, %v4279
      %v4354 = vadd.f32 %v4144, %v4348
      %v4355 = vadd.f32 %v4145, %v4350
      %v4356 = vtanh.pop %v4352
      %v4357 = vtanh.pop %v4353
      %v4358 = vtanh.pop %v4354
      %v4359 = vtanh.pop %v4355
      %v4360 = vxor.u32 %v4352, 2147483648
      %v4361 = vxor.u32 %v4353, 2147483648
      %v4362 = vxor.u32 %v4354, 2147483648
      %v4363 = vxor.u32 %v4355, 2147483648
      %v4364 = vmul.f32 %v4360, 1.442695
      %v4365 = vpow.pop %v4364
      %v4366 = vmul.f32 %v4361, 1.442695
      %v4367 = vpow.pop %v4366
      %v4368 = vmul.f32 %v4362, 1.442695
      %v4369 = vpow.pop %v4368
      %v4370 = vmul.f32 %v4363, 1.442695
      %v4371 = vpow.pop %v4370
      %v4372 = vadd.f32 %v4365, 1.0
      %v4373 = vadd.f32 %v4367, 1.0
      %v4374 = vadd.f32 %v4369, 1.0
      %v4375 = vadd.f32 %v4371, 1.0
      %v4376 = vrcp.pop %v4372
      %v4377 = vmul.f32 1.0, %v4376
      %v4378 = vrcp.pop %v4373
      %v4379 = vmul.f32 1.0, %v4378
      %v4380 = vrcp.pop %v4374
      %v4381 = vmul.f32 1.0, %v4380
      %v4382 = vrcp.pop %v4375
      %v4383 = vmul.f32 1.0, %v4382
      %v4384 = vsel %vm144, %v4356, %v4377
      %v4385 = vsel %vm145, %v4357, %v4379
      %v4386 = vsel %vm146, %v4358, %v4381
      %v4387 = vsel %vm147, %v4359, %v4383
      %v4388 = vmul.f32 %v4385, %v4134
      %v4389 = vmul.f32 %v4384, %v4386
      %v4390 = vadd.f32 %v4388, %v4389
      %v4391 = vtanh.pop %v4390
      %v4392 = vmul.f32 %v4387, %v4391
      %s4393 = scalar_lea.vmem [#allocation3], 40
      %4394 = vst [vmem:[%s4393] sm:$0xff] %v4392
      %s4395 = smul.u32 6, 4
      %s4396 = smul.addr %s4395, 8
      %s4397 = scalar_lea.vmem [#allocation16], %s4396
      %v4398 = vld [vmem:[%s4397] sm:$0xff]
      %v4399 = vld [vmem:[%s4397 + $0x8] sm:$0xff]
      %v4400 = vld [vmem:[%s4397 + $0x10] sm:$0xff]
      %v4401 = vld [vmem:[%s4397 + $0x18] sm:$0xff]
      %v4402 = vld [vmem:[#allocation9] sm:$0xff]
      %v4403 = vld [vmem:[#allocation9 + $0x8] sm:$0xff]
      %v4404 = vld [vmem:[#allocation9 + $0x10] sm:$0xff]
      %v4405 = vld [vmem:[#allocation9 + $0x18] sm:$0xff]
      %v4406 = vld [vmem:[#allocation9 + $0x20] sm:$0xff]
      %v4407 = vld [vmem:[#allocation9 + $0x28] sm:$0xff]
      %v4408 = vld [vmem:[#allocation9 + $0x30] sm:$0xff]
      %v4409 = vld [vmem:[#allocation9 + $0x38] sm:$0xff]
      %v4410 = vld [vmem:[#allocation9 + $0x40] sm:$0xff]
      %v4411 = vld [vmem:[#allocation9 + $0x48] sm:$0xff]
      %v4412 = vld [vmem:[#allocation9 + $0x50] sm:$0xff]
      %v4413 = vld [vmem:[#allocation9 + $0x58] sm:$0xff]
      %v4414 = vld [vmem:[#allocation9 + $0x60] sm:$0xff]
      %v4415 = vld [vmem:[#allocation9 + $0x68] sm:$0xff]
      %v4416 = vld [vmem:[#allocation9 + $0x70] sm:$0xff]
      %v4417 = vld [vmem:[#allocation9 + $0x78] sm:$0xff]
      %v4418 = vld [vmem:[#allocation9 + $0x80] sm:$0xff]
      %v4419 = vld [vmem:[#allocation9 + $0x88] sm:$0xff]
      %v4420 = vld [vmem:[#allocation9 + $0x90] sm:$0xff]
      %v4421 = vld [vmem:[#allocation9 + $0x98] sm:$0xff]
      %v4422 = vld [vmem:[#allocation9 + $0xa0] sm:$0xff]
      %v4423 = vld [vmem:[#allocation9 + $0xa8] sm:$0xff]
      %v4424 = vld [vmem:[#allocation9 + $0xb0] sm:$0xff]
      %v4425 = vld [vmem:[#allocation9 + $0xb8] sm:$0xff]
      %v4426 = vld [vmem:[#allocation9 + $0xc0] sm:$0xff]
      %v4427 = vld [vmem:[#allocation9 + $0xc8] sm:$0xff]
      %v4428 = vld [vmem:[#allocation9 + $0xd0] sm:$0xff]
      %v4429 = vld [vmem:[#allocation9 + $0xd8] sm:$0xff]
      %v4430 = vld [vmem:[#allocation9 + $0xe0] sm:$0xff]
      %v4431 = vld [vmem:[#allocation9 + $0xe8] sm:$0xff]
      %v4432 = vld [vmem:[#allocation9 + $0xf0] sm:$0xff]
      %v4433 = vld [vmem:[#allocation9 + $0xf8] sm:$0xff]
      %v4434 = vld [vmem:[#allocation9 + $0x100] sm:$0xff]
      %v4435 = vld [vmem:[#allocation9 + $0x108] sm:$0xff]
      %v4436 = vld [vmem:[#allocation9 + $0x110] sm:$0xff]
      %v4437 = vld [vmem:[#allocation9 + $0x118] sm:$0xff]
      %v4438 = vld [vmem:[#allocation9 + $0x120] sm:$0xff]
      %v4439 = vld [vmem:[#allocation9 + $0x128] sm:$0xff]
      %v4440 = vld [vmem:[#allocation9 + $0x130] sm:$0xff]
      %v4441 = vld [vmem:[#allocation9 + $0x138] sm:$0xff]
      %v4442 = vld [vmem:[#allocation9 + $0x140] sm:$0xff]
      %v4443 = vld [vmem:[#allocation9 + $0x148] sm:$0xff]
      %v4444 = vld [vmem:[#allocation9 + $0x150] sm:$0xff]
      %v4445 = vld [vmem:[#allocation9 + $0x158] sm:$0xff]
      %v4446 = vld [vmem:[#allocation9 + $0x160] sm:$0xff]
      %v4447 = vld [vmem:[#allocation9 + $0x168] sm:$0xff]
      %v4448 = vld [vmem:[#allocation9 + $0x170] sm:$0xff]
      %v4449 = vld [vmem:[#allocation9 + $0x178] sm:$0xff]
      %v4450 = vld [vmem:[#allocation9 + $0x180] sm:$0xff]
      %v4451 = vld [vmem:[#allocation9 + $0x188] sm:$0xff]
      %v4452 = vld [vmem:[#allocation9 + $0x190] sm:$0xff]
      %v4453 = vld [vmem:[#allocation9 + $0x198] sm:$0xff]
      %v4454 = vld [vmem:[#allocation9 + $0x1a0] sm:$0xff]
      %v4455 = vld [vmem:[#allocation9 + $0x1a8] sm:$0xff]
      %v4456 = vld [vmem:[#allocation9 + $0x1b0] sm:$0xff]
      %v4457 = vld [vmem:[#allocation9 + $0x1b8] sm:$0xff]
      %v4458 = vld [vmem:[#allocation9 + $0x1c0] sm:$0xff]
      %v4459 = vld [vmem:[#allocation9 + $0x1c8] sm:$0xff]
      %v4460 = vld [vmem:[#allocation9 + $0x1d0] sm:$0xff]
      %v4461 = vld [vmem:[#allocation9 + $0x1d8] sm:$0xff]
      %v4462 = vld [vmem:[#allocation9 + $0x1e0] sm:$0xff]
      %v4463 = vld [vmem:[#allocation9 + $0x1e8] sm:$0xff]
      %v4464 = vld [vmem:[#allocation9 + $0x1f0] sm:$0xff]
      %v4465 = vld [vmem:[#allocation9 + $0x1f8] sm:$0xff]
      %4466 = vmatprep.subr.mxu0 %v4403
      %4467 = vmatpush1.msra.mxu0 %v4402
      %4468 = vmatprep.subr.mxu0 %v4407
      %4469 = vmatpush1.msra.mxu0 %v4406
      %4470 = vmatprep.subr.mxu0 %v4411
      %4471 = vmatpush1.msra.mxu0 %v4410
      %4472 = vmatprep.subr.mxu0 %v4415
      %4473 = vmatpush1.msra.mxu0 %v4414
      %4474 = vmatprep.subr.mxu0 %v4419
      %4475 = vmatpush1.msra.mxu0 %v4418
      %4476 = vmatprep.subr.mxu0 %v4423
      %4477 = vmatpush1.msra.mxu0 %v4422
      %4478 = vmatprep.subr.mxu0 %v4427
      %4479 = vmatpush1.msra.mxu0 %v4426
      %4480 = vmatprep.subr.mxu0 %v4431
      %4481 = vmatpush1.msra.mxu0 %v4430
      %4482 = vmatprep.subr.mxu0 %v4435
      %4483 = vmatpush1.msra.mxu0 %v4434
      %4484 = vmatprep.subr.mxu0 %v4439
      %4485 = vmatpush1.msra.mxu0 %v4438
      %4486 = vmatprep.subr.mxu0 %v4443
      %4487 = vmatpush1.msra.mxu0 %v4442
      %4488 = vmatprep.subr.mxu0 %v4447
      %4489 = vmatpush1.msra.mxu0 %v4446
      %4490 = vmatprep.subr.mxu0 %v4451
      %4491 = vmatpush1.msra.mxu0 %v4450
      %4492 = vmatprep.subr.mxu0 %v4455
      %4493 = vmatpush1.msra.mxu0 %v4454
      %4494 = vmatprep.subr.mxu0 %v4459
      %4495 = vmatpush1.msra.mxu0 %v4458
      %4496 = vmatprep.subr.mxu0 %v4463
      %4497 = vmatpush1.msra.mxu0 %v4462
      %4498 = vmatprep.subr.mxu0 0.0
      %4499 = vmatpush1.msra.mxu0 0.0
      %4500 = vmatprep.subr.mxu0 0.0
      %4501 = vmatpush1.msra.mxu0 0.0
      %4502 = vmatprep.subr.mxu0 0.0
      %4503 = vmatpush1.msra.mxu0 0.0
      %4504 = vmatprep.subr.mxu0 0.0
      %4505 = vmatpush1.msra.mxu0 0.0
      %4506 = vmatprep.subr.mxu0 0.0
      %4507 = vmatpush1.msra.mxu0 0.0
      %4508 = vmatprep.subr.mxu0 0.0
      %4509 = vmatpush1.msra.mxu0 0.0
      %4510 = vmatprep.subr.mxu0 0.0
      %4511 = vmatpush1.msra.mxu0 0.0
      %4512 = vmatprep.subr.mxu0 0.0
      %4513 = vmatpush1.msra.mxu0 0.0
      %4514 = vmatprep.subr.mxu0 0.0
      %4515 = vmatpush1.msra.mxu0 0.0
      %4516 = vmatprep.subr.mxu0 0.0
      %4517 = vmatpush1.msra.mxu0 0.0
      %4518 = vmatprep.subr.mxu0 0.0
      %4519 = vmatpush1.msra.mxu0 0.0
      %4520 = vmatprep.subr.mxu0 0.0
      %4521 = vmatpush1.msra.mxu0 0.0
      %4522 = vmatprep.subr.mxu0 0.0
      %4523 = vmatpush1.msra.mxu0 0.0
      %4524 = vmatprep.subr.mxu0 0.0
      %4525 = vmatpush1.msra.mxu0 0.0
      %4526 = vmatprep.subr.mxu0 0.0
      %4527 = vmatpush1.msra.mxu0 0.0
      %4528 = vmatprep.subr.mxu0 0.0
      %4529 = vmatpush1.msra.mxu0 0.0
      %4530 = vmatprep.mubr.f32.mxu0 0.0
      %4531 = vmatmul.mubr.f32.gmra.mrb[0].mxu0 %v4392
      %v4532 = vpop.f32.mrb[0].mxu0
      %v4533 = vadd.f32 0.0, %v4532
      %v4534 = vpop.f32.mrb[0].mxu0
      %v4535 = vadd.f32 0.0, %v4534
      %4536 = vdwg.mxu0
      %4537 = vmatprep.subr.mxu0 %v4405
      %4538 = vmatpush1.msra.mxu0 %v4404
      %4539 = vmatprep.subr.mxu0 %v4409
      %4540 = vmatpush1.msra.mxu0 %v4408
      %4541 = vmatprep.subr.mxu0 %v4413
      %4542 = vmatpush1.msra.mxu0 %v4412
      %4543 = vmatprep.subr.mxu0 %v4417
      %4544 = vmatpush1.msra.mxu0 %v4416
      %4545 = vmatprep.subr.mxu0 %v4421
      %4546 = vmatpush1.msra.mxu0 %v4420
      %4547 = vmatprep.subr.mxu0 %v4425
      %4548 = vmatpush1.msra.mxu0 %v4424
      %4549 = vmatprep.subr.mxu0 %v4429
      %4550 = vmatpush1.msra.mxu0 %v4428
      %4551 = vmatprep.subr.mxu0 %v4433
      %4552 = vmatpush1.msra.mxu0 %v4432
      %4553 = vmatprep.subr.mxu0 %v4437
      %4554 = vmatpush1.msra.mxu0 %v4436
      %4555 = vmatprep.subr.mxu0 %v4441
      %4556 = vmatpush1.msra.mxu0 %v4440
      %4557 = vmatprep.subr.mxu0 %v4445
      %4558 = vmatpush1.msra.mxu0 %v4444
      %4559 = vmatprep.subr.mxu0 %v4449
      %4560 = vmatpush1.msra.mxu0 %v4448
      %4561 = vmatprep.subr.mxu0 %v4453
      %4562 = vmatpush1.msra.mxu0 %v4452
      %4563 = vmatprep.subr.mxu0 %v4457
      %4564 = vmatpush1.msra.mxu0 %v4456
      %4565 = vmatprep.subr.mxu0 %v4461
      %4566 = vmatpush1.msra.mxu0 %v4460
      %4567 = vmatprep.subr.mxu0 %v4465
      %4568 = vmatpush1.msra.mxu0 %v4464
      %4569 = vmatprep.subr.mxu0 0.0
      %4570 = vmatpush1.msra.mxu0 0.0
      %4571 = vmatprep.subr.mxu0 0.0
      %4572 = vmatpush1.msra.mxu0 0.0
      %4573 = vmatprep.subr.mxu0 0.0
      %4574 = vmatpush1.msra.mxu0 0.0
      %4575 = vmatprep.subr.mxu0 0.0
      %4576 = vmatpush1.msra.mxu0 0.0
      %4577 = vmatprep.subr.mxu0 0.0
      %4578 = vmatpush1.msra.mxu0 0.0
      %4579 = vmatprep.subr.mxu0 0.0
      %4580 = vmatpush1.msra.mxu0 0.0
      %4581 = vmatprep.subr.mxu0 0.0
      %4582 = vmatpush1.msra.mxu0 0.0
      %4583 = vmatprep.subr.mxu0 0.0
      %4584 = vmatpush1.msra.mxu0 0.0
      %4585 = vmatprep.subr.mxu0 0.0
      %4586 = vmatpush1.msra.mxu0 0.0
      %4587 = vmatprep.subr.mxu0 0.0
      %4588 = vmatpush1.msra.mxu0 0.0
      %4589 = vmatprep.subr.mxu0 0.0
      %4590 = vmatpush1.msra.mxu0 0.0
      %4591 = vmatprep.subr.mxu0 0.0
      %4592 = vmatpush1.msra.mxu0 0.0
      %4593 = vmatprep.subr.mxu0 0.0
      %4594 = vmatpush1.msra.mxu0 0.0
      %4595 = vmatprep.subr.mxu0 0.0
      %4596 = vmatpush1.msra.mxu0 0.0
      %4597 = vmatprep.subr.mxu0 0.0
      %4598 = vmatpush1.msra.mxu0 0.0
      %4599 = vmatprep.subr.mxu0 0.0
      %4600 = vmatpush1.msra.mxu0 0.0
      %4601 = vmatprep.mubr.f32.mxu0 0.0
      %4602 = vmatmul.mubr.f32.gmra.mrb[0].mxu0 %v4392
      %v4603 = vpop.f32.mrb[0].mxu0
      %v4604 = vadd.f32 0.0, %v4603
      %v4605 = vpop.f32.mrb[0].mxu0
      %v4606 = vadd.f32 0.0, %v4605
      %4607 = vdwg.mxu0
      %v4608 = vadd.f32 %v4398, %v4533
      %v4609 = vadd.f32 %v4399, %v4535
      %v4610 = vadd.f32 %v4400, %v4604
      %v4611 = vadd.f32 %v4401, %v4606
      %v4612 = vtanh.pop %v4608
      %v4613 = vtanh.pop %v4609
      %v4614 = vtanh.pop %v4610
      %v4615 = vtanh.pop %v4611
      %v4616 = vxor.u32 %v4608, 2147483648
      %v4617 = vxor.u32 %v4609, 2147483648
      %v4618 = vxor.u32 %v4610, 2147483648
      %v4619 = vxor.u32 %v4611, 2147483648
      %v4620 = vmul.f32 %v4616, 1.442695
      %v4621 = vpow.pop %v4620
      %v4622 = vmul.f32 %v4617, 1.442695
      %v4623 = vpow.pop %v4622
      %v4624 = vmul.f32 %v4618, 1.442695
      %v4625 = vpow.pop %v4624
      %v4626 = vmul.f32 %v4619, 1.442695
      %v4627 = vpow.pop %v4626
      %v4628 = vadd.f32 %v4621, 1.0
      %v4629 = vadd.f32 %v4623, 1.0
      %v4630 = vadd.f32 %v4625, 1.0
      %v4631 = vadd.f32 %v4627, 1.0
      %v4632 = vrcp.pop %v4628
      %v4633 = vmul.f32 1.0, %v4632
      %v4634 = vrcp.pop %v4629
      %v4635 = vmul.f32 1.0, %v4634
      %v4636 = vrcp.pop %v4630
      %v4637 = vmul.f32 1.0, %v4636
      %v4638 = vrcp.pop %v4631
      %v4639 = vmul.f32 1.0, %v4638
      %v4640 = vsel %vm144, %v4612, %v4633
      %v4641 = vsel %vm145, %v4613, %v4635
      %v4642 = vsel %vm146, %v4614, %v4637
      %v4643 = vsel %vm147, %v4615, %v4639
      %v4644 = vmul.f32 %v4641, %v4390
      %v4645 = vmul.f32 %v4640, %v4642
      %v4646 = vadd.f32 %v4644, %v4645
      %v4647 = vtanh.pop %v4646
      %v4648 = vmul.f32 %v4643, %v4647
      %s4649 = scalar_lea.vmem [#allocation3], 48
      %4650 = vst [vmem:[%s4649] sm:$0xff] %v4648
      %s4651 = smul.u32 7, 4
      %s4652 = smul.addr %s4651, 8
      %s4653 = scalar_lea.vmem [#allocation16], %s4652
      %v4654 = vld [vmem:[%s4653] sm:$0xff]
      %v4655 = vld [vmem:[%s4653 + $0x8] sm:$0xff]
      %v4656 = vld [vmem:[%s4653 + $0x10] sm:$0xff]
      %v4657 = vld [vmem:[%s4653 + $0x18] sm:$0xff]
      %v4658 = vld [vmem:[#allocation9] sm:$0xff]
      %v4659 = vld [vmem:[#allocation9 + $0x8] sm:$0xff]
      %v4660 = vld [vmem:[#allocation9 + $0x10] sm:$0xff]
      %v4661 = vld [vmem:[#allocation9 + $0x18] sm:$0xff]
      %v4662 = vld [vmem:[#allocation9 + $0x20] sm:$0xff]
      %v4663 = vld [vmem:[#allocation9 + $0x28] sm:$0xff]
      %v4664 = vld [vmem:[#allocation9 + $0x30] sm:$0xff]
      %v4665 = vld [vmem:[#allocation9 + $0x38] sm:$0xff]
      %v4666 = vld [vmem:[#allocation9 + $0x40] sm:$0xff]
      %v4667 = vld [vmem:[#allocation9 + $0x48] sm:$0xff]
      %v4668 = vld [vmem:[#allocation9 + $0x50] sm:$0xff]
      %v4669 = vld [vmem:[#allocation9 + $0x58] sm:$0xff]
      %v4670 = vld [vmem:[#allocation9 + $0x60] sm:$0xff]
      %v4671 = vld [vmem:[#allocation9 + $0x68] sm:$0xff]
      %v4672 = vld [vmem:[#allocation9 + $0x70] sm:$0xff]
      %v4673 = vld [vmem:[#allocation9 + $0x78] sm:$0xff]
      %v4674 = vld [vmem:[#allocation9 + $0x80] sm:$0xff]
      %v4675 = vld [vmem:[#allocation9 + $0x88] sm:$0xff]
      %v4676 = vld [vmem:[#allocation9 + $0x90] sm:$0xff]
      %v4677 = vld [vmem:[#allocation9 + $0x98] sm:$0xff]
      %v4678 = vld [vmem:[#allocation9 + $0xa0] sm:$0xff]
      %v4679 = vld [vmem:[#allocation9 + $0xa8] sm:$0xff]
      %v4680 = vld [vmem:[#allocation9 + $0xb0] sm:$0xff]
      %v4681 = vld [vmem:[#allocation9 + $0xb8] sm:$0xff]
      %v4682 = vld [vmem:[#allocation9 + $0xc0] sm:$0xff]
      %v4683 = vld [vmem:[#allocation9 + $0xc8] sm:$0xff]
      %v4684 = vld [vmem:[#allocation9 + $0xd0] sm:$0xff]
      %v4685 = vld [vmem:[#allocation9 + $0xd8] sm:$0xff]
      %v4686 = vld [vmem:[#allocation9 + $0xe0] sm:$0xff]
      %v4687 = vld [vmem:[#allocation9 + $0xe8] sm:$0xff]
      %v4688 = vld [vmem:[#allocation9 + $0xf0] sm:$0xff]
      %v4689 = vld [vmem:[#allocation9 + $0xf8] sm:$0xff]
      %v4690 = vld [vmem:[#allocation9 + $0x100] sm:$0xff]
      %v4691 = vld [vmem:[#allocation9 + $0x108] sm:$0xff]
      %v4692 = vld [vmem:[#allocation9 + $0x110] sm:$0xff]
      %v4693 = vld [vmem:[#allocation9 + $0x118] sm:$0xff]
      %v4694 = vld [vmem:[#allocation9 + $0x120] sm:$0xff]
      %v4695 = vld [vmem:[#allocation9 + $0x128] sm:$0xff]
      %v4696 = vld [vmem:[#allocation9 + $0x130] sm:$0xff]
      %v4697 = vld [vmem:[#allocation9 + $0x138] sm:$0xff]
      %v4698 = vld [vmem:[#allocation9 + $0x140] sm:$0xff]
      %v4699 = vld [vmem:[#allocation9 + $0x148] sm:$0xff]
      %v4700 = vld [vmem:[#allocation9 + $0x150] sm:$0xff]
      %v4701 = vld [vmem:[#allocation9 + $0x158] sm:$0xff]
      %v4702 = vld [vmem:[#allocation9 + $0x160] sm:$0xff]
      %v4703 = vld [vmem:[#allocation9 + $0x168] sm:$0xff]
      %v4704 = vld [vmem:[#allocation9 + $0x170] sm:$0xff]
      %v4705 = vld [vmem:[#allocation9 + $0x178] sm:$0xff]
      %v4706 = vld [vmem:[#allocation9 + $0x180] sm:$0xff]
      %v4707 = vld [vmem:[#allocation9 + $0x188] sm:$0xff]
      %v4708 = vld [vmem:[#allocation9 + $0x190] sm:$0xff]
      %v4709 = vld [vmem:[#allocation9 + $0x198] sm:$0xff]
      %v4710 = vld [vmem:[#allocation9 + $0x1a0] sm:$0xff]
      %v4711 = vld [vmem:[#allocation9 + $0x1a8] sm:$0xff]
      %v4712 = vld [vmem:[#allocation9 + $0x1b0] sm:$0xff]
      %v4713 = vld [vmem:[#allocation9 + $0x1b8] sm:$0xff]
      %v4714 = vld [vmem:[#allocation9 + $0x1c0] sm:$0xff]
      %v4715 = vld [vmem:[#allocation9 + $0x1c8] sm:$0xff]
      %v4716 = vld [vmem:[#allocation9 + $0x1d0] sm:$0xff]
      %v4717 = vld [vmem:[#allocation9 + $0x1d8] sm:$0xff]
      %v4718 = vld [vmem:[#allocation9 + $0x1e0] sm:$0xff]
      %v4719 = vld [vmem:[#allocation9 + $0x1e8] sm:$0xff]
      %v4720 = vld [vmem:[#allocation9 + $0x1f0] sm:$0xff]
      %v4721 = vld [vmem:[#allocation9 + $0x1f8] sm:$0xff]
      %4722 = vmatprep.subr.mxu0 %v4659
      %4723 = vmatpush1.msra.mxu0 %v4658
      %4724 = vmatprep.subr.mxu0 %v4663
      %4725 = vmatpush1.msra.mxu0 %v4662
      %4726 = vmatprep.subr.mxu0 %v4667
      %4727 = vmatpush1.msra.mxu0 %v4666
      %4728 = vmatprep.subr.mxu0 %v4671
      %4729 = vmatpush1.msra.mxu0 %v4670
      %4730 = vmatprep.subr.mxu0 %v4675
      %4731 = vmatpush1.msra.mxu0 %v4674
      %4732 = vmatprep.subr.mxu0 %v4679
      %4733 = vmatpush1.msra.mxu0 %v4678
      %4734 = vmatprep.subr.mxu0 %v4683
      %4735 = vmatpush1.msra.mxu0 %v4682
      %4736 = vmatprep.subr.mxu0 %v4687
      %4737 = vmatpush1.msra.mxu0 %v4686
      %4738 = vmatprep.subr.mxu0 %v4691
      %4739 = vmatpush1.msra.mxu0 %v4690
      %4740 = vmatprep.subr.mxu0 %v4695
      %4741 = vmatpush1.msra.mxu0 %v4694
      %4742 = vmatprep.subr.mxu0 %v4699
      %4743 = vmatpush1.msra.mxu0 %v4698
      %4744 = vmatprep.subr.mxu0 %v4703
      %4745 = vmatpush1.msra.mxu0 %v4702
      %4746 = vmatprep.subr.mxu0 %v4707
      %4747 = vmatpush1.msra.mxu0 %v4706
      %4748 = vmatprep.subr.mxu0 %v4711
      %4749 = vmatpush1.msra.mxu0 %v4710
      %4750 = vmatprep.subr.mxu0 %v4715
      %4751 = vmatpush1.msra.mxu0 %v4714
      %4752 = vmatprep.subr.mxu0 %v4719
      %4753 = vmatpush1.msra.mxu0 %v4718
      %4754 = vmatprep.subr.mxu0 0.0
      %4755 = vmatpush1.msra.mxu0 0.0
      %4756 = vmatprep.subr.mxu0 0.0
      %4757 = vmatpush1.msra.mxu0 0.0
      %4758 = vmatprep.subr.mxu0 0.0
      %4759 = vmatpush1.msra.mxu0 0.0
      %4760 = vmatprep.subr.mxu0 0.0
      %4761 = vmatpush1.msra.mxu0 0.0
      %4762 = vmatprep.subr.mxu0 0.0
      %4763 = vmatpush1.msra.mxu0 0.0
      %4764 = vmatprep.subr.mxu0 0.0
      %4765 = vmatpush1.msra.mxu0 0.0
      %4766 = vmatprep.subr.mxu0 0.0
      %4767 = vmatpush1.msra.mxu0 0.0
      %4768 = vmatprep.subr.mxu0 0.0
      %4769 = vmatpush1.msra.mxu0 0.0
      %4770 = vmatprep.subr.mxu0 0.0
      %4771 = vmatpush1.msra.mxu0 0.0
      %4772 = vmatprep.subr.mxu0 0.0
      %4773 = vmatpush1.msra.mxu0 0.0
      %4774 = vmatprep.subr.mxu0 0.0
      %4775 = vmatpush1.msra.mxu0 0.0
      %4776 = vmatprep.subr.mxu0 0.0
      %4777 = vmatpush1.msra.mxu0 0.0
      %4778 = vmatprep.subr.mxu0 0.0
      %4779 = vmatpush1.msra.mxu0 0.0
      %4780 = vmatprep.subr.mxu0 0.0
      %4781 = vmatpush1.msra.mxu0 0.0
      %4782 = vmatprep.subr.mxu0 0.0
      %4783 = vmatpush1.msra.mxu0 0.0
      %4784 = vmatprep.subr.mxu0 0.0
      %4785 = vmatpush1.msra.mxu0 0.0
      %4786 = vmatprep.mubr.f32.mxu0 0.0
      %4787 = vmatmul.mubr.f32.gmra.mrb[0].mxu0 %v4648
      %v4788 = vpop.f32.mrb[0].mxu0
      %v4789 = vadd.f32 0.0, %v4788
      %v4790 = vpop.f32.mrb[0].mxu0
      %v4791 = vadd.f32 0.0, %v4790
      %4792 = vdwg.mxu0
      %4793 = vmatprep.subr.mxu0 %v4661
      %4794 = vmatpush1.msra.mxu0 %v4660
      %4795 = vmatprep.subr.mxu0 %v4665
      %4796 = vmatpush1.msra.mxu0 %v4664
      %4797 = vmatprep.subr.mxu0 %v4669
      %4798 = vmatpush1.msra.mxu0 %v4668
      %4799 = vmatprep.subr.mxu0 %v4673
      %4800 = vmatpush1.msra.mxu0 %v4672
      %4801 = vmatprep.subr.mxu0 %v4677
      %4802 = vmatpush1.msra.mxu0 %v4676
      %4803 = vmatprep.subr.mxu0 %v4681
      %4804 = vmatpush1.msra.mxu0 %v4680
      %4805 = vmatprep.subr.mxu0 %v4685
      %4806 = vmatpush1.msra.mxu0 %v4684
      %4807 = vmatprep.subr.mxu0 %v4689
      %4808 = vmatpush1.msra.mxu0 %v4688
      %4809 = vmatprep.subr.mxu0 %v4693
      %4810 = vmatpush1.msra.mxu0 %v4692
      %4811 = vmatprep.subr.mxu0 %v4697
      %4812 = vmatpush1.msra.mxu0 %v4696
      %4813 = vmatprep.subr.mxu0 %v4701
      %4814 = vmatpush1.msra.mxu0 %v4700
      %4815 = vmatprep.subr.mxu0 %v4705
      %4816 = vmatpush1.msra.mxu0 %v4704
      %4817 = vmatprep.subr.mxu0 %v4709
      %4818 = vmatpush1.msra.mxu0 %v4708
      %4819 = vmatprep.subr.mxu0 %v4713
      %4820 = vmatpush1.msra.mxu0 %v4712
      %4821 = vmatprep.subr.mxu0 %v4717
      %4822 = vmatpush1.msra.mxu0 %v4716
      %4823 = vmatprep.subr.mxu0 %v4721
      %4824 = vmatpush1.msra.mxu0 %v4720
      %4825 = vmatprep.subr.mxu0 0.0
      %4826 = vmatpush1.msra.mxu0 0.0
      %4827 = vmatprep.subr.mxu0 0.0
      %4828 = vmatpush1.msra.mxu0 0.0
      %4829 = vmatprep.subr.mxu0 0.0
      %4830 = vmatpush1.msra.mxu0 0.0
      %4831 = vmatprep.subr.mxu0 0.0
      %4832 = vmatpush1.msra.mxu0 0.0
      %4833 = vmatprep.subr.mxu0 0.0
      %4834 = vmatpush1.msra.mxu0 0.0
      %4835 = vmatprep.subr.mxu0 0.0
      %4836 = vmatpush1.msra.mxu0 0.0
      %4837 = vmatprep.subr.mxu0 0.0
      %4838 = vmatpush1.msra.mxu0 0.0
      %4839 = vmatprep.subr.mxu0 0.0
      %4840 = vmatpush1.msra.mxu0 0.0
      %4841 = vmatprep.subr.mxu0 0.0
      %4842 = vmatpush1.msra.mxu0 0.0
      %4843 = vmatprep.subr.mxu0 0.0
      %4844 = vmatpush1.msra.mxu0 0.0
      %4845 = vmatprep.subr.mxu0 0.0
      %4846 = vmatpush1.msra.mxu0 0.0
      %4847 = vmatprep.subr.mxu0 0.0
      %4848 = vmatpush1.msra.mxu0 0.0
      %4849 = vmatprep.subr.mxu0 0.0
      %4850 = vmatpush1.msra.mxu0 0.0
      %4851 = vmatprep.subr.mxu0 0.0
      %4852 = vmatpush1.msra.mxu0 0.0
      %4853 = vmatprep.subr.mxu0 0.0
      %4854 = vmatpush1.msra.mxu0 0.0
      %4855 = vmatprep.subr.mxu0 0.0
      %4856 = vmatpush1.msra.mxu0 0.0
      %4857 = vmatprep.mubr.f32.mxu0 0.0
      %4858 = vmatmul.mubr.f32.gmra.mrb[0].mxu0 %v4648
      %v4859 = vpop.f32.mrb[0].mxu0
      %v4860 = vadd.f32 0.0, %v4859
      %v4861 = vpop.f32.mrb[0].mxu0
      %v4862 = vadd.f32 0.0, %v4861
      %4863 = vdwg.mxu0
      %v4864 = vadd.f32 %v4654, %v4789
      %v4865 = vadd.f32 %v4655, %v4791
      %v4866 = vadd.f32 %v4656, %v4860
      %v4867 = vadd.f32 %v4657, %v4862
      %v4868 = vtanh.pop %v4864
      %v4869 = vtanh.pop %v4865
      %v4870 = vtanh.pop %v4866
      %v4871 = vtanh.pop %v4867
      %v4872 = vxor.u32 %v4864, 2147483648
      %v4873 = vxor.u32 %v4865, 2147483648
      %v4874 = vxor.u32 %v4866, 2147483648
      %v4875 = vxor.u32 %v4867, 2147483648
      %v4876 = vmul.f32 %v4872, 1.442695
      %v4877 = vpow.pop %v4876
      %v4878 = vmul.f32 %v4873, 1.442695
      %v4879 = vpow.pop %v4878
      %v4880 = vmul.f32 %v4874, 1.442695
      %v4881 = vpow.pop %v4880
      %v4882 = vmul.f32 %v4875, 1.442695
      %v4883 = vpow.pop %v4882
      %v4884 = vadd.f32 %v4877, 1.0
      %v4885 = vadd.f32 %v4879, 1.0
      %v4886 = vadd.f32 %v4881, 1.0
      %v4887 = vadd.f32 %v4883, 1.0
      %v4888 = vrcp.pop %v4884
      %v4889 = vmul.f32 1.0, %v4888
      %v4890 = vrcp.pop %v4885
      %v4891 = vmul.f32 1.0, %v4890
      %v4892 = vrcp.pop %v4886
      %v4893 = vmul.f32 1.0, %v4892
      %v4894 = vrcp.pop %v4887
      %v4895 = vmul.f32 1.0, %v4894
      %v4896 = vsel %vm144, %v4868, %v4889
      %v4897 = vsel %vm145, %v4869, %v4891
      %v4898 = vsel %vm146, %v4870, %v4893
      %v4899 = vsel %vm147, %v4871, %v4895
      %v4900 = vmul.f32 %v4897, %v4646
      %v4901 = vmul.f32 %v4896, %v4898
      %v4902 = vadd.f32 %v4900, %v4901
      %v4903 = vtanh.pop %v4902
      %v4904 = vmul.f32 %v4899, %v4903
      %s4905 = scalar_lea.vmem [#allocation3], 56
      %4906 = vst [vmem:[%s4905] sm:$0xff] %v4904
    %v4907 = vld [vmem:[#allocation3] sm:$0xff]
    %v4908 = vld [vmem:[#allocation3 + $0x8] sm:$0xff]
    %v4909 = vld [vmem:[#allocation3 + $0x10] sm:$0xff]
    %v4910 = vld [vmem:[#allocation3 + $0x18] sm:$0xff]
    %v4911 = vld [vmem:[#allocation3 + $0x20] sm:$0xff]
    %v4912 = vld [vmem:[#allocation3 + $0x28] sm:$0xff]
    %v4913 = vld [vmem:[#allocation3 + $0x30] sm:$0xff]
    %v4914 = vld [vmem:[#allocation3 + $0x38] sm:$0xff]
    $region76: #{music_lstm_forward.1} parent=1
      #allocation17 [shape = 'u8[131072]{0}', space=vmem, size = 0x20000, scoped, tag = 'scoped memory for music_lstm_forward.1']
      %v4915 = vld [vmem:[#allocation10] sm:$0xff]
      %v4916 = vld [vmem:[#allocation10 + $0x8] sm:$0xff]
      %v4917 = vld [vmem:[#allocation10 + $0x10] sm:$0xff]
      %v4918 = vld [vmem:[#allocation10 + $0x18] sm:$0xff]
      %v4919 = vld [vmem:[#allocation10 + $0x20] sm:$0xff]
      %v4920 = vld [vmem:[#allocation10 + $0x28] sm:$0xff]
      %v4921 = vld [vmem:[#allocation10 + $0x30] sm:$0xff]
      %v4922 = vld [vmem:[#allocation10 + $0x38] sm:$0xff]
      %v4923 = vld [vmem:[#allocation10 + $0x40] sm:$0xff]
      %v4924 = vld [vmem:[#allocation10 + $0x48] sm:$0xff]
      %v4925 = vld [vmem:[#allocation10 + $0x50] sm:$0xff]
      %v4926 = vld [vmem:[#allocation10 + $0x58] sm:$0xff]
      %v4927 = vld [vmem:[#allocation10 + $0x60] sm:$0xff]
      %v4928 = vld [vmem:[#allocation10 + $0x68] sm:$0xff]
      %v4929 = vld [vmem:[#allocation10 + $0x70] sm:$0xff]
      %v4930 = vld [vmem:[#allocation10 + $0x78] sm:$0xff]
      %v4931 = vld [vmem:[#allocation10 + $0x80] sm:$0xff]
      %v4932 = vld [vmem:[#allocation10 + $0x88] sm:$0xff]
      %v4933 = vld [vmem:[#allocation10 + $0x90] sm:$0xff]
      %v4934 = vld [vmem:[#allocation10 + $0x98] sm:$0xff]
      %v4935 = vld [vmem:[#allocation10 + $0xa0] sm:$0xff]
      %v4936 = vld [vmem:[#allocation10 + $0xa8] sm:$0xff]
      %v4937 = vld [vmem:[#allocation10 + $0xb0] sm:$0xff]
      %v4938 = vld [vmem:[#allocation10 + $0xb8] sm:$0xff]
      %v4939 = vld [vmem:[#allocation10 + $0xc0] sm:$0xff]
      %v4940 = vld [vmem:[#allocation10 + $0xc8] sm:$0xff]
      %v4941 = vld [vmem:[#allocation10 + $0xd0] sm:$0xff]
      %v4942 = vld [vmem:[#allocation10 + $0xd8] sm:$0xff]
      %v4943 = vld [vmem:[#allocation10 + $0xe0] sm:$0xff]
      %v4944 = vld [vmem:[#allocation10 + $0xe8] sm:$0xff]
      %v4945 = vld [vmem:[#allocation10 + $0xf0] sm:$0xff]
      %v4946 = vld [vmem:[#allocation10 + $0xf8] sm:$0xff]
      %v4947 = vld [vmem:[#allocation10 + $0x100] sm:$0xff]
      %v4948 = vld [vmem:[#allocation10 + $0x108] sm:$0xff]
      %v4949 = vld [vmem:[#allocation10 + $0x110] sm:$0xff]
      %v4950 = vld [vmem:[#allocation10 + $0x118] sm:$0xff]
      %v4951 = vld [vmem:[#allocation10 + $0x120] sm:$0xff]
      %v4952 = vld [vmem:[#allocation10 + $0x128] sm:$0xff]
      %v4953 = vld [vmem:[#allocation10 + $0x130] sm:$0xff]
      %v4954 = vld [vmem:[#allocation10 + $0x138] sm:$0xff]
      %v4955 = vld [vmem:[#allocation10 + $0x140] sm:$0xff]
      %v4956 = vld [vmem:[#allocation10 + $0x148] sm:$0xff]
      %v4957 = vld [vmem:[#allocation10 + $0x150] sm:$0xff]
      %v4958 = vld [vmem:[#allocation10 + $0x158] sm:$0xff]
      %v4959 = vld [vmem:[#allocation10 + $0x160] sm:$0xff]
      %v4960 = vld [vmem:[#allocation10 + $0x168] sm:$0xff]
      %v4961 = vld [vmem:[#allocation10 + $0x170] sm:$0xff]
      %v4962 = vld [vmem:[#allocation10 + $0x178] sm:$0xff]
      %v4963 = vld [vmem:[#allocation10 + $0x180] sm:$0xff]
      %v4964 = vld [vmem:[#allocation10 + $0x188] sm:$0xff]
      %v4965 = vld [vmem:[#allocation10 + $0x190] sm:$0xff]
      %v4966 = vld [vmem:[#allocation10 + $0x198] sm:$0xff]
      %v4967 = vld [vmem:[#allocation10 + $0x1a0] sm:$0xff]
      %v4968 = vld [vmem:[#allocation10 + $0x1a8] sm:$0xff]
      %v4969 = vld [vmem:[#allocation10 + $0x1b0] sm:$0xff]
      %v4970 = vld [vmem:[#allocation10 + $0x1b8] sm:$0xff]
      %v4971 = vld [vmem:[#allocation10 + $0x1c0] sm:$0xff]
      %v4972 = vld [vmem:[#allocation10 + $0x1c8] sm:$0xff]
      %v4973 = vld [vmem:[#allocation10 + $0x1d0] sm:$0xff]
      %v4974 = vld [vmem:[#allocation10 + $0x1d8] sm:$0xff]
      %v4975 = vld [vmem:[#allocation10 + $0x1e0] sm:$0xff]
      %v4976 = vld [vmem:[#allocation10 + $0x1e8] sm:$0xff]
      %v4977 = vld [vmem:[#allocation10 + $0x1f0] sm:$0xff]
      %v4978 = vld [vmem:[#allocation10 + $0x1f8] sm:$0xff]
      %v4979 = vld [vmem:[%s9] sm:$0xf]
      %v4981 = vlaneseq
      %v4982 = vshrl.u32 %v4981, 7
      %v4983 = vsub.s32 0, %v4982
      %v4984 = vrot.slane %v4979, %v4983
      %v4985 = vlaneseq
      %v4986 = vshrl.u32 %v4985, 7
      %v4987 = vsub.s32 1, %v4986
      %v4988 = vrot.slane %v4979, %v4987
      %v4989 = vlaneseq
      %v4990 = vshrl.u32 %v4989, 7
      %v4991 = vsub.s32 2, %v4990
      %v4992 = vrot.slane %v4979, %v4991
      %v4993 = vlaneseq
      %v4994 = vshrl.u32 %v4993, 7
      %v4995 = vsub.s32 3, %v4994
      %v4996 = vrot.slane %v4979, %v4995
      %5001 = vmatprep.subr.mxu0 %v4916
      %5002 = vmatpush1.msra.mxu0 %v4915
      %5003 = vmatprep.subr.mxu0 %v4920
      %5004 = vmatpush1.msra.mxu0 %v4919
      %5005 = vmatprep.subr.mxu0 %v4924
      %5006 = vmatpush1.msra.mxu0 %v4923
      %5007 = vmatprep.subr.mxu0 %v4928
      %5008 = vmatpush1.msra.mxu0 %v4927
      %5009 = vmatprep.subr.mxu0 %v4932
      %5010 = vmatpush1.msra.mxu0 %v4931
      %5011 = vmatprep.subr.mxu0 %v4936
      %5012 = vmatpush1.msra.mxu0 %v4935
      %5013 = vmatprep.subr.mxu0 %v4940
      %5014 = vmatpush1.msra.mxu0 %v4939
      %5015 = vmatprep.subr.mxu0 %v4944
      %5016 = vmatpush1.msra.mxu0 %v4943
      %5017 = vmatprep.subr.mxu0 %v4948
      %5018 = vmatpush1.msra.mxu0 %v4947
      %5019 = vmatprep.subr.mxu0 %v4952
      %5020 = vmatpush1.msra.mxu0 %v4951
      %5021 = vmatprep.subr.mxu0 %v4956
      %5022 = vmatpush1.msra.mxu0 %v4955
      %5023 = vmatprep.subr.mxu0 %v4960
      %5024 = vmatpush1.msra.mxu0 %v4959
      %5025 = vmatprep.subr.mxu0 %v4964
      %5026 = vmatpush1.msra.mxu0 %v4963
      %5027 = vmatprep.subr.mxu0 %v4968
      %5028 = vmatpush1.msra.mxu0 %v4967
      %5029 = vmatprep.subr.mxu0 %v4972
      %5030 = vmatpush1.msra.mxu0 %v4971
      %5031 = vmatprep.subr.mxu0 %v4976
      %5032 = vmatpush1.msra.mxu0 %v4975
      %5033 = vmatprep.subr.mxu0 0.0
      %5034 = vmatpush1.msra.mxu0 0.0
      %5035 = vmatprep.subr.mxu0 0.0
      %5036 = vmatpush1.msra.mxu0 0.0
      %5037 = vmatprep.subr.mxu0 0.0
      %5038 = vmatpush1.msra.mxu0 0.0
      %5039 = vmatprep.subr.mxu0 0.0
      %5040 = vmatpush1.msra.mxu0 0.0
      %5041 = vmatprep.subr.mxu0 0.0
      %5042 = vmatpush1.msra.mxu0 0.0
      %5043 = vmatprep.subr.mxu0 0.0
      %5044 = vmatpush1.msra.mxu0 0.0
      %5045 = vmatprep.subr.mxu0 0.0
      %5046 = vmatpush1.msra.mxu0 0.0
      %5047 = vmatprep.subr.mxu0 0.0
      %5048 = vmatpush1.msra.mxu0 0.0
      %5049 = vmatprep.subr.mxu0 0.0
      %5050 = vmatpush1.msra.mxu0 0.0
      %5051 = vmatprep.subr.mxu0 0.0
      %5052 = vmatpush1.msra.mxu0 0.0
      %5053 = vmatprep.subr.mxu0 0.0
      %5054 = vmatpush1.msra.mxu0 0.0
      %5055 = vmatprep.subr.mxu0 0.0
      %5056 = vmatpush1.msra.mxu0 0.0
      %5057 = vmatprep.subr.mxu0 0.0
      %5058 = vmatpush1.msra.mxu0 0.0
      %5059 = vmatprep.subr.mxu0 0.0
      %5060 = vmatpush1.msra.mxu0 0.0
      %5061 = vmatprep.subr.mxu0 0.0
      %5062 = vmatpush1.msra.mxu0 0.0
      %5063 = vmatprep.subr.mxu0 0.0
      %5064 = vmatpush1.msra.mxu0 0.0
      %5065 = vmatprep.mubr.f32.mxu0 0.0
      %5066 = vmatmul.mubr.f32.gmra.mrb[0].mxu0 %v4907
      %v5067 = vpop.f32.mrb[0].mxu0
      %v5068 = vadd.f32 %v4984, %v5067
      %v5069 = vpop.f32.mrb[0].mxu0
      %v5070 = vadd.f32 %v4988, %v5069
      %5071 = vmatprep.mubr.f32.mxu0 0.0
      %5072 = vmatmul.mubr.f32.gmra.mrb[0].mxu0 %v4908
      %v5073 = vpop.f32.mrb[0].mxu0
      %v5074 = vadd.f32 %v4984, %v5073
      %v5075 = vpop.f32.mrb[0].mxu0
      %v5076 = vadd.f32 %v4988, %v5075
      %5077 = vmatprep.mubr.f32.mxu0 0.0
      %5078 = vmatmul.mubr.f32.gmra.mrb[0].mxu0 %v4909
      %v5079 = vpop.f32.mrb[0].mxu0
      %v5080 = vadd.f32 %v4984, %v5079
      %v5081 = vpop.f32.mrb[0].mxu0
      %v5082 = vadd.f32 %v4988, %v5081
      %5083 = vmatprep.mubr.f32.mxu0 0.0
      %5084 = vmatmul.mubr.f32.gmra.mrb[0].mxu0 %v4910
      %v5085 = vpop.f32.mrb[0].mxu0
      %v5086 = vadd.f32 %v4984, %v5085
      %v5087 = vpop.f32.mrb[0].mxu0
      %v5088 = vadd.f32 %v4988, %v5087
      %5089 = vmatprep.mubr.f32.mxu0 0.0
      %5090 = vmatmul.mubr.f32.gmra.mrb[0].mxu0 %v4911
      %v5091 = vpop.f32.mrb[0].mxu0
      %v5092 = vadd.f32 %v4984, %v5091
      %v5093 = vpop.f32.mrb[0].mxu0
      %v5094 = vadd.f32 %v4988, %v5093
      %5095 = vmatprep.mubr.f32.mxu0 0.0
      %5096 = vmatmul.mubr.f32.gmra.mrb[0].mxu0 %v4912
      %v5097 = vpop.f32.mrb[0].mxu0
      %v5098 = vadd.f32 %v4984, %v5097
      %v5099 = vpop.f32.mrb[0].mxu0
      %v5100 = vadd.f32 %v4988, %v5099
      %5101 = vmatprep.mubr.f32.mxu0 0.0
      %5102 = vmatmul.mubr.f32.gmra.mrb[0].mxu0 %v4913
      %v5103 = vpop.f32.mrb[0].mxu0
      %v5104 = vadd.f32 %v4984, %v5103
      %v5105 = vpop.f32.mrb[0].mxu0
      %v5106 = vadd.f32 %v4988, %v5105
      %5107 = vmatprep.mubr.f32.mxu0 0.0
      %5108 = vmatmul.mubr.f32.gmra.mrb[0].mxu0 %v4914
      %v5109 = vpop.f32.mrb[0].mxu0
      %v5110 = vadd.f32 %v4984, %v5109
      %v5111 = vpop.f32.mrb[0].mxu0
      %v5112 = vadd.f32 %v4988, %v5111
      %5113 = vdwg.mxu0
      %5114 = vmatprep.subr.mxu0 %v4918
      %5115 = vmatpush1.msra.mxu0 %v4917
      %5116 = vmatprep.subr.mxu0 %v4922
      %5117 = vmatpush1.msra.mxu0 %v4921
      %5118 = vmatprep.subr.mxu0 %v4926
      %5119 = vmatpush1.msra.mxu0 %v4925
      %5120 = vmatprep.subr.mxu0 %v4930
      %5121 = vmatpush1.msra.mxu0 %v4929
      %5122 = vmatprep.subr.mxu0 %v4934
      %5123 = vmatpush1.msra.mxu0 %v4933
      %5124 = vmatprep.subr.mxu0 %v4938
      %5125 = vmatpush1.msra.mxu0 %v4937
      %5126 = vmatprep.subr.mxu0 %v4942
      %5127 = vmatpush1.msra.mxu0 %v4941
      %5128 = vmatprep.subr.mxu0 %v4946
      %5129 = vmatpush1.msra.mxu0 %v4945
      %5130 = vmatprep.subr.mxu0 %v4950
      %5131 = vmatpush1.msra.mxu0 %v4949
      %5132 = vmatprep.subr.mxu0 %v4954
      %5133 = vmatpush1.msra.mxu0 %v4953
      %5134 = vmatprep.subr.mxu0 %v4958
      %5135 = vmatpush1.msra.mxu0 %v4957
      %5136 = vmatprep.subr.mxu0 %v4962
      %5137 = vmatpush1.msra.mxu0 %v4961
      %5138 = vmatprep.subr.mxu0 %v4966
      %5139 = vmatpush1.msra.mxu0 %v4965
      %5140 = vmatprep.subr.mxu0 %v4970
      %5141 = vmatpush1.msra.mxu0 %v4969
      %5142 = vmatprep.subr.mxu0 %v4974
      %5143 = vmatpush1.msra.mxu0 %v4973
      %5144 = vmatprep.subr.mxu0 %v4978
      %5145 = vmatpush1.msra.mxu0 %v4977
      %5146 = vmatprep.subr.mxu0 0.0
      %5147 = vmatpush1.msra.mxu0 0.0
      %5148 = vmatprep.subr.mxu0 0.0
      %5149 = vmatpush1.msra.mxu0 0.0
      %5150 = vmatprep.subr.mxu0 0.0
      %5151 = vmatpush1.msra.mxu0 0.0
      %5152 = vmatprep.subr.mxu0 0.0
      %5153 = vmatpush1.msra.mxu0 0.0
      %5154 = vmatprep.subr.mxu0 0.0
      %5155 = vmatpush1.msra.mxu0 0.0
      %5156 = vmatprep.subr.mxu0 0.0
      %5157 = vmatpush1.msra.mxu0 0.0
      %5158 = vmatprep.subr.mxu0 0.0
      %5159 = vmatpush1.msra.mxu0 0.0
      %5160 = vmatprep.subr.mxu0 0.0
      %5161 = vmatpush1.msra.mxu0 0.0
      %5162 = vmatprep.subr.mxu0 0.0
      %5163 = vmatpush1.msra.mxu0 0.0
      %5164 = vmatprep.subr.mxu0 0.0
      %5165 = vmatpush1.msra.mxu0 0.0
      %5166 = vmatprep.subr.mxu0 0.0
      %5167 = vmatpush1.msra.mxu0 0.0
      %5168 = vmatprep.subr.mxu0 0.0
      %5169 = vmatpush1.msra.mxu0 0.0
      %5170 = vmatprep.subr.mxu0 0.0
      %5171 = vmatpush1.msra.mxu0 0.0
      %5172 = vmatprep.subr.mxu0 0.0
      %5173 = vmatpush1.msra.mxu0 0.0
      %5174 = vmatprep.subr.mxu0 0.0
      %5175 = vmatpush1.msra.mxu0 0.0
      %5176 = vmatprep.subr.mxu0 0.0
      %5177 = vmatpush1.msra.mxu0 0.0
      %5178 = vmatprep.mubr.f32.mxu0 0.0
      %5179 = vmatmul.mubr.f32.gmra.mrb[0].mxu0 %v4907
      %v5180 = vpop.f32.mrb[0].mxu0
      %v5181 = vadd.f32 %v4992, %v5180
      %v5182 = vpop.f32.mrb[0].mxu0
      %v5183 = vadd.f32 %v4996, %v5182
      %5184 = vmatprep.mubr.f32.mxu0 0.0
      %5185 = vmatmul.mubr.f32.gmra.mrb[0].mxu0 %v4908
      %v5186 = vpop.f32.mrb[0].mxu0
      %v5187 = vadd.f32 %v4992, %v5186
      %v5188 = vpop.f32.mrb[0].mxu0
      %v5189 = vadd.f32 %v4996, %v5188
      %5190 = vmatprep.mubr.f32.mxu0 0.0
      %5191 = vmatmul.mubr.f32.gmra.mrb[0].mxu0 %v4909
      %v5192 = vpop.f32.mrb[0].mxu0
      %v5193 = vadd.f32 %v4992, %v5192
      %v5194 = vpop.f32.mrb[0].mxu0
      %v5195 = vadd.f32 %v4996, %v5194
      %5196 = vmatprep.mubr.f32.mxu0 0.0
      %5197 = vmatmul.mubr.f32.gmra.mrb[0].mxu0 %v4910
      %v5198 = vpop.f32.mrb[0].mxu0
      %v5199 = vadd.f32 %v4992, %v5198
      %v5200 = vpop.f32.mrb[0].mxu0
      %v5201 = vadd.f32 %v4996, %v5200
      %5202 = vmatprep.mubr.f32.mxu0 0.0
      %5203 = vmatmul.mubr.f32.gmra.mrb[0].mxu0 %v4911
      %v5204 = vpop.f32.mrb[0].mxu0
      %v5205 = vadd.f32 %v4992, %v5204
      %v5206 = vpop.f32.mrb[0].mxu0
      %v5207 = vadd.f32 %v4996, %v5206
      %5208 = vmatprep.mubr.f32.mxu0 0.0
      %5209 = vmatmul.mubr.f32.gmra.mrb[0].mxu0 %v4912
      %v5210 = vpop.f32.mrb[0].mxu0
      %v5211 = vadd.f32 %v4992, %v5210
      %v5212 = vpop.f32.mrb[0].mxu0
      %v5213 = vadd.f32 %v4996, %v5212
      %5214 = vmatprep.mubr.f32.mxu0 0.0
      %5215 = vmatmul.mubr.f32.gmra.mrb[0].mxu0 %v4913
      %v5216 = vpop.f32.mrb[0].mxu0
      %v5217 = vadd.f32 %v4992, %v5216
      %v5218 = vpop.f32.mrb[0].mxu0
      %v5219 = vadd.f32 %v4996, %v5218
      %5220 = vmatprep.mubr.f32.mxu0 0.0
      %5221 = vmatmul.mubr.f32.gmra.mrb[0].mxu0 %v4914
      %v5222 = vpop.f32.mrb[0].mxu0
      %v5223 = vadd.f32 %v4992, %v5222
      %v5224 = vpop.f32.mrb[0].mxu0
      %v5225 = vadd.f32 %v4996, %v5224
      %5226 = vdwg.mxu0
      %5227 = vst [vmem:[#allocation17] sm:$0xff] %v5068
      %5228 = vst [vmem:[#allocation17 + $0x8] sm:$0xff] %v5070
      %5229 = vst [vmem:[#allocation17 + $0x10] sm:$0xff] %v5181
      %5230 = vst [vmem:[#allocation17 + $0x18] sm:$0xff] %v5183
      %5231 = vst [vmem:[#allocation17 + $0x20] sm:$0xff] %v5074
      %5232 = vst [vmem:[#allocation17 + $0x28] sm:$0xff] %v5076
      %5233 = vst [vmem:[#allocation17 + $0x30] sm:$0xff] %v5187
      %5234 = vst [vmem:[#allocation17 + $0x38] sm:$0xff] %v5189
      %5235 = vst [vmem:[#allocation17 + $0x40] sm:$0xff] %v5080
      %5236 = vst [vmem:[#allocation17 + $0x48] sm:$0xff] %v5082
      %5237 = vst [vmem:[#allocation17 + $0x50] sm:$0xff] %v5193
      %5238 = vst [vmem:[#allocation17 + $0x58] sm:$0xff] %v5195
      %5239 = vst [vmem:[#allocation17 + $0x60] sm:$0xff] %v5086
      %5240 = vst [vmem:[#allocation17 + $0x68] sm:$0xff] %v5088
      %5241 = vst [vmem:[#allocation17 + $0x70] sm:$0xff] %v5199
      %5242 = vst [vmem:[#allocation17 + $0x78] sm:$0xff] %v5201
      %5243 = vst [vmem:[#allocation17 + $0x80] sm:$0xff] %v5092
      %5244 = vst [vmem:[#allocation17 + $0x88] sm:$0xff] %v5094
      %5245 = vst [vmem:[#allocation17 + $0x90] sm:$0xff] %v5205
      %5246 = vst [vmem:[#allocation17 + $0x98] sm:$0xff] %v5207
      %5247 = vst [vmem:[#allocation17 + $0xa0] sm:$0xff] %v5098
      %5248 = vst [vmem:[#allocation17 + $0xa8] sm:$0xff] %v5100
      %5249 = vst [vmem:[#allocation17 + $0xb0] sm:$0xff] %v5211
      %5250 = vst [vmem:[#allocation17 + $0xb8] sm:$0xff] %v5213
      %5251 = vst [vmem:[#allocation17 + $0xc0] sm:$0xff] %v5104
      %5252 = vst [vmem:[#allocation17 + $0xc8] sm:$0xff] %v5106
      %5253 = vst [vmem:[#allocation17 + $0xd0] sm:$0xff] %v5217
      %5254 = vst [vmem:[#allocation17 + $0xd8] sm:$0xff] %v5219
      %5255 = vst [vmem:[#allocation17 + $0xe0] sm:$0xff] %v5110
      %5256 = vst [vmem:[#allocation17 + $0xe8] sm:$0xff] %v5112
      %5257 = vst [vmem:[#allocation17 + $0xf0] sm:$0xff] %v5223
      %5258 = vst [vmem:[#allocation17 + $0xf8] sm:$0xff] %v5225
      %s5259 = smul.u32 0, 4
      %s5260 = smul.addr %s5259, 8
      %s5261 = scalar_lea.vmem [#allocation17], %s5260
      %v5262 = vld [vmem:[%s5261] sm:$0xff]
      %v5263 = vld [vmem:[%s5261 + $0x8] sm:$0xff]
      %v5264 = vld [vmem:[%s5261 + $0x10] sm:$0xff]
      %v5265 = vld [vmem:[%s5261 + $0x18] sm:$0xff]
      %v5266 = vld [vmem:[#allocation12] sm:$0xff]
      %v5267 = vld [vmem:[#allocation12 + $0x8] sm:$0xff]
      %v5268 = vld [vmem:[#allocation12 + $0x10] sm:$0xff]
      %v5269 = vld [vmem:[#allocation12 + $0x18] sm:$0xff]
      %v5270 = vld [vmem:[#allocation12 + $0x20] sm:$0xff]
      %v5271 = vld [vmem:[#allocation12 + $0x28] sm:$0xff]
      %v5272 = vld [vmem:[#allocation12 + $0x30] sm:$0xff]
      %v5273 = vld [vmem:[#allocation12 + $0x38] sm:$0xff]
      %v5274 = vld [vmem:[#allocation12 + $0x40] sm:$0xff]
      %v5275 = vld [vmem:[#allocation12 + $0x48] sm:$0xff]
      %v5276 = vld [vmem:[#allocation12 + $0x50] sm:$0xff]
      %v5277 = vld [vmem:[#allocation12 + $0x58] sm:$0xff]
      %v5278 = vld [vmem:[#allocation12 + $0x60] sm:$0xff]
      %v5279 = vld [vmem:[#allocation12 + $0x68] sm:$0xff]
      %v5280 = vld [vmem:[#allocation12 + $0x70] sm:$0xff]
      %v5281 = vld [vmem:[#allocation12 + $0x78] sm:$0xff]
      %v5282 = vld [vmem:[#allocation12 + $0x80] sm:$0xff]
      %v5283 = vld [vmem:[#allocation12 + $0x88] sm:$0xff]
      %v5284 = vld [vmem:[#allocation12 + $0x90] sm:$0xff]
      %v5285 = vld [vmem:[#allocation12 + $0x98] sm:$0xff]
      %v5286 = vld [vmem:[#allocation12 + $0xa0] sm:$0xff]
      %v5287 = vld [vmem:[#allocation12 + $0xa8] sm:$0xff]
      %v5288 = vld [vmem:[#allocation12 + $0xb0] sm:$0xff]
      %v5289 = vld [vmem:[#allocation12 + $0xb8] sm:$0xff]
      %v5290 = vld [vmem:[#allocation12 + $0xc0] sm:$0xff]
      %v5291 = vld [vmem:[#allocation12 + $0xc8] sm:$0xff]
      %v5292 = vld [vmem:[#allocation12 + $0xd0] sm:$0xff]
      %v5293 = vld [vmem:[#allocation12 + $0xd8] sm:$0xff]
      %v5294 = vld [vmem:[#allocation12 + $0xe0] sm:$0xff]
      %v5295 = vld [vmem:[#allocation12 + $0xe8] sm:$0xff]
      %v5296 = vld [vmem:[#allocation12 + $0xf0] sm:$0xff]
      %v5297 = vld [vmem:[#allocation12 + $0xf8] sm:$0xff]
      %v5298 = vld [vmem:[#allocation12 + $0x100] sm:$0xff]
      %v5299 = vld [vmem:[#allocation12 + $0x108] sm:$0xff]
      %v5300 = vld [vmem:[#allocation12 + $0x110] sm:$0xff]
      %v5301 = vld [vmem:[#allocation12 + $0x118] sm:$0xff]
      %v5302 = vld [vmem:[#allocation12 + $0x120] sm:$0xff]
      %v5303 = vld [vmem:[#allocation12 + $0x128] sm:$0xff]
      %v5304 = vld [vmem:[#allocation12 + $0x130] sm:$0xff]
      %v5305 = vld [vmem:[#allocation12 + $0x138] sm:$0xff]
      %v5306 = vld [vmem:[#allocation12 + $0x140] sm:$0xff]
      %v5307 = vld [vmem:[#allocation12 + $0x148] sm:$0xff]
      %v5308 = vld [vmem:[#allocation12 + $0x150] sm:$0xff]
      %v5309 = vld [vmem:[#allocation12 + $0x158] sm:$0xff]
      %v5310 = vld [vmem:[#allocation12 + $0x160] sm:$0xff]
      %v5311 = vld [vmem:[#allocation12 + $0x168] sm:$0xff]
      %v5312 = vld [vmem:[#allocation12 + $0x170] sm:$0xff]
      %v5313 = vld [vmem:[#allocation12 + $0x178] sm:$0xff]
      %v5314 = vld [vmem:[#allocation12 + $0x180] sm:$0xff]
      %v5315 = vld [vmem:[#allocation12 + $0x188] sm:$0xff]
      %v5316 = vld [vmem:[#allocation12 + $0x190] sm:$0xff]
      %v5317 = vld [vmem:[#allocation12 + $0x198] sm:$0xff]
      %v5318 = vld [vmem:[#allocation12 + $0x1a0] sm:$0xff]
      %v5319 = vld [vmem:[#allocation12 + $0x1a8] sm:$0xff]
      %v5320 = vld [vmem:[#allocation12 + $0x1b0] sm:$0xff]
      %v5321 = vld [vmem:[#allocation12 + $0x1b8] sm:$0xff]
      %v5322 = vld [vmem:[#allocation12 + $0x1c0] sm:$0xff]
      %v5323 = vld [vmem:[#allocation12 + $0x1c8] sm:$0xff]
      %v5324 = vld [vmem:[#allocation12 + $0x1d0] sm:$0xff]
      %v5325 = vld [vmem:[#allocation12 + $0x1d8] sm:$0xff]
      %v5326 = vld [vmem:[#allocation12 + $0x1e0] sm:$0xff]
      %v5327 = vld [vmem:[#allocation12 + $0x1e8] sm:$0xff]
      %v5328 = vld [vmem:[#allocation12 + $0x1f0] sm:$0xff]
      %v5329 = vld [vmem:[#allocation12 + $0x1f8] sm:$0xff]
      %5330 = vmatprep.subr.mxu0 %v5267
      %5331 = vmatpush1.msra.mxu0 %v5266
      %5332 = vmatprep.subr.mxu0 %v5271
      %5333 = vmatpush1.msra.mxu0 %v5270
      %5334 = vmatprep.subr.mxu0 %v5275
      %5335 = vmatpush1.msra.mxu0 %v5274
      %5336 = vmatprep.subr.mxu0 %v5279
      %5337 = vmatpush1.msra.mxu0 %v5278
      %5338 = vmatprep.subr.mxu0 %v5283
      %5339 = vmatpush1.msra.mxu0 %v5282
      %5340 = vmatprep.subr.mxu0 %v5287
      %5341 = vmatpush1.msra.mxu0 %v5286
      %5342 = vmatprep.subr.mxu0 %v5291
      %5343 = vmatpush1.msra.mxu0 %v5290
      %5344 = vmatprep.subr.mxu0 %v5295
      %5345 = vmatpush1.msra.mxu0 %v5294
      %5346 = vmatprep.subr.mxu0 %v5299
      %5347 = vmatpush1.msra.mxu0 %v5298
      %5348 = vmatprep.subr.mxu0 %v5303
      %5349 = vmatpush1.msra.mxu0 %v5302
      %5350 = vmatprep.subr.mxu0 %v5307
      %5351 = vmatpush1.msra.mxu0 %v5306
      %5352 = vmatprep.subr.mxu0 %v5311
      %5353 = vmatpush1.msra.mxu0 %v5310
      %5354 = vmatprep.subr.mxu0 %v5315
      %5355 = vmatpush1.msra.mxu0 %v5314
      %5356 = vmatprep.subr.mxu0 %v5319
      %5357 = vmatpush1.msra.mxu0 %v5318
      %5358 = vmatprep.subr.mxu0 %v5323
      %5359 = vmatpush1.msra.mxu0 %v5322
      %5360 = vmatprep.subr.mxu0 %v5327
      %5361 = vmatpush1.msra.mxu0 %v5326
      %5362 = vmatprep.subr.mxu0 0.0
      %5363 = vmatpush1.msra.mxu0 0.0
      %5364 = vmatprep.subr.mxu0 0.0
      %5365 = vmatpush1.msra.mxu0 0.0
      %5366 = vmatprep.subr.mxu0 0.0
      %5367 = vmatpush1.msra.mxu0 0.0
      %5368 = vmatprep.subr.mxu0 0.0
      %5369 = vmatpush1.msra.mxu0 0.0
      %5370 = vmatprep.subr.mxu0 0.0
      %5371 = vmatpush1.msra.mxu0 0.0
      %5372 = vmatprep.subr.mxu0 0.0
      %5373 = vmatpush1.msra.mxu0 0.0
      %5374 = vmatprep.subr.mxu0 0.0
      %5375 = vmatpush1.msra.mxu0 0.0
      %5376 = vmatprep.subr.mxu0 0.0
      %5377 = vmatpush1.msra.mxu0 0.0
      %5378 = vmatprep.subr.mxu0 0.0
      %5379 = vmatpush1.msra.mxu0 0.0
      %5380 = vmatprep.subr.mxu0 0.0
      %5381 = vmatpush1.msra.mxu0 0.0
      %5382 = vmatprep.subr.mxu0 0.0
      %5383 = vmatpush1.msra.mxu0 0.0
      %5384 = vmatprep.subr.mxu0 0.0
      %5385 = vmatpush1.msra.mxu0 0.0
      %5386 = vmatprep.subr.mxu0 0.0
      %5387 = vmatpush1.msra.mxu0 0.0
      %5388 = vmatprep.subr.mxu0 0.0
      %5389 = vmatpush1.msra.mxu0 0.0
      %5390 = vmatprep.subr.mxu0 0.0
      %5391 = vmatpush1.msra.mxu0 0.0
      %5392 = vmatprep.subr.mxu0 0.0
      %5393 = vmatpush1.msra.mxu0 0.0
      %5394 = vmatprep.mubr.f32.mxu0 0.0
      %5395 = vmatmul.mubr.f32.gmra.mrb[0].mxu0 0.0
      %v5396 = vpop.f32.mrb[0].mxu0
      %v5397 = vadd.f32 0.0, %v5396
      %v5398 = vpop.f32.mrb[0].mxu0
      %v5399 = vadd.f32 0.0, %v5398
      %5400 = vdwg.mxu0
      %5401 = vmatprep.subr.mxu0 %v5269
      %5402 = vmatpush1.msra.mxu0 %v5268
      %5403 = vmatprep.subr.mxu0 %v5273
      %5404 = vmatpush1.msra.mxu0 %v5272
      %5405 = vmatprep.subr.mxu0 %v5277
      %5406 = vmatpush1.msra.mxu0 %v5276
      %5407 = vmatprep.subr.mxu0 %v5281
      %5408 = vmatpush1.msra.mxu0 %v5280
      %5409 = vmatprep.subr.mxu0 %v5285
      %5410 = vmatpush1.msra.mxu0 %v5284
      %5411 = vmatprep.subr.mxu0 %v5289
      %5412 = vmatpush1.msra.mxu0 %v5288
      %5413 = vmatprep.subr.mxu0 %v5293
      %5414 = vmatpush1.msra.mxu0 %v5292
      %5415 = vmatprep.subr.mxu0 %v5297
      %5416 = vmatpush1.msra.mxu0 %v5296
      %5417 = vmatprep.subr.mxu0 %v5301
      %5418 = vmatpush1.msra.mxu0 %v5300
      %5419 = vmatprep.subr.mxu0 %v5305
      %5420 = vmatpush1.msra.mxu0 %v5304
      %5421 = vmatprep.subr.mxu0 %v5309
      %5422 = vmatpush1.msra.mxu0 %v5308
      %5423 = vmatprep.subr.mxu0 %v5313
      %5424 = vmatpush1.msra.mxu0 %v5312
      %5425 = vmatprep.subr.mxu0 %v5317
      %5426 = vmatpush1.msra.mxu0 %v5316
      %5427 = vmatprep.subr.mxu0 %v5321
      %5428 = vmatpush1.msra.mxu0 %v5320
      %5429 = vmatprep.subr.mxu0 %v5325
      %5430 = vmatpush1.msra.mxu0 %v5324
      %5431 = vmatprep.subr.mxu0 %v5329
      %5432 = vmatpush1.msra.mxu0 %v5328
      %5433 = vmatprep.subr.mxu0 0.0
      %5434 = vmatpush1.msra.mxu0 0.0
      %5435 = vmatprep.subr.mxu0 0.0
      %5436 = vmatpush1.msra.mxu0 0.0
      %5437 = vmatprep.subr.mxu0 0.0
      %5438 = vmatpush1.msra.mxu0 0.0
      %5439 = vmatprep.subr.mxu0 0.0
      %5440 = vmatpush1.msra.mxu0 0.0
      %5441 = vmatprep.subr.mxu0 0.0
      %5442 = vmatpush1.msra.mxu0 0.0
      %5443 = vmatprep.subr.mxu0 0.0
      %5444 = vmatpush1.msra.mxu0 0.0
      %5445 = vmatprep.subr.mxu0 0.0
      %5446 = vmatpush1.msra.mxu0 0.0
      %5447 = vmatprep.subr.mxu0 0.0
      %5448 = vmatpush1.msra.mxu0 0.0
      %5449 = vmatprep.subr.mxu0 0.0
      %5450 = vmatpush1.msra.mxu0 0.0
      %5451 = vmatprep.subr.mxu0 0.0
      %5452 = vmatpush1.msra.mxu0 0.0
      %5453 = vmatprep.subr.mxu0 0.0
      %5454 = vmatpush1.msra.mxu0 0.0
      %5455 = vmatprep.subr.mxu0 0.0
      %5456 = vmatpush1.msra.mxu0 0.0
      %5457 = vmatprep.subr.mxu0 0.0
      %5458 = vmatpush1.msra.mxu0 0.0
      %5459 = vmatprep.subr.mxu0 0.0
      %5460 = vmatpush1.msra.mxu0 0.0
      %5461 = vmatprep.subr.mxu0 0.0
      %5462 = vmatpush1.msra.mxu0 0.0
      %5463 = vmatprep.subr.mxu0 0.0
      %5464 = vmatpush1.msra.mxu0 0.0
      %5465 = vmatprep.mubr.f32.mxu0 0.0
      %5466 = vmatmul.mubr.f32.gmra.mrb[0].mxu0 0.0
      %v5467 = vpop.f32.mrb[0].mxu0
      %v5468 = vadd.f32 0.0, %v5467
      %v5469 = vpop.f32.mrb[0].mxu0
      %v5470 = vadd.f32 0.0, %v5469
      %5471 = vdwg.mxu0
      %v5472 = vadd.f32 %v5262, %v5397
      %v5473 = vadd.f32 %v5263, %v5399
      %v5474 = vadd.f32 %v5264, %v5468
      %v5475 = vadd.f32 %v5265, %v5470
      %v5476 = vtanh.pop %v5472
      %v5477 = vtanh.pop %v5473
      %v5478 = vtanh.pop %v5474
      %v5479 = vtanh.pop %v5475
      %v5480 = vxor.u32 %v5472, 2147483648
      %v5481 = vxor.u32 %v5473, 2147483648
      %v5482 = vxor.u32 %v5474, 2147483648
      %v5483 = vxor.u32 %v5475, 2147483648
      %v5484 = vmul.f32 %v5480, 1.442695
      %v5485 = vpow.pop %v5484
      %v5486 = vmul.f32 %v5481, 1.442695
      %v5487 = vpow.pop %v5486
      %v5488 = vmul.f32 %v5482, 1.442695
      %v5489 = vpow.pop %v5488
      %v5490 = vmul.f32 %v5483, 1.442695
      %v5491 = vpow.pop %v5490
      %v5492 = vadd.f32 %v5485, 1.0
      %v5493 = vadd.f32 %v5487, 1.0
      %v5494 = vadd.f32 %v5489, 1.0
      %v5495 = vadd.f32 %v5491, 1.0
      %v5496 = vrcp.pop %v5492
      %v5497 = vmul.f32 1.0, %v5496
      %v5498 = vrcp.pop %v5493
      %v5499 = vmul.f32 1.0, %v5498
      %v5500 = vrcp.pop %v5494
      %v5501 = vmul.f32 1.0, %v5500
      %v5502 = vrcp.pop %v5495
      %v5503 = vmul.f32 1.0, %v5502
      %v5504 = vsel %vm144, %v5476, %v5497
      %v5505 = vsel %vm145, %v5477, %v5499
      %v5506 = vsel %vm146, %v5478, %v5501
      %v5507 = vsel %vm147, %v5479, %v5503
      %v5508 = vmul.f32 %v5505, 0.0
      %v5509 = vmul.f32 %v5504, %v5506
      %v5510 = vadd.f32 %v5508, %v5509
      %v5511 = vtanh.pop %v5510
      %v5512 = vmul.f32 %v5507, %v5511
      %5513 = vst [vmem:[#allocation4] sm:$0xff] %v5512
      %s5514 = smul.u32 1, 4
      %s5515 = smul.addr %s5514, 8
      %s5516 = scalar_lea.vmem [#allocation17], %s5515
      %v5517 = vld [vmem:[%s5516] sm:$0xff]
      %v5518 = vld [vmem:[%s5516 + $0x8] sm:$0xff]
      %v5519 = vld [vmem:[%s5516 + $0x10] sm:$0xff]
      %v5520 = vld [vmem:[%s5516 + $0x18] sm:$0xff]
      %v5521 = vld [vmem:[#allocation12] sm:$0xff]
      %v5522 = vld [vmem:[#allocation12 + $0x8] sm:$0xff]
      %v5523 = vld [vmem:[#allocation12 + $0x10] sm:$0xff]
      %v5524 = vld [vmem:[#allocation12 + $0x18] sm:$0xff]
      %v5525 = vld [vmem:[#allocation12 + $0x20] sm:$0xff]
      %v5526 = vld [vmem:[#allocation12 + $0x28] sm:$0xff]
      %v5527 = vld [vmem:[#allocation12 + $0x30] sm:$0xff]
      %v5528 = vld [vmem:[#allocation12 + $0x38] sm:$0xff]
      %v5529 = vld [vmem:[#allocation12 + $0x40] sm:$0xff]
      %v5530 = vld [vmem:[#allocation12 + $0x48] sm:$0xff]
      %v5531 = vld [vmem:[#allocation12 + $0x50] sm:$0xff]
      %v5532 = vld [vmem:[#allocation12 + $0x58] sm:$0xff]
      %v5533 = vld [vmem:[#allocation12 + $0x60] sm:$0xff]
      %v5534 = vld [vmem:[#allocation12 + $0x68] sm:$0xff]
      %v5535 = vld [vmem:[#allocation12 + $0x70] sm:$0xff]
      %v5536 = vld [vmem:[#allocation12 + $0x78] sm:$0xff]
      %v5537 = vld [vmem:[#allocation12 + $0x80] sm:$0xff]
      %v5538 = vld [vmem:[#allocation12 + $0x88] sm:$0xff]
      %v5539 = vld [vmem:[#allocation12 + $0x90] sm:$0xff]
      %v5540 = vld [vmem:[#allocation12 + $0x98] sm:$0xff]
      %v5541 = vld [vmem:[#allocation12 + $0xa0] sm:$0xff]
      %v5542 = vld [vmem:[#allocation12 + $0xa8] sm:$0xff]
      %v5543 = vld [vmem:[#allocation12 + $0xb0] sm:$0xff]
      %v5544 = vld [vmem:[#allocation12 + $0xb8] sm:$0xff]
      %v5545 = vld [vmem:[#allocation12 + $0xc0] sm:$0xff]
      %v5546 = vld [vmem:[#allocation12 + $0xc8] sm:$0xff]
      %v5547 = vld [vmem:[#allocation12 + $0xd0] sm:$0xff]
      %v5548 = vld [vmem:[#allocation12 + $0xd8] sm:$0xff]
      %v5549 = vld [vmem:[#allocation12 + $0xe0] sm:$0xff]
      %v5550 = vld [vmem:[#allocation12 + $0xe8] sm:$0xff]
      %v5551 = vld [vmem:[#allocation12 + $0xf0] sm:$0xff]
      %v5552 = vld [vmem:[#allocation12 + $0xf8] sm:$0xff]
      %v5553 = vld [vmem:[#allocation12 + $0x100] sm:$0xff]
      %v5554 = vld [vmem:[#allocation12 + $0x108] sm:$0xff]
      %v5555 = vld [vmem:[#allocation12 + $0x110] sm:$0xff]
      %v5556 = vld [vmem:[#allocation12 + $0x118] sm:$0xff]
      %v5557 = vld [vmem:[#allocation12 + $0x120] sm:$0xff]
      %v5558 = vld [vmem:[#allocation12 + $0x128] sm:$0xff]
      %v5559 = vld [vmem:[#allocation12 + $0x130] sm:$0xff]
      %v5560 = vld [vmem:[#allocation12 + $0x138] sm:$0xff]
      %v5561 = vld [vmem:[#allocation12 + $0x140] sm:$0xff]
      %v5562 = vld [vmem:[#allocation12 + $0x148] sm:$0xff]
      %v5563 = vld [vmem:[#allocation12 + $0x150] sm:$0xff]
      %v5564 = vld [vmem:[#allocation12 + $0x158] sm:$0xff]
      %v5565 = vld [vmem:[#allocation12 + $0x160] sm:$0xff]
      %v5566 = vld [vmem:[#allocation12 + $0x168] sm:$0xff]
      %v5567 = vld [vmem:[#allocation12 + $0x170] sm:$0xff]
      %v5568 = vld [vmem:[#allocation12 + $0x178] sm:$0xff]
      %v5569 = vld [vmem:[#allocation12 + $0x180] sm:$0xff]
      %v5570 = vld [vmem:[#allocation12 + $0x188] sm:$0xff]
      %v5571 = vld [vmem:[#allocation12 + $0x190] sm:$0xff]
      %v5572 = vld [vmem:[#allocation12 + $0x198] sm:$0xff]
      %v5573 = vld [vmem:[#allocation12 + $0x1a0] sm:$0xff]
      %v5574 = vld [vmem:[#allocation12 + $0x1a8] sm:$0xff]
      %v5575 = vld [vmem:[#allocation12 + $0x1b0] sm:$0xff]
      %v5576 = vld [vmem:[#allocation12 + $0x1b8] sm:$0xff]
      %v5577 = vld [vmem:[#allocation12 + $0x1c0] sm:$0xff]
      %v5578 = vld [vmem:[#allocation12 + $0x1c8] sm:$0xff]
      %v5579 = vld [vmem:[#allocation12 + $0x1d0] sm:$0xff]
      %v5580 = vld [vmem:[#allocation12 + $0x1d8] sm:$0xff]
      %v5581 = vld [vmem:[#allocation12 + $0x1e0] sm:$0xff]
      %v5582 = vld [vmem:[#allocation12 + $0x1e8] sm:$0xff]
      %v5583 = vld [vmem:[#allocation12 + $0x1f0] sm:$0xff]
      %v5584 = vld [vmem:[#allocation12 + $0x1f8] sm:$0xff]
      %5585 = vmatprep.subr.mxu0 %v5522
      %5586 = vmatpush1.msra.mxu0 %v5521
      %5587 = vmatprep.subr.mxu0 %v5526
      %5588 = vmatpush1.msra.mxu0 %v5525
      %5589 = vmatprep.subr.mxu0 %v5530
      %5590 = vmatpush1.msra.mxu0 %v5529
      %5591 = vmatprep.subr.mxu0 %v5534
      %5592 = vmatpush1.msra.mxu0 %v5533
      %5593 = vmatprep.subr.mxu0 %v5538
      %5594 = vmatpush1.msra.mxu0 %v5537
      %5595 = vmatprep.subr.mxu0 %v5542
      %5596 = vmatpush1.msra.mxu0 %v5541
      %5597 = vmatprep.subr.mxu0 %v5546
      %5598 = vmatpush1.msra.mxu0 %v5545
      %5599 = vmatprep.subr.mxu0 %v5550
      %5600 = vmatpush1.msra.mxu0 %v5549
      %5601 = vmatprep.subr.mxu0 %v5554
      %5602 = vmatpush1.msra.mxu0 %v5553
      %5603 = vmatprep.subr.mxu0 %v5558
      %5604 = vmatpush1.msra.mxu0 %v5557
      %5605 = vmatprep.subr.mxu0 %v5562
      %5606 = vmatpush1.msra.mxu0 %v5561
      %5607 = vmatprep.subr.mxu0 %v5566
      %5608 = vmatpush1.msra.mxu0 %v5565
      %5609 = vmatprep.subr.mxu0 %v5570
      %5610 = vmatpush1.msra.mxu0 %v5569
      %5611 = vmatprep.subr.mxu0 %v5574
      %5612 = vmatpush1.msra.mxu0 %v5573
      %5613 = vmatprep.subr.mxu0 %v5578
      %5614 = vmatpush1.msra.mxu0 %v5577
      %5615 = vmatprep.subr.mxu0 %v5582
      %5616 = vmatpush1.msra.mxu0 %v5581
      %5617 = vmatprep.subr.mxu0 0.0
      %5618 = vmatpush1.msra.mxu0 0.0
      %5619 = vmatprep.subr.mxu0 0.0
      %5620 = vmatpush1.msra.mxu0 0.0
      %5621 = vmatprep.subr.mxu0 0.0
      %5622 = vmatpush1.msra.mxu0 0.0
      %5623 = vmatprep.subr.mxu0 0.0
      %5624 = vmatpush1.msra.mxu0 0.0
      %5625 = vmatprep.subr.mxu0 0.0
      %5626 = vmatpush1.msra.mxu0 0.0
      %5627 = vmatprep.subr.mxu0 0.0
      %5628 = vmatpush1.msra.mxu0 0.0
      %5629 = vmatprep.subr.mxu0 0.0
      %5630 = vmatpush1.msra.mxu0 0.0
      %5631 = vmatprep.subr.mxu0 0.0
      %5632 = vmatpush1.msra.mxu0 0.0
      %5633 = vmatprep.subr.mxu0 0.0
      %5634 = vmatpush1.msra.mxu0 0.0
      %5635 = vmatprep.subr.mxu0 0.0
      %5636 = vmatpush1.msra.mxu0 0.0
      %5637 = vmatprep.subr.mxu0 0.0
      %5638 = vmatpush1.msra.mxu0 0.0
      %5639 = vmatprep.subr.mxu0 0.0
      %5640 = vmatpush1.msra.mxu0 0.0
      %5641 = vmatprep.subr.mxu0 0.0
      %5642 = vmatpush1.msra.mxu0 0.0
      %5643 = vmatprep.subr.mxu0 0.0
      %5644 = vmatpush1.msra.mxu0 0.0
      %5645 = vmatprep.subr.mxu0 0.0
      %5646 = vmatpush1.msra.mxu0 0.0
      %5647 = vmatprep.subr.mxu0 0.0
      %5648 = vmatpush1.msra.mxu0 0.0
      %5649 = vmatprep.mubr.f32.mxu0 0.0
      %5650 = vmatmul.mubr.f32.gmra.mrb[0].mxu0 %v5512
      %v5651 = vpop.f32.mrb[0].mxu0
      %v5652 = vadd.f32 0.0, %v5651
      %v5653 = vpop.f32.mrb[0].mxu0
      %v5654 = vadd.f32 0.0, %v5653
      %5655 = vdwg.mxu0
      %5656 = vmatprep.subr.mxu0 %v5524
      %5657 = vmatpush1.msra.mxu0 %v5523
      %5658 = vmatprep.subr.mxu0 %v5528
      %5659 = vmatpush1.msra.mxu0 %v5527
      %5660 = vmatprep.subr.mxu0 %v5532
      %5661 = vmatpush1.msra.mxu0 %v5531
      %5662 = vmatprep.subr.mxu0 %v5536
      %5663 = vmatpush1.msra.mxu0 %v5535
      %5664 = vmatprep.subr.mxu0 %v5540
      %5665 = vmatpush1.msra.mxu0 %v5539
      %5666 = vmatprep.subr.mxu0 %v5544
      %5667 = vmatpush1.msra.mxu0 %v5543
      %5668 = vmatprep.subr.mxu0 %v5548
      %5669 = vmatpush1.msra.mxu0 %v5547
      %5670 = vmatprep.subr.mxu0 %v5552
      %5671 = vmatpush1.msra.mxu0 %v5551
      %5672 = vmatprep.subr.mxu0 %v5556
      %5673 = vmatpush1.msra.mxu0 %v5555
      %5674 = vmatprep.subr.mxu0 %v5560
      %5675 = vmatpush1.msra.mxu0 %v5559
      %5676 = vmatprep.subr.mxu0 %v5564
      %5677 = vmatpush1.msra.mxu0 %v5563
      %5678 = vmatprep.subr.mxu0 %v5568
      %5679 = vmatpush1.msra.mxu0 %v5567
      %5680 = vmatprep.subr.mxu0 %v5572
      %5681 = vmatpush1.msra.mxu0 %v5571
      %5682 = vmatprep.subr.mxu0 %v5576
      %5683 = vmatpush1.msra.mxu0 %v5575
      %5684 = vmatprep.subr.mxu0 %v5580
      %5685 = vmatpush1.msra.mxu0 %v5579
      %5686 = vmatprep.subr.mxu0 %v5584
      %5687 = vmatpush1.msra.mxu0 %v5583
      %5688 = vmatprep.subr.mxu0 0.0
      %5689 = vmatpush1.msra.mxu0 0.0
      %5690 = vmatprep.subr.mxu0 0.0
      %5691 = vmatpush1.msra.mxu0 0.0
      %5692 = vmatprep.subr.mxu0 0.0
      %5693 = vmatpush1.msra.mxu0 0.0
      %5694 = vmatprep.subr.mxu0 0.0
      %5695 = vmatpush1.msra.mxu0 0.0
      %5696 = vmatprep.subr.mxu0 0.0
      %5697 = vmatpush1.msra.mxu0 0.0
      %5698 = vmatprep.subr.mxu0 0.0
      %5699 = vmatpush1.msra.mxu0 0.0
      %5700 = vmatprep.subr.mxu0 0.0
      %5701 = vmatpush1.msra.mxu0 0.0
      %5702 = vmatprep.subr.mxu0 0.0
      %5703 = vmatpush1.msra.mxu0 0.0
      %5704 = vmatprep.subr.mxu0 0.0
      %5705 = vmatpush1.msra.mxu0 0.0
      %5706 = vmatprep.subr.mxu0 0.0
      %5707 = vmatpush1.msra.mxu0 0.0
      %5708 = vmatprep.subr.mxu0 0.0
      %5709 = vmatpush1.msra.mxu0 0.0
      %5710 = vmatprep.subr.mxu0 0.0
      %5711 = vmatpush1.msra.mxu0 0.0
      %5712 = vmatprep.subr.mxu0 0.0
      %5713 = vmatpush1.msra.mxu0 0.0
      %5714 = vmatprep.subr.mxu0 0.0
      %5715 = vmatpush1.msra.mxu0 0.0
      %5716 = vmatprep.subr.mxu0 0.0
      %5717 = vmatpush1.msra.mxu0 0.0
      %5718 = vmatprep.subr.mxu0 0.0
      %5719 = vmatpush1.msra.mxu0 0.0
      %5720 = vmatprep.mubr.f32.mxu0 0.0
      %5721 = vmatmul.mubr.f32.gmra.mrb[0].mxu0 %v5512
      %v5722 = vpop.f32.mrb[0].mxu0
      %v5723 = vadd.f32 0.0, %v5722
      %v5724 = vpop.f32.mrb[0].mxu0
      %v5725 = vadd.f32 0.0, %v5724
      %5726 = vdwg.mxu0
      %v5727 = vadd.f32 %v5517, %v5652
      %v5728 = vadd.f32 %v5518, %v5654
      %v5729 = vadd.f32 %v5519, %v5723
      %v5730 = vadd.f32 %v5520, %v5725
      %v5731 = vtanh.pop %v5727
      %v5732 = vtanh.pop %v5728
      %v5733 = vtanh.pop %v5729
      %v5734 = vtanh.pop %v5730
      %v5735 = vxor.u32 %v5727, 2147483648
      %v5736 = vxor.u32 %v5728, 2147483648
      %v5737 = vxor.u32 %v5729, 2147483648
      %v5738 = vxor.u32 %v5730, 2147483648
      %v5739 = vmul.f32 %v5735, 1.442695
      %v5740 = vpow.pop %v5739
      %v5741 = vmul.f32 %v5736, 1.442695
      %v5742 = vpow.pop %v5741
      %v5743 = vmul.f32 %v5737, 1.442695
      %v5744 = vpow.pop %v5743
      %v5745 = vmul.f32 %v5738, 1.442695
      %v5746 = vpow.pop %v5745
      %v5747 = vadd.f32 %v5740, 1.0
      %v5748 = vadd.f32 %v5742, 1.0
      %v5749 = vadd.f32 %v5744, 1.0
      %v5750 = vadd.f32 %v5746, 1.0
      %v5751 = vrcp.pop %v5747
      %v5752 = vmul.f32 1.0, %v5751
      %v5753 = vrcp.pop %v5748
      %v5754 = vmul.f32 1.0, %v5753
      %v5755 = vrcp.pop %v5749
      %v5756 = vmul.f32 1.0, %v5755
      %v5757 = vrcp.pop %v5750
      %v5758 = vmul.f32 1.0, %v5757
      %v5759 = vsel %vm144, %v5731, %v5752
      %v5760 = vsel %vm145, %v5732, %v5754
      %v5761 = vsel %vm146, %v5733, %v5756
      %v5762 = vsel %vm147, %v5734, %v5758
      %v5763 = vmul.f32 %v5760, %v5510
      %v5764 = vmul.f32 %v5759, %v5761
      %v5765 = vadd.f32 %v5763, %v5764
      %v5766 = vtanh.pop %v5765
      %v5767 = vmul.f32 %v5762, %v5766
      %s5768 = scalar_lea.vmem [#allocation4], 8
      %5769 = vst [vmem:[%s5768] sm:$0xff] %v5767
      %s5770 = smul.u32 2, 4
      %s5771 = smul.addr %s5770, 8
      %s5772 = scalar_lea.vmem [#allocation17], %s5771
      %v5773 = vld [vmem:[%s5772] sm:$0xff]
      %v5774 = vld [vmem:[%s5772 + $0x8] sm:$0xff]
      %v5775 = vld [vmem:[%s5772 + $0x10] sm:$0xff]
      %v5776 = vld [vmem:[%s5772 + $0x18] sm:$0xff]
      %v5777 = vld [vmem:[#allocation12] sm:$0xff]
      %v5778 = vld [vmem:[#allocation12 + $0x8] sm:$0xff]
      %v5779 = vld [vmem:[#allocation12 + $0x10] sm:$0xff]
      %v5780 = vld [vmem:[#allocation12 + $0x18] sm:$0xff]
      %v5781 = vld [vmem:[#allocation12 + $0x20] sm:$0xff]
      %v5782 = vld [vmem:[#allocation12 + $0x28] sm:$0xff]
      %v5783 = vld [vmem:[#allocation12 + $0x30] sm:$0xff]
      %v5784 = vld [vmem:[#allocation12 + $0x38] sm:$0xff]
      %v5785 = vld [vmem:[#allocation12 + $0x40] sm:$0xff]
      %v5786 = vld [vmem:[#allocation12 + $0x48] sm:$0xff]
      %v5787 = vld [vmem:[#allocation12 + $0x50] sm:$0xff]
      %v5788 = vld [vmem:[#allocation12 + $0x58] sm:$0xff]
      %v5789 = vld [vmem:[#allocation12 + $0x60] sm:$0xff]
      %v5790 = vld [vmem:[#allocation12 + $0x68] sm:$0xff]
      %v5791 = vld [vmem:[#allocation12 + $0x70] sm:$0xff]
      %v5792 = vld [vmem:[#allocation12 + $0x78] sm:$0xff]
      %v5793 = vld [vmem:[#allocation12 + $0x80] sm:$0xff]
      %v5794 = vld [vmem:[#allocation12 + $0x88] sm:$0xff]
      %v5795 = vld [vmem:[#allocation12 + $0x90] sm:$0xff]
      %v5796 = vld [vmem:[#allocation12 + $0x98] sm:$0xff]
      %v5797 = vld [vmem:[#allocation12 + $0xa0] sm:$0xff]
      %v5798 = vld [vmem:[#allocation12 + $0xa8] sm:$0xff]
      %v5799 = vld [vmem:[#allocation12 + $0xb0] sm:$0xff]
      %v5800 = vld [vmem:[#allocation12 + $0xb8] sm:$0xff]
      %v5801 = vld [vmem:[#allocation12 + $0xc0] sm:$0xff]
      %v5802 = vld [vmem:[#allocation12 + $0xc8] sm:$0xff]
      %v5803 = vld [vmem:[#allocation12 + $0xd0] sm:$0xff]
      %v5804 = vld [vmem:[#allocation12 + $0xd8] sm:$0xff]
      %v5805 = vld [vmem:[#allocation12 + $0xe0] sm:$0xff]
      %v5806 = vld [vmem:[#allocation12 + $0xe8] sm:$0xff]
      %v5807 = vld [vmem:[#allocation12 + $0xf0] sm:$0xff]
      %v5808 = vld [vmem:[#allocation12 + $0xf8] sm:$0xff]
      %v5809 = vld [vmem:[#allocation12 + $0x100] sm:$0xff]
      %v5810 = vld [vmem:[#allocation12 + $0x108] sm:$0xff]
      %v5811 = vld [vmem:[#allocation12 + $0x110] sm:$0xff]
      %v5812 = vld [vmem:[#allocation12 + $0x118] sm:$0xff]
      %v5813 = vld [vmem:[#allocation12 + $0x120] sm:$0xff]
      %v5814 = vld [vmem:[#allocation12 + $0x128] sm:$0xff]
      %v5815 = vld [vmem:[#allocation12 + $0x130] sm:$0xff]
      %v5816 = vld [vmem:[#allocation12 + $0x138] sm:$0xff]
      %v5817 = vld [vmem:[#allocation12 + $0x140] sm:$0xff]
      %v5818 = vld [vmem:[#allocation12 + $0x148] sm:$0xff]
      %v5819 = vld [vmem:[#allocation12 + $0x150] sm:$0xff]
      %v5820 = vld [vmem:[#allocation12 + $0x158] sm:$0xff]
      %v5821 = vld [vmem:[#allocation12 + $0x160] sm:$0xff]
      %v5822 = vld [vmem:[#allocation12 + $0x168] sm:$0xff]
      %v5823 = vld [vmem:[#allocation12 + $0x170] sm:$0xff]
      %v5824 = vld [vmem:[#allocation12 + $0x178] sm:$0xff]
      %v5825 = vld [vmem:[#allocation12 + $0x180] sm:$0xff]
      %v5826 = vld [vmem:[#allocation12 + $0x188] sm:$0xff]
      %v5827 = vld [vmem:[#allocation12 + $0x190] sm:$0xff]
      %v5828 = vld [vmem:[#allocation12 + $0x198] sm:$0xff]
      %v5829 = vld [vmem:[#allocation12 + $0x1a0] sm:$0xff]
      %v5830 = vld [vmem:[#allocation12 + $0x1a8] sm:$0xff]
      %v5831 = vld [vmem:[#allocation12 + $0x1b0] sm:$0xff]
      %v5832 = vld [vmem:[#allocation12 + $0x1b8] sm:$0xff]
      %v5833 = vld [vmem:[#allocation12 + $0x1c0] sm:$0xff]
      %v5834 = vld [vmem:[#allocation12 + $0x1c8] sm:$0xff]
      %v5835 = vld [vmem:[#allocation12 + $0x1d0] sm:$0xff]
      %v5836 = vld [vmem:[#allocation12 + $0x1d8] sm:$0xff]
      %v5837 = vld [vmem:[#allocation12 + $0x1e0] sm:$0xff]
      %v5838 = vld [vmem:[#allocation12 + $0x1e8] sm:$0xff]
      %v5839 = vld [vmem:[#allocation12 + $0x1f0] sm:$0xff]
      %v5840 = vld [vmem:[#allocation12 + $0x1f8] sm:$0xff]
      %5841 = vmatprep.subr.mxu0 %v5778
      %5842 = vmatpush1.msra.mxu0 %v5777
      %5843 = vmatprep.subr.mxu0 %v5782
      %5844 = vmatpush1.msra.mxu0 %v5781
      %5845 = vmatprep.subr.mxu0 %v5786
      %5846 = vmatpush1.msra.mxu0 %v5785
      %5847 = vmatprep.subr.mxu0 %v5790
      %5848 = vmatpush1.msra.mxu0 %v5789
      %5849 = vmatprep.subr.mxu0 %v5794
      %5850 = vmatpush1.msra.mxu0 %v5793
      %5851 = vmatprep.subr.mxu0 %v5798
      %5852 = vmatpush1.msra.mxu0 %v5797
      %5853 = vmatprep.subr.mxu0 %v5802
      %5854 = vmatpush1.msra.mxu0 %v5801
      %5855 = vmatprep.subr.mxu0 %v5806
      %5856 = vmatpush1.msra.mxu0 %v5805
      %5857 = vmatprep.subr.mxu0 %v5810
      %5858 = vmatpush1.msra.mxu0 %v5809
      %5859 = vmatprep.subr.mxu0 %v5814
      %5860 = vmatpush1.msra.mxu0 %v5813
      %5861 = vmatprep.subr.mxu0 %v5818
      %5862 = vmatpush1.msra.mxu0 %v5817
      %5863 = vmatprep.subr.mxu0 %v5822
      %5864 = vmatpush1.msra.mxu0 %v5821
      %5865 = vmatprep.subr.mxu0 %v5826
      %5866 = vmatpush1.msra.mxu0 %v5825
      %5867 = vmatprep.subr.mxu0 %v5830
      %5868 = vmatpush1.msra.mxu0 %v5829
      %5869 = vmatprep.subr.mxu0 %v5834
      %5870 = vmatpush1.msra.mxu0 %v5833
      %5871 = vmatprep.subr.mxu0 %v5838
      %5872 = vmatpush1.msra.mxu0 %v5837
      %5873 = vmatprep.subr.mxu0 0.0
      %5874 = vmatpush1.msra.mxu0 0.0
      %5875 = vmatprep.subr.mxu0 0.0
      %5876 = vmatpush1.msra.mxu0 0.0
      %5877 = vmatprep.subr.mxu0 0.0
      %5878 = vmatpush1.msra.mxu0 0.0
      %5879 = vmatprep.subr.mxu0 0.0
      %5880 = vmatpush1.msra.mxu0 0.0
      %5881 = vmatprep.subr.mxu0 0.0
      %5882 = vmatpush1.msra.mxu0 0.0
      %5883 = vmatprep.subr.mxu0 0.0
      %5884 = vmatpush1.msra.mxu0 0.0
      %5885 = vmatprep.subr.mxu0 0.0
      %5886 = vmatpush1.msra.mxu0 0.0
      %5887 = vmatprep.subr.mxu0 0.0
      %5888 = vmatpush1.msra.mxu0 0.0
      %5889 = vmatprep.subr.mxu0 0.0
      %5890 = vmatpush1.msra.mxu0 0.0
      %5891 = vmatprep.subr.mxu0 0.0
      %5892 = vmatpush1.msra.mxu0 0.0
      %5893 = vmatprep.subr.mxu0 0.0
      %5894 = vmatpush1.msra.mxu0 0.0
      %5895 = vmatprep.subr.mxu0 0.0
      %5896 = vmatpush1.msra.mxu0 0.0
      %5897 = vmatprep.subr.mxu0 0.0
      %5898 = vmatpush1.msra.mxu0 0.0
      %5899 = vmatprep.subr.mxu0 0.0
      %5900 = vmatpush1.msra.mxu0 0.0
      %5901 = vmatprep.subr.mxu0 0.0
      %5902 = vmatpush1.msra.mxu0 0.0
      %5903 = vmatprep.subr.mxu0 0.0
      %5904 = vmatpush1.msra.mxu0 0.0
      %5905 = vmatprep.mubr.f32.mxu0 0.0
      %5906 = vmatmul.mubr.f32.gmra.mrb[0].mxu0 %v5767
      %v5907 = vpop.f32.mrb[0].mxu0
      %v5908 = vadd.f32 0.0, %v5907
      %v5909 = vpop.f32.mrb[0].mxu0
      %v5910 = vadd.f32 0.0, %v5909
      %5911 = vdwg.mxu0
      %5912 = vmatprep.subr.mxu0 %v5780
      %5913 = vmatpush1.msra.mxu0 %v5779
      %5914 = vmatprep.subr.mxu0 %v5784
      %5915 = vmatpush1.msra.mxu0 %v5783
      %5916 = vmatprep.subr.mxu0 %v5788
      %5917 = vmatpush1.msra.mxu0 %v5787
      %5918 = vmatprep.subr.mxu0 %v5792
      %5919 = vmatpush1.msra.mxu0 %v5791
      %5920 = vmatprep.subr.mxu0 %v5796
      %5921 = vmatpush1.msra.mxu0 %v5795
      %5922 = vmatprep.subr.mxu0 %v5800
      %5923 = vmatpush1.msra.mxu0 %v5799
      %5924 = vmatprep.subr.mxu0 %v5804
      %5925 = vmatpush1.msra.mxu0 %v5803
      %5926 = vmatprep.subr.mxu0 %v5808
      %5927 = vmatpush1.msra.mxu0 %v5807
      %5928 = vmatprep.subr.mxu0 %v5812
      %5929 = vmatpush1.msra.mxu0 %v5811
      %5930 = vmatprep.subr.mxu0 %v5816
      %5931 = vmatpush1.msra.mxu0 %v5815
      %5932 = vmatprep.subr.mxu0 %v5820
      %5933 = vmatpush1.msra.mxu0 %v5819
      %5934 = vmatprep.subr.mxu0 %v5824
      %5935 = vmatpush1.msra.mxu0 %v5823
      %5936 = vmatprep.subr.mxu0 %v5828
      %5937 = vmatpush1.msra.mxu0 %v5827
      %5938 = vmatprep.subr.mxu0 %v5832
      %5939 = vmatpush1.msra.mxu0 %v5831
      %5940 = vmatprep.subr.mxu0 %v5836
      %5941 = vmatpush1.msra.mxu0 %v5835
      %5942 = vmatprep.subr.mxu0 %v5840
      %5943 = vmatpush1.msra.mxu0 %v5839
      %5944 = vmatprep.subr.mxu0 0.0
      %5945 = vmatpush1.msra.mxu0 0.0
      %5946 = vmatprep.subr.mxu0 0.0
      %5947 = vmatpush1.msra.mxu0 0.0
      %5948 = vmatprep.subr.mxu0 0.0
      %5949 = vmatpush1.msra.mxu0 0.0
      %5950 = vmatprep.subr.mxu0 0.0
      %5951 = vmatpush1.msra.mxu0 0.0
      %5952 = vmatprep.subr.mxu0 0.0
      %5953 = vmatpush1.msra.mxu0 0.0
      %5954 = vmatprep.subr.mxu0 0.0
      %5955 = vmatpush1.msra.mxu0 0.0
      %5956 = vmatprep.subr.mxu0 0.0
      %5957 = vmatpush1.msra.mxu0 0.0
      %5958 = vmatprep.subr.mxu0 0.0
      %5959 = vmatpush1.msra.mxu0 0.0
      %5960 = vmatprep.subr.mxu0 0.0
      %5961 = vmatpush1.msra.mxu0 0.0
      %5962 = vmatprep.subr.mxu0 0.0
      %5963 = vmatpush1.msra.mxu0 0.0
      %5964 = vmatprep.subr.mxu0 0.0
      %5965 = vmatpush1.msra.mxu0 0.0
      %5966 = vmatprep.subr.mxu0 0.0
      %5967 = vmatpush1.msra.mxu0 0.0
      %5968 = vmatprep.subr.mxu0 0.0
      %5969 = vmatpush1.msra.mxu0 0.0
      %5970 = vmatprep.subr.mxu0 0.0
      %5971 = vmatpush1.msra.mxu0 0.0
      %5972 = vmatprep.subr.mxu0 0.0
      %5973 = vmatpush1.msra.mxu0 0.0
      %5974 = vmatprep.subr.mxu0 0.0
      %5975 = vmatpush1.msra.mxu0 0.0
      %5976 = vmatprep.mubr.f32.mxu0 0.0
      %5977 = vmatmul.mubr.f32.gmra.mrb[0].mxu0 %v5767
      %v5978 = vpop.f32.mrb[0].mxu0
      %v5979 = vadd.f32 0.0, %v5978
      %v5980 = vpop.f32.mrb[0].mxu0
      %v5981 = vadd.f32 0.0, %v5980
      %5982 = vdwg.mxu0
      %v5983 = vadd.f32 %v5773, %v5908
      %v5984 = vadd.f32 %v5774, %v5910
      %v5985 = vadd.f32 %v5775, %v5979
      %v5986 = vadd.f32 %v5776, %v5981
      %v5987 = vtanh.pop %v5983
      %v5988 = vtanh.pop %v5984
      %v5989 = vtanh.pop %v5985
      %v5990 = vtanh.pop %v5986
      %v5991 = vxor.u32 %v5983, 2147483648
      %v5992 = vxor.u32 %v5984, 2147483648
      %v5993 = vxor.u32 %v5985, 2147483648
      %v5994 = vxor.u32 %v5986, 2147483648
      %v5995 = vmul.f32 %v5991, 1.442695
      %v5996 = vpow.pop %v5995
      %v5997 = vmul.f32 %v5992, 1.442695
      %v5998 = vpow.pop %v5997
      %v5999 = vmul.f32 %v5993, 1.442695
      %v6000 = vpow.pop %v5999
      %v6001 = vmul.f32 %v5994, 1.442695
      %v6002 = vpow.pop %v6001
      %v6003 = vadd.f32 %v5996, 1.0
      %v6004 = vadd.f32 %v5998, 1.0
      %v6005 = vadd.f32 %v6000, 1.0
      %v6006 = vadd.f32 %v6002, 1.0
      %v6007 = vrcp.pop %v6003
      %v6008 = vmul.f32 1.0, %v6007
      %v6009 = vrcp.pop %v6004
      %v6010 = vmul.f32 1.0, %v6009
      %v6011 = vrcp.pop %v6005
      %v6012 = vmul.f32 1.0, %v6011
      %v6013 = vrcp.pop %v6006
      %v6014 = vmul.f32 1.0, %v6013
      %v6015 = vsel %vm144, %v5987, %v6008
      %v6016 = vsel %vm145, %v5988, %v6010
      %v6017 = vsel %vm146, %v5989, %v6012
      %v6018 = vsel %vm147, %v5990, %v6014
      %v6019 = vmul.f32 %v6016, %v5765
      %v6020 = vmul.f32 %v6015, %v6017
      %v6021 = vadd.f32 %v6019, %v6020
      %v6022 = vtanh.pop %v6021
      %v6023 = vmul.f32 %v6018, %v6022
      %s6024 = scalar_lea.vmem [#allocation4], 16
      %6025 = vst [vmem:[%s6024] sm:$0xff] %v6023
      %s6026 = smul.u32 3, 4
      %s6027 = smul.addr %s6026, 8
      %s6028 = scalar_lea.vmem [#allocation17], %s6027
      %v6029 = vld [vmem:[%s6028] sm:$0xff]
      %v6030 = vld [vmem:[%s6028 + $0x8] sm:$0xff]
      %v6031 = vld [vmem:[%s6028 + $0x10] sm:$0xff]
      %v6032 = vld [vmem:[%s6028 + $0x18] sm:$0xff]
      %v6033 = vld [vmem:[#allocation12] sm:$0xff]
      %v6034 = vld [vmem:[#allocation12 + $0x8] sm:$0xff]
      %v6035 = vld [vmem:[#allocation12 + $0x10] sm:$0xff]
      %v6036 = vld [vmem:[#allocation12 + $0x18] sm:$0xff]
      %v6037 = vld [vmem:[#allocation12 + $0x20] sm:$0xff]
      %v6038 = vld [vmem:[#allocation12 + $0x28] sm:$0xff]
      %v6039 = vld [vmem:[#allocation12 + $0x30] sm:$0xff]
      %v6040 = vld [vmem:[#allocation12 + $0x38] sm:$0xff]
      %v6041 = vld [vmem:[#allocation12 + $0x40] sm:$0xff]
      %v6042 = vld [vmem:[#allocation12 + $0x48] sm:$0xff]
      %v6043 = vld [vmem:[#allocation12 + $0x50] sm:$0xff]
      %v6044 = vld [vmem:[#allocation12 + $0x58] sm:$0xff]
      %v6045 = vld [vmem:[#allocation12 + $0x60] sm:$0xff]
      %v6046 = vld [vmem:[#allocation12 + $0x68] sm:$0xff]
      %v6047 = vld [vmem:[#allocation12 + $0x70] sm:$0xff]
      %v6048 = vld [vmem:[#allocation12 + $0x78] sm:$0xff]
      %v6049 = vld [vmem:[#allocation12 + $0x80] sm:$0xff]
      %v6050 = vld [vmem:[#allocation12 + $0x88] sm:$0xff]
      %v6051 = vld [vmem:[#allocation12 + $0x90] sm:$0xff]
      %v6052 = vld [vmem:[#allocation12 + $0x98] sm:$0xff]
      %v6053 = vld [vmem:[#allocation12 + $0xa0] sm:$0xff]
      %v6054 = vld [vmem:[#allocation12 + $0xa8] sm:$0xff]
      %v6055 = vld [vmem:[#allocation12 + $0xb0] sm:$0xff]
      %v6056 = vld [vmem:[#allocation12 + $0xb8] sm:$0xff]
      %v6057 = vld [vmem:[#allocation12 + $0xc0] sm:$0xff]
      %v6058 = vld [vmem:[#allocation12 + $0xc8] sm:$0xff]
      %v6059 = vld [vmem:[#allocation12 + $0xd0] sm:$0xff]
      %v6060 = vld [vmem:[#allocation12 + $0xd8] sm:$0xff]
      %v6061 = vld [vmem:[#allocation12 + $0xe0] sm:$0xff]
      %v6062 = vld [vmem:[#allocation12 + $0xe8] sm:$0xff]
      %v6063 = vld [vmem:[#allocation12 + $0xf0] sm:$0xff]
      %v6064 = vld [vmem:[#allocation12 + $0xf8] sm:$0xff]
      %v6065 = vld [vmem:[#allocation12 + $0x100] sm:$0xff]
      %v6066 = vld [vmem:[#allocation12 + $0x108] sm:$0xff]
      %v6067 = vld [vmem:[#allocation12 + $0x110] sm:$0xff]
      %v6068 = vld [vmem:[#allocation12 + $0x118] sm:$0xff]
      %v6069 = vld [vmem:[#allocation12 + $0x120] sm:$0xff]
      %v6070 = vld [vmem:[#allocation12 + $0x128] sm:$0xff]
      %v6071 = vld [vmem:[#allocation12 + $0x130] sm:$0xff]
      %v6072 = vld [vmem:[#allocation12 + $0x138] sm:$0xff]
      %v6073 = vld [vmem:[#allocation12 + $0x140] sm:$0xff]
      %v6074 = vld [vmem:[#allocation12 + $0x148] sm:$0xff]
      %v6075 = vld [vmem:[#allocation12 + $0x150] sm:$0xff]
      %v6076 = vld [vmem:[#allocation12 + $0x158] sm:$0xff]
      %v6077 = vld [vmem:[#allocation12 + $0x160] sm:$0xff]
      %v6078 = vld [vmem:[#allocation12 + $0x168] sm:$0xff]
      %v6079 = vld [vmem:[#allocation12 + $0x170] sm:$0xff]
      %v6080 = vld [vmem:[#allocation12 + $0x178] sm:$0xff]
      %v6081 = vld [vmem:[#allocation12 + $0x180] sm:$0xff]
      %v6082 = vld [vmem:[#allocation12 + $0x188] sm:$0xff]
      %v6083 = vld [vmem:[#allocation12 + $0x190] sm:$0xff]
      %v6084 = vld [vmem:[#allocation12 + $0x198] sm:$0xff]
      %v6085 = vld [vmem:[#allocation12 + $0x1a0] sm:$0xff]
      %v6086 = vld [vmem:[#allocation12 + $0x1a8] sm:$0xff]
      %v6087 = vld [vmem:[#allocation12 + $0x1b0] sm:$0xff]
      %v6088 = vld [vmem:[#allocation12 + $0x1b8] sm:$0xff]
      %v6089 = vld [vmem:[#allocation12 + $0x1c0] sm:$0xff]
      %v6090 = vld [vmem:[#allocation12 + $0x1c8] sm:$0xff]
      %v6091 = vld [vmem:[#allocation12 + $0x1d0] sm:$0xff]
      %v6092 = vld [vmem:[#allocation12 + $0x1d8] sm:$0xff]
      %v6093 = vld [vmem:[#allocation12 + $0x1e0] sm:$0xff]
      %v6094 = vld [vmem:[#allocation12 + $0x1e8] sm:$0xff]
      %v6095 = vld [vmem:[#allocation12 + $0x1f0] sm:$0xff]
      %v6096 = vld [vmem:[#allocation12 + $0x1f8] sm:$0xff]
      %6097 = vmatprep.subr.mxu0 %v6034
      %6098 = vmatpush1.msra.mxu0 %v6033
      %6099 = vmatprep.subr.mxu0 %v6038
      %6100 = vmatpush1.msra.mxu0 %v6037
      %6101 = vmatprep.subr.mxu0 %v6042
      %6102 = vmatpush1.msra.mxu0 %v6041
      %6103 = vmatprep.subr.mxu0 %v6046
      %6104 = vmatpush1.msra.mxu0 %v6045
      %6105 = vmatprep.subr.mxu0 %v6050
      %6106 = vmatpush1.msra.mxu0 %v6049
      %6107 = vmatprep.subr.mxu0 %v6054
      %6108 = vmatpush1.msra.mxu0 %v6053
      %6109 = vmatprep.subr.mxu0 %v6058
      %6110 = vmatpush1.msra.mxu0 %v6057
      %6111 = vmatprep.subr.mxu0 %v6062
      %6112 = vmatpush1.msra.mxu0 %v6061
      %6113 = vmatprep.subr.mxu0 %v6066
      %6114 = vmatpush1.msra.mxu0 %v6065
      %6115 = vmatprep.subr.mxu0 %v6070
      %6116 = vmatpush1.msra.mxu0 %v6069
      %6117 = vmatprep.subr.mxu0 %v6074
      %6118 = vmatpush1.msra.mxu0 %v6073
      %6119 = vmatprep.subr.mxu0 %v6078
      %6120 = vmatpush1.msra.mxu0 %v6077
      %6121 = vmatprep.subr.mxu0 %v6082
      %6122 = vmatpush1.msra.mxu0 %v6081
      %6123 = vmatprep.subr.mxu0 %v6086
      %6124 = vmatpush1.msra.mxu0 %v6085
      %6125 = vmatprep.subr.mxu0 %v6090
      %6126 = vmatpush1.msra.mxu0 %v6089
      %6127 = vmatprep.subr.mxu0 %v6094
      %6128 = vmatpush1.msra.mxu0 %v6093
      %6129 = vmatprep.subr.mxu0 0.0
      %6130 = vmatpush1.msra.mxu0 0.0
      %6131 = vmatprep.subr.mxu0 0.0
      %6132 = vmatpush1.msra.mxu0 0.0
      %6133 = vmatprep.subr.mxu0 0.0
      %6134 = vmatpush1.msra.mxu0 0.0
      %6135 = vmatprep.subr.mxu0 0.0
      %6136 = vmatpush1.msra.mxu0 0.0
      %6137 = vmatprep.subr.mxu0 0.0
      %6138 = vmatpush1.msra.mxu0 0.0
      %6139 = vmatprep.subr.mxu0 0.0
      %6140 = vmatpush1.msra.mxu0 0.0
      %6141 = vmatprep.subr.mxu0 0.0
      %6142 = vmatpush1.msra.mxu0 0.0
      %6143 = vmatprep.subr.mxu0 0.0
      %6144 = vmatpush1.msra.mxu0 0.0
      %6145 = vmatprep.subr.mxu0 0.0
      %6146 = vmatpush1.msra.mxu0 0.0
      %6147 = vmatprep.subr.mxu0 0.0
      %6148 = vmatpush1.msra.mxu0 0.0
      %6149 = vmatprep.subr.mxu0 0.0
      %6150 = vmatpush1.msra.mxu0 0.0
      %6151 = vmatprep.subr.mxu0 0.0
      %6152 = vmatpush1.msra.mxu0 0.0
      %6153 = vmatprep.subr.mxu0 0.0
      %6154 = vmatpush1.msra.mxu0 0.0
      %6155 = vmatprep.subr.mxu0 0.0
      %6156 = vmatpush1.msra.mxu0 0.0
      %6157 = vmatprep.subr.mxu0 0.0
      %6158 = vmatpush1.msra.mxu0 0.0
      %6159 = vmatprep.subr.mxu0 0.0
      %6160 = vmatpush1.msra.mxu0 0.0
      %6161 = vmatprep.mubr.f32.mxu0 0.0
      %6162 = vmatmul.mubr.f32.gmra.mrb[0].mxu0 %v6023
      %v6163 = vpop.f32.mrb[0].mxu0
      %v6164 = vadd.f32 0.0, %v6163
      %v6165 = vpop.f32.mrb[0].mxu0
      %v6166 = vadd.f32 0.0, %v6165
      %6167 = vdwg.mxu0
      %6168 = vmatprep.subr.mxu0 %v6036
      %6169 = vmatpush1.msra.mxu0 %v6035
      %6170 = vmatprep.subr.mxu0 %v6040
      %6171 = vmatpush1.msra.mxu0 %v6039
      %6172 = vmatprep.subr.mxu0 %v6044
      %6173 = vmatpush1.msra.mxu0 %v6043
      %6174 = vmatprep.subr.mxu0 %v6048
      %6175 = vmatpush1.msra.mxu0 %v6047
      %6176 = vmatprep.subr.mxu0 %v6052
      %6177 = vmatpush1.msra.mxu0 %v6051
      %6178 = vmatprep.subr.mxu0 %v6056
      %6179 = vmatpush1.msra.mxu0 %v6055
      %6180 = vmatprep.subr.mxu0 %v6060
      %6181 = vmatpush1.msra.mxu0 %v6059
      %6182 = vmatprep.subr.mxu0 %v6064
      %6183 = vmatpush1.msra.mxu0 %v6063
      %6184 = vmatprep.subr.mxu0 %v6068
      %6185 = vmatpush1.msra.mxu0 %v6067
      %6186 = vmatprep.subr.mxu0 %v6072
      %6187 = vmatpush1.msra.mxu0 %v6071
      %6188 = vmatprep.subr.mxu0 %v6076
      %6189 = vmatpush1.msra.mxu0 %v6075
      %6190 = vmatprep.subr.mxu0 %v6080
      %6191 = vmatpush1.msra.mxu0 %v6079
      %6192 = vmatprep.subr.mxu0 %v6084
      %6193 = vmatpush1.msra.mxu0 %v6083
      %6194 = vmatprep.subr.mxu0 %v6088
      %6195 = vmatpush1.msra.mxu0 %v6087
      %6196 = vmatprep.subr.mxu0 %v6092
      %6197 = vmatpush1.msra.mxu0 %v6091
      %6198 = vmatprep.subr.mxu0 %v6096
      %6199 = vmatpush1.msra.mxu0 %v6095
      %6200 = vmatprep.subr.mxu0 0.0
      %6201 = vmatpush1.msra.mxu0 0.0
      %6202 = vmatprep.subr.mxu0 0.0
      %6203 = vmatpush1.msra.mxu0 0.0
      %6204 = vmatprep.subr.mxu0 0.0
      %6205 = vmatpush1.msra.mxu0 0.0
      %6206 = vmatprep.subr.mxu0 0.0
      %6207 = vmatpush1.msra.mxu0 0.0
      %6208 = vmatprep.subr.mxu0 0.0
      %6209 = vmatpush1.msra.mxu0 0.0
      %6210 = vmatprep.subr.mxu0 0.0
      %6211 = vmatpush1.msra.mxu0 0.0
      %6212 = vmatprep.subr.mxu0 0.0
      %6213 = vmatpush1.msra.mxu0 0.0
      %6214 = vmatprep.subr.mxu0 0.0
      %6215 = vmatpush1.msra.mxu0 0.0
      %6216 = vmatprep.subr.mxu0 0.0
      %6217 = vmatpush1.msra.mxu0 0.0
      %6218 = vmatprep.subr.mxu0 0.0
      %6219 = vmatpush1.msra.mxu0 0.0
      %6220 = vmatprep.subr.mxu0 0.0
      %6221 = vmatpush1.msra.mxu0 0.0
      %6222 = vmatprep.subr.mxu0 0.0
      %6223 = vmatpush1.msra.mxu0 0.0
      %6224 = vmatprep.subr.mxu0 0.0
      %6225 = vmatpush1.msra.mxu0 0.0
      %6226 = vmatprep.subr.mxu0 0.0
      %6227 = vmatpush1.msra.mxu0 0.0
      %6228 = vmatprep.subr.mxu0 0.0
      %6229 = vmatpush1.msra.mxu0 0.0
      %6230 = vmatprep.subr.mxu0 0.0
      %6231 = vmatpush1.msra.mxu0 0.0
      %6232 = vmatprep.mubr.f32.mxu0 0.0
      %6233 = vmatmul.mubr.f32.gmra.mrb[0].mxu0 %v6023
      %v6234 = vpop.f32.mrb[0].mxu0
      %v6235 = vadd.f32 0.0, %v6234
      %v6236 = vpop.f32.mrb[0].mxu0
      %v6237 = vadd.f32 0.0, %v6236
      %6238 = vdwg.mxu0
      %v6239 = vadd.f32 %v6029, %v6164
      %v6240 = vadd.f32 %v6030, %v6166
      %v6241 = vadd.f32 %v6031, %v6235
      %v6242 = vadd.f32 %v6032, %v6237
      %v6243 = vtanh.pop %v6239
      %v6244 = vtanh.pop %v6240
      %v6245 = vtanh.pop %v6241
      %v6246 = vtanh.pop %v6242
      %v6247 = vxor.u32 %v6239, 2147483648
      %v6248 = vxor.u32 %v6240, 2147483648
      %v6249 = vxor.u32 %v6241, 2147483648
      %v6250 = vxor.u32 %v6242, 2147483648
      %v6251 = vmul.f32 %v6247, 1.442695
      %v6252 = vpow.pop %v6251
      %v6253 = vmul.f32 %v6248, 1.442695
      %v6254 = vpow.pop %v6253
      %v6255 = vmul.f32 %v6249, 1.442695
      %v6256 = vpow.pop %v6255
      %v6257 = vmul.f32 %v6250, 1.442695
      %v6258 = vpow.pop %v6257
      %v6259 = vadd.f32 %v6252, 1.0
      %v6260 = vadd.f32 %v6254, 1.0
      %v6261 = vadd.f32 %v6256, 1.0
      %v6262 = vadd.f32 %v6258, 1.0
      %v6263 = vrcp.pop %v6259
      %v6264 = vmul.f32 1.0, %v6263
      %v6265 = vrcp.pop %v6260
      %v6266 = vmul.f32 1.0, %v6265
      %v6267 = vrcp.pop %v6261
      %v6268 = vmul.f32 1.0, %v6267
      %v6269 = vrcp.pop %v6262
      %v6270 = vmul.f32 1.0, %v6269
      %v6271 = vsel %vm144, %v6243, %v6264
      %v6272 = vsel %vm145, %v6244, %v6266
      %v6273 = vsel %vm146, %v6245, %v6268
      %v6274 = vsel %vm147, %v6246, %v6270
      %v6275 = vmul.f32 %v6272, %v6021
      %v6276 = vmul.f32 %v6271, %v6273
      %v6277 = vadd.f32 %v6275, %v6276
      %v6278 = vtanh.pop %v6277
      %v6279 = vmul.f32 %v6274, %v6278
      %s6280 = scalar_lea.vmem [#allocation4], 24
      %6281 = vst [vmem:[%s6280] sm:$0xff] %v6279
      %s6282 = smul.u32 4, 4
      %s6283 = smul.addr %s6282, 8
      %s6284 = scalar_lea.vmem [#allocation17], %s6283
      %v6285 = vld [vmem:[%s6284] sm:$0xff]
      %v6286 = vld [vmem:[%s6284 + $0x8] sm:$0xff]
      %v6287 = vld [vmem:[%s6284 + $0x10] sm:$0xff]
      %v6288 = vld [vmem:[%s6284 + $0x18] sm:$0xff]
      %v6289 = vld [vmem:[#allocation12] sm:$0xff]
      %v6290 = vld [vmem:[#allocation12 + $0x8] sm:$0xff]
      %v6291 = vld [vmem:[#allocation12 + $0x10] sm:$0xff]
      %v6292 = vld [vmem:[#allocation12 + $0x18] sm:$0xff]
      %v6293 = vld [vmem:[#allocation12 + $0x20] sm:$0xff]
      %v6294 = vld [vmem:[#allocation12 + $0x28] sm:$0xff]
      %v6295 = vld [vmem:[#allocation12 + $0x30] sm:$0xff]
      %v6296 = vld [vmem:[#allocation12 + $0x38] sm:$0xff]
      %v6297 = vld [vmem:[#allocation12 + $0x40] sm:$0xff]
      %v6298 = vld [vmem:[#allocation12 + $0x48] sm:$0xff]
      %v6299 = vld [vmem:[#allocation12 + $0x50] sm:$0xff]
      %v6300 = vld [vmem:[#allocation12 + $0x58] sm:$0xff]
      %v6301 = vld [vmem:[#allocation12 + $0x60] sm:$0xff]
      %v6302 = vld [vmem:[#allocation12 + $0x68] sm:$0xff]
      %v6303 = vld [vmem:[#allocation12 + $0x70] sm:$0xff]
      %v6304 = vld [vmem:[#allocation12 + $0x78] sm:$0xff]
      %v6305 = vld [vmem:[#allocation12 + $0x80] sm:$0xff]
      %v6306 = vld [vmem:[#allocation12 + $0x88] sm:$0xff]
      %v6307 = vld [vmem:[#allocation12 + $0x90] sm:$0xff]
      %v6308 = vld [vmem:[#allocation12 + $0x98] sm:$0xff]
      %v6309 = vld [vmem:[#allocation12 + $0xa0] sm:$0xff]
      %v6310 = vld [vmem:[#allocation12 + $0xa8] sm:$0xff]
      %v6311 = vld [vmem:[#allocation12 + $0xb0] sm:$0xff]
      %v6312 = vld [vmem:[#allocation12 + $0xb8] sm:$0xff]
      %v6313 = vld [vmem:[#allocation12 + $0xc0] sm:$0xff]
      %v6314 = vld [vmem:[#allocation12 + $0xc8] sm:$0xff]
      %v6315 = vld [vmem:[#allocation12 + $0xd0] sm:$0xff]
      %v6316 = vld [vmem:[#allocation12 + $0xd8] sm:$0xff]
      %v6317 = vld [vmem:[#allocation12 + $0xe0] sm:$0xff]
      %v6318 = vld [vmem:[#allocation12 + $0xe8] sm:$0xff]
      %v6319 = vld [vmem:[#allocation12 + $0xf0] sm:$0xff]
      %v6320 = vld [vmem:[#allocation12 + $0xf8] sm:$0xff]
      %v6321 = vld [vmem:[#allocation12 + $0x100] sm:$0xff]
      %v6322 = vld [vmem:[#allocation12 + $0x108] sm:$0xff]
      %v6323 = vld [vmem:[#allocation12 + $0x110] sm:$0xff]
      %v6324 = vld [vmem:[#allocation12 + $0x118] sm:$0xff]
      %v6325 = vld [vmem:[#allocation12 + $0x120] sm:$0xff]
      %v6326 = vld [vmem:[#allocation12 + $0x128] sm:$0xff]
      %v6327 = vld [vmem:[#allocation12 + $0x130] sm:$0xff]
      %v6328 = vld [vmem:[#allocation12 + $0x138] sm:$0xff]
      %v6329 = vld [vmem:[#allocation12 + $0x140] sm:$0xff]
      %v6330 = vld [vmem:[#allocation12 + $0x148] sm:$0xff]
      %v6331 = vld [vmem:[#allocation12 + $0x150] sm:$0xff]
      %v6332 = vld [vmem:[#allocation12 + $0x158] sm:$0xff]
      %v6333 = vld [vmem:[#allocation12 + $0x160] sm:$0xff]
      %v6334 = vld [vmem:[#allocation12 + $0x168] sm:$0xff]
      %v6335 = vld [vmem:[#allocation12 + $0x170] sm:$0xff]
      %v6336 = vld [vmem:[#allocation12 + $0x178] sm:$0xff]
      %v6337 = vld [vmem:[#allocation12 + $0x180] sm:$0xff]
      %v6338 = vld [vmem:[#allocation12 + $0x188] sm:$0xff]
      %v6339 = vld [vmem:[#allocation12 + $0x190] sm:$0xff]
      %v6340 = vld [vmem:[#allocation12 + $0x198] sm:$0xff]
      %v6341 = vld [vmem:[#allocation12 + $0x1a0] sm:$0xff]
      %v6342 = vld [vmem:[#allocation12 + $0x1a8] sm:$0xff]
      %v6343 = vld [vmem:[#allocation12 + $0x1b0] sm:$0xff]
      %v6344 = vld [vmem:[#allocation12 + $0x1b8] sm:$0xff]
      %v6345 = vld [vmem:[#allocation12 + $0x1c0] sm:$0xff]
      %v6346 = vld [vmem:[#allocation12 + $0x1c8] sm:$0xff]
      %v6347 = vld [vmem:[#allocation12 + $0x1d0] sm:$0xff]
      %v6348 = vld [vmem:[#allocation12 + $0x1d8] sm:$0xff]
      %v6349 = vld [vmem:[#allocation12 + $0x1e0] sm:$0xff]
      %v6350 = vld [vmem:[#allocation12 + $0x1e8] sm:$0xff]
      %v6351 = vld [vmem:[#allocation12 + $0x1f0] sm:$0xff]
      %v6352 = vld [vmem:[#allocation12 + $0x1f8] sm:$0xff]
      %6353 = vmatprep.subr.mxu0 %v6290
      %6354 = vmatpush1.msra.mxu0 %v6289
      %6355 = vmatprep.subr.mxu0 %v6294
      %6356 = vmatpush1.msra.mxu0 %v6293
      %6357 = vmatprep.subr.mxu0 %v6298
      %6358 = vmatpush1.msra.mxu0 %v6297
      %6359 = vmatprep.subr.mxu0 %v6302
      %6360 = vmatpush1.msra.mxu0 %v6301
      %6361 = vmatprep.subr.mxu0 %v6306
      %6362 = vmatpush1.msra.mxu0 %v6305
      %6363 = vmatprep.subr.mxu0 %v6310
      %6364 = vmatpush1.msra.mxu0 %v6309
      %6365 = vmatprep.subr.mxu0 %v6314
      %6366 = vmatpush1.msra.mxu0 %v6313
      %6367 = vmatprep.subr.mxu0 %v6318
      %6368 = vmatpush1.msra.mxu0 %v6317
      %6369 = vmatprep.subr.mxu0 %v6322
      %6370 = vmatpush1.msra.mxu0 %v6321
      %6371 = vmatprep.subr.mxu0 %v6326
      %6372 = vmatpush1.msra.mxu0 %v6325
      %6373 = vmatprep.subr.mxu0 %v6330
      %6374 = vmatpush1.msra.mxu0 %v6329
      %6375 = vmatprep.subr.mxu0 %v6334
      %6376 = vmatpush1.msra.mxu0 %v6333
      %6377 = vmatprep.subr.mxu0 %v6338
      %6378 = vmatpush1.msra.mxu0 %v6337
      %6379 = vmatprep.subr.mxu0 %v6342
      %6380 = vmatpush1.msra.mxu0 %v6341
      %6381 = vmatprep.subr.mxu0 %v6346
      %6382 = vmatpush1.msra.mxu0 %v6345
      %6383 = vmatprep.subr.mxu0 %v6350
      %6384 = vmatpush1.msra.mxu0 %v6349
      %6385 = vmatprep.subr.mxu0 0.0
      %6386 = vmatpush1.msra.mxu0 0.0
      %6387 = vmatprep.subr.mxu0 0.0
      %6388 = vmatpush1.msra.mxu0 0.0
      %6389 = vmatprep.subr.mxu0 0.0
      %6390 = vmatpush1.msra.mxu0 0.0
      %6391 = vmatprep.subr.mxu0 0.0
      %6392 = vmatpush1.msra.mxu0 0.0
      %6393 = vmatprep.subr.mxu0 0.0
      %6394 = vmatpush1.msra.mxu0 0.0
      %6395 = vmatprep.subr.mxu0 0.0
      %6396 = vmatpush1.msra.mxu0 0.0
      %6397 = vmatprep.subr.mxu0 0.0
      %6398 = vmatpush1.msra.mxu0 0.0
      %6399 = vmatprep.subr.mxu0 0.0
      %6400 = vmatpush1.msra.mxu0 0.0
      %6401 = vmatprep.subr.mxu0 0.0
      %6402 = vmatpush1.msra.mxu0 0.0
      %6403 = vmatprep.subr.mxu0 0.0
      %6404 = vmatpush1.msra.mxu0 0.0
      %6405 = vmatprep.subr.mxu0 0.0
      %6406 = vmatpush1.msra.mxu0 0.0
      %6407 = vmatprep.subr.mxu0 0.0
      %6408 = vmatpush1.msra.mxu0 0.0
      %6409 = vmatprep.subr.mxu0 0.0
      %6410 = vmatpush1.msra.mxu0 0.0
      %6411 = vmatprep.subr.mxu0 0.0
      %6412 = vmatpush1.msra.mxu0 0.0
      %6413 = vmatprep.subr.mxu0 0.0
      %6414 = vmatpush1.msra.mxu0 0.0
      %6415 = vmatprep.subr.mxu0 0.0
      %6416 = vmatpush1.msra.mxu0 0.0
      %6417 = vmatprep.mubr.f32.mxu0 0.0
      %6418 = vmatmul.mubr.f32.gmra.mrb[0].mxu0 %v6279
      %v6419 = vpop.f32.mrb[0].mxu0
      %v6420 = vadd.f32 0.0, %v6419
      %v6421 = vpop.f32.mrb[0].mxu0
      %v6422 = vadd.f32 0.0, %v6421
      %6423 = vdwg.mxu0
      %6424 = vmatprep.subr.mxu0 %v6292
      %6425 = vmatpush1.msra.mxu0 %v6291
      %6426 = vmatprep.subr.mxu0 %v6296
      %6427 = vmatpush1.msra.mxu0 %v6295
      %6428 = vmatprep.subr.mxu0 %v6300
      %6429 = vmatpush1.msra.mxu0 %v6299
      %6430 = vmatprep.subr.mxu0 %v6304
      %6431 = vmatpush1.msra.mxu0 %v6303
      %6432 = vmatprep.subr.mxu0 %v6308
      %6433 = vmatpush1.msra.mxu0 %v6307
      %6434 = vmatprep.subr.mxu0 %v6312
      %6435 = vmatpush1.msra.mxu0 %v6311
      %6436 = vmatprep.subr.mxu0 %v6316
      %6437 = vmatpush1.msra.mxu0 %v6315
      %6438 = vmatprep.subr.mxu0 %v6320
      %6439 = vmatpush1.msra.mxu0 %v6319
      %6440 = vmatprep.subr.mxu0 %v6324
      %6441 = vmatpush1.msra.mxu0 %v6323
      %6442 = vmatprep.subr.mxu0 %v6328
      %6443 = vmatpush1.msra.mxu0 %v6327
      %6444 = vmatprep.subr.mxu0 %v6332
      %6445 = vmatpush1.msra.mxu0 %v6331
      %6446 = vmatprep.subr.mxu0 %v6336
      %6447 = vmatpush1.msra.mxu0 %v6335
      %6448 = vmatprep.subr.mxu0 %v6340
      %6449 = vmatpush1.msra.mxu0 %v6339
      %6450 = vmatprep.subr.mxu0 %v6344
      %6451 = vmatpush1.msra.mxu0 %v6343
      %6452 = vmatprep.subr.mxu0 %v6348
      %6453 = vmatpush1.msra.mxu0 %v6347
      %6454 = vmatprep.subr.mxu0 %v6352
      %6455 = vmatpush1.msra.mxu0 %v6351
      %6456 = vmatprep.subr.mxu0 0.0
      %6457 = vmatpush1.msra.mxu0 0.0
      %6458 = vmatprep.subr.mxu0 0.0
      %6459 = vmatpush1.msra.mxu0 0.0
      %6460 = vmatprep.subr.mxu0 0.0
      %6461 = vmatpush1.msra.mxu0 0.0
      %6462 = vmatprep.subr.mxu0 0.0
      %6463 = vmatpush1.msra.mxu0 0.0
      %6464 = vmatprep.subr.mxu0 0.0
      %6465 = vmatpush1.msra.mxu0 0.0
      %6466 = vmatprep.subr.mxu0 0.0
      %6467 = vmatpush1.msra.mxu0 0.0
      %6468 = vmatprep.subr.mxu0 0.0
      %6469 = vmatpush1.msra.mxu0 0.0
      %6470 = vmatprep.subr.mxu0 0.0
      %6471 = vmatpush1.msra.mxu0 0.0
      %6472 = vmatprep.subr.mxu0 0.0
      %6473 = vmatpush1.msra.mxu0 0.0
      %6474 = vmatprep.subr.mxu0 0.0
      %6475 = vmatpush1.msra.mxu0 0.0
      %6476 = vmatprep.subr.mxu0 0.0
      %6477 = vmatpush1.msra.mxu0 0.0
      %6478 = vmatprep.subr.mxu0 0.0
      %6479 = vmatpush1.msra.mxu0 0.0
      %6480 = vmatprep.subr.mxu0 0.0
      %6481 = vmatpush1.msra.mxu0 0.0
      %6482 = vmatprep.subr.mxu0 0.0
      %6483 = vmatpush1.msra.mxu0 0.0
      %6484 = vmatprep.subr.mxu0 0.0
      %6485 = vmatpush1.msra.mxu0 0.0
      %6486 = vmatprep.subr.mxu0 0.0
      %6487 = vmatpush1.msra.mxu0 0.0
      %6488 = vmatprep.mubr.f32.mxu0 0.0
      %6489 = vmatmul.mubr.f32.gmra.mrb[0].mxu0 %v6279
      %v6490 = vpop.f32.mrb[0].mxu0
      %v6491 = vadd.f32 0.0, %v6490
      %v6492 = vpop.f32.mrb[0].mxu0
      %v6493 = vadd.f32 0.0, %v6492
      %6494 = vdwg.mxu0
      %v6495 = vadd.f32 %v6285, %v6420
      %v6496 = vadd.f32 %v6286, %v6422
      %v6497 = vadd.f32 %v6287, %v6491
      %v6498 = vadd.f32 %v6288, %v6493
      %v6499 = vtanh.pop %v6495
      %v6500 = vtanh.pop %v6496
      %v6501 = vtanh.pop %v6497
      %v6502 = vtanh.pop %v6498
      %v6503 = vxor.u32 %v6495, 2147483648
      %v6504 = vxor.u32 %v6496, 2147483648
      %v6505 = vxor.u32 %v6497, 2147483648
      %v6506 = vxor.u32 %v6498, 2147483648
      %v6507 = vmul.f32 %v6503, 1.442695
      %v6508 = vpow.pop %v6507
      %v6509 = vmul.f32 %v6504, 1.442695
      %v6510 = vpow.pop %v6509
      %v6511 = vmul.f32 %v6505, 1.442695
      %v6512 = vpow.pop %v6511
      %v6513 = vmul.f32 %v6506, 1.442695
      %v6514 = vpow.pop %v6513
      %v6515 = vadd.f32 %v6508, 1.0
      %v6516 = vadd.f32 %v6510, 1.0
      %v6517 = vadd.f32 %v6512, 1.0
      %v6518 = vadd.f32 %v6514, 1.0
      %v6519 = vrcp.pop %v6515
      %v6520 = vmul.f32 1.0, %v6519
      %v6521 = vrcp.pop %v6516
      %v6522 = vmul.f32 1.0, %v6521
      %v6523 = vrcp.pop %v6517
      %v6524 = vmul.f32 1.0, %v6523
      %v6525 = vrcp.pop %v6518
      %v6526 = vmul.f32 1.0, %v6525
      %v6527 = vsel %vm144, %v6499, %v6520
      %v6528 = vsel %vm145, %v6500, %v6522
      %v6529 = vsel %vm146, %v6501, %v6524
      %v6530 = vsel %vm147, %v6502, %v6526
      %v6531 = vmul.f32 %v6528, %v6277
      %v6532 = vmul.f32 %v6527, %v6529
      %v6533 = vadd.f32 %v6531, %v6532
      %v6534 = vtanh.pop %v6533
      %v6535 = vmul.f32 %v6530, %v6534
      %s6536 = scalar_lea.vmem [#allocation4], 32
      %6537 = vst [vmem:[%s6536] sm:$0xff] %v6535
      %s6538 = smul.u32 5, 4
      %s6539 = smul.addr %s6538, 8
      %s6540 = scalar_lea.vmem [#allocation17], %s6539
      %v6541 = vld [vmem:[%s6540] sm:$0xff]
      %v6542 = vld [vmem:[%s6540 + $0x8] sm:$0xff]
      %v6543 = vld [vmem:[%s6540 + $0x10] sm:$0xff]
      %v6544 = vld [vmem:[%s6540 + $0x18] sm:$0xff]
      %v6545 = vld [vmem:[#allocation12] sm:$0xff]
      %v6546 = vld [vmem:[#allocation12 + $0x8] sm:$0xff]
      %v6547 = vld [vmem:[#allocation12 + $0x10] sm:$0xff]
      %v6548 = vld [vmem:[#allocation12 + $0x18] sm:$0xff]
      %v6549 = vld [vmem:[#allocation12 + $0x20] sm:$0xff]
      %v6550 = vld [vmem:[#allocation12 + $0x28] sm:$0xff]
      %v6551 = vld [vmem:[#allocation12 + $0x30] sm:$0xff]
      %v6552 = vld [vmem:[#allocation12 + $0x38] sm:$0xff]
      %v6553 = vld [vmem:[#allocation12 + $0x40] sm:$0xff]
      %v6554 = vld [vmem:[#allocation12 + $0x48] sm:$0xff]
      %v6555 = vld [vmem:[#allocation12 + $0x50] sm:$0xff]
      %v6556 = vld [vmem:[#allocation12 + $0x58] sm:$0xff]
      %v6557 = vld [vmem:[#allocation12 + $0x60] sm:$0xff]
      %v6558 = vld [vmem:[#allocation12 + $0x68] sm:$0xff]
      %v6559 = vld [vmem:[#allocation12 + $0x70] sm:$0xff]
      %v6560 = vld [vmem:[#allocation12 + $0x78] sm:$0xff]
      %v6561 = vld [vmem:[#allocation12 + $0x80] sm:$0xff]
      %v6562 = vld [vmem:[#allocation12 + $0x88] sm:$0xff]
      %v6563 = vld [vmem:[#allocation12 + $0x90] sm:$0xff]
      %v6564 = vld [vmem:[#allocation12 + $0x98] sm:$0xff]
      %v6565 = vld [vmem:[#allocation12 + $0xa0] sm:$0xff]
      %v6566 = vld [vmem:[#allocation12 + $0xa8] sm:$0xff]
      %v6567 = vld [vmem:[#allocation12 + $0xb0] sm:$0xff]
      %v6568 = vld [vmem:[#allocation12 + $0xb8] sm:$0xff]
      %v6569 = vld [vmem:[#allocation12 + $0xc0] sm:$0xff]
      %v6570 = vld [vmem:[#allocation12 + $0xc8] sm:$0xff]
      %v6571 = vld [vmem:[#allocation12 + $0xd0] sm:$0xff]
      %v6572 = vld [vmem:[#allocation12 + $0xd8] sm:$0xff]
      %v6573 = vld [vmem:[#allocation12 + $0xe0] sm:$0xff]
      %v6574 = vld [vmem:[#allocation12 + $0xe8] sm:$0xff]
      %v6575 = vld [vmem:[#allocation12 + $0xf0] sm:$0xff]
      %v6576 = vld [vmem:[#allocation12 + $0xf8] sm:$0xff]
      %v6577 = vld [vmem:[#allocation12 + $0x100] sm:$0xff]
      %v6578 = vld [vmem:[#allocation12 + $0x108] sm:$0xff]
      %v6579 = vld [vmem:[#allocation12 + $0x110] sm:$0xff]
      %v6580 = vld [vmem:[#allocation12 + $0x118] sm:$0xff]
      %v6581 = vld [vmem:[#allocation12 + $0x120] sm:$0xff]
      %v6582 = vld [vmem:[#allocation12 + $0x128] sm:$0xff]
      %v6583 = vld [vmem:[#allocation12 + $0x130] sm:$0xff]
      %v6584 = vld [vmem:[#allocation12 + $0x138] sm:$0xff]
      %v6585 = vld [vmem:[#allocation12 + $0x140] sm:$0xff]
      %v6586 = vld [vmem:[#allocation12 + $0x148] sm:$0xff]
      %v6587 = vld [vmem:[#allocation12 + $0x150] sm:$0xff]
      %v6588 = vld [vmem:[#allocation12 + $0x158] sm:$0xff]
      %v6589 = vld [vmem:[#allocation12 + $0x160] sm:$0xff]
      %v6590 = vld [vmem:[#allocation12 + $0x168] sm:$0xff]
      %v6591 = vld [vmem:[#allocation12 + $0x170] sm:$0xff]
      %v6592 = vld [vmem:[#allocation12 + $0x178] sm:$0xff]
      %v6593 = vld [vmem:[#allocation12 + $0x180] sm:$0xff]
      %v6594 = vld [vmem:[#allocation12 + $0x188] sm:$0xff]
      %v6595 = vld [vmem:[#allocation12 + $0x190] sm:$0xff]
      %v6596 = vld [vmem:[#allocation12 + $0x198] sm:$0xff]
      %v6597 = vld [vmem:[#allocation12 + $0x1a0] sm:$0xff]
      %v6598 = vld [vmem:[#allocation12 + $0x1a8] sm:$0xff]
      %v6599 = vld [vmem:[#allocation12 + $0x1b0] sm:$0xff]
      %v6600 = vld [vmem:[#allocation12 + $0x1b8] sm:$0xff]
      %v6601 = vld [vmem:[#allocation12 + $0x1c0] sm:$0xff]
      %v6602 = vld [vmem:[#allocation12 + $0x1c8] sm:$0xff]
      %v6603 = vld [vmem:[#allocation12 + $0x1d0] sm:$0xff]
      %v6604 = vld [vmem:[#allocation12 + $0x1d8] sm:$0xff]
      %v6605 = vld [vmem:[#allocation12 + $0x1e0] sm:$0xff]
      %v6606 = vld [vmem:[#allocation12 + $0x1e8] sm:$0xff]
      %v6607 = vld [vmem:[#allocation12 + $0x1f0] sm:$0xff]
      %v6608 = vld [vmem:[#allocation12 + $0x1f8] sm:$0xff]
      %6609 = vmatprep.subr.mxu0 %v6546
      %6610 = vmatpush1.msra.mxu0 %v6545
      %6611 = vmatprep.subr.mxu0 %v6550
      %6612 = vmatpush1.msra.mxu0 %v6549
      %6613 = vmatprep.subr.mxu0 %v6554
      %6614 = vmatpush1.msra.mxu0 %v6553
      %6615 = vmatprep.subr.mxu0 %v6558
      %6616 = vmatpush1.msra.mxu0 %v6557
      %6617 = vmatprep.subr.mxu0 %v6562
      %6618 = vmatpush1.msra.mxu0 %v6561
      %6619 = vmatprep.subr.mxu0 %v6566
      %6620 = vmatpush1.msra.mxu0 %v6565
      %6621 = vmatprep.subr.mxu0 %v6570
      %6622 = vmatpush1.msra.mxu0 %v6569
      %6623 = vmatprep.subr.mxu0 %v6574
      %6624 = vmatpush1.msra.mxu0 %v6573
      %6625 = vmatprep.subr.mxu0 %v6578
      %6626 = vmatpush1.msra.mxu0 %v6577
      %6627 = vmatprep.subr.mxu0 %v6582
      %6628 = vmatpush1.msra.mxu0 %v6581
      %6629 = vmatprep.subr.mxu0 %v6586
      %6630 = vmatpush1.msra.mxu0 %v6585
      %6631 = vmatprep.subr.mxu0 %v6590
      %6632 = vmatpush1.msra.mxu0 %v6589
      %6633 = vmatprep.subr.mxu0 %v6594
      %6634 = vmatpush1.msra.mxu0 %v6593
      %6635 = vmatprep.subr.mxu0 %v6598
      %6636 = vmatpush1.msra.mxu0 %v6597
      %6637 = vmatprep.subr.mxu0 %v6602
      %6638 = vmatpush1.msra.mxu0 %v6601
      %6639 = vmatprep.subr.mxu0 %v6606
      %6640 = vmatpush1.msra.mxu0 %v6605
      %6641 = vmatprep.subr.mxu0 0.0
      %6642 = vmatpush1.msra.mxu0 0.0
      %6643 = vmatprep.subr.mxu0 0.0
      %6644 = vmatpush1.msra.mxu0 0.0
      %6645 = vmatprep.subr.mxu0 0.0
      %6646 = vmatpush1.msra.mxu0 0.0
      %6647 = vmatprep.subr.mxu0 0.0
      %6648 = vmatpush1.msra.mxu0 0.0
      %6649 = vmatprep.subr.mxu0 0.0
      %6650 = vmatpush1.msra.mxu0 0.0
      %6651 = vmatprep.subr.mxu0 0.0
      %6652 = vmatpush1.msra.mxu0 0.0
      %6653 = vmatprep.subr.mxu0 0.0
      %6654 = vmatpush1.msra.mxu0 0.0
      %6655 = vmatprep.subr.mxu0 0.0
      %6656 = vmatpush1.msra.mxu0 0.0
      %6657 = vmatprep.subr.mxu0 0.0
      %6658 = vmatpush1.msra.mxu0 0.0
      %6659 = vmatprep.subr.mxu0 0.0
      %6660 = vmatpush1.msra.mxu0 0.0
      %6661 = vmatprep.subr.mxu0 0.0
      %6662 = vmatpush1.msra.mxu0 0.0
      %6663 = vmatprep.subr.mxu0 0.0
      %6664 = vmatpush1.msra.mxu0 0.0
      %6665 = vmatprep.subr.mxu0 0.0
      %6666 = vmatpush1.msra.mxu0 0.0
      %6667 = vmatprep.subr.mxu0 0.0
      %6668 = vmatpush1.msra.mxu0 0.0
      %6669 = vmatprep.subr.mxu0 0.0
      %6670 = vmatpush1.msra.mxu0 0.0
      %6671 = vmatprep.subr.mxu0 0.0
      %6672 = vmatpush1.msra.mxu0 0.0
      %6673 = vmatprep.mubr.f32.mxu0 0.0
      %6674 = vmatmul.mubr.f32.gmra.mrb[0].mxu0 %v6535
      %v6675 = vpop.f32.mrb[0].mxu0
      %v6676 = vadd.f32 0.0, %v6675
      %v6677 = vpop.f32.mrb[0].mxu0
      %v6678 = vadd.f32 0.0, %v6677
      %6679 = vdwg.mxu0
      %6680 = vmatprep.subr.mxu0 %v6548
      %6681 = vmatpush1.msra.mxu0 %v6547
      %6682 = vmatprep.subr.mxu0 %v6552
      %6683 = vmatpush1.msra.mxu0 %v6551
      %6684 = vmatprep.subr.mxu0 %v6556
      %6685 = vmatpush1.msra.mxu0 %v6555
      %6686 = vmatprep.subr.mxu0 %v6560
      %6687 = vmatpush1.msra.mxu0 %v6559
      %6688 = vmatprep.subr.mxu0 %v6564
      %6689 = vmatpush1.msra.mxu0 %v6563
      %6690 = vmatprep.subr.mxu0 %v6568
      %6691 = vmatpush1.msra.mxu0 %v6567
      %6692 = vmatprep.subr.mxu0 %v6572
      %6693 = vmatpush1.msra.mxu0 %v6571
      %6694 = vmatprep.subr.mxu0 %v6576
      %6695 = vmatpush1.msra.mxu0 %v6575
      %6696 = vmatprep.subr.mxu0 %v6580
      %6697 = vmatpush1.msra.mxu0 %v6579
      %6698 = vmatprep.subr.mxu0 %v6584
      %6699 = vmatpush1.msra.mxu0 %v6583
      %6700 = vmatprep.subr.mxu0 %v6588
      %6701 = vmatpush1.msra.mxu0 %v6587
      %6702 = vmatprep.subr.mxu0 %v6592
      %6703 = vmatpush1.msra.mxu0 %v6591
      %6704 = vmatprep.subr.mxu0 %v6596
      %6705 = vmatpush1.msra.mxu0 %v6595
      %6706 = vmatprep.subr.mxu0 %v6600
      %6707 = vmatpush1.msra.mxu0 %v6599
      %6708 = vmatprep.subr.mxu0 %v6604
      %6709 = vmatpush1.msra.mxu0 %v6603
      %6710 = vmatprep.subr.mxu0 %v6608
      %6711 = vmatpush1.msra.mxu0 %v6607
      %6712 = vmatprep.subr.mxu0 0.0
      %6713 = vmatpush1.msra.mxu0 0.0
      %6714 = vmatprep.subr.mxu0 0.0
      %6715 = vmatpush1.msra.mxu0 0.0
      %6716 = vmatprep.subr.mxu0 0.0
      %6717 = vmatpush1.msra.mxu0 0.0
      %6718 = vmatprep.subr.mxu0 0.0
      %6719 = vmatpush1.msra.mxu0 0.0
      %6720 = vmatprep.subr.mxu0 0.0
      %6721 = vmatpush1.msra.mxu0 0.0
      %6722 = vmatprep.subr.mxu0 0.0
      %6723 = vmatpush1.msra.mxu0 0.0
      %6724 = vmatprep.subr.mxu0 0.0
      %6725 = vmatpush1.msra.mxu0 0.0
      %6726 = vmatprep.subr.mxu0 0.0
      %6727 = vmatpush1.msra.mxu0 0.0
      %6728 = vmatprep.subr.mxu0 0.0
      %6729 = vmatpush1.msra.mxu0 0.0
      %6730 = vmatprep.subr.mxu0 0.0
      %6731 = vmatpush1.msra.mxu0 0.0
      %6732 = vmatprep.subr.mxu0 0.0
      %6733 = vmatpush1.msra.mxu0 0.0
      %6734 = vmatprep.subr.mxu0 0.0
      %6735 = vmatpush1.msra.mxu0 0.0
      %6736 = vmatprep.subr.mxu0 0.0
      %6737 = vmatpush1.msra.mxu0 0.0
      %6738 = vmatprep.subr.mxu0 0.0
      %6739 = vmatpush1.msra.mxu0 0.0
      %6740 = vmatprep.subr.mxu0 0.0
      %6741 = vmatpush1.msra.mxu0 0.0
      %6742 = vmatprep.subr.mxu0 0.0
      %6743 = vmatpush1.msra.mxu0 0.0
      %6744 = vmatprep.mubr.f32.mxu0 0.0
      %6745 = vmatmul.mubr.f32.gmra.mrb[0].mxu0 %v6535
      %v6746 = vpop.f32.mrb[0].mxu0
      %v6747 = vadd.f32 0.0, %v6746
      %v6748 = vpop.f32.mrb[0].mxu0
      %v6749 = vadd.f32 0.0, %v6748
      %6750 = vdwg.mxu0
      %v6751 = vadd.f32 %v6541, %v6676
      %v6752 = vadd.f32 %v6542, %v6678
      %v6753 = vadd.f32 %v6543, %v6747
      %v6754 = vadd.f32 %v6544, %v6749
      %v6755 = vtanh.pop %v6751
      %v6756 = vtanh.pop %v6752
      %v6757 = vtanh.pop %v6753
      %v6758 = vtanh.pop %v6754
      %v6759 = vxor.u32 %v6751, 2147483648
      %v6760 = vxor.u32 %v6752, 2147483648
      %v6761 = vxor.u32 %v6753, 2147483648
      %v6762 = vxor.u32 %v6754, 2147483648
      %v6763 = vmul.f32 %v6759, 1.442695
      %v6764 = vpow.pop %v6763
      %v6765 = vmul.f32 %v6760, 1.442695
      %v6766 = vpow.pop %v6765
      %v6767 = vmul.f32 %v6761, 1.442695
      %v6768 = vpow.pop %v6767
      %v6769 = vmul.f32 %v6762, 1.442695
      %v6770 = vpow.pop %v6769
      %v6771 = vadd.f32 %v6764, 1.0
      %v6772 = vadd.f32 %v6766, 1.0
      %v6773 = vadd.f32 %v6768, 1.0
      %v6774 = vadd.f32 %v6770, 1.0
      %v6775 = vrcp.pop %v6771
      %v6776 = vmul.f32 1.0, %v6775
      %v6777 = vrcp.pop %v6772
      %v6778 = vmul.f32 1.0, %v6777
      %v6779 = vrcp.pop %v6773
      %v6780 = vmul.f32 1.0, %v6779
      %v6781 = vrcp.pop %v6774
      %v6782 = vmul.f32 1.0, %v6781
      %v6783 = vsel %vm144, %v6755, %v6776
      %v6784 = vsel %vm145, %v6756, %v6778
      %v6785 = vsel %vm146, %v6757, %v6780
      %v6786 = vsel %vm147, %v6758, %v6782
      %v6787 = vmul.f32 %v6784, %v6533
      %v6788 = vmul.f32 %v6783, %v6785
      %v6789 = vadd.f32 %v6787, %v6788
      %v6790 = vtanh.pop %v6789
      %v6791 = vmul.f32 %v6786, %v6790
      %s6792 = scalar_lea.vmem [#allocation4], 40
      %6793 = vst [vmem:[%s6792] sm:$0xff] %v6791
      %s6794 = smul.u32 6, 4
      %s6795 = smul.addr %s6794, 8
      %s6796 = scalar_lea.vmem [#allocation17], %s6795
      %v6797 = vld [vmem:[%s6796] sm:$0xff]
      %v6798 = vld [vmem:[%s6796 + $0x8] sm:$0xff]
      %v6799 = vld [vmem:[%s6796 + $0x10] sm:$0xff]
      %v6800 = vld [vmem:[%s6796 + $0x18] sm:$0xff]
      %v6801 = vld [vmem:[#allocation12] sm:$0xff]
      %v6802 = vld [vmem:[#allocation12 + $0x8] sm:$0xff]
      %v6803 = vld [vmem:[#allocation12 + $0x10] sm:$0xff]
      %v6804 = vld [vmem:[#allocation12 + $0x18] sm:$0xff]
      %v6805 = vld [vmem:[#allocation12 + $0x20] sm:$0xff]
      %v6806 = vld [vmem:[#allocation12 + $0x28] sm:$0xff]
      %v6807 = vld [vmem:[#allocation12 + $0x30] sm:$0xff]
      %v6808 = vld [vmem:[#allocation12 + $0x38] sm:$0xff]
      %v6809 = vld [vmem:[#allocation12 + $0x40] sm:$0xff]
      %v6810 = vld [vmem:[#allocation12 + $0x48] sm:$0xff]
      %v6811 = vld [vmem:[#allocation12 + $0x50] sm:$0xff]
      %v6812 = vld [vmem:[#allocation12 + $0x58] sm:$0xff]
      %v6813 = vld [vmem:[#allocation12 + $0x60] sm:$0xff]
      %v6814 = vld [vmem:[#allocation12 + $0x68] sm:$0xff]
      %v6815 = vld [vmem:[#allocation12 + $0x70] sm:$0xff]
      %v6816 = vld [vmem:[#allocation12 + $0x78] sm:$0xff]
      %v6817 = vld [vmem:[#allocation12 + $0x80] sm:$0xff]
      %v6818 = vld [vmem:[#allocation12 + $0x88] sm:$0xff]
      %v6819 = vld [vmem:[#allocation12 + $0x90] sm:$0xff]
      %v6820 = vld [vmem:[#allocation12 + $0x98] sm:$0xff]
      %v6821 = vld [vmem:[#allocation12 + $0xa0] sm:$0xff]
      %v6822 = vld [vmem:[#allocation12 + $0xa8] sm:$0xff]
      %v6823 = vld [vmem:[#allocation12 + $0xb0] sm:$0xff]
      %v6824 = vld [vmem:[#allocation12 + $0xb8] sm:$0xff]
      %v6825 = vld [vmem:[#allocation12 + $0xc0] sm:$0xff]
      %v6826 = vld [vmem:[#allocation12 + $0xc8] sm:$0xff]
      %v6827 = vld [vmem:[#allocation12 + $0xd0] sm:$0xff]
      %v6828 = vld [vmem:[#allocation12 + $0xd8] sm:$0xff]
      %v6829 = vld [vmem:[#allocation12 + $0xe0] sm:$0xff]
      %v6830 = vld [vmem:[#allocation12 + $0xe8] sm:$0xff]
      %v6831 = vld [vmem:[#allocation12 + $0xf0] sm:$0xff]
      %v6832 = vld [vmem:[#allocation12 + $0xf8] sm:$0xff]
      %v6833 = vld [vmem:[#allocation12 + $0x100] sm:$0xff]
      %v6834 = vld [vmem:[#allocation12 + $0x108] sm:$0xff]
      %v6835 = vld [vmem:[#allocation12 + $0x110] sm:$0xff]
      %v6836 = vld [vmem:[#allocation12 + $0x118] sm:$0xff]
      %v6837 = vld [vmem:[#allocation12 + $0x120] sm:$0xff]
      %v6838 = vld [vmem:[#allocation12 + $0x128] sm:$0xff]
      %v6839 = vld [vmem:[#allocation12 + $0x130] sm:$0xff]
      %v6840 = vld [vmem:[#allocation12 + $0x138] sm:$0xff]
      %v6841 = vld [vmem:[#allocation12 + $0x140] sm:$0xff]
      %v6842 = vld [vmem:[#allocation12 + $0x148] sm:$0xff]
      %v6843 = vld [vmem:[#allocation12 + $0x150] sm:$0xff]
      %v6844 = vld [vmem:[#allocation12 + $0x158] sm:$0xff]
      %v6845 = vld [vmem:[#allocation12 + $0x160] sm:$0xff]
      %v6846 = vld [vmem:[#allocation12 + $0x168] sm:$0xff]
      %v6847 = vld [vmem:[#allocation12 + $0x170] sm:$0xff]
      %v6848 = vld [vmem:[#allocation12 + $0x178] sm:$0xff]
      %v6849 = vld [vmem:[#allocation12 + $0x180] sm:$0xff]
      %v6850 = vld [vmem:[#allocation12 + $0x188] sm:$0xff]
      %v6851 = vld [vmem:[#allocation12 + $0x190] sm:$0xff]
      %v6852 = vld [vmem:[#allocation12 + $0x198] sm:$0xff]
      %v6853 = vld [vmem:[#allocation12 + $0x1a0] sm:$0xff]
      %v6854 = vld [vmem:[#allocation12 + $0x1a8] sm:$0xff]
      %v6855 = vld [vmem:[#allocation12 + $0x1b0] sm:$0xff]
      %v6856 = vld [vmem:[#allocation12 + $0x1b8] sm:$0xff]
      %v6857 = vld [vmem:[#allocation12 + $0x1c0] sm:$0xff]
      %v6858 = vld [vmem:[#allocation12 + $0x1c8] sm:$0xff]
      %v6859 = vld [vmem:[#allocation12 + $0x1d0] sm:$0xff]
      %v6860 = vld [vmem:[#allocation12 + $0x1d8] sm:$0xff]
      %v6861 = vld [vmem:[#allocation12 + $0x1e0] sm:$0xff]
      %v6862 = vld [vmem:[#allocation12 + $0x1e8] sm:$0xff]
      %v6863 = vld [vmem:[#allocation12 + $0x1f0] sm:$0xff]
      %v6864 = vld [vmem:[#allocation12 + $0x1f8] sm:$0xff]
      %6865 = vmatprep.subr.mxu0 %v6802
      %6866 = vmatpush1.msra.mxu0 %v6801
      %6867 = vmatprep.subr.mxu0 %v6806
      %6868 = vmatpush1.msra.mxu0 %v6805
      %6869 = vmatprep.subr.mxu0 %v6810
      %6870 = vmatpush1.msra.mxu0 %v6809
      %6871 = vmatprep.subr.mxu0 %v6814
      %6872 = vmatpush1.msra.mxu0 %v6813
      %6873 = vmatprep.subr.mxu0 %v6818
      %6874 = vmatpush1.msra.mxu0 %v6817
      %6875 = vmatprep.subr.mxu0 %v6822
      %6876 = vmatpush1.msra.mxu0 %v6821
      %6877 = vmatprep.subr.mxu0 %v6826
      %6878 = vmatpush1.msra.mxu0 %v6825
      %6879 = vmatprep.subr.mxu0 %v6830
      %6880 = vmatpush1.msra.mxu0 %v6829
      %6881 = vmatprep.subr.mxu0 %v6834
      %6882 = vmatpush1.msra.mxu0 %v6833
      %6883 = vmatprep.subr.mxu0 %v6838
      %6884 = vmatpush1.msra.mxu0 %v6837
      %6885 = vmatprep.subr.mxu0 %v6842
      %6886 = vmatpush1.msra.mxu0 %v6841
      %6887 = vmatprep.subr.mxu0 %v6846
      %6888 = vmatpush1.msra.mxu0 %v6845
      %6889 = vmatprep.subr.mxu0 %v6850
      %6890 = vmatpush1.msra.mxu0 %v6849
      %6891 = vmatprep.subr.mxu0 %v6854
      %6892 = vmatpush1.msra.mxu0 %v6853
      %6893 = vmatprep.subr.mxu0 %v6858
      %6894 = vmatpush1.msra.mxu0 %v6857
      %6895 = vmatprep.subr.mxu0 %v6862
      %6896 = vmatpush1.msra.mxu0 %v6861
      %6897 = vmatprep.subr.mxu0 0.0
      %6898 = vmatpush1.msra.mxu0 0.0
      %6899 = vmatprep.subr.mxu0 0.0
      %6900 = vmatpush1.msra.mxu0 0.0
      %6901 = vmatprep.subr.mxu0 0.0
      %6902 = vmatpush1.msra.mxu0 0.0
      %6903 = vmatprep.subr.mxu0 0.0
      %6904 = vmatpush1.msra.mxu0 0.0
      %6905 = vmatprep.subr.mxu0 0.0
      %6906 = vmatpush1.msra.mxu0 0.0
      %6907 = vmatprep.subr.mxu0 0.0
      %6908 = vmatpush1.msra.mxu0 0.0
      %6909 = vmatprep.subr.mxu0 0.0
      %6910 = vmatpush1.msra.mxu0 0.0
      %6911 = vmatprep.subr.mxu0 0.0
      %6912 = vmatpush1.msra.mxu0 0.0
      %6913 = vmatprep.subr.mxu0 0.0
      %6914 = vmatpush1.msra.mxu0 0.0
      %6915 = vmatprep.subr.mxu0 0.0
      %6916 = vmatpush1.msra.mxu0 0.0
      %6917 = vmatprep.subr.mxu0 0.0
      %6918 = vmatpush1.msra.mxu0 0.0
      %6919 = vmatprep.subr.mxu0 0.0
      %6920 = vmatpush1.msra.mxu0 0.0
      %6921 = vmatprep.subr.mxu0 0.0
      %6922 = vmatpush1.msra.mxu0 0.0
      %6923 = vmatprep.subr.mxu0 0.0
      %6924 = vmatpush1.msra.mxu0 0.0
      %6925 = vmatprep.subr.mxu0 0.0
      %6926 = vmatpush1.msra.mxu0 0.0
      %6927 = vmatprep.subr.mxu0 0.0
      %6928 = vmatpush1.msra.mxu0 0.0
      %6929 = vmatprep.mubr.f32.mxu0 0.0
      %6930 = vmatmul.mubr.f32.gmra.mrb[0].mxu0 %v6791
      %v6931 = vpop.f32.mrb[0].mxu0
      %v6932 = vadd.f32 0.0, %v6931
      %v6933 = vpop.f32.mrb[0].mxu0
      %v6934 = vadd.f32 0.0, %v6933
      %6935 = vdwg.mxu0
      %6936 = vmatprep.subr.mxu0 %v6804
      %6937 = vmatpush1.msra.mxu0 %v6803
      %6938 = vmatprep.subr.mxu0 %v6808
      %6939 = vmatpush1.msra.mxu0 %v6807
      %6940 = vmatprep.subr.mxu0 %v6812
      %6941 = vmatpush1.msra.mxu0 %v6811
      %6942 = vmatprep.subr.mxu0 %v6816
      %6943 = vmatpush1.msra.mxu0 %v6815
      %6944 = vmatprep.subr.mxu0 %v6820
      %6945 = vmatpush1.msra.mxu0 %v6819
      %6946 = vmatprep.subr.mxu0 %v6824
      %6947 = vmatpush1.msra.mxu0 %v6823
      %6948 = vmatprep.subr.mxu0 %v6828
      %6949 = vmatpush1.msra.mxu0 %v6827
      %6950 = vmatprep.subr.mxu0 %v6832
      %6951 = vmatpush1.msra.mxu0 %v6831
      %6952 = vmatprep.subr.mxu0 %v6836
      %6953 = vmatpush1.msra.mxu0 %v6835
      %6954 = vmatprep.subr.mxu0 %v6840
      %6955 = vmatpush1.msra.mxu0 %v6839
      %6956 = vmatprep.subr.mxu0 %v6844
      %6957 = vmatpush1.msra.mxu0 %v6843
      %6958 = vmatprep.subr.mxu0 %v6848
      %6959 = vmatpush1.msra.mxu0 %v6847
      %6960 = vmatprep.subr.mxu0 %v6852
      %6961 = vmatpush1.msra.mxu0 %v6851
      %6962 = vmatprep.subr.mxu0 %v6856
      %6963 = vmatpush1.msra.mxu0 %v6855
      %6964 = vmatprep.subr.mxu0 %v6860
      %6965 = vmatpush1.msra.mxu0 %v6859
      %6966 = vmatprep.subr.mxu0 %v6864
      %6967 = vmatpush1.msra.mxu0 %v6863
      %6968 = vmatprep.subr.mxu0 0.0
      %6969 = vmatpush1.msra.mxu0 0.0
      %6970 = vmatprep.subr.mxu0 0.0
      %6971 = vmatpush1.msra.mxu0 0.0
      %6972 = vmatprep.subr.mxu0 0.0
      %6973 = vmatpush1.msra.mxu0 0.0
      %6974 = vmatprep.subr.mxu0 0.0
      %6975 = vmatpush1.msra.mxu0 0.0
      %6976 = vmatprep.subr.mxu0 0.0
      %6977 = vmatpush1.msra.mxu0 0.0
      %6978 = vmatprep.subr.mxu0 0.0
      %6979 = vmatpush1.msra.mxu0 0.0
      %6980 = vmatprep.subr.mxu0 0.0
      %6981 = vmatpush1.msra.mxu0 0.0
      %6982 = vmatprep.subr.mxu0 0.0
      %6983 = vmatpush1.msra.mxu0 0.0
      %6984 = vmatprep.subr.mxu0 0.0
      %6985 = vmatpush1.msra.mxu0 0.0
      %6986 = vmatprep.subr.mxu0 0.0
      %6987 = vmatpush1.msra.mxu0 0.0
      %6988 = vmatprep.subr.mxu0 0.0
      %6989 = vmatpush1.msra.mxu0 0.0
      %6990 = vmatprep.subr.mxu0 0.0
      %6991 = vmatpush1.msra.mxu0 0.0
      %6992 = vmatprep.subr.mxu0 0.0
      %6993 = vmatpush1.msra.mxu0 0.0
      %6994 = vmatprep.subr.mxu0 0.0
      %6995 = vmatpush1.msra.mxu0 0.0
      %6996 = vmatprep.subr.mxu0 0.0
      %6997 = vmatpush1.msra.mxu0 0.0
      %6998 = vmatprep.subr.mxu0 0.0
      %6999 = vmatpush1.msra.mxu0 0.0
      %7000 = vmatprep.mubr.f32.mxu0 0.0
      %7001 = vmatmul.mubr.f32.gmra.mrb[0].mxu0 %v6791
      %v7002 = vpop.f32.mrb[0].mxu0
      %v7003 = vadd.f32 0.0, %v7002
      %v7004 = vpop.f32.mrb[0].mxu0
      %v7005 = vadd.f32 0.0, %v7004
      %7006 = vdwg.mxu0
      %v7007 = vadd.f32 %v6797, %v6932
      %v7008 = vadd.f32 %v6798, %v6934
      %v7009 = vadd.f32 %v6799, %v7003
      %v7010 = vadd.f32 %v6800, %v7005
      %v7011 = vtanh.pop %v7007
      %v7012 = vtanh.pop %v7008
      %v7013 = vtanh.pop %v7009
      %v7014 = vtanh.pop %v7010
      %v7015 = vxor.u32 %v7007, 2147483648
      %v7016 = vxor.u32 %v7008, 2147483648
      %v7017 = vxor.u32 %v7009, 2147483648
      %v7018 = vxor.u32 %v7010, 2147483648
      %v7019 = vmul.f32 %v7015, 1.442695
      %v7020 = vpow.pop %v7019
      %v7021 = vmul.f32 %v7016, 1.442695
      %v7022 = vpow.pop %v7021
      %v7023 = vmul.f32 %v7017, 1.442695
      %v7024 = vpow.pop %v7023
      %v7025 = vmul.f32 %v7018, 1.442695
      %v7026 = vpow.pop %v7025
      %v7027 = vadd.f32 %v7020, 1.0
      %v7028 = vadd.f32 %v7022, 1.0
      %v7029 = vadd.f32 %v7024, 1.0
      %v7030 = vadd.f32 %v7026, 1.0
      %v7031 = vrcp.pop %v7027
      %v7032 = vmul.f32 1.0, %v7031
      %v7033 = vrcp.pop %v7028
      %v7034 = vmul.f32 1.0, %v7033
      %v7035 = vrcp.pop %v7029
      %v7036 = vmul.f32 1.0, %v7035
      %v7037 = vrcp.pop %v7030
      %v7038 = vmul.f32 1.0, %v7037
      %v7039 = vsel %vm144, %v7011, %v7032
      %v7040 = vsel %vm145, %v7012, %v7034
      %v7041 = vsel %vm146, %v7013, %v7036
      %v7042 = vsel %vm147, %v7014, %v7038
      %v7043 = vmul.f32 %v7040, %v6789
      %v7044 = vmul.f32 %v7039, %v7041
      %v7045 = vadd.f32 %v7043, %v7044
      %v7046 = vtanh.pop %v7045
      %v7047 = vmul.f32 %v7042, %v7046
      %s7048 = scalar_lea.vmem [#allocation4], 48
      %7049 = vst [vmem:[%s7048] sm:$0xff] %v7047
      %s7050 = smul.u32 7, 4
      %s7051 = smul.addr %s7050, 8
      %s7052 = scalar_lea.vmem [#allocation17], %s7051
      %v7053 = vld [vmem:[%s7052] sm:$0xff]
      %v7054 = vld [vmem:[%s7052 + $0x8] sm:$0xff]
      %v7055 = vld [vmem:[%s7052 + $0x10] sm:$0xff]
      %v7056 = vld [vmem:[%s7052 + $0x18] sm:$0xff]
      %v7057 = vld [vmem:[#allocation12] sm:$0xff]
      %v7058 = vld [vmem:[#allocation12 + $0x8] sm:$0xff]
      %v7059 = vld [vmem:[#allocation12 + $0x10] sm:$0xff]
      %v7060 = vld [vmem:[#allocation12 + $0x18] sm:$0xff]
      %v7061 = vld [vmem:[#allocation12 + $0x20] sm:$0xff]
      %v7062 = vld [vmem:[#allocation12 + $0x28] sm:$0xff]
      %v7063 = vld [vmem:[#allocation12 + $0x30] sm:$0xff]
      %v7064 = vld [vmem:[#allocation12 + $0x38] sm:$0xff]
      %v7065 = vld [vmem:[#allocation12 + $0x40] sm:$0xff]
      %v7066 = vld [vmem:[#allocation12 + $0x48] sm:$0xff]
      %v7067 = vld [vmem:[#allocation12 + $0x50] sm:$0xff]
      %v7068 = vld [vmem:[#allocation12 + $0x58] sm:$0xff]
      %v7069 = vld [vmem:[#allocation12 + $0x60] sm:$0xff]
      %v7070 = vld [vmem:[#allocation12 + $0x68] sm:$0xff]
      %v7071 = vld [vmem:[#allocation12 + $0x70] sm:$0xff]
      %v7072 = vld [vmem:[#allocation12 + $0x78] sm:$0xff]
      %v7073 = vld [vmem:[#allocation12 + $0x80] sm:$0xff]
      %v7074 = vld [vmem:[#allocation12 + $0x88] sm:$0xff]
      %v7075 = vld [vmem:[#allocation12 + $0x90] sm:$0xff]
      %v7076 = vld [vmem:[#allocation12 + $0x98] sm:$0xff]
      %v7077 = vld [vmem:[#allocation12 + $0xa0] sm:$0xff]
      %v7078 = vld [vmem:[#allocation12 + $0xa8] sm:$0xff]
      %v7079 = vld [vmem:[#allocation12 + $0xb0] sm:$0xff]
      %v7080 = vld [vmem:[#allocation12 + $0xb8] sm:$0xff]
      %v7081 = vld [vmem:[#allocation12 + $0xc0] sm:$0xff]
      %v7082 = vld [vmem:[#allocation12 + $0xc8] sm:$0xff]
      %v7083 = vld [vmem:[#allocation12 + $0xd0] sm:$0xff]
      %v7084 = vld [vmem:[#allocation12 + $0xd8] sm:$0xff]
      %v7085 = vld [vmem:[#allocation12 + $0xe0] sm:$0xff]
      %v7086 = vld [vmem:[#allocation12 + $0xe8] sm:$0xff]
      %v7087 = vld [vmem:[#allocation12 + $0xf0] sm:$0xff]
      %v7088 = vld [vmem:[#allocation12 + $0xf8] sm:$0xff]
      %v7089 = vld [vmem:[#allocation12 + $0x100] sm:$0xff]
      %v7090 = vld [vmem:[#allocation12 + $0x108] sm:$0xff]
      %v7091 = vld [vmem:[#allocation12 + $0x110] sm:$0xff]
      %v7092 = vld [vmem:[#allocation12 + $0x118] sm:$0xff]
      %v7093 = vld [vmem:[#allocation12 + $0x120] sm:$0xff]
      %v7094 = vld [vmem:[#allocation12 + $0x128] sm:$0xff]
      %v7095 = vld [vmem:[#allocation12 + $0x130] sm:$0xff]
      %v7096 = vld [vmem:[#allocation12 + $0x138] sm:$0xff]
      %v7097 = vld [vmem:[#allocation12 + $0x140] sm:$0xff]
      %v7098 = vld [vmem:[#allocation12 + $0x148] sm:$0xff]
      %v7099 = vld [vmem:[#allocation12 + $0x150] sm:$0xff]
      %v7100 = vld [vmem:[#allocation12 + $0x158] sm:$0xff]
      %v7101 = vld [vmem:[#allocation12 + $0x160] sm:$0xff]
      %v7102 = vld [vmem:[#allocation12 + $0x168] sm:$0xff]
      %v7103 = vld [vmem:[#allocation12 + $0x170] sm:$0xff]
      %v7104 = vld [vmem:[#allocation12 + $0x178] sm:$0xff]
      %v7105 = vld [vmem:[#allocation12 + $0x180] sm:$0xff]
      %v7106 = vld [vmem:[#allocation12 + $0x188] sm:$0xff]
      %v7107 = vld [vmem:[#allocation12 + $0x190] sm:$0xff]
      %v7108 = vld [vmem:[#allocation12 + $0x198] sm:$0xff]
      %v7109 = vld [vmem:[#allocation12 + $0x1a0] sm:$0xff]
      %v7110 = vld [vmem:[#allocation12 + $0x1a8] sm:$0xff]
      %v7111 = vld [vmem:[#allocation12 + $0x1b0] sm:$0xff]
      %v7112 = vld [vmem:[#allocation12 + $0x1b8] sm:$0xff]
      %v7113 = vld [vmem:[#allocation12 + $0x1c0] sm:$0xff]
      %v7114 = vld [vmem:[#allocation12 + $0x1c8] sm:$0xff]
      %v7115 = vld [vmem:[#allocation12 + $0x1d0] sm:$0xff]
      %v7116 = vld [vmem:[#allocation12 + $0x1d8] sm:$0xff]
      %v7117 = vld [vmem:[#allocation12 + $0x1e0] sm:$0xff]
      %v7118 = vld [vmem:[#allocation12 + $0x1e8] sm:$0xff]
      %v7119 = vld [vmem:[#allocation12 + $0x1f0] sm:$0xff]
      %v7120 = vld [vmem:[#allocation12 + $0x1f8] sm:$0xff]
      %7121 = vmatprep.subr.mxu0 %v7058
      %7122 = vmatpush1.msra.mxu0 %v7057
      %7123 = vmatprep.subr.mxu0 %v7062
      %7124 = vmatpush1.msra.mxu0 %v7061
      %7125 = vmatprep.subr.mxu0 %v7066
      %7126 = vmatpush1.msra.mxu0 %v7065
      %7127 = vmatprep.subr.mxu0 %v7070
      %7128 = vmatpush1.msra.mxu0 %v7069
      %7129 = vmatprep.subr.mxu0 %v7074
      %7130 = vmatpush1.msra.mxu0 %v7073
      %7131 = vmatprep.subr.mxu0 %v7078
      %7132 = vmatpush1.msra.mxu0 %v7077
      %7133 = vmatprep.subr.mxu0 %v7082
      %7134 = vmatpush1.msra.mxu0 %v7081
      %7135 = vmatprep.subr.mxu0 %v7086
      %7136 = vmatpush1.msra.mxu0 %v7085
      %7137 = vmatprep.subr.mxu0 %v7090
      %7138 = vmatpush1.msra.mxu0 %v7089
      %7139 = vmatprep.subr.mxu0 %v7094
      %7140 = vmatpush1.msra.mxu0 %v7093
      %7141 = vmatprep.subr.mxu0 %v7098
      %7142 = vmatpush1.msra.mxu0 %v7097
      %7143 = vmatprep.subr.mxu0 %v7102
      %7144 = vmatpush1.msra.mxu0 %v7101
      %7145 = vmatprep.subr.mxu0 %v7106
      %7146 = vmatpush1.msra.mxu0 %v7105
      %7147 = vmatprep.subr.mxu0 %v7110
      %7148 = vmatpush1.msra.mxu0 %v7109
      %7149 = vmatprep.subr.mxu0 %v7114
      %7150 = vmatpush1.msra.mxu0 %v7113
      %7151 = vmatprep.subr.mxu0 %v7118
      %7152 = vmatpush1.msra.mxu0 %v7117
      %7153 = vmatprep.subr.mxu0 0.0
      %7154 = vmatpush1.msra.mxu0 0.0
      %7155 = vmatprep.subr.mxu0 0.0
      %7156 = vmatpush1.msra.mxu0 0.0
      %7157 = vmatprep.subr.mxu0 0.0
      %7158 = vmatpush1.msra.mxu0 0.0
      %7159 = vmatprep.subr.mxu0 0.0
      %7160 = vmatpush1.msra.mxu0 0.0
      %7161 = vmatprep.subr.mxu0 0.0
      %7162 = vmatpush1.msra.mxu0 0.0
      %7163 = vmatprep.subr.mxu0 0.0
      %7164 = vmatpush1.msra.mxu0 0.0
      %7165 = vmatprep.subr.mxu0 0.0
      %7166 = vmatpush1.msra.mxu0 0.0
      %7167 = vmatprep.subr.mxu0 0.0
      %7168 = vmatpush1.msra.mxu0 0.0
      %7169 = vmatprep.subr.mxu0 0.0
      %7170 = vmatpush1.msra.mxu0 0.0
      %7171 = vmatprep.subr.mxu0 0.0
      %7172 = vmatpush1.msra.mxu0 0.0
      %7173 = vmatprep.subr.mxu0 0.0
      %7174 = vmatpush1.msra.mxu0 0.0
      %7175 = vmatprep.subr.mxu0 0.0
      %7176 = vmatpush1.msra.mxu0 0.0
      %7177 = vmatprep.subr.mxu0 0.0
      %7178 = vmatpush1.msra.mxu0 0.0
      %7179 = vmatprep.subr.mxu0 0.0
      %7180 = vmatpush1.msra.mxu0 0.0
      %7181 = vmatprep.subr.mxu0 0.0
      %7182 = vmatpush1.msra.mxu0 0.0
      %7183 = vmatprep.subr.mxu0 0.0
      %7184 = vmatpush1.msra.mxu0 0.0
      %7185 = vmatprep.mubr.f32.mxu0 0.0
      %7186 = vmatmul.mubr.f32.gmra.mrb[0].mxu0 %v7047
      %v7187 = vpop.f32.mrb[0].mxu0
      %v7188 = vadd.f32 0.0, %v7187
      %v7189 = vpop.f32.mrb[0].mxu0
      %v7190 = vadd.f32 0.0, %v7189
      %7191 = vdwg.mxu0
      %7192 = vmatprep.subr.mxu0 %v7060
      %7193 = vmatpush1.msra.mxu0 %v7059
      %7194 = vmatprep.subr.mxu0 %v7064
      %7195 = vmatpush1.msra.mxu0 %v7063
      %7196 = vmatprep.subr.mxu0 %v7068
      %7197 = vmatpush1.msra.mxu0 %v7067
      %7198 = vmatprep.subr.mxu0 %v7072
      %7199 = vmatpush1.msra.mxu0 %v7071
      %7200 = vmatprep.subr.mxu0 %v7076
      %7201 = vmatpush1.msra.mxu0 %v7075
      %7202 = vmatprep.subr.mxu0 %v7080
      %7203 = vmatpush1.msra.mxu0 %v7079
      %7204 = vmatprep.subr.mxu0 %v7084
      %7205 = vmatpush1.msra.mxu0 %v7083
      %7206 = vmatprep.subr.mxu0 %v7088
      %7207 = vmatpush1.msra.mxu0 %v7087
      %7208 = vmatprep.subr.mxu0 %v7092
      %7209 = vmatpush1.msra.mxu0 %v7091
      %7210 = vmatprep.subr.mxu0 %v7096
      %7211 = vmatpush1.msra.mxu0 %v7095
      %7212 = vmatprep.subr.mxu0 %v7100
      %7213 = vmatpush1.msra.mxu0 %v7099
      %7214 = vmatprep.subr.mxu0 %v7104
      %7215 = vmatpush1.msra.mxu0 %v7103
      %7216 = vmatprep.subr.mxu0 %v7108
      %7217 = vmatpush1.msra.mxu0 %v7107
      %7218 = vmatprep.subr.mxu0 %v7112
      %7219 = vmatpush1.msra.mxu0 %v7111
      %7220 = vmatprep.subr.mxu0 %v7116
      %7221 = vmatpush1.msra.mxu0 %v7115
      %7222 = vmatprep.subr.mxu0 %v7120
      %7223 = vmatpush1.msra.mxu0 %v7119
      %7224 = vmatprep.subr.mxu0 0.0
      %7225 = vmatpush1.msra.mxu0 0.0
      %7226 = vmatprep.subr.mxu0 0.0
      %7227 = vmatpush1.msra.mxu0 0.0
      %7228 = vmatprep.subr.mxu0 0.0
      %7229 = vmatpush1.msra.mxu0 0.0
      %7230 = vmatprep.subr.mxu0 0.0
      %7231 = vmatpush1.msra.mxu0 0.0
      %7232 = vmatprep.subr.mxu0 0.0
      %7233 = vmatpush1.msra.mxu0 0.0
      %7234 = vmatprep.subr.mxu0 0.0
      %7235 = vmatpush1.msra.mxu0 0.0
      %7236 = vmatprep.subr.mxu0 0.0
      %7237 = vmatpush1.msra.mxu0 0.0
      %7238 = vmatprep.subr.mxu0 0.0
      %7239 = vmatpush1.msra.mxu0 0.0
      %7240 = vmatprep.subr.mxu0 0.0
      %7241 = vmatpush1.msra.mxu0 0.0
      %7242 = vmatprep.subr.mxu0 0.0
      %7243 = vmatpush1.msra.mxu0 0.0
      %7244 = vmatprep.subr.mxu0 0.0
      %7245 = vmatpush1.msra.mxu0 0.0
      %7246 = vmatprep.subr.mxu0 0.0
      %7247 = vmatpush1.msra.mxu0 0.0
      %7248 = vmatprep.subr.mxu0 0.0
      %7249 = vmatpush1.msra.mxu0 0.0
      %7250 = vmatprep.subr.mxu0 0.0
      %7251 = vmatpush1.msra.mxu0 0.0
      %7252 = vmatprep.subr.mxu0 0.0
      %7253 = vmatpush1.msra.mxu0 0.0
      %7254 = vmatprep.subr.mxu0 0.0
      %7255 = vmatpush1.msra.mxu0 0.0
      %7256 = vmatprep.mubr.f32.mxu0 0.0
      %7257 = vmatmul.mubr.f32.gmra.mrb[0].mxu0 %v7047
      %v7258 = vpop.f32.mrb[0].mxu0
      %v7259 = vadd.f32 0.0, %v7258
      %v7260 = vpop.f32.mrb[0].mxu0
      %v7261 = vadd.f32 0.0, %v7260
      %7262 = vdwg.mxu0
      %v7263 = vadd.f32 %v7053, %v7188
      %v7264 = vadd.f32 %v7054, %v7190
      %v7265 = vadd.f32 %v7055, %v7259
      %v7266 = vadd.f32 %v7056, %v7261
      %v7267 = vtanh.pop %v7263
      %v7268 = vtanh.pop %v7264
      %v7269 = vtanh.pop %v7265
      %v7270 = vtanh.pop %v7266
      %v7271 = vxor.u32 %v7263, 2147483648
      %v7272 = vxor.u32 %v7264, 2147483648
      %v7273 = vxor.u32 %v7265, 2147483648
      %v7274 = vxor.u32 %v7266, 2147483648
      %v7275 = vmul.f32 %v7271, 1.442695
      %v7276 = vpow.pop %v7275
      %v7277 = vmul.f32 %v7272, 1.442695
      %v7278 = vpow.pop %v7277
      %v7279 = vmul.f32 %v7273, 1.442695
      %v7280 = vpow.pop %v7279
      %v7281 = vmul.f32 %v7274, 1.442695
      %v7282 = vpow.pop %v7281
      %v7283 = vadd.f32 %v7276, 1.0
      %v7284 = vadd.f32 %v7278, 1.0
      %v7285 = vadd.f32 %v7280, 1.0
      %v7286 = vadd.f32 %v7282, 1.0
      %v7287 = vrcp.pop %v7283
      %v7288 = vmul.f32 1.0, %v7287
      %v7289 = vrcp.pop %v7284
      %v7290 = vmul.f32 1.0, %v7289
      %v7291 = vrcp.pop %v7285
      %v7292 = vmul.f32 1.0, %v7291
      %v7293 = vrcp.pop %v7286
      %v7294 = vmul.f32 1.0, %v7293
      %v7295 = vsel %vm144, %v7267, %v7288
      %v7296 = vsel %vm145, %v7268, %v7290
      %v7297 = vsel %vm146, %v7269, %v7292
      %v7298 = vsel %vm147, %v7270, %v7294
      %v7299 = vmul.f32 %v7296, %v7045
      %v7300 = vmul.f32 %v7295, %v7297
      %v7301 = vadd.f32 %v7299, %v7300
      %v7302 = vtanh.pop %v7301
      %v7303 = vmul.f32 %v7298, %v7302
      %s7304 = scalar_lea.vmem [#allocation4], 56
      %7305 = vst [vmem:[%s7304] sm:$0xff] %v7303
    %v7306 = vld [vmem:[#allocation4] sm:$0xff]
    %v7307 = vld [vmem:[#allocation4 + $0x8] sm:$0xff]
    %v7308 = vld [vmem:[#allocation4 + $0x10] sm:$0xff]
    %v7309 = vld [vmem:[#allocation4 + $0x18] sm:$0xff]
    %v7310 = vld [vmem:[#allocation4 + $0x20] sm:$0xff]
    %v7311 = vld [vmem:[#allocation4 + $0x28] sm:$0xff]
    %v7312 = vld [vmem:[#allocation4 + $0x30] sm:$0xff]
    %v7313 = vld [vmem:[#allocation4 + $0x38] sm:$0xff]
    %v7314 = vld [vmem:[#allocation13] sm:$0xff]
    %v7315 = vld [vmem:[#allocation13 + $0x8] sm:$0xff]
    %v7316 = vld [vmem:[#allocation13 + $0x10] sm:$0xff]
    %v7317 = vld [vmem:[#allocation13 + $0x18] sm:$0xff]
    %v7318 = vld [vmem:[#allocation13 + $0x20] sm:$0xff]
    %v7319 = vld [vmem:[#allocation13 + $0x28] sm:$0xff]
    %v7320 = vld [vmem:[#allocation13 + $0x30] sm:$0xff]
    %v7321 = vld [vmem:[#allocation13 + $0x38] sm:$0xff]
    %v7322 = vld [vmem:[#allocation13 + $0x40] sm:$0xff]
    %v7323 = vld [vmem:[#allocation13 + $0x48] sm:$0xff]
    %v7324 = vld [vmem:[#allocation13 + $0x50] sm:$0xff]
    %v7325 = vld [vmem:[#allocation13 + $0x58] sm:$0xff]
    %v7326 = vld [vmem:[#allocation13 + $0x60] sm:$0xff]
    %v7327 = vld [vmem:[#allocation13 + $0x68] sm:$0xff]
    %v7328 = vld [vmem:[#allocation13 + $0x70] sm:$0xff]
    %v7329 = vld [vmem:[#allocation13 + $0x78] sm:$0xff]
    %v7330 = vld [vmem:[%s11] sm:$0x1]
    %v7332 = vlaneseq
    %v7333 = vshrl.u32 %v7332, 7
    %v7334 = vsub.s32 0, %v7333
    %v7335 = vrot.slane %v7330, %v7334
    %7337 = vmatprep.subr.mxu0 0.0
    %7338 = vmatpush1.msra.mxu0 %v7314
    %7339 = vmatprep.subr.mxu0 0.0
    %7340 = vmatpush1.msra.mxu0 %v7315
    %7341 = vmatprep.subr.mxu0 0.0
    %7342 = vmatpush1.msra.mxu0 %v7316
    %7343 = vmatprep.subr.mxu0 0.0
    %7344 = vmatpush1.msra.mxu0 %v7317
    %7345 = vmatprep.subr.mxu0 0.0
    %7346 = vmatpush1.msra.mxu0 %v7318
    %7347 = vmatprep.subr.mxu0 0.0
    %7348 = vmatpush1.msra.mxu0 %v7319
    %7349 = vmatprep.subr.mxu0 0.0
    %7350 = vmatpush1.msra.mxu0 %v7320
    %7351 = vmatprep.subr.mxu0 0.0
    %7352 = vmatpush1.msra.mxu0 %v7321
    %7353 = vmatprep.subr.mxu0 0.0
    %7354 = vmatpush1.msra.mxu0 %v7322
    %7355 = vmatprep.subr.mxu0 0.0
    %7356 = vmatpush1.msra.mxu0 %v7323
    %7357 = vmatprep.subr.mxu0 0.0
    %7358 = vmatpush1.msra.mxu0 %v7324
    %7359 = vmatprep.subr.mxu0 0.0
    %7360 = vmatpush1.msra.mxu0 %v7325
    %7361 = vmatprep.subr.mxu0 0.0
    %7362 = vmatpush1.msra.mxu0 %v7326
    %7363 = vmatprep.subr.mxu0 0.0
    %7364 = vmatpush1.msra.mxu0 %v7327
    %7365 = vmatprep.subr.mxu0 0.0
    %7366 = vmatpush1.msra.mxu0 %v7328
    %7367 = vmatprep.subr.mxu0 0.0
    %7368 = vmatpush1.msra.mxu0 %v7329
    %7369 = vmatprep.subr.mxu0 0.0
    %7370 = vmatpush1.msra.mxu0 0.0
    %7371 = vmatprep.subr.mxu0 0.0
    %7372 = vmatpush1.msra.mxu0 0.0
    %7373 = vmatprep.subr.mxu0 0.0
    %7374 = vmatpush1.msra.mxu0 0.0
    %7375 = vmatprep.subr.mxu0 0.0
    %7376 = vmatpush1.msra.mxu0 0.0
    %7377 = vmatprep.subr.mxu0 0.0
    %7378 = vmatpush1.msra.mxu0 0.0
    %7379 = vmatprep.subr.mxu0 0.0
    %7380 = vmatpush1.msra.mxu0 0.0
    %7381 = vmatprep.subr.mxu0 0.0
    %7382 = vmatpush1.msra.mxu0 0.0
    %7383 = vmatprep.subr.mxu0 0.0
    %7384 = vmatpush1.msra.mxu0 0.0
    %7385 = vmatprep.subr.mxu0 0.0
    %7386 = vmatpush1.msra.mxu0 0.0
    %7387 = vmatprep.subr.mxu0 0.0
    %7388 = vmatpush1.msra.mxu0 0.0
    %7389 = vmatprep.subr.mxu0 0.0
    %7390 = vmatpush1.msra.mxu0 0.0
    %7391 = vmatprep.subr.mxu0 0.0
    %7392 = vmatpush1.msra.mxu0 0.0
    %7393 = vmatprep.subr.mxu0 0.0
    %7394 = vmatpush1.msra.mxu0 0.0
    %7395 = vmatprep.subr.mxu0 0.0
    %7396 = vmatpush1.msra.mxu0 0.0
    %7397 = vmatprep.subr.mxu0 0.0
    %7398 = vmatpush1.msra.mxu0 0.0
    %7399 = vmatprep.subr.mxu0 0.0
    %7400 = vmatpush1.msra.mxu0 0.0
    %7401 = vmatprep.mubr.f32.mxu0 0.0
    %7402 = vmatmul.mubr.f32.gmra.mrb[0].mxu0 %v7306
    %v7403 = vpop.f32.mrb[0].mxu0
    %v7404 = vadd.f32 %v7335, %v7403
    %v7405 = vpop.f32.mrb[0].mxu0
    %7406 = vmatprep.mubr.f32.mxu0 0.0
    %7407 = vmatmul.mubr.f32.gmra.mrb[0].mxu0 %v7307
    %v7408 = vpop.f32.mrb[0].mxu0
    %v7409 = vadd.f32 %v7335, %v7408
    %v7410 = vpop.f32.mrb[0].mxu0
    %7411 = vmatprep.mubr.f32.mxu0 0.0
    %7412 = vmatmul.mubr.f32.gmra.mrb[0].mxu0 %v7308
    %v7413 = vpop.f32.mrb[0].mxu0
    %v7414 = vadd.f32 %v7335, %v7413
    %v7415 = vpop.f32.mrb[0].mxu0
    %7416 = vmatprep.mubr.f32.mxu0 0.0
    %7417 = vmatmul.mubr.f32.gmra.mrb[0].mxu0 %v7309
    %v7418 = vpop.f32.mrb[0].mxu0
    %v7419 = vadd.f32 %v7335, %v7418
    %v7420 = vpop.f32.mrb[0].mxu0
    %7421 = vmatprep.mubr.f32.mxu0 0.0
    %7422 = vmatmul.mubr.f32.gmra.mrb[0].mxu0 %v7310
    %v7423 = vpop.f32.mrb[0].mxu0
    %v7424 = vadd.f32 %v7335, %v7423
    %v7425 = vpop.f32.mrb[0].mxu0
    %7426 = vmatprep.mubr.f32.mxu0 0.0
    %7427 = vmatmul.mubr.f32.gmra.mrb[0].mxu0 %v7311
    %v7428 = vpop.f32.mrb[0].mxu0
    %v7429 = vadd.f32 %v7335, %v7428
    %v7430 = vpop.f32.mrb[0].mxu0
    %7431 = vmatprep.mubr.f32.mxu0 0.0
    %7432 = vmatmul.mubr.f32.gmra.mrb[0].mxu0 %v7312
    %v7433 = vpop.f32.mrb[0].mxu0
    %v7434 = vadd.f32 %v7335, %v7433
    %v7435 = vpop.f32.mrb[0].mxu0
    %7436 = vmatprep.mubr.f32.mxu0 0.0
    %7437 = vmatmul.mubr.f32.gmra.mrb[0].mxu0 %v7313
    %v7438 = vpop.f32.mrb[0].mxu0
    %v7439 = vadd.f32 %v7335, %v7438
    %v7440 = vpop.f32.mrb[0].mxu0
    %7441 = vdwg.mxu0
    %v7442 = vxor.u32 %v7404, 2147483648
    %v7443 = vxor.u32 %v7409, 2147483648
    %v7444 = vxor.u32 %v7414, 2147483648
    %v7445 = vxor.u32 %v7419, 2147483648
    %v7446 = vxor.u32 %v7424, 2147483648
    %v7447 = vxor.u32 %v7429, 2147483648
    %v7448 = vxor.u32 %v7434, 2147483648
    %v7449 = vxor.u32 %v7439, 2147483648
    %v7450 = vmul.f32 %v7442, 1.442695
    %v7451 = vpow.pop %v7450
    %v7452 = vmul.f32 %v7443, 1.442695
    %v7453 = vpow.pop %v7452
    %v7454 = vmul.f32 %v7444, 1.442695
    %v7455 = vpow.pop %v7454
    %v7456 = vmul.f32 %v7445, 1.442695
    %v7457 = vpow.pop %v7456
    %v7458 = vmul.f32 %v7446, 1.442695
    %v7459 = vpow.pop %v7458
    %v7460 = vmul.f32 %v7447, 1.442695
    %v7461 = vpow.pop %v7460
    %v7462 = vmul.f32 %v7448, 1.442695
    %v7463 = vpow.pop %v7462
    %v7464 = vmul.f32 %v7449, 1.442695
    %v7465 = vpow.pop %v7464
    %v7466 = vadd.f32 %v7451, 1.0
    %v7467 = vadd.f32 %v7453, 1.0
    %v7468 = vadd.f32 %v7455, 1.0
    %v7469 = vadd.f32 %v7457, 1.0
    %v7470 = vadd.f32 %v7459, 1.0
    %v7471 = vadd.f32 %v7461, 1.0
    %v7472 = vadd.f32 %v7463, 1.0
    %v7473 = vadd.f32 %v7465, 1.0
    %v7474 = vrcp.pop %v7466
    %v7475 = vmul.f32 1.0, %v7474
    %v7476 = vrcp.pop %v7467
    %v7477 = vmul.f32 1.0, %v7476
    %v7478 = vrcp.pop %v7468
    %v7479 = vmul.f32 1.0, %v7478
    %v7480 = vrcp.pop %v7469
    %v7481 = vmul.f32 1.0, %v7480
    %v7482 = vrcp.pop %v7470
    %v7483 = vmul.f32 1.0, %v7482
    %v7484 = vrcp.pop %v7471
    %v7485 = vmul.f32 1.0, %v7484
    %v7486 = vrcp.pop %v7472
    %v7487 = vmul.f32 1.0, %v7486
    %v7488 = vrcp.pop %v7473
    %v7489 = vmul.f32 1.0, %v7488
    %7490 = vst [vmem:[%s12] sm:$0xff] %v7475
    %7491 = vst [vmem:[%s12 + $0x8] sm:$0xff] %v7477
    %7492 = vst [vmem:[%s12 + $0x10] sm:$0xff] %v7479
    %7493 = vst [vmem:[%s12 + $0x18] sm:$0xff] %v7481
    %7494 = vst [vmem:[%s12 + $0x20] sm:$0xff] %v7483
    %7495 = vst [vmem:[%s12 + $0x28] sm:$0xff] %v7485
    %7496 = vst [vmem:[%s12 + $0x30] sm:$0xff] %v7487
    %7497 = vst [vmem:[%s12 + $0x38] sm:$0xff] %v7489
    // Predicated region
    $region77: #{music_lstm_forward.1} parent=1 // pred_check
      _
    $region78: #{music_lstm_forward.1} parent=1 // pred_check_branch
      %7499 = sbr.rel (0) target = $region80
    $region79: #{music_lstm_forward.1} parent=1 // pred_region
      _
    $region80: #{music_lstm_forward.1} parent=1 // pred_fallthru
      _
    // Predicated region
    $region81: #{music_lstm_forward.1} parent=1 // pred_check
      _
    $region82: #{music_lstm_forward.1} parent=1 // pred_check_branch
      %7501 = sbr.rel (0) target = $region84
    $region83: #{music_lstm_forward.1} parent=1 // pred_region
      _
    $region84: #{music_lstm_forward.1} parent=1 // pred_fallthru
      _
    %7502 = vsyncpa [#allocation6], 1
    %7503 = vsyncpa [#allocation8], 1
    %7504 = vsyncpa [#allocation11], 1
    %7505 = vsyncpa [#allocation14], 1

</llo_original>
